<compile_context>
chip_gen: v7x
topology: tpu7x:2x2x1
jax: 0.10.0
libtpu: 0.0.40
codegen_flags: <defaults>
</compile_context>

<pallas_src>
import functools

import jax
import jax.numpy as jnp
from jax.experimental import pallas as pl
from jax.experimental.pallas import tpu as pltpu

EPS = 1e-5


# ----------------------------- fused Pallas kernel --------------------------

def _sa_block_kernel(x_ref, w1t_ref, b1_ref, wqkvt_ref, rel_ref, mask_ref,
                     bn2s_ref, bn2b_ref, w3t_ref, b3_ref,
                     o_ref,
                     biasB_ref,
                     *, G, gc, K, pad, H, W):
    """One image per grid step.  Layout: (channels, H*W) = (sublanes, lanes).

    x_ref:    (1, Cin, HW)     input (also the residual)
    w1t_ref:  (width, Cin)     conv1 weight^T with bn1 scale folded in
    b1_ref:   (width, 1)       bn1 shift
    wqkvt_ref:(3*width, width) qkv weight^T, output rows permuted to (c, g)
    rel_ref:  (gc, K)          SMEM scalars: rows [0,gc/2)=relative_h (per i),
                               rows [gc/2,gc)=relative_w (per j)
    mask_ref: (K*K, HW)        neighborhood validity masks (zero-pad semantics)
    bn2s/bn2b:(width, 1)       bn2 scale/shift (permuted channel order)
    w3t_ref:  (out_c, width)   conv3 weight^T (bn3 scale folded, cols permuted)
    b3_ref:   (out_c, 1)       bn3 shift
    o_ref:    (1, out_c, HW)   output
    biasB_ref:(K, G, HW)       VMEM scratch for the column part of q.rel
    """
    HW = H * W
    width = G * gc
    gch = gc // 2
    f32 = jnp.float32

    x = x_ref[0]                                              # (Cin, HW)

    # -- conv1 (1x1) + folded bn1 + relu -------------------------------------
    h1 = jnp.dot(w1t_ref[...], x, preferred_element_type=f32)
    h1 = jnp.maximum(h1 + b1_ref[...], 0.0)                   # (width, HW)

    # -- qkv 1x1 conv (no bn / relu); rows already in (c, g) order -----------
    qkv = jnp.dot(wqkvt_ref[...], h1, preferred_element_type=f32)
    q = qkv[0:width]
    k = qkv[width:2 * width]
    v = qkv[2 * width:3 * width]

    # -- separable q.rel bias: B[j] = sum_c relative_w[c,j] * q_c[gch+c] -----
    for j in range(K):
        b = rel_ref[gch, j] * q[gch * G:(gch + 1) * G]
        for c in range(1, gc - gch):
            b = b + rel_ref[gch + c, j] * q[(gch + c) * G:(gch + c + 1) * G]
        biasB_ref[j] = b                                      # (G, HW)

    # -- single-pass online softmax over the K*K neighborhood offsets --------
    m = jnp.full((G, HW), -jnp.inf, dtype=f32)
    denom = jnp.zeros((G, HW), f32)
    accs = [jnp.zeros((G, HW), f32) for _ in range(gc)]

    for i in range(K):
        di = i - pad
        # A[i] = sum_c relative_h[c,i] * q_c[c]   (hoisted over the j loop)
        a_i = rel_ref[0, i] * q[0:G]
        for c in range(1, gch):
            a_i = a_i + rel_ref[c, i] * q[c * G:(c + 1) * G]

        for j in range(K):
            dj = j - pad
            p_off = i * K + j
            shift = (-(di * W + dj)) % HW                    # static per offset
            if shift == 0:
                kr, vr = k, v
            else:
                kr = pltpu.roll(k, shift, axis=1)            # XLU, not vld/VPU
                vr = pltpu.roll(v, shift, axis=1)
            msk = mask_ref[p_off:p_off + 1, :]               # (1, HW)

            qk = q * kr                                      # (width, HW)
            ssum = qk[0:G]
            for c in range(1, gc):
                ssum = ssum + qk[c * G:(c + 1) * G]          # reduce over gc
            # mask AFTER the reduction; invalid offsets keep only q.rel
            logit = ssum * msk + (a_i + biasB_ref[j])        # (G, HW)

            m_new = jnp.maximum(m, logit)
            alpha = jnp.exp(m - m_new)
            e = jnp.exp(logit - m_new)
            denom = alpha * denom + e                        # unmasked denom
            em = e * msk                                     # masked numerator
            for c in range(gc):
                accs[c] = alpha * accs[c] + em * vr[c * G:(c + 1) * G]
            m = m_new

    inv = pl.reciprocal(denom, approx=False)                 # exact f32 parity
    h2 = jnp.concatenate([a * inv for a in accs], axis=0)    # (width, HW)

    # -- bn2 + relu (scale/shift in permuted channel order) ------------------
    h2 = jnp.maximum(h2 * bn2s_ref[...] + bn2b_ref[...], 0.0)

    # -- conv3 (1x1, bn3 scale folded) + shift + residual + relu -------------
    out = jnp.dot(w3t_ref[...], h2, preferred_element_type=f32)
    out = jnp.maximum(out + b3_ref[...] + x, 0.0)
    o_ref[0] = out.astype(o_ref.dtype)


# ----------------------------- host-side wrapper ----------------------------

def _fold_bn(gamma, beta):
    # eval-mode BN with running_mean=0, running_var=1
    return gamma / jnp.sqrt(1.0 + EPS), beta


def self_attention_block_forward(x_nchw, p):
    N, Cin, H, W = x_nchw.shape
    HW = H * W
    width, G, K, pad = p['width'], p['groups'], p['K'], p['pad']
    gc = width // G
    P = K * K
    out_c = p['out_c']
    assert Cin == out_c, "stride=1 / downsample=None requires inplanes == planes*4"
    assert gc % 2 == 0 and gc >= 2, "group_channels must be even (module splits h/w)"
    assert HW % 128 == 0, "flattened spatial axis must be lane-dense (mult of 128)"
    assert pad < H and pad < W, "roll-wrapped positions must be mask-covered"

    # channel permutation: new row r' = c*G + g  <->  original channel g*gc + c
    rp = jnp.arange(width)
    perm = (rp % G) * gc + (rp // G)

    sc1, sh1 = _fold_bn(p['gamma1'], p['beta1'])
    sc2, sh2 = _fold_bn(p['gamma2'], p['beta2'])
    sc3, sh3 = _fold_bn(p['gamma3'], p['beta3'])

    # 1x1 convs as (out, in) matrices with the BN scale folded into the rows.
    w1t = (p['w1'] * sc1[None, :]).T                          # (width, Cin)
    b1 = sh1.reshape(width, 1)

    wqkvt = p['w_qkv'].T.reshape(3, width, width)[:, perm, :].reshape(
        3 * width, width)                                     # rows permuted

    w3t = (p['w3'] * sc3[None, :]).T[:, perm]                 # (out_c, width)
    b3 = sh3.reshape(out_c, 1)

    bn2s = sc2[perm].reshape(width, 1)
    bn2b = sh2[perm].reshape(width, 1)

    # separable relative-position scalars: rows [0,gc/2)=relative_h (per row
    # offset i), rows [gc/2,gc)=relative_w (per column offset j)
    rel = jnp.concatenate([p['relative_h'], p['relative_w']], axis=0)  # (gc, K)

    # validity masks for the K*K neighborhood offsets (zero-padded unfold)
    hh = jnp.arange(H).reshape(H, 1)
    ww = jnp.arange(W).reshape(1, W)
    masks = []
    for i in range(K):
        for j in range(K):
            di, dj = i - pad, j - pad
            ok = ((hh + di >= 0) & (hh + di < H) &
                  (ww + dj >= 0) & (ww + dj < W))
            masks.append(ok.reshape(HW))
    maskf = jnp.stack(masks, axis=0).astype(jnp.float32)      # (P, HW)

    x3 = x_nchw.reshape(N, Cin, HW)                           # lane-dense input

    kernel = functools.partial(_sa_block_kernel, G=G, gc=gc, K=K, pad=pad,
                               H=H, W=W)

    # TODO(synk): for v7x megacore balance at small N, add a second parallel
    #             grid axis (batch split or H row-bands with a halo).
    out3 = pl.pallas_call(
        kernel,
        out_shape=jax.ShapeDtypeStruct((N, out_c, HW), x_nchw.dtype),
        grid=(N,),
        in_specs=[
            pl.BlockSpec((1, Cin, HW), lambda n: (n, 0, 0)),      # x / residual
            pl.BlockSpec((width, Cin), lambda n: (0, 0)),         # w1t
            pl.BlockSpec((width, 1), lambda n: (0, 0)),           # b1
            pl.BlockSpec((3 * width, width), lambda n: (0, 0)),   # wqkvt
            pl.BlockSpec(memory_space=pltpu.MemorySpace.SMEM),    # rel (scalars)
            pl.BlockSpec((P, HW), lambda n: (0, 0)),              # masks
            pl.BlockSpec((width, 1), lambda n: (0, 0)),           # bn2 scale
            pl.BlockSpec((width, 1), lambda n: (0, 0)),           # bn2 shift
            pl.BlockSpec((out_c, width), lambda n: (0, 0)),       # w3t
            pl.BlockSpec((out_c, 1), lambda n: (0, 0)),           # b3
        ],
        out_specs=pl.BlockSpec((1, out_c, HW), lambda n: (n, 0, 0)),
        scratch_shapes=[
            pltpu.VMEM((K, G, HW), jnp.float32),      # B[j] bias slabs
        ],
        compiler_params=pltpu.CompilerParams(
            dimension_semantics=("parallel",),
        ),
    )(x3, w1t, b1, wqkvt, rel, maskf, bn2s, bn2b, w3t, b3)

    return out3.reshape(N, out_c, H, W)


# ----------------------------- params / reference ---------------------------

def init_params(key, inplanes, planes, groups=8, base_width=64, K=7, pad=3):
    width = int(planes * (base_width / 64.0))
    out_c = planes * 4
    gc = width // groups
    ks = jax.random.split(key, 11)
    sd1 = (1.0 / inplanes) ** 0.5
    sdq = (1.0 / width) ** 0.5
    sdr = (1.0 / gc) ** 0.5
    return dict(
        groups=groups, K=K, pad=pad, width=width, out_c=out_c,
        w1=jax.random.normal(ks[0], (inplanes, width), jnp.float32) * sd1,
        gamma1=1.0 + 0.1 * jax.random.normal(ks[1], (width,), jnp.float32),
        beta1=0.1 * jax.random.normal(ks[2], (width,), jnp.float32),
        w_qkv=jax.random.normal(ks[3], (width, 3 * width), jnp.float32) * sdq,
        relative_h=jax.random.normal(ks[4], (gc // 2, K), jnp.float32) * sdr,
        relative_w=jax.random.normal(ks[5], (gc // 2, K), jnp.float32) * sdr,
        gamma2=1.0 + 0.1 * jax.random.normal(ks[6], (width,), jnp.float32),
        beta2=0.1 * jax.random.normal(ks[7], (width,), jnp.float32),
        w3=jax.random.normal(ks[8], (width, out_c), jnp.float32) * sdq,
        gamma3=1.0 + 0.1 * jax.random.normal(ks[9], (out_c,), jnp.float32),
        beta3=0.1 * jax.random.normal(ks[10], (out_c,), jnp.float32),
    )


def unfold_neighborhood(x_nchw, K, pad):
    """Zero-padded KxK neighborhood gather == nn.Unfold(K, 1, pad, 1)."""
    N, C, H, W = x_nchw.shape
    xp = jnp.pad(x_nchw, ((0, 0), (0, 0), (pad, pad), (pad, pad)))
    patches = [xp[:, :, i:i + H, j:j + W] for i in range(K) for j in range(K)]
    return jnp.stack(patches, axis=-1)


def reference_forward(x, p):
    N, Cin, H, W = x.shape
    width, G, K, pad = p['width'], p['groups'], p['K'], p['pad']
    gc = width // G
    P = K * K

    def bn(t, gamma, beta):
        return (t * (gamma / jnp.sqrt(1.0 + EPS))[None, :, None, None]
                + beta[None, :, None, None])

    def conv1x1(t, w):
        return jnp.einsum('nchw,cd->ndhw', t, w)

    out = jax.nn.relu(bn(conv1x1(x, p['w1']), p['gamma1'], p['beta1']))
    qkv = conv1x1(out, p['w_qkv'])
    q, k, v = qkv[:, :width], qkv[:, width:2 * width], qkv[:, 2 * width:]
    k_unf = unfold_neighborhood(k, K, pad).reshape(N, G, gc, H, W, K, K)
    v_unf = unfold_neighborhood(v, K, pad).reshape(N, G, gc, H, W, P)
    k_h = k_unf[:, :, :gc // 2] + p['relative_h'][None, None, :, None, None, :, None]
    k_w = k_unf[:, :, gc // 2:] + p['relative_w'][None, None, :, None, None, None, :]
    kr = jnp.concatenate([k_h, k_w], axis=2).reshape(N, G, gc, H, W, P)
    qv = q.reshape(N, G, gc, H, W, 1)
    logits = jnp.sum(qv * kr, axis=2)
    attn = jax.nn.softmax(logits, axis=-1)
    sa = jnp.sum(attn[:, :, None] * v_unf, axis=-1).reshape(N, width, H, W)
    out = jax.nn.relu(bn(sa, p['gamma2'], p['beta2']))
    out = bn(conv1x1(out, p['w3']), p['gamma3'], p['beta3'])
    return jax.nn.relu(out + x)


# ----------------------------- main ------------------------------------------

if __name__ == "__main__":
    key = jax.random.PRNGKey(0)
    k_x, k_p = jax.random.split(key)

    # width = planes = 16, groups = 8, expansion*planes = 64 == inplanes,
    # H*W = 256 so the flattened-spatial lane axis is a multiple of 128.
    N, inplanes, H, W = 2, 64, 16, 16
    planes = 16
    x = jax.random.normal(k_x, (N, inplanes, H, W), jnp.float32)
    params = init_params(k_p, inplanes, planes)

    out = jax.block_until_ready(self_attention_block_forward(x, params))

    ref = reference_forward(x, params)
    assert out.shape == (N, planes * 4, H, W), out.shape
    if not jnp.allclose(out, ref, rtol=1e-4, atol=1e-4):
        max_err = jnp.max(jnp.abs(out - ref))
        raise AssertionError(f"mismatch vs reference, max abs err={max_err}")
    print("KERNEL_OK")
</pallas_src>

<mosaic_0001>
module attributes {stable_mosaic.version = 11 : i64} {
  func.func @_sa_block_kernel(%arg0: i32, %arg1: memref<1x64x256xf32, #tpu.memory_space<vmem>>, %arg2: memref<16x64xf32, #tpu.memory_space<vmem>>, %arg3: memref<16x1xf32, #tpu.memory_space<vmem>>, %arg4: memref<48x16xf32, #tpu.memory_space<vmem>>, %arg5: memref<2x7xf32, #tpu.memory_space<smem>>, %arg6: memref<49x256xf32, #tpu.memory_space<vmem>>, %arg7: memref<16x1xf32, #tpu.memory_space<vmem>>, %arg8: memref<16x1xf32, #tpu.memory_space<vmem>>, %arg9: memref<64x16xf32, #tpu.memory_space<vmem>>, %arg10: memref<64x1xf32, #tpu.memory_space<vmem>>, %arg11: memref<1x64x256xf32, #tpu.memory_space<vmem>>, %arg12: memref<7x8x256xf32, #tpu.memory_space<vmem>>) attributes {dimension_semantics = [#tpu.dimension_semantics<parallel>], iteration_bounds = array<i64: 2>, scalar_prefetch = 0 : i64, scratch_operands = 1 : i64, tpu.core_type = #tpu.core_type<tc>, window_params = [{transform_indices = @transform_0, window_bounds = array<i64: 1, 64, 256>}, {pipeline_mode = #tpu.pipeline_mode<synchronous>, transform_indices = @transform_1, window_bounds = array<i64: 16, 64>}, {pipeline_mode = #tpu.pipeline_mode<synchronous>, transform_indices = @transform_2, window_bounds = array<i64: 16, 1>}, {pipeline_mode = #tpu.pipeline_mode<synchronous>, transform_indices = @transform_3, window_bounds = array<i64: 48, 16>}, {transform_indices = @transform_4, window_bounds = array<i64: 2, 7>}, {pipeline_mode = #tpu.pipeline_mode<synchronous>, transform_indices = @transform_5, window_bounds = array<i64: 49, 256>}, {pipeline_mode = #tpu.pipeline_mode<synchronous>, transform_indices = @transform_6, window_bounds = array<i64: 16, 1>}, {pipeline_mode = #tpu.pipeline_mode<synchronous>, transform_indices = @transform_7, window_bounds = array<i64: 16, 1>}, {pipeline_mode = #tpu.pipeline_mode<synchronous>, transform_indices = @transform_8, window_bounds = array<i64: 64, 16>}, {pipeline_mode = #tpu.pipeline_mode<synchronous>, transform_indices = @transform_9, window_bounds = array<i64: 64, 1>}, {transform_indices = @transform_10, window_bounds = array<i64: 1, 64, 256>}]} {
    %c0 = arith.constant 0 : index
    %c0_0 = arith.constant 0 : index
    %c0_1 = arith.constant 0 : index
    %0 = vector.load %arg1[%c0, %c0_0, %c0_1] : memref<1x64x256xf32, #tpu.memory_space<vmem>>, vector<1x64x256xf32>
    %1 = vector.shape_cast %0 : vector<1x64x256xf32> to vector<64x256xf32>
    %c0_2 = arith.constant 0 : index
    %c0_3 = arith.constant 0 : index
    %2 = vector.load %arg2[%c0_2, %c0_3] : memref<16x64xf32, #tpu.memory_space<vmem>>, vector<16x64xf32>
    %cst = arith.constant dense<0.000000e+00> : vector<16x256xf32>
    %3 = tpu.matmul %2, %1, %cst {dimension_numbers = #tpu.dot_dimension_numbers<[1], [0], [0], [1], [0, 0, 1, 1], [], []>} : vector<16x64xf32>, vector<64x256xf32>, vector<16x256xf32> -> vector<16x256xf32>
    %c0_4 = arith.constant 0 : index
    %c0_5 = arith.constant 0 : index
    %4 = vector.load %arg3[%c0_4, %c0_5] : memref<16x1xf32, #tpu.memory_space<vmem>>, vector<16x1xf32>
    %5 = vector.broadcast %4 : vector<16x1xf32> to vector<16x256xf32>
    %6 = arith.addf %3, %5 : vector<16x256xf32>
    %cst_6 = arith.constant 0.000000e+00 : f32
    %7 = vector.broadcast %cst_6 : f32 to vector<16x256xf32>
    %8 = arith.maximumf %6, %7 : vector<16x256xf32>
    %c0_7 = arith.constant 0 : index
    %c0_8 = arith.constant 0 : index
    %9 = vector.load %arg4[%c0_7, %c0_8] : memref<48x16xf32, #tpu.memory_space<vmem>>, vector<48x16xf32>
    %cst_9 = arith.constant dense<0.000000e+00> : vector<48x256xf32>
    %10 = tpu.matmul %9, %8, %cst_9 {dimension_numbers = #tpu.dot_dimension_numbers<[1], [0], [0], [1], [0, 0, 1, 1], [], []>} : vector<48x16xf32>, vector<16x256xf32>, vector<48x256xf32> -> vector<48x256xf32>
    %11 = vector.extract_strided_slice %10 {offsets = [0, 0], sizes = [16, 256], strides = [1, 1]} : vector<48x256xf32> to vector<16x256xf32>
    %12 = vector.extract_strided_slice %10 {offsets = [16, 0], sizes = [16, 256], strides = [1, 1]} : vector<48x256xf32> to vector<16x256xf32>
    %13 = vector.extract_strided_slice %10 {offsets = [32, 0], sizes = [16, 256], strides = [1, 1]} : vector<48x256xf32> to vector<16x256xf32>
    %c1 = arith.constant 1 : index
    %c0_10 = arith.constant 0 : index
    %14 = memref.load %arg5[%c1, %c0_10] : memref<2x7xf32, #tpu.memory_space<smem>>
    %15 = vector.extract_strided_slice %11 {offsets = [8, 0], sizes = [8, 256], strides = [1, 1]} : vector<16x256xf32> to vector<8x256xf32>
    %16 = vector.broadcast %14 : f32 to vector<8x256xf32>
    %17 = arith.mulf %16, %15 : vector<8x256xf32>
    %c0_11 = arith.constant 0 : index
    %c0_12 = arith.constant 0 : index
    %c0_13 = arith.constant 0 : index
    %18 = vector.load %arg12[%c0_11, %c0_12, %c0_13] : memref<7x8x256xf32, #tpu.memory_space<vmem>>, vector<1x8x256xf32>
    %19 = vector.shape_cast %18 : vector<1x8x256xf32> to vector<8x256xf32>
    %20 = vector.shape_cast %17 : vector<8x256xf32> to vector<1x8x256xf32>
    tpu.vector_store %arg12[%c0_11, %c0_12, %c0_13], %20 {strides = array<i32>} : memref<7x8x256xf32, #tpu.memory_space<vmem>>, vector<1x8x256xf32>,
    %c1_14 = arith.constant 1 : index
    %c1_15 = arith.constant 1 : index
    %21 = memref.load %arg5[%c1_14, %c1_15] : memref<2x7xf32, #tpu.memory_space<smem>>
    %22 = vector.extract_strided_slice %11 {offsets = [8, 0], sizes = [8, 256], strides = [1, 1]} : vector<16x256xf32> to vector<8x256xf32>
    %23 = vector.broadcast %21 : f32 to vector<8x256xf32>
    %24 = arith.mulf %23, %22 : vector<8x256xf32>
    %c1_16 = arith.constant 1 : index
    %c0_17 = arith.constant 0 : index
    %c0_18 = arith.constant 0 : index
    %25 = vector.load %arg12[%c1_16, %c0_17, %c0_18] : memref<7x8x256xf32, #tpu.memory_space<vmem>>, vector<1x8x256xf32>
    %26 = vector.shape_cast %25 : vector<1x8x256xf32> to vector<8x256xf32>
    %27 = vector.shape_cast %24 : vector<8x256xf32> to vector<1x8x256xf32>
    tpu.vector_store %arg12[%c1_16, %c0_17, %c0_18], %27 {strides = array<i32>} : memref<7x8x256xf32, #tpu.memory_space<vmem>>, vector<1x8x256xf32>,
    %c1_19 = arith.constant 1 : index
    %c2 = arith.constant 2 : index
    %28 = memref.load %arg5[%c1_19, %c2] : memref<2x7xf32, #tpu.memory_space<smem>>
    %29 = vector.extract_strided_slice %11 {offsets = [8, 0], sizes = [8, 256], strides = [1, 1]} : vector<16x256xf32> to vector<8x256xf32>
    %30 = vector.broadcast %28 : f32 to vector<8x256xf32>
    %31 = arith.mulf %30, %29 : vector<8x256xf32>
    %c2_20 = arith.constant 2 : index
    %c0_21 = arith.constant 0 : index
    %c0_22 = arith.constant 0 : index
    %32 = vector.load %arg12[%c2_20, %c0_21, %c0_22] : memref<7x8x256xf32, #tpu.memory_space<vmem>>, vector<1x8x256xf32>
    %33 = vector.shape_cast %32 : vector<1x8x256xf32> to vector<8x256xf32>
    %34 = vector.shape_cast %31 : vector<8x256xf32> to vector<1x8x256xf32>
    tpu.vector_store %arg12[%c2_20, %c0_21, %c0_22], %34 {strides = array<i32>} : memref<7x8x256xf32, #tpu.memory_space<vmem>>, vector<1x8x256xf32>,
    %c1_23 = arith.constant 1 : index
    %c3 = arith.constant 3 : index
    %35 = memref.load %arg5[%c1_23, %c3] : memref<2x7xf32, #tpu.memory_space<smem>>
    %36 = vector.extract_strided_slice %11 {offsets = [8, 0], sizes = [8, 256], strides = [1, 1]} : vector<16x256xf32> to vector<8x256xf32>
    %37 = vector.broadcast %35 : f32 to vector<8x256xf32>
    %38 = arith.mulf %37, %36 : vector<8x256xf32>
    %c3_24 = arith.constant 3 : index
    %c0_25 = arith.constant 0 : index
    %c0_26 = arith.constant 0 : index
    %39 = vector.load %arg12[%c3_24, %c0_25, %c0_26] : memref<7x8x256xf32, #tpu.memory_space<vmem>>, vector<1x8x256xf32>
    %40 = vector.shape_cast %39 : vector<1x8x256xf32> to vector<8x256xf32>
    %41 = vector.shape_cast %38 : vector<8x256xf32> to vector<1x8x256xf32>
    tpu.vector_store %arg12[%c3_24, %c0_25, %c0_26], %41 {strides = array<i32>} : memref<7x8x256xf32, #tpu.memory_space<vmem>>, vector<1x8x256xf32>,
    %c1_27 = arith.constant 1 : index
    %c4 = arith.constant 4 : index
    %42 = memref.load %arg5[%c1_27, %c4] : memref<2x7xf32, #tpu.memory_space<smem>>
    %43 = vector.extract_strided_slice %11 {offsets = [8, 0], sizes = [8, 256], strides = [1, 1]} : vector<16x256xf32> to vector<8x256xf32>
    %44 = vector.broadcast %42 : f32 to vector<8x256xf32>
    %45 = arith.mulf %44, %43 : vector<8x256xf32>
    %c4_28 = arith.constant 4 : index
    %c0_29 = arith.constant 0 : index
    %c0_30 = arith.constant 0 : index
    %46 = vector.load %arg12[%c4_28, %c0_29, %c0_30] : memref<7x8x256xf32, #tpu.memory_space<vmem>>, vector<1x8x256xf32>
    %47 = vector.shape_cast %46 : vector<1x8x256xf32> to vector<8x256xf32>
    %48 = vector.shape_cast %45 : vector<8x256xf32> to vector<1x8x256xf32>
    tpu.vector_store %arg12[%c4_28, %c0_29, %c0_30], %48 {strides = array<i32>} : memref<7x8x256xf32, #tpu.memory_space<vmem>>, vector<1x8x256xf32>,
    %c1_31 = arith.constant 1 : index
    %c5 = arith.constant 5 : index
    %49 = memref.load %arg5[%c1_31, %c5] : memref<2x7xf32, #tpu.memory_space<smem>>
    %50 = vector.extract_strided_slice %11 {offsets = [8, 0], sizes = [8, 256], strides = [1, 1]} : vector<16x256xf32> to vector<8x256xf32>
    %51 = vector.broadcast %49 : f32 to vector<8x256xf32>
    %52 = arith.mulf %51, %50 : vector<8x256xf32>
    %c5_32 = arith.constant 5 : index
    %c0_33 = arith.constant 0 : index
    %c0_34 = arith.constant 0 : index
    %53 = vector.load %arg12[%c5_32, %c0_33, %c0_34] : memref<7x8x256xf32, #tpu.memory_space<vmem>>, vector<1x8x256xf32>
    %54 = vector.shape_cast %53 : vector<1x8x256xf32> to vector<8x256xf32>
    %55 = vector.shape_cast %52 : vector<8x256xf32> to vector<1x8x256xf32>
    tpu.vector_store %arg12[%c5_32, %c0_33, %c0_34], %55 {strides = array<i32>} : memref<7x8x256xf32, #tpu.memory_space<vmem>>, vector<1x8x256xf32>,
    %c1_35 = arith.constant 1 : index
    %c6 = arith.constant 6 : index
    %56 = memref.load %arg5[%c1_35, %c6] : memref<2x7xf32, #tpu.memory_space<smem>>
    %57 = vector.extract_strided_slice %11 {offsets = [8, 0], sizes = [8, 256], strides = [1, 1]} : vector<16x256xf32> to vector<8x256xf32>
    %58 = vector.broadcast %56 : f32 to vector<8x256xf32>
    %59 = arith.mulf %58, %57 : vector<8x256xf32>
    %c6_36 = arith.constant 6 : index
    %c0_37 = arith.constant 0 : index
    %c0_38 = arith.constant 0 : index
    %60 = vector.load %arg12[%c6_36, %c0_37, %c0_38] : memref<7x8x256xf32, #tpu.memory_space<vmem>>, vector<1x8x256xf32>
    %61 = vector.shape_cast %60 : vector<1x8x256xf32> to vector<8x256xf32>
    %62 = vector.shape_cast %59 : vector<8x256xf32> to vector<1x8x256xf32>
    tpu.vector_store %arg12[%c6_36, %c0_37, %c0_38], %62 {strides = array<i32>} : memref<7x8x256xf32, #tpu.memory_space<vmem>>, vector<1x8x256xf32>,
    %cst_39 = arith.constant 0xFF800000 : f32
    %63 = vector.broadcast %cst_39 : f32 to vector<8x256xf32>
    %cst_40 = arith.constant 0.000000e+00 : f32
    %64 = vector.broadcast %cst_40 : f32 to vector<8x256xf32>
    %cst_41 = arith.constant 0.000000e+00 : f32
    %65 = vector.broadcast %cst_41 : f32 to vector<8x256xf32>
    %cst_42 = arith.constant 0.000000e+00 : f32
    %66 = vector.broadcast %cst_42 : f32 to vector<8x256xf32>
    %c0_43 = arith.constant 0 : index
    %c0_44 = arith.constant 0 : index
    %67 = memref.load %arg5[%c0_43, %c0_44] : memref<2x7xf32, #tpu.memory_space<smem>>
    %68 = vector.extract_strided_slice %11 {offsets = [0, 0], sizes = [8, 256], strides = [1, 1]} : vector<16x256xf32> to vector<8x256xf32>
    %69 = vector.broadcast %67 : f32 to vector<8x256xf32>
    %70 = arith.mulf %69, %68 : vector<8x256xf32>
    %c51_i32 = arith.constant 51 : i32
    %71 = tpu.dynamic_rotate %12 by %c51_i32 dim 1 : vector<16x256xf32>, i32 -> vector<16x256xf32>
    %c51_i32_45 = arith.constant 51 : i32
    %72 = tpu.dynamic_rotate %13 by %c51_i32_45 dim 1 : vector<16x256xf32>, i32 -> vector<16x256xf32>
    %c0_46 = arith.constant 0 : index
    %c0_47 = arith.constant 0 : index
    %73 = vector.load %arg6[%c0_46, %c0_47] : memref<49x256xf32, #tpu.memory_space<vmem>>, vector<1x256xf32>
    %74 = arith.mulf %11, %71 : vector<16x256xf32>
    %75 = vector.extract_strided_slice %74 {offsets = [0, 0], sizes = [8, 256], strides = [1, 1]} : vector<16x256xf32> to vector<8x256xf32>
    %76 = vector.extract_strided_slice %74 {offsets = [8, 0], sizes = [8, 256], strides = [1, 1]} : vector<16x256xf32> to vector<8x256xf32>
    %77 = arith.addf %75, %76 : vector<8x256xf32>
    %78 = vector.broadcast %73 : vector<1x256xf32> to vector<8x256xf32>
    %79 = arith.mulf %77, %78 : vector<8x256xf32>
    %c0_48 = arith.constant 0 : index
    %c0_49 = arith.constant 0 : index
    %c0_50 = arith.constant 0 : index
    %80 = vector.load %arg12[%c0_48, %c0_49, %c0_50] : memref<7x8x256xf32, #tpu.memory_space<vmem>>, vector<1x8x256xf32>
    %81 = vector.shape_cast %80 : vector<1x8x256xf32> to vector<8x256xf32>
    %82 = arith.addf %70, %81 : vector<8x256xf32>
    %83 = arith.addf %79, %82 : vector<8x256xf32>
    %84 = arith.maximumf %63, %83 : vector<8x256xf32>
    %85 = arith.subf %63, %84 : vector<8x256xf32>
    %86 = math.exp %85 : vector<8x256xf32>
    %87 = arith.subf %83, %84 : vector<8x256xf32>
    %88 = math.exp %87 : vector<8x256xf32>
    %89 = arith.mulf %86, %64 : vector<8x256xf32>
    %90 = arith.addf %89, %88 : vector<8x256xf32>
    %91 = vector.broadcast %73 : vector<1x256xf32> to vector<8x256xf32>
    %92 = arith.mulf %88, %91 : vector<8x256xf32>
    %93 = arith.mulf %86, %65 : vector<8x256xf32>
    %94 = vector.extract_strided_slice %72 {offsets = [0, 0], sizes = [8, 256], strides = [1, 1]} : vector<16x256xf32> to vector<8x256xf32>
    %95 = arith.mulf %92, %94 : vector<8x256xf32>
    %96 = arith.addf %93, %95 : vector<8x256xf32>
    %97 = arith.mulf %86, %66 : vector<8x256xf32>
    %98 = vector.extract_strided_slice %72 {offsets = [8, 0], sizes = [8, 256], strides = [1, 1]} : vector<16x256xf32> to vector<8x256xf32>
    %99 = arith.mulf %92, %98 : vector<8x256xf32>
    %100 = arith.addf %97, %99 : vector<8x256xf32>
    %c50_i32 = arith.constant 50 : i32
    %101 = tpu.dynamic_rotate %12 by %c50_i32 dim 1 : vector<16x256xf32>, i32 -> vector<16x256xf32>
    %c50_i32_51 = arith.constant 50 : i32
    %102 = tpu.dynamic_rotate %13 by %c50_i32_51 dim 1 : vector<16x256xf32>, i32 -> vector<16x256xf32>
    %c1_52 = arith.constant 1 : index
    %c0_53 = arith.constant 0 : index
    %103 = vector.load %arg6[%c1_52, %c0_53] : memref<49x256xf32, #tpu.memory_space<vmem>>, vector<1x256xf32>
    %104 = arith.mulf %11, %101 : vector<16x256xf32>
    %105 = vector.extract_strided_slice %104 {offsets = [0, 0], sizes = [8, 256], strides = [1, 1]} : vector<16x256xf32> to vector<8x256xf32>
    %106 = vector.extract_strided_slice %104 {offsets = [8, 0], sizes = [8, 256], strides = [1, 1]} : vector<16x256xf32> to vector<8x256xf32>
    %107 = arith.addf %105, %106 : vector<8x256xf32>
    %108 = vector.broadcast %103 : vector<1x256xf32> to vector<8x256xf32>
    %109 = arith.mulf %107, %108 : vector<8x256xf32>
    %c1_54 = arith.constant 1 : index
    %c0_55 = arith.constant 0 : index
    %c0_56 = arith.constant 0 : index
    %110 = vector.load %arg12[%c1_54, %c0_55, %c0_56] : memref<7x8x256xf32, #tpu.memory_space<vmem>>, vector<1x8x256xf32>
    %111 = vector.shape_cast %110 : vector<1x8x256xf32> to vector<8x256xf32>
    %112 = arith.addf %70, %111 : vector<8x256xf32>
    %113 = arith.addf %109, %112 : vector<8x256xf32>
    %114 = arith.maximumf %84, %113 : vector<8x256xf32>
    %115 = arith.subf %84, %114 : vector<8x256xf32>
    %116 = math.exp %115 : vector<8x256xf32>
    %117 = arith.subf %113, %114 : vector<8x256xf32>
    %118 = math.exp %117 : vector<8x256xf32>
    %119 = arith.mulf %116, %90 : vector<8x256xf32>
    %120 = arith.addf %119, %118 : vector<8x256xf32>
    %121 = vector.broadcast %103 : vector<1x256xf32> to vector<8x256xf32>
    %122 = arith.mulf %118, %121 : vector<8x256xf32>
    %123 = arith.mulf %116, %96 : vector<8x256xf32>
    %124 = vector.extract_strided_slice %102 {offsets = [0, 0], sizes = [8, 256], strides = [1, 1]} : vector<16x256xf32> to vector<8x256xf32>
    %125 = arith.mulf %122, %124 : vector<8x256xf32>
    %126 = arith.addf %123, %125 : vector<8x256xf32>
    %127 = arith.mulf %116, %100 : vector<8x256xf32>
    %128 = vector.extract_strided_slice %102 {offsets = [8, 0], sizes = [8, 256], strides = [1, 1]} : vector<16x256xf32> to vector<8x256xf32>
    %129 = arith.mulf %122, %128 : vector<8x256xf32>
    %130 = arith.addf %127, %129 : vector<8x256xf32>
    %c49_i32 = arith.constant 49 : i32
    %131 = tpu.dynamic_rotate %12 by %c49_i32 dim 1 : vector<16x256xf32>, i32 -> vector<16x256xf32>
    %c49_i32_57 = arith.constant 49 : i32
    %132 = tpu.dynamic_rotate %13 by %c49_i32_57 dim 1 : vector<16x256xf32>, i32 -> vector<16x256xf32>
    %c2_58 = arith.constant 2 : index
    %c0_59 = arith.constant 0 : index
    %133 = vector.load %arg6[%c2_58, %c0_59] : memref<49x256xf32, #tpu.memory_space<vmem>>, vector<1x256xf32>
    %134 = arith.mulf %11, %131 : vector<16x256xf32>
    %135 = vector.extract_strided_slice %134 {offsets = [0, 0], sizes = [8, 256], strides = [1, 1]} : vector<16x256xf32> to vector<8x256xf32>
    %136 = vector.extract_strided_slice %134 {offsets = [8, 0], sizes = [8, 256], strides = [1, 1]} : vector<16x256xf32> to vector<8x256xf32>
    %137 = arith.addf %135, %136 : vector<8x256xf32>
    %138 = vector.broadcast %133 : vector<1x256xf32> to vector<8x256xf32>
    %139 = arith.mulf %137, %138 : vector<8x256xf32>
    %c2_60 = arith.constant 2 : index
    %c0_61 = arith.constant 0 : index
    %c0_62 = arith.constant 0 : index
    %140 = vector.load %arg12[%c2_60, %c0_61, %c0_62] : memref<7x8x256xf32, #tpu.memory_space<vmem>>, vector<1x8x256xf32>
    %141 = vector.shape_cast %140 : vector<1x8x256xf32> to vector<8x256xf32>
    %142 = arith.addf %70, %141 : vector<8x256xf32>
    %143 = arith.addf %139, %142 : vector<8x256xf32>
    %144 = arith.maximumf %114, %143 : vector<8x256xf32>
    %145 = arith.subf %114, %144 : vector<8x256xf32>
    %146 = math.exp %145 : vector<8x256xf32>
    %147 = arith.subf %143, %144 : vector<8x256xf32>
    %148 = math.exp %147 : vector<8x256xf32>
    %149 = arith.mulf %146, %120 : vector<8x256xf32>
    %150 = arith.addf %149, %148 : vector<8x256xf32>
    %151 = vector.broadcast %133 : vector<1x256xf32> to vector<8x256xf32>
    %152 = arith.mulf %148, %151 : vector<8x256xf32>
    %153 = arith.mulf %146, %126 : vector<8x256xf32>
    %154 = vector.extract_strided_slice %132 {offsets = [0, 0], sizes = [8, 256], strides = [1, 1]} : vector<16x256xf32> to vector<8x256xf32>
    %155 = arith.mulf %152, %154 : vector<8x256xf32>
    %156 = arith.addf %153, %155 : vector<8x256xf32>
    %157 = arith.mulf %146, %130 : vector<8x256xf32>
    %158 = vector.extract_strided_slice %132 {offsets = [8, 0], sizes = [8, 256], strides = [1, 1]} : vector<16x256xf32> to vector<8x256xf32>
    %159 = arith.mulf %152, %158 : vector<8x256xf32>
    %160 = arith.addf %157, %159 : vector<8x256xf32>
    %c48_i32 = arith.constant 48 : i32
    %161 = tpu.dynamic_rotate %12 by %c48_i32 dim 1 : vector<16x256xf32>, i32 -> vector<16x256xf32>
    %c48_i32_63 = arith.constant 48 : i32
    %162 = tpu.dynamic_rotate %13 by %c48_i32_63 dim 1 : vector<16x256xf32>, i32 -> vector<16x256xf32>
    %c3_64 = arith.constant 3 : index
    %c0_65 = arith.constant 0 : index
    %163 = vector.load %arg6[%c3_64, %c0_65] : memref<49x256xf32, #tpu.memory_space<vmem>>, vector<1x256xf32>
    %164 = arith.mulf %11, %161 : vector<16x256xf32>
    %165 = vector.extract_strided_slice %164 {offsets = [0, 0], sizes = [8, 256], strides = [1, 1]} : vector<16x256xf32> to vector<8x256xf32>
    %166 = vector.extract_strided_slice %164 {offsets = [8, 0], sizes = [8, 256], strides = [1, 1]} : vector<16x256xf32> to vector<8x256xf32>
    %167 = arith.addf %165, %166 : vector<8x256xf32>
    %168 = vector.broadcast %163 : vector<1x256xf32> to vector<8x256xf32>
    %169 = arith.mulf %167, %168 : vector<8x256xf32>
    %c3_66 = arith.constant 3 : index
    %c0_67 = arith.constant 0 : index
    %c0_68 = arith.constant 0 : index
    %170 = vector.load %arg12[%c3_66, %c0_67, %c0_68] : memref<7x8x256xf32, #tpu.memory_space<vmem>>, vector<1x8x256xf32>
    %171 = vector.shape_cast %170 : vector<1x8x256xf32> to vector<8x256xf32>
    %172 = arith.addf %70, %171 : vector<8x256xf32>
    %173 = arith.addf %169, %172 : vector<8x256xf32>
    %174 = arith.maximumf %144, %173 : vector<8x256xf32>
    %175 = arith.subf %144, %174 : vector<8x256xf32>
    %176 = math.exp %175 : vector<8x256xf32>
    %177 = arith.subf %173, %174 : vector<8x256xf32>
    %178 = math.exp %177 : vector<8x256xf32>
    %179 = arith.mulf %176, %150 : vector<8x256xf32>
    %180 = arith.addf %179, %178 : vector<8x256xf32>
    %181 = vector.broadcast %163 : vector<1x256xf32> to vector<8x256xf32>
    %182 = arith.mulf %178, %181 : vector<8x256xf32>
    %183 = arith.mulf %176, %156 : vector<8x256xf32>
    %184 = vector.extract_strided_slice %162 {offsets = [0, 0], sizes = [8, 256], strides = [1, 1]} : vector<16x256xf32> to vector<8x256xf32>
    %185 = arith.mulf %182, %184 : vector<8x256xf32>
    %186 = arith.addf %183, %185 : vector<8x256xf32>
    %187 = arith.mulf %176, %160 : vector<8x256xf32>
    %188 = vector.extract_strided_slice %162 {offsets = [8, 0], sizes = [8, 256], strides = [1, 1]} : vector<16x256xf32> to vector<8x256xf32>
    %189 = arith.mulf %182, %188 : vector<8x256xf32>
    %190 = arith.addf %187, %189 : vector<8x256xf32>
    %c47_i32 = arith.constant 47 : i32
    %191 = tpu.dynamic_rotate %12 by %c47_i32 dim 1 : vector<16x256xf32>, i32 -> vector<16x256xf32>
    %c47_i32_69 = arith.constant 47 : i32
    %192 = tpu.dynamic_rotate %13 by %c47_i32_69 dim 1 : vector<16x256xf32>, i32 -> vector<16x256xf32>
    %c4_70 = arith.constant 4 : index
    %c0_71 = arith.constant 0 : index
    %193 = vector.load %arg6[%c4_70, %c0_71] : memref<49x256xf32, #tpu.memory_space<vmem>>, vector<1x256xf32>
    %194 = arith.mulf %11, %191 : vector<16x256xf32>
    %195 = vector.extract_strided_slice %194 {offsets = [0, 0], sizes = [8, 256], strides = [1, 1]} : vector<16x256xf32> to vector<8x256xf32>
    %196 = vector.extract_strided_slice %194 {offsets = [8, 0], sizes = [8, 256], strides = [1, 1]} : vector<16x256xf32> to vector<8x256xf32>
    %197 = arith.addf %195, %196 : vector<8x256xf32>
    %198 = vector.broadcast %193 : vector<1x256xf32> to vector<8x256xf32>
    %199 = arith.mulf %197, %198 : vector<8x256xf32>
    %c4_72 = arith.constant 4 : index
    %c0_73 = arith.constant 0 : index
    %c0_74 = arith.constant 0 : index
    %200 = vector.load %arg12[%c4_72, %c0_73, %c0_74] : memref<7x8x256xf32, #tpu.memory_space<vmem>>, vector<1x8x256xf32>
    %201 = vector.shape_cast %200 : vector<1x8x256xf32> to vector<8x256xf32>
    %202 = arith.addf %70, %201 : vector<8x256xf32>
    %203 = arith.addf %199, %202 : vector<8x256xf32>
    %204 = arith.maximumf %174, %203 : vector<8x256xf32>
    %205 = arith.subf %174, %204 : vector<8x256xf32>
    %206 = math.exp %205 : vector<8x256xf32>
    %207 = arith.subf %203, %204 : vector<8x256xf32>
    %208 = math.exp %207 : vector<8x256xf32>
    %209 = arith.mulf %206, %180 : vector<8x256xf32>
    %210 = arith.addf %209, %208 : vector<8x256xf32>
    %211 = vector.broadcast %193 : vector<1x256xf32> to vector<8x256xf32>
    %212 = arith.mulf %208, %211 : vector<8x256xf32>
    %213 = arith.mulf %206, %186 : vector<8x256xf32>
    %214 = vector.extract_strided_slice %192 {offsets = [0, 0], sizes = [8, 256], strides = [1, 1]} : vector<16x256xf32> to vector<8x256xf32>
    %215 = arith.mulf %212, %214 : vector<8x256xf32>
    %216 = arith.addf %213, %215 : vector<8x256xf32>
    %217 = arith.mulf %206, %190 : vector<8x256xf32>
    %218 = vector.extract_strided_slice %192 {offsets = [8, 0], sizes = [8, 256], strides = [1, 1]} : vector<16x256xf32> to vector<8x256xf32>
    %219 = arith.mulf %212, %218 : vector<8x256xf32>
    %220 = arith.addf %217, %219 : vector<8x256xf32>
    %c46_i32 = arith.constant 46 : i32
    %221 = tpu.dynamic_rotate %12 by %c46_i32 dim 1 : vector<16x256xf32>, i32 -> vector<16x256xf32>
    %c46_i32_75 = arith.constant 46 : i32
    %222 = tpu.dynamic_rotate %13 by %c46_i32_75 dim 1 : vector<16x256xf32>, i32 -> vector<16x256xf32>
    %c5_76 = arith.constant 5 : index
    %c0_77 = arith.constant 0 : index
    %223 = vector.load %arg6[%c5_76, %c0_77] : memref<49x256xf32, #tpu.memory_space<vmem>>, vector<1x256xf32>
    %224 = arith.mulf %11, %221 : vector<16x256xf32>
    %225 = vector.extract_strided_slice %224 {offsets = [0, 0], sizes = [8, 256], strides = [1, 1]} : vector<16x256xf32> to vector<8x256xf32>
    %226 = vector.extract_strided_slice %224 {offsets = [8, 0], sizes = [8, 256], strides = [1, 1]} : vector<16x256xf32> to vector<8x256xf32>
    %227 = arith.addf %225, %226 : vector<8x256xf32>
    %228 = vector.broadcast %223 : vector<1x256xf32> to vector<8x256xf32>
    %229 = arith.mulf %227, %228 : vector<8x256xf32>
    %c5_78 = arith.constant 5 : index
    %c0_79 = arith.constant 0 : index
    %c0_80 = arith.constant 0 : index
    %230 = vector.load %arg12[%c5_78, %c0_79, %c0_80] : memref<7x8x256xf32, #tpu.memory_space<vmem>>, vector<1x8x256xf32>
    %231 = vector.shape_cast %230 : vector<1x8x256xf32> to vector<8x256xf32>
    %232 = arith.addf %70, %231 : vector<8x256xf32>
    %233 = arith.addf %229, %232 : vector<8x256xf32>
    %234 = arith.maximumf %204, %233 : vector<8x256xf32>
    %235 = arith.subf %204, %234 : vector<8x256xf32>
    %236 = math.exp %235 : vector<8x256xf32>
    %237 = arith.subf %233, %234 : vector<8x256xf32>
    %238 = math.exp %237 : vector<8x256xf32>
    %239 = arith.mulf %236, %210 : vector<8x256xf32>
    %240 = arith.addf %239, %238 : vector<8x256xf32>
    %241 = vector.broadcast %223 : vector<1x256xf32> to vector<8x256xf32>
    %242 = arith.mulf %238, %241 : vector<8x256xf32>
    %243 = arith.mulf %236, %216 : vector<8x256xf32>
    %244 = vector.extract_strided_slice %222 {offsets = [0, 0], sizes = [8, 256], strides = [1, 1]} : vector<16x256xf32> to vector<8x256xf32>
    %245 = arith.mulf %242, %244 : vector<8x256xf32>
    %246 = arith.addf %243, %245 : vector<8x256xf32>
    %247 = arith.mulf %236, %220 : vector<8x256xf32>
    %248 = vector.extract_strided_slice %222 {offsets = [8, 0], sizes = [8, 256], strides = [1, 1]} : vector<16x256xf32> to vector<8x256xf32>
    %249 = arith.mulf %242, %248 : vector<8x256xf32>
    %250 = arith.addf %247, %249 : vector<8x256xf32>
    %c45_i32 = arith.constant 45 : i32
    %251 = tpu.dynamic_rotate %12 by %c45_i32 dim 1 : vector<16x256xf32>, i32 -> vector<16x256xf32>
    %c45_i32_81 = arith.constant 45 : i32
    %252 = tpu.dynamic_rotate %13 by %c45_i32_81 dim 1 : vector<16x256xf32>, i32 -> vector<16x256xf32>
    %c6_82 = arith.constant 6 : index
    %c0_83 = arith.constant 0 : index
    %253 = vector.load %arg6[%c6_82, %c0_83] : memref<49x256xf32, #tpu.memory_space<vmem>>, vector<1x256xf32>
    %254 = arith.mulf %11, %251 : vector<16x256xf32>
    %255 = vector.extract_strided_slice %254 {offsets = [0, 0], sizes = [8, 256], strides = [1, 1]} : vector<16x256xf32> to vector<8x256xf32>
    %256 = vector.extract_strided_slice %254 {offsets = [8, 0], sizes = [8, 256], strides = [1, 1]} : vector<16x256xf32> to vector<8x256xf32>
    %257 = arith.addf %255, %256 : vector<8x256xf32>
    %258 = vector.broadcast %253 : vector<1x256xf32> to vector<8x256xf32>
    %259 = arith.mulf %257, %258 : vector<8x256xf32>
    %c6_84 = arith.constant 6 : index
    %c0_85 = arith.constant 0 : index
    %c0_86 = arith.constant 0 : index
    %260 = vector.load %arg12[%c6_84, %c0_85, %c0_86] : memref<7x8x256xf32, #tpu.memory_space<vmem>>, vector<1x8x256xf32>
    %261 = vector.shape_cast %260 : vector<1x8x256xf32> to vector<8x256xf32>
    %262 = arith.addf %70, %261 : vector<8x256xf32>
    %263 = arith.addf %259, %262 : vector<8x256xf32>
    %264 = arith.maximumf %234, %263 : vector<8x256xf32>
    %265 = arith.subf %234, %264 : vector<8x256xf32>
    %266 = math.exp %265 : vector<8x256xf32>
    %267 = arith.subf %263, %264 : vector<8x256xf32>
    %268 = math.exp %267 : vector<8x256xf32>
    %269 = arith.mulf %266, %240 : vector<8x256xf32>
    %270 = arith.addf %269, %268 : vector<8x256xf32>
    %271 = vector.broadcast %253 : vector<1x256xf32> to vector<8x256xf32>
    %272 = arith.mulf %268, %271 : vector<8x256xf32>
    %273 = arith.mulf %266, %246 : vector<8x256xf32>
    %274 = vector.extract_strided_slice %252 {offsets = [0, 0], sizes = [8, 256], strides = [1, 1]} : vector<16x256xf32> to vector<8x256xf32>
    %275 = arith.mulf %272, %274 : vector<8x256xf32>
    %276 = arith.addf %273, %275 : vector<8x256xf32>
    %277 = arith.mulf %266, %250 : vector<8x256xf32>
    %278 = vector.extract_strided_slice %252 {offsets = [8, 0], sizes = [8, 256], strides = [1, 1]} : vector<16x256xf32> to vector<8x256xf32>
    %279 = arith.mulf %272, %278 : vector<8x256xf32>
    %280 = arith.addf %277, %279 : vector<8x256xf32>
    %c0_87 = arith.constant 0 : index
    %c1_88 = arith.constant 1 : index
    %281 = memref.load %arg5[%c0_87, %c1_88] : memref<2x7xf32, #tpu.memory_space<smem>>
    %282 = vector.extract_strided_slice %11 {offsets = [0, 0], sizes = [8, 256], strides = [1, 1]} : vector<16x256xf32> to vector<8x256xf32>
    %283 = vector.broadcast %281 : f32 to vector<8x256xf32>
    %284 = arith.mulf %283, %282 : vector<8x256xf32>
    %c35_i32 = arith.constant 35 : i32
    %285 = tpu.dynamic_rotate %12 by %c35_i32 dim 1 : vector<16x256xf32>, i32 -> vector<16x256xf32>
    %c35_i32_89 = arith.constant 35 : i32
    %286 = tpu.dynamic_rotate %13 by %c35_i32_89 dim 1 : vector<16x256xf32>, i32 -> vector<16x256xf32>
    %c7 = arith.constant 7 : index
    %c0_90 = arith.constant 0 : index
    %287 = vector.load %arg6[%c7, %c0_90] : memref<49x256xf32, #tpu.memory_space<vmem>>, vector<1x256xf32>
    %288 = arith.mulf %11, %285 : vector<16x256xf32>
    %289 = vector.extract_strided_slice %288 {offsets = [0, 0], sizes = [8, 256], strides = [1, 1]} : vector<16x256xf32> to vector<8x256xf32>
    %290 = vector.extract_strided_slice %288 {offsets = [8, 0], sizes = [8, 256], strides = [1, 1]} : vector<16x256xf32> to vector<8x256xf32>
    %291 = arith.addf %289, %290 : vector<8x256xf32>
    %292 = vector.broadcast %287 : vector<1x256xf32> to vector<8x256xf32>
    %293 = arith.mulf %291, %292 : vector<8x256xf32>
    %c0_91 = arith.constant 0 : index
    %c0_92 = arith.constant 0 : index
    %c0_93 = arith.constant 0 : index
    %294 = vector.load %arg12[%c0_91, %c0_92, %c0_93] : memref<7x8x256xf32, #tpu.memory_space<vmem>>, vector<1x8x256xf32>
    %295 = vector.shape_cast %294 : vector<1x8x256xf32> to vector<8x256xf32>
    %296 = arith.addf %284, %295 : vector<8x256xf32>
    %297 = arith.addf %293, %296 : vector<8x256xf32>
    %298 = arith.maximumf %264, %297 : vector<8x256xf32>
    %299 = arith.subf %264, %298 : vector<8x256xf32>
    %300 = math.exp %299 : vector<8x256xf32>
    %301 = arith.subf %297, %298 : vector<8x256xf32>
    %302 = math.exp %301 : vector<8x256xf32>
    %303 = arith.mulf %300, %270 : vector<8x256xf32>
    %304 = arith.addf %303, %302 : vector<8x256xf32>
    %305 = vector.broadcast %287 : vector<1x256xf32> to vector<8x256xf32>
    %306 = arith.mulf %302, %305 : vector<8x256xf32>
    %307 = arith.mulf %300, %276 : vector<8x256xf32>
    %308 = vector.extract_strided_slice %286 {offsets = [0, 0], sizes = [8, 256], strides = [1, 1]} : vector<16x256xf32> to vector<8x256xf32>
    %309 = arith.mulf %306, %308 : vector<8x256xf32>
    %310 = arith.addf %307, %309 : vector<8x256xf32>
    %311 = arith.mulf %300, %280 : vector<8x256xf32>
    %312 = vector.extract_strided_slice %286 {offsets = [8, 0], sizes = [8, 256], strides = [1, 1]} : vector<16x256xf32> to vector<8x256xf32>
    %313 = arith.mulf %306, %312 : vector<8x256xf32>
    %314 = arith.addf %311, %313 : vector<8x256xf32>
    %c34_i32 = arith.constant 34 : i32
    %315 = tpu.dynamic_rotate %12 by %c34_i32 dim 1 : vector<16x256xf32>, i32 -> vector<16x256xf32>
    %c34_i32_94 = arith.constant 34 : i32
    %316 = tpu.dynamic_rotate %13 by %c34_i32_94 dim 1 : vector<16x256xf32>, i32 -> vector<16x256xf32>
    %c8 = arith.constant 8 : index
    %c0_95 = arith.constant 0 : index
    %317 = vector.load %arg6[%c8, %c0_95] : memref<49x256xf32, #tpu.memory_space<vmem>>, vector<1x256xf32>
    %318 = arith.mulf %11, %315 : vector<16x256xf32>
    %319 = vector.extract_strided_slice %318 {offsets = [0, 0], sizes = [8, 256], strides = [1, 1]} : vector<16x256xf32> to vector<8x256xf32>
    %320 = vector.extract_strided_slice %318 {offsets = [8, 0], sizes = [8, 256], strides = [1, 1]} : vector<16x256xf32> to vector<8x256xf32>
    %321 = arith.addf %319, %320 : vector<8x256xf32>
    %322 = vector.broadcast %317 : vector<1x256xf32> to vector<8x256xf32>
    %323 = arith.mulf %321, %322 : vector<8x256xf32>
    %c1_96 = arith.constant 1 : index
    %c0_97 = arith.constant 0 : index
    %c0_98 = arith.constant 0 : index
    %324 = vector.load %arg12[%c1_96, %c0_97, %c0_98] : memref<7x8x256xf32, #tpu.memory_space<vmem>>, vector<1x8x256xf32>
    %325 = vector.shape_cast %324 : vector<1x8x256xf32> to vector<8x256xf32>
    %326 = arith.addf %284, %325 : vector<8x256xf32>
    %327 = arith.addf %323, %326 : vector<8x256xf32>
    %328 = arith.maximumf %298, %327 : vector<8x256xf32>
    %329 = arith.subf %298, %328 : vector<8x256xf32>
    %330 = math.exp %329 : vector<8x256xf32>
    %331 = arith.subf %327, %328 : vector<8x256xf32>
    %332 = math.exp %331 : vector<8x256xf32>
    %333 = arith.mulf %330, %304 : vector<8x256xf32>
    %334 = arith.addf %333, %332 : vector<8x256xf32>
    %335 = vector.broadcast %317 : vector<1x256xf32> to vector<8x256xf32>
    %336 = arith.mulf %332, %335 : vector<8x256xf32>
    %337 = arith.mulf %330, %310 : vector<8x256xf32>
    %338 = vector.extract_strided_slice %316 {offsets = [0, 0], sizes = [8, 256], strides = [1, 1]} : vector<16x256xf32> to vector<8x256xf32>
    %339 = arith.mulf %336, %338 : vector<8x256xf32>
    %340 = arith.addf %337, %339 : vector<8x256xf32>
    %341 = arith.mulf %330, %314 : vector<8x256xf32>
    %342 = vector.extract_strided_slice %316 {offsets = [8, 0], sizes = [8, 256], strides = [1, 1]} : vector<16x256xf32> to vector<8x256xf32>
    %343 = arith.mulf %336, %342 : vector<8x256xf32>
    %344 = arith.addf %341, %343 : vector<8x256xf32>
    %c33_i32 = arith.constant 33 : i32
    %345 = tpu.dynamic_rotate %12 by %c33_i32 dim 1 : vector<16x256xf32>, i32 -> vector<16x256xf32>
    %c33_i32_99 = arith.constant 33 : i32
    %346 = tpu.dynamic_rotate %13 by %c33_i32_99 dim 1 : vector<16x256xf32>, i32 -> vector<16x256xf32>
    %c9 = arith.constant 9 : index
    %c0_100 = arith.constant 0 : index
    %347 = vector.load %arg6[%c9, %c0_100] : memref<49x256xf32, #tpu.memory_space<vmem>>, vector<1x256xf32>
    %348 = arith.mulf %11, %345 : vector<16x256xf32>
    %349 = vector.extract_strided_slice %348 {offsets = [0, 0], sizes = [8, 256], strides = [1, 1]} : vector<16x256xf32> to vector<8x256xf32>
    %350 = vector.extract_strided_slice %348 {offsets = [8, 0], sizes = [8, 256], strides = [1, 1]} : vector<16x256xf32> to vector<8x256xf32>
    %351 = arith.addf %349, %350 : vector<8x256xf32>
    %352 = vector.broadcast %347 : vector<1x256xf32> to vector<8x256xf32>
    %353 = arith.mulf %351, %352 : vector<8x256xf32>
    %c2_101 = arith.constant 2 : index
    %c0_102 = arith.constant 0 : index
    %c0_103 = arith.constant 0 : index
    %354 = vector.load %arg12[%c2_101, %c0_102, %c0_103] : memref<7x8x256xf32, #tpu.memory_space<vmem>>, vector<1x8x256xf32>
    %355 = vector.shape_cast %354 : vector<1x8x256xf32> to vector<8x256xf32>
    %356 = arith.addf %284, %355 : vector<8x256xf32>
    %357 = arith.addf %353, %356 : vector<8x256xf32>
    %358 = arith.maximumf %328, %357 : vector<8x256xf32>
    %359 = arith.subf %328, %358 : vector<8x256xf32>
    %360 = math.exp %359 : vector<8x256xf32>
    %361 = arith.subf %357, %358 : vector<8x256xf32>
    %362 = math.exp %361 : vector<8x256xf32>
    %363 = arith.mulf %360, %334 : vector<8x256xf32>
    %364 = arith.addf %363, %362 : vector<8x256xf32>
    %365 = vector.broadcast %347 : vector<1x256xf32> to vector<8x256xf32>
    %366 = arith.mulf %362, %365 : vector<8x256xf32>
    %367 = arith.mulf %360, %340 : vector<8x256xf32>
    %368 = vector.extract_strided_slice %346 {offsets = [0, 0], sizes = [8, 256], strides = [1, 1]} : vector<16x256xf32> to vector<8x256xf32>
    %369 = arith.mulf %366, %368 : vector<8x256xf32>
    %370 = arith.addf %367, %369 : vector<8x256xf32>
    %371 = arith.mulf %360, %344 : vector<8x256xf32>
    %372 = vector.extract_strided_slice %346 {offsets = [8, 0], sizes = [8, 256], strides = [1, 1]} : vector<16x256xf32> to vector<8x256xf32>
    %373 = arith.mulf %366, %372 : vector<8x256xf32>
    %374 = arith.addf %371, %373 : vector<8x256xf32>
    %c32_i32 = arith.constant 32 : i32
    %375 = tpu.dynamic_rotate %12 by %c32_i32 dim 1 : vector<16x256xf32>, i32 -> vector<16x256xf32>
    %c32_i32_104 = arith.constant 32 : i32
    %376 = tpu.dynamic_rotate %13 by %c32_i32_104 dim 1 : vector<16x256xf32>, i32 -> vector<16x256xf32>
    %c10 = arith.constant 10 : index
    %c0_105 = arith.constant 0 : index
    %377 = vector.load %arg6[%c10, %c0_105] : memref<49x256xf32, #tpu.memory_space<vmem>>, vector<1x256xf32>
    %378 = arith.mulf %11, %375 : vector<16x256xf32>
    %379 = vector.extract_strided_slice %378 {offsets = [0, 0], sizes = [8, 256], strides = [1, 1]} : vector<16x256xf32> to vector<8x256xf32>
    %380 = vector.extract_strided_slice %378 {offsets = [8, 0], sizes = [8, 256], strides = [1, 1]} : vector<16x256xf32> to vector<8x256xf32>
    %381 = arith.addf %379, %380 : vector<8x256xf32>
    %382 = vector.broadcast %377 : vector<1x256xf32> to vector<8x256xf32>
    %383 = arith.mulf %381, %382 : vector<8x256xf32>
    %c3_106 = arith.constant 3 : index
    %c0_107 = arith.constant 0 : index
    %c0_108 = arith.constant 0 : index
    %384 = vector.load %arg12[%c3_106, %c0_107, %c0_108] : memref<7x8x256xf32, #tpu.memory_space<vmem>>, vector<1x8x256xf32>
    %385 = vector.shape_cast %384 : vector<1x8x256xf32> to vector<8x256xf32>
    %386 = arith.addf %284, %385 : vector<8x256xf32>
    %387 = arith.addf %383, %386 : vector<8x256xf32>
    %388 = arith.maximumf %358, %387 : vector<8x256xf32>
    %389 = arith.subf %358, %388 : vector<8x256xf32>
    %390 = math.exp %389 : vector<8x256xf32>
    %391 = arith.subf %387, %388 : vector<8x256xf32>
    %392 = math.exp %391 : vector<8x256xf32>
    %393 = arith.mulf %390, %364 : vector<8x256xf32>
    %394 = arith.addf %393, %392 : vector<8x256xf32>
    %395 = vector.broadcast %377 : vector<1x256xf32> to vector<8x256xf32>
    %396 = arith.mulf %392, %395 : vector<8x256xf32>
    %397 = arith.mulf %390, %370 : vector<8x256xf32>
    %398 = vector.extract_strided_slice %376 {offsets = [0, 0], sizes = [8, 256], strides = [1, 1]} : vector<16x256xf32> to vector<8x256xf32>
    %399 = arith.mulf %396, %398 : vector<8x256xf32>
    %400 = arith.addf %397, %399 : vector<8x256xf32>
    %401 = arith.mulf %390, %374 : vector<8x256xf32>
    %402 = vector.extract_strided_slice %376 {offsets = [8, 0], sizes = [8, 256], strides = [1, 1]} : vector<16x256xf32> to vector<8x256xf32>
    %403 = arith.mulf %396, %402 : vector<8x256xf32>
    %404 = arith.addf %401, %403 : vector<8x256xf32>
    %c31_i32 = arith.constant 31 : i32
    %405 = tpu.dynamic_rotate %12 by %c31_i32 dim 1 : vector<16x256xf32>, i32 -> vector<16x256xf32>
    %c31_i32_109 = arith.constant 31 : i32
    %406 = tpu.dynamic_rotate %13 by %c31_i32_109 dim 1 : vector<16x256xf32>, i32 -> vector<16x256xf32>
    %c11 = arith.constant 11 : index
    %c0_110 = arith.constant 0 : index
    %407 = vector.load %arg6[%c11, %c0_110] : memref<49x256xf32, #tpu.memory_space<vmem>>, vector<1x256xf32>
    %408 = arith.mulf %11, %405 : vector<16x256xf32>
    %409 = vector.extract_strided_slice %408 {offsets = [0, 0], sizes = [8, 256], strides = [1, 1]} : vector<16x256xf32> to vector<8x256xf32>
    %410 = vector.extract_strided_slice %408 {offsets = [8, 0], sizes = [8, 256], strides = [1, 1]} : vector<16x256xf32> to vector<8x256xf32>
    %411 = arith.addf %409, %410 : vector<8x256xf32>
    %412 = vector.broadcast %407 : vector<1x256xf32> to vector<8x256xf32>
    %413 = arith.mulf %411, %412 : vector<8x256xf32>
    %c4_111 = arith.constant 4 : index
    %c0_112 = arith.constant 0 : index
    %c0_113 = arith.constant 0 : index
    %414 = vector.load %arg12[%c4_111, %c0_112, %c0_113] : memref<7x8x256xf32, #tpu.memory_space<vmem>>, vector<1x8x256xf32>
    %415 = vector.shape_cast %414 : vector<1x8x256xf32> to vector<8x256xf32>
    %416 = arith.addf %284, %415 : vector<8x256xf32>
    %417 = arith.addf %413, %416 : vector<8x256xf32>
    %418 = arith.maximumf %388, %417 : vector<8x256xf32>
    %419 = arith.subf %388, %418 : vector<8x256xf32>
    %420 = math.exp %419 : vector<8x256xf32>
    %421 = arith.subf %417, %418 : vector<8x256xf32>
    %422 = math.exp %421 : vector<8x256xf32>
    %423 = arith.mulf %420, %394 : vector<8x256xf32>
    %424 = arith.addf %423, %422 : vector<8x256xf32>
    %425 = vector.broadcast %407 : vector<1x256xf32> to vector<8x256xf32>
    %426 = arith.mulf %422, %425 : vector<8x256xf32>
    %427 = arith.mulf %420, %400 : vector<8x256xf32>
    %428 = vector.extract_strided_slice %406 {offsets = [0, 0], sizes = [8, 256], strides = [1, 1]} : vector<16x256xf32> to vector<8x256xf32>
    %429 = arith.mulf %426, %428 : vector<8x256xf32>
    %430 = arith.addf %427, %429 : vector<8x256xf32>
    %431 = arith.mulf %420, %404 : vector<8x256xf32>
    %432 = vector.extract_strided_slice %406 {offsets = [8, 0], sizes = [8, 256], strides = [1, 1]} : vector<16x256xf32> to vector<8x256xf32>
    %433 = arith.mulf %426, %432 : vector<8x256xf32>
    %434 = arith.addf %431, %433 : vector<8x256xf32>
    %c30_i32 = arith.constant 30 : i32
    %435 = tpu.dynamic_rotate %12 by %c30_i32 dim 1 : vector<16x256xf32>, i32 -> vector<16x256xf32>
    %c30_i32_114 = arith.constant 30 : i32
    %436 = tpu.dynamic_rotate %13 by %c30_i32_114 dim 1 : vector<16x256xf32>, i32 -> vector<16x256xf32>
    %c12 = arith.constant 12 : index
    %c0_115 = arith.constant 0 : index
    %437 = vector.load %arg6[%c12, %c0_115] : memref<49x256xf32, #tpu.memory_space<vmem>>, vector<1x256xf32>
    %438 = arith.mulf %11, %435 : vector<16x256xf32>
    %439 = vector.extract_strided_slice %438 {offsets = [0, 0], sizes = [8, 256], strides = [1, 1]} : vector<16x256xf32> to vector<8x256xf32>
    %440 = vector.extract_strided_slice %438 {offsets = [8, 0], sizes = [8, 256], strides = [1, 1]} : vector<16x256xf32> to vector<8x256xf32>
    %441 = arith.addf %439, %440 : vector<8x256xf32>
    %442 = vector.broadcast %437 : vector<1x256xf32> to vector<8x256xf32>
    %443 = arith.mulf %441, %442 : vector<8x256xf32>
    %c5_116 = arith.constant 5 : index
    %c0_117 = arith.constant 0 : index
    %c0_118 = arith.constant 0 : index
    %444 = vector.load %arg12[%c5_116, %c0_117, %c0_118] : memref<7x8x256xf32, #tpu.memory_space<vmem>>, vector<1x8x256xf32>
    %445 = vector.shape_cast %444 : vector<1x8x256xf32> to vector<8x256xf32>
    %446 = arith.addf %284, %445 : vector<8x256xf32>
    %447 = arith.addf %443, %446 : vector<8x256xf32>
    %448 = arith.maximumf %418, %447 : vector<8x256xf32>
    %449 = arith.subf %418, %448 : vector<8x256xf32>
    %450 = math.exp %449 : vector<8x256xf32>
    %451 = arith.subf %447, %448 : vector<8x256xf32>
    %452 = math.exp %451 : vector<8x256xf32>
    %453 = arith.mulf %450, %424 : vector<8x256xf32>
    %454 = arith.addf %453, %452 : vector<8x256xf32>
    %455 = vector.broadcast %437 : vector<1x256xf32> to vector<8x256xf32>
    %456 = arith.mulf %452, %455 : vector<8x256xf32>
    %457 = arith.mulf %450, %430 : vector<8x256xf32>
    %458 = vector.extract_strided_slice %436 {offsets = [0, 0], sizes = [8, 256], strides = [1, 1]} : vector<16x256xf32> to vector<8x256xf32>
    %459 = arith.mulf %456, %458 : vector<8x256xf32>
    %460 = arith.addf %457, %459 : vector<8x256xf32>
    %461 = arith.mulf %450, %434 : vector<8x256xf32>
    %462 = vector.extract_strided_slice %436 {offsets = [8, 0], sizes = [8, 256], strides = [1, 1]} : vector<16x256xf32> to vector<8x256xf32>
    %463 = arith.mulf %456, %462 : vector<8x256xf32>
    %464 = arith.addf %461, %463 : vector<8x256xf32>
    %c29_i32 = arith.constant 29 : i32
    %465 = tpu.dynamic_rotate %12 by %c29_i32 dim 1 : vector<16x256xf32>, i32 -> vector<16x256xf32>
    %c29_i32_119 = arith.constant 29 : i32
    %466 = tpu.dynamic_rotate %13 by %c29_i32_119 dim 1 : vector<16x256xf32>, i32 -> vector<16x256xf32>
    %c13 = arith.constant 13 : index
    %c0_120 = arith.constant 0 : index
    %467 = vector.load %arg6[%c13, %c0_120] : memref<49x256xf32, #tpu.memory_space<vmem>>, vector<1x256xf32>
    %468 = arith.mulf %11, %465 : vector<16x256xf32>
    %469 = vector.extract_strided_slice %468 {offsets = [0, 0], sizes = [8, 256], strides = [1, 1]} : vector<16x256xf32> to vector<8x256xf32>
    %470 = vector.extract_strided_slice %468 {offsets = [8, 0], sizes = [8, 256], strides = [1, 1]} : vector<16x256xf32> to vector<8x256xf32>
    %471 = arith.addf %469, %470 : vector<8x256xf32>
    %472 = vector.broadcast %467 : vector<1x256xf32> to vector<8x256xf32>
    %473 = arith.mulf %471, %472 : vector<8x256xf32>
    %c6_121 = arith.constant 6 : index
    %c0_122 = arith.constant 0 : index
    %c0_123 = arith.constant 0 : index
    %474 = vector.load %arg12[%c6_121, %c0_122, %c0_123] : memref<7x8x256xf32, #tpu.memory_space<vmem>>, vector<1x8x256xf32>
    %475 = vector.shape_cast %474 : vector<1x8x256xf32> to vector<8x256xf32>
    %476 = arith.addf %284, %475 : vector<8x256xf32>
    %477 = arith.addf %473, %476 : vector<8x256xf32>
    %478 = arith.maximumf %448, %477 : vector<8x256xf32>
    %479 = arith.subf %448, %478 : vector<8x256xf32>
    %480 = math.exp %479 : vector<8x256xf32>
    %481 = arith.subf %477, %478 : vector<8x256xf32>
    %482 = math.exp %481 : vector<8x256xf32>
    %483 = arith.mulf %480, %454 : vector<8x256xf32>
    %484 = arith.addf %483, %482 : vector<8x256xf32>
    %485 = vector.broadcast %467 : vector<1x256xf32> to vector<8x256xf32>
    %486 = arith.mulf %482, %485 : vector<8x256xf32>
    %487 = arith.mulf %480, %460 : vector<8x256xf32>
    %488 = vector.extract_strided_slice %466 {offsets = [0, 0], sizes = [8, 256], strides = [1, 1]} : vector<16x256xf32> to vector<8x256xf32>
    %489 = arith.mulf %486, %488 : vector<8x256xf32>
    %490 = arith.addf %487, %489 : vector<8x256xf32>
    %491 = arith.mulf %480, %464 : vector<8x256xf32>
    %492 = vector.extract_strided_slice %466 {offsets = [8, 0], sizes = [8, 256], strides = [1, 1]} : vector<16x256xf32> to vector<8x256xf32>
    %493 = arith.mulf %486, %492 : vector<8x256xf32>
    %494 = arith.addf %491, %493 : vector<8x256xf32>
    %c0_124 = arith.constant 0 : index
    %c2_125 = arith.constant 2 : index
    %495 = memref.load %arg5[%c0_124, %c2_125] : memref<2x7xf32, #tpu.memory_space<smem>>
    %496 = vector.extract_strided_slice %11 {offsets = [0, 0], sizes = [8, 256], strides = [1, 1]} : vector<16x256xf32> to vector<8x256xf32>
    %497 = vector.broadcast %495 : f32 to vector<8x256xf32>
    %498 = arith.mulf %497, %496 : vector<8x256xf32>
    %c19_i32 = arith.constant 19 : i32
    %499 = tpu.dynamic_rotate %12 by %c19_i32 dim 1 : vector<16x256xf32>, i32 -> vector<16x256xf32>
    %c19_i32_126 = arith.constant 19 : i32
    %500 = tpu.dynamic_rotate %13 by %c19_i32_126 dim 1 : vector<16x256xf32>, i32 -> vector<16x256xf32>
    %c14 = arith.constant 14 : index
    %c0_127 = arith.constant 0 : index
    %501 = vector.load %arg6[%c14, %c0_127] : memref<49x256xf32, #tpu.memory_space<vmem>>, vector<1x256xf32>
    %502 = arith.mulf %11, %499 : vector<16x256xf32>
    %503 = vector.extract_strided_slice %502 {offsets = [0, 0], sizes = [8, 256], strides = [1, 1]} : vector<16x256xf32> to vector<8x256xf32>
    %504 = vector.extract_strided_slice %502 {offsets = [8, 0], sizes = [8, 256], strides = [1, 1]} : vector<16x256xf32> to vector<8x256xf32>
    %505 = arith.addf %503, %504 : vector<8x256xf32>
    %506 = vector.broadcast %501 : vector<1x256xf32> to vector<8x256xf32>
    %507 = arith.mulf %505, %506 : vector<8x256xf32>
    %c0_128 = arith.constant 0 : index
    %c0_129 = arith.constant 0 : index
    %c0_130 = arith.constant 0 : index
    %508 = vector.load %arg12[%c0_128, %c0_129, %c0_130] : memref<7x8x256xf32, #tpu.memory_space<vmem>>, vector<1x8x256xf32>
    %509 = vector.shape_cast %508 : vector<1x8x256xf32> to vector<8x256xf32>
    %510 = arith.addf %498, %509 : vector<8x256xf32>
    %511 = arith.addf %507, %510 : vector<8x256xf32>
    %512 = arith.maximumf %478, %511 : vector<8x256xf32>
    %513 = arith.subf %478, %512 : vector<8x256xf32>
    %514 = math.exp %513 : vector<8x256xf32>
    %515 = arith.subf %511, %512 : vector<8x256xf32>
    %516 = math.exp %515 : vector<8x256xf32>
    %517 = arith.mulf %514, %484 : vector<8x256xf32>
    %518 = arith.addf %517, %516 : vector<8x256xf32>
    %519 = vector.broadcast %501 : vector<1x256xf32> to vector<8x256xf32>
    %520 = arith.mulf %516, %519 : vector<8x256xf32>
    %521 = arith.mulf %514, %490 : vector<8x256xf32>
    %522 = vector.extract_strided_slice %500 {offsets = [0, 0], sizes = [8, 256], strides = [1, 1]} : vector<16x256xf32> to vector<8x256xf32>
    %523 = arith.mulf %520, %522 : vector<8x256xf32>
    %524 = arith.addf %521, %523 : vector<8x256xf32>
    %525 = arith.mulf %514, %494 : vector<8x256xf32>
    %526 = vector.extract_strided_slice %500 {offsets = [8, 0], sizes = [8, 256], strides = [1, 1]} : vector<16x256xf32> to vector<8x256xf32>
    %527 = arith.mulf %520, %526 : vector<8x256xf32>
    %528 = arith.addf %525, %527 : vector<8x256xf32>
    %c18_i32 = arith.constant 18 : i32
    %529 = tpu.dynamic_rotate %12 by %c18_i32 dim 1 : vector<16x256xf32>, i32 -> vector<16x256xf32>
    %c18_i32_131 = arith.constant 18 : i32
    %530 = tpu.dynamic_rotate %13 by %c18_i32_131 dim 1 : vector<16x256xf32>, i32 -> vector<16x256xf32>
    %c15 = arith.constant 15 : index
    %c0_132 = arith.constant 0 : index
    %531 = vector.load %arg6[%c15, %c0_132] : memref<49x256xf32, #tpu.memory_space<vmem>>, vector<1x256xf32>
    %532 = arith.mulf %11, %529 : vector<16x256xf32>
    %533 = vector.extract_strided_slice %532 {offsets = [0, 0], sizes = [8, 256], strides = [1, 1]} : vector<16x256xf32> to vector<8x256xf32>
    %534 = vector.extract_strided_slice %532 {offsets = [8, 0], sizes = [8, 256], strides = [1, 1]} : vector<16x256xf32> to vector<8x256xf32>
    %535 = arith.addf %533, %534 : vector<8x256xf32>
    %536 = vector.broadcast %531 : vector<1x256xf32> to vector<8x256xf32>
    %537 = arith.mulf %535, %536 : vector<8x256xf32>
    %c1_133 = arith.constant 1 : index
    %c0_134 = arith.constant 0 : index
    %c0_135 = arith.constant 0 : index
    %538 = vector.load %arg12[%c1_133, %c0_134, %c0_135] : memref<7x8x256xf32, #tpu.memory_space<vmem>>, vector<1x8x256xf32>
    %539 = vector.shape_cast %538 : vector<1x8x256xf32> to vector<8x256xf32>
    %540 = arith.addf %498, %539 : vector<8x256xf32>
    %541 = arith.addf %537, %540 : vector<8x256xf32>
    %542 = arith.maximumf %512, %541 : vector<8x256xf32>
    %543 = arith.subf %512, %542 : vector<8x256xf32>
    %544 = math.exp %543 : vector<8x256xf32>
    %545 = arith.subf %541, %542 : vector<8x256xf32>
    %546 = math.exp %545 : vector<8x256xf32>
    %547 = arith.mulf %544, %518 : vector<8x256xf32>
    %548 = arith.addf %547, %546 : vector<8x256xf32>
    %549 = vector.broadcast %531 : vector<1x256xf32> to vector<8x256xf32>
    %550 = arith.mulf %546, %549 : vector<8x256xf32>
    %551 = arith.mulf %544, %524 : vector<8x256xf32>
    %552 = vector.extract_strided_slice %530 {offsets = [0, 0], sizes = [8, 256], strides = [1, 1]} : vector<16x256xf32> to vector<8x256xf32>
    %553 = arith.mulf %550, %552 : vector<8x256xf32>
    %554 = arith.addf %551, %553 : vector<8x256xf32>
    %555 = arith.mulf %544, %528 : vector<8x256xf32>
    %556 = vector.extract_strided_slice %530 {offsets = [8, 0], sizes = [8, 256], strides = [1, 1]} : vector<16x256xf32> to vector<8x256xf32>
    %557 = arith.mulf %550, %556 : vector<8x256xf32>
    %558 = arith.addf %555, %557 : vector<8x256xf32>
    %c17_i32 = arith.constant 17 : i32
    %559 = tpu.dynamic_rotate %12 by %c17_i32 dim 1 : vector<16x256xf32>, i32 -> vector<16x256xf32>
    %c17_i32_136 = arith.constant 17 : i32
    %560 = tpu.dynamic_rotate %13 by %c17_i32_136 dim 1 : vector<16x256xf32>, i32 -> vector<16x256xf32>
    %c16 = arith.constant 16 : index
    %c0_137 = arith.constant 0 : index
    %561 = vector.load %arg6[%c16, %c0_137] : memref<49x256xf32, #tpu.memory_space<vmem>>, vector<1x256xf32>
    %562 = arith.mulf %11, %559 : vector<16x256xf32>
    %563 = vector.extract_strided_slice %562 {offsets = [0, 0], sizes = [8, 256], strides = [1, 1]} : vector<16x256xf32> to vector<8x256xf32>
    %564 = vector.extract_strided_slice %562 {offsets = [8, 0], sizes = [8, 256], strides = [1, 1]} : vector<16x256xf32> to vector<8x256xf32>
    %565 = arith.addf %563, %564 : vector<8x256xf32>
    %566 = vector.broadcast %561 : vector<1x256xf32> to vector<8x256xf32>
    %567 = arith.mulf %565, %566 : vector<8x256xf32>
    %c2_138 = arith.constant 2 : index
    %c0_139 = arith.constant 0 : index
    %c0_140 = arith.constant 0 : index
    %568 = vector.load %arg12[%c2_138, %c0_139, %c0_140] : memref<7x8x256xf32, #tpu.memory_space<vmem>>, vector<1x8x256xf32>
    %569 = vector.shape_cast %568 : vector<1x8x256xf32> to vector<8x256xf32>
    %570 = arith.addf %498, %569 : vector<8x256xf32>
    %571 = arith.addf %567, %570 : vector<8x256xf32>
    %572 = arith.maximumf %542, %571 : vector<8x256xf32>
    %573 = arith.subf %542, %572 : vector<8x256xf32>
    %574 = math.exp %573 : vector<8x256xf32>
    %575 = arith.subf %571, %572 : vector<8x256xf32>
    %576 = math.exp %575 : vector<8x256xf32>
    %577 = arith.mulf %574, %548 : vector<8x256xf32>
    %578 = arith.addf %577, %576 : vector<8x256xf32>
    %579 = vector.broadcast %561 : vector<1x256xf32> to vector<8x256xf32>
    %580 = arith.mulf %576, %579 : vector<8x256xf32>
    %581 = arith.mulf %574, %554 : vector<8x256xf32>
    %582 = vector.extract_strided_slice %560 {offsets = [0, 0], sizes = [8, 256], strides = [1, 1]} : vector<16x256xf32> to vector<8x256xf32>
    %583 = arith.mulf %580, %582 : vector<8x256xf32>
    %584 = arith.addf %581, %583 : vector<8x256xf32>
    %585 = arith.mulf %574, %558 : vector<8x256xf32>
    %586 = vector.extract_strided_slice %560 {offsets = [8, 0], sizes = [8, 256], strides = [1, 1]} : vector<16x256xf32> to vector<8x256xf32>
    %587 = arith.mulf %580, %586 : vector<8x256xf32>
    %588 = arith.addf %585, %587 : vector<8x256xf32>
    %c16_i32 = arith.constant 16 : i32
    %589 = tpu.dynamic_rotate %12 by %c16_i32 dim 1 : vector<16x256xf32>, i32 -> vector<16x256xf32>
    %c16_i32_141 = arith.constant 16 : i32
    %590 = tpu.dynamic_rotate %13 by %c16_i32_141 dim 1 : vector<16x256xf32>, i32 -> vector<16x256xf32>
    %c17 = arith.constant 17 : index
    %c0_142 = arith.constant 0 : index
    %591 = vector.load %arg6[%c17, %c0_142] : memref<49x256xf32, #tpu.memory_space<vmem>>, vector<1x256xf32>
    %592 = arith.mulf %11, %589 : vector<16x256xf32>
    %593 = vector.extract_strided_slice %592 {offsets = [0, 0], sizes = [8, 256], strides = [1, 1]} : vector<16x256xf32> to vector<8x256xf32>
    %594 = vector.extract_strided_slice %592 {offsets = [8, 0], sizes = [8, 256], strides = [1, 1]} : vector<16x256xf32> to vector<8x256xf32>
    %595 = arith.addf %593, %594 : vector<8x256xf32>
    %596 = vector.broadcast %591 : vector<1x256xf32> to vector<8x256xf32>
    %597 = arith.mulf %595, %596 : vector<8x256xf32>
    %c3_143 = arith.constant 3 : index
    %c0_144 = arith.constant 0 : index
    %c0_145 = arith.constant 0 : index
    %598 = vector.load %arg12[%c3_143, %c0_144, %c0_145] : memref<7x8x256xf32, #tpu.memory_space<vmem>>, vector<1x8x256xf32>
    %599 = vector.shape_cast %598 : vector<1x8x256xf32> to vector<8x256xf32>
    %600 = arith.addf %498, %599 : vector<8x256xf32>
    %601 = arith.addf %597, %600 : vector<8x256xf32>
    %602 = arith.maximumf %572, %601 : vector<8x256xf32>
    %603 = arith.subf %572, %602 : vector<8x256xf32>
    %604 = math.exp %603 : vector<8x256xf32>
    %605 = arith.subf %601, %602 : vector<8x256xf32>
    %606 = math.exp %605 : vector<8x256xf32>
    %607 = arith.mulf %604, %578 : vector<8x256xf32>
    %608 = arith.addf %607, %606 : vector<8x256xf32>
    %609 = vector.broadcast %591 : vector<1x256xf32> to vector<8x256xf32>
    %610 = arith.mulf %606, %609 : vector<8x256xf32>
    %611 = arith.mulf %604, %584 : vector<8x256xf32>
    %612 = vector.extract_strided_slice %590 {offsets = [0, 0], sizes = [8, 256], strides = [1, 1]} : vector<16x256xf32> to vector<8x256xf32>
    %613 = arith.mulf %610, %612 : vector<8x256xf32>
    %614 = arith.addf %611, %613 : vector<8x256xf32>
    %615 = arith.mulf %604, %588 : vector<8x256xf32>
    %616 = vector.extract_strided_slice %590 {offsets = [8, 0], sizes = [8, 256], strides = [1, 1]} : vector<16x256xf32> to vector<8x256xf32>
    %617 = arith.mulf %610, %616 : vector<8x256xf32>
    %618 = arith.addf %615, %617 : vector<8x256xf32>
    %c15_i32 = arith.constant 15 : i32
    %619 = tpu.dynamic_rotate %12 by %c15_i32 dim 1 : vector<16x256xf32>, i32 -> vector<16x256xf32>
    %c15_i32_146 = arith.constant 15 : i32
    %620 = tpu.dynamic_rotate %13 by %c15_i32_146 dim 1 : vector<16x256xf32>, i32 -> vector<16x256xf32>
    %c18 = arith.constant 18 : index
    %c0_147 = arith.constant 0 : index
    %621 = vector.load %arg6[%c18, %c0_147] : memref<49x256xf32, #tpu.memory_space<vmem>>, vector<1x256xf32>
    %622 = arith.mulf %11, %619 : vector<16x256xf32>
    %623 = vector.extract_strided_slice %622 {offsets = [0, 0], sizes = [8, 256], strides = [1, 1]} : vector<16x256xf32> to vector<8x256xf32>
    %624 = vector.extract_strided_slice %622 {offsets = [8, 0], sizes = [8, 256], strides = [1, 1]} : vector<16x256xf32> to vector<8x256xf32>
    %625 = arith.addf %623, %624 : vector<8x256xf32>
    %626 = vector.broadcast %621 : vector<1x256xf32> to vector<8x256xf32>
    %627 = arith.mulf %625, %626 : vector<8x256xf32>
    %c4_148 = arith.constant 4 : index
    %c0_149 = arith.constant 0 : index
    %c0_150 = arith.constant 0 : index
    %628 = vector.load %arg12[%c4_148, %c0_149, %c0_150] : memref<7x8x256xf32, #tpu.memory_space<vmem>>, vector<1x8x256xf32>
    %629 = vector.shape_cast %628 : vector<1x8x256xf32> to vector<8x256xf32>
    %630 = arith.addf %498, %629 : vector<8x256xf32>
    %631 = arith.addf %627, %630 : vector<8x256xf32>
    %632 = arith.maximumf %602, %631 : vector<8x256xf32>
    %633 = arith.subf %602, %632 : vector<8x256xf32>
    %634 = math.exp %633 : vector<8x256xf32>
    %635 = arith.subf %631, %632 : vector<8x256xf32>
    %636 = math.exp %635 : vector<8x256xf32>
    %637 = arith.mulf %634, %608 : vector<8x256xf32>
    %638 = arith.addf %637, %636 : vector<8x256xf32>
    %639 = vector.broadcast %621 : vector<1x256xf32> to vector<8x256xf32>
    %640 = arith.mulf %636, %639 : vector<8x256xf32>
    %641 = arith.mulf %634, %614 : vector<8x256xf32>
    %642 = vector.extract_strided_slice %620 {offsets = [0, 0], sizes = [8, 256], strides = [1, 1]} : vector<16x256xf32> to vector<8x256xf32>
    %643 = arith.mulf %640, %642 : vector<8x256xf32>
    %644 = arith.addf %641, %643 : vector<8x256xf32>
    %645 = arith.mulf %634, %618 : vector<8x256xf32>
    %646 = vector.extract_strided_slice %620 {offsets = [8, 0], sizes = [8, 256], strides = [1, 1]} : vector<16x256xf32> to vector<8x256xf32>
    %647 = arith.mulf %640, %646 : vector<8x256xf32>
    %648 = arith.addf %645, %647 : vector<8x256xf32>
    %c14_i32 = arith.constant 14 : i32
    %649 = tpu.dynamic_rotate %12 by %c14_i32 dim 1 : vector<16x256xf32>, i32 -> vector<16x256xf32>
    %c14_i32_151 = arith.constant 14 : i32
    %650 = tpu.dynamic_rotate %13 by %c14_i32_151 dim 1 : vector<16x256xf32>, i32 -> vector<16x256xf32>
    %c19 = arith.constant 19 : index
    %c0_152 = arith.constant 0 : index
    %651 = vector.load %arg6[%c19, %c0_152] : memref<49x256xf32, #tpu.memory_space<vmem>>, vector<1x256xf32>
    %652 = arith.mulf %11, %649 : vector<16x256xf32>
    %653 = vector.extract_strided_slice %652 {offsets = [0, 0], sizes = [8, 256], strides = [1, 1]} : vector<16x256xf32> to vector<8x256xf32>
    %654 = vector.extract_strided_slice %652 {offsets = [8, 0], sizes = [8, 256], strides = [1, 1]} : vector<16x256xf32> to vector<8x256xf32>
    %655 = arith.addf %653, %654 : vector<8x256xf32>
    %656 = vector.broadcast %651 : vector<1x256xf32> to vector<8x256xf32>
    %657 = arith.mulf %655, %656 : vector<8x256xf32>
    %c5_153 = arith.constant 5 : index
    %c0_154 = arith.constant 0 : index
    %c0_155 = arith.constant 0 : index
    %658 = vector.load %arg12[%c5_153, %c0_154, %c0_155] : memref<7x8x256xf32, #tpu.memory_space<vmem>>, vector<1x8x256xf32>
    %659 = vector.shape_cast %658 : vector<1x8x256xf32> to vector<8x256xf32>
    %660 = arith.addf %498, %659 : vector<8x256xf32>
    %661 = arith.addf %657, %660 : vector<8x256xf32>
    %662 = arith.maximumf %632, %661 : vector<8x256xf32>
    %663 = arith.subf %632, %662 : vector<8x256xf32>
    %664 = math.exp %663 : vector<8x256xf32>
    %665 = arith.subf %661, %662 : vector<8x256xf32>
    %666 = math.exp %665 : vector<8x256xf32>
    %667 = arith.mulf %664, %638 : vector<8x256xf32>
    %668 = arith.addf %667, %666 : vector<8x256xf32>
    %669 = vector.broadcast %651 : vector<1x256xf32> to vector<8x256xf32>
    %670 = arith.mulf %666, %669 : vector<8x256xf32>
    %671 = arith.mulf %664, %644 : vector<8x256xf32>
    %672 = vector.extract_strided_slice %650 {offsets = [0, 0], sizes = [8, 256], strides = [1, 1]} : vector<16x256xf32> to vector<8x256xf32>
    %673 = arith.mulf %670, %672 : vector<8x256xf32>
    %674 = arith.addf %671, %673 : vector<8x256xf32>
    %675 = arith.mulf %664, %648 : vector<8x256xf32>
    %676 = vector.extract_strided_slice %650 {offsets = [8, 0], sizes = [8, 256], strides = [1, 1]} : vector<16x256xf32> to vector<8x256xf32>
    %677 = arith.mulf %670, %676 : vector<8x256xf32>
    %678 = arith.addf %675, %677 : vector<8x256xf32>
    %c13_i32 = arith.constant 13 : i32
    %679 = tpu.dynamic_rotate %12 by %c13_i32 dim 1 : vector<16x256xf32>, i32 -> vector<16x256xf32>
    %c13_i32_156 = arith.constant 13 : i32
    %680 = tpu.dynamic_rotate %13 by %c13_i32_156 dim 1 : vector<16x256xf32>, i32 -> vector<16x256xf32>
    %c20 = arith.constant 20 : index
    %c0_157 = arith.constant 0 : index
    %681 = vector.load %arg6[%c20, %c0_157] : memref<49x256xf32, #tpu.memory_space<vmem>>, vector<1x256xf32>
    %682 = arith.mulf %11, %679 : vector<16x256xf32>
    %683 = vector.extract_strided_slice %682 {offsets = [0, 0], sizes = [8, 256], strides = [1, 1]} : vector<16x256xf32> to vector<8x256xf32>
    %684 = vector.extract_strided_slice %682 {offsets = [8, 0], sizes = [8, 256], strides = [1, 1]} : vector<16x256xf32> to vector<8x256xf32>
    %685 = arith.addf %683, %684 : vector<8x256xf32>
    %686 = vector.broadcast %681 : vector<1x256xf32> to vector<8x256xf32>
    %687 = arith.mulf %685, %686 : vector<8x256xf32>
    %c6_158 = arith.constant 6 : index
    %c0_159 = arith.constant 0 : index
    %c0_160 = arith.constant 0 : index
    %688 = vector.load %arg12[%c6_158, %c0_159, %c0_160] : memref<7x8x256xf32, #tpu.memory_space<vmem>>, vector<1x8x256xf32>
    %689 = vector.shape_cast %688 : vector<1x8x256xf32> to vector<8x256xf32>
    %690 = arith.addf %498, %689 : vector<8x256xf32>
    %691 = arith.addf %687, %690 : vector<8x256xf32>
    %692 = arith.maximumf %662, %691 : vector<8x256xf32>
    %693 = arith.subf %662, %692 : vector<8x256xf32>
    %694 = math.exp %693 : vector<8x256xf32>
    %695 = arith.subf %691, %692 : vector<8x256xf32>
    %696 = math.exp %695 : vector<8x256xf32>
    %697 = arith.mulf %694, %668 : vector<8x256xf32>
    %698 = arith.addf %697, %696 : vector<8x256xf32>
    %699 = vector.broadcast %681 : vector<1x256xf32> to vector<8x256xf32>
    %700 = arith.mulf %696, %699 : vector<8x256xf32>
    %701 = arith.mulf %694, %674 : vector<8x256xf32>
    %702 = vector.extract_strided_slice %680 {offsets = [0, 0], sizes = [8, 256], strides = [1, 1]} : vector<16x256xf32> to vector<8x256xf32>
    %703 = arith.mulf %700, %702 : vector<8x256xf32>
    %704 = arith.addf %701, %703 : vector<8x256xf32>
    %705 = arith.mulf %694, %678 : vector<8x256xf32>
    %706 = vector.extract_strided_slice %680 {offsets = [8, 0], sizes = [8, 256], strides = [1, 1]} : vector<16x256xf32> to vector<8x256xf32>
    %707 = arith.mulf %700, %706 : vector<8x256xf32>
    %708 = arith.addf %705, %707 : vector<8x256xf32>
    %c0_161 = arith.constant 0 : index
    %c3_162 = arith.constant 3 : index
    %709 = memref.load %arg5[%c0_161, %c3_162] : memref<2x7xf32, #tpu.memory_space<smem>>
    %710 = vector.extract_strided_slice %11 {offsets = [0, 0], sizes = [8, 256], strides = [1, 1]} : vector<16x256xf32> to vector<8x256xf32>
    %711 = vector.broadcast %709 : f32 to vector<8x256xf32>
    %712 = arith.mulf %711, %710 : vector<8x256xf32>
    %c3_i32 = arith.constant 3 : i32
    %713 = tpu.dynamic_rotate %12 by %c3_i32 dim 1 : vector<16x256xf32>, i32 -> vector<16x256xf32>
    %c3_i32_163 = arith.constant 3 : i32
    %714 = tpu.dynamic_rotate %13 by %c3_i32_163 dim 1 : vector<16x256xf32>, i32 -> vector<16x256xf32>
    %c21 = arith.constant 21 : index
    %c0_164 = arith.constant 0 : index
    %715 = vector.load %arg6[%c21, %c0_164] : memref<49x256xf32, #tpu.memory_space<vmem>>, vector<1x256xf32>
    %716 = arith.mulf %11, %713 : vector<16x256xf32>
    %717 = vector.extract_strided_slice %716 {offsets = [0, 0], sizes = [8, 256], strides = [1, 1]} : vector<16x256xf32> to vector<8x256xf32>
    %718 = vector.extract_strided_slice %716 {offsets = [8, 0], sizes = [8, 256], strides = [1, 1]} : vector<16x256xf32> to vector<8x256xf32>
    %719 = arith.addf %717, %718 : vector<8x256xf32>
    %720 = vector.broadcast %715 : vector<1x256xf32> to vector<8x256xf32>
    %721 = arith.mulf %719, %720 : vector<8x256xf32>
    %c0_165 = arith.constant 0 : index
    %c0_166 = arith.constant 0 : index
    %c0_167 = arith.constant 0 : index
    %722 = vector.load %arg12[%c0_165, %c0_166, %c0_167] : memref<7x8x256xf32, #tpu.memory_space<vmem>>, vector<1x8x256xf32>
    %723 = vector.shape_cast %722 : vector<1x8x256xf32> to vector<8x256xf32>
    %724 = arith.addf %712, %723 : vector<8x256xf32>
    %725 = arith.addf %721, %724 : vector<8x256xf32>
    %726 = arith.maximumf %692, %725 : vector<8x256xf32>
    %727 = arith.subf %692, %726 : vector<8x256xf32>
    %728 = math.exp %727 : vector<8x256xf32>
    %729 = arith.subf %725, %726 : vector<8x256xf32>
    %730 = math.exp %729 : vector<8x256xf32>
    %731 = arith.mulf %728, %698 : vector<8x256xf32>
    %732 = arith.addf %731, %730 : vector<8x256xf32>
    %733 = vector.broadcast %715 : vector<1x256xf32> to vector<8x256xf32>
    %734 = arith.mulf %730, %733 : vector<8x256xf32>
    %735 = arith.mulf %728, %704 : vector<8x256xf32>
    %736 = vector.extract_strided_slice %714 {offsets = [0, 0], sizes = [8, 256], strides = [1, 1]} : vector<16x256xf32> to vector<8x256xf32>
    %737 = arith.mulf %734, %736 : vector<8x256xf32>
    %738 = arith.addf %735, %737 : vector<8x256xf32>
    %739 = arith.mulf %728, %708 : vector<8x256xf32>
    %740 = vector.extract_strided_slice %714 {offsets = [8, 0], sizes = [8, 256], strides = [1, 1]} : vector<16x256xf32> to vector<8x256xf32>
    %741 = arith.mulf %734, %740 : vector<8x256xf32>
    %742 = arith.addf %739, %741 : vector<8x256xf32>
    %c2_i32 = arith.constant 2 : i32
    %743 = tpu.dynamic_rotate %12 by %c2_i32 dim 1 : vector<16x256xf32>, i32 -> vector<16x256xf32>
    %c2_i32_168 = arith.constant 2 : i32
    %744 = tpu.dynamic_rotate %13 by %c2_i32_168 dim 1 : vector<16x256xf32>, i32 -> vector<16x256xf32>
    %c22 = arith.constant 22 : index
    %c0_169 = arith.constant 0 : index
    %745 = vector.load %arg6[%c22, %c0_169] : memref<49x256xf32, #tpu.memory_space<vmem>>, vector<1x256xf32>
    %746 = arith.mulf %11, %743 : vector<16x256xf32>
    %747 = vector.extract_strided_slice %746 {offsets = [0, 0], sizes = [8, 256], strides = [1, 1]} : vector<16x256xf32> to vector<8x256xf32>
    %748 = vector.extract_strided_slice %746 {offsets = [8, 0], sizes = [8, 256], strides = [1, 1]} : vector<16x256xf32> to vector<8x256xf32>
    %749 = arith.addf %747, %748 : vector<8x256xf32>
    %750 = vector.broadcast %745 : vector<1x256xf32> to vector<8x256xf32>
    %751 = arith.mulf %749, %750 : vector<8x256xf32>
    %c1_170 = arith.constant 1 : index
    %c0_171 = arith.constant 0 : index
    %c0_172 = arith.constant 0 : index
    %752 = vector.load %arg12[%c1_170, %c0_171, %c0_172] : memref<7x8x256xf32, #tpu.memory_space<vmem>>, vector<1x8x256xf32>
    %753 = vector.shape_cast %752 : vector<1x8x256xf32> to vector<8x256xf32>
    %754 = arith.addf %712, %753 : vector<8x256xf32>
    %755 = arith.addf %751, %754 : vector<8x256xf32>
    %756 = arith.maximumf %726, %755 : vector<8x256xf32>
    %757 = arith.subf %726, %756 : vector<8x256xf32>
    %758 = math.exp %757 : vector<8x256xf32>
    %759 = arith.subf %755, %756 : vector<8x256xf32>
    %760 = math.exp %759 : vector<8x256xf32>
    %761 = arith.mulf %758, %732 : vector<8x256xf32>
    %762 = arith.addf %761, %760 : vector<8x256xf32>
    %763 = vector.broadcast %745 : vector<1x256xf32> to vector<8x256xf32>
    %764 = arith.mulf %760, %763 : vector<8x256xf32>
    %765 = arith.mulf %758, %738 : vector<8x256xf32>
    %766 = vector.extract_strided_slice %744 {offsets = [0, 0], sizes = [8, 256], strides = [1, 1]} : vector<16x256xf32> to vector<8x256xf32>
    %767 = arith.mulf %764, %766 : vector<8x256xf32>
    %768 = arith.addf %765, %767 : vector<8x256xf32>
    %769 = arith.mulf %758, %742 : vector<8x256xf32>
    %770 = vector.extract_strided_slice %744 {offsets = [8, 0], sizes = [8, 256], strides = [1, 1]} : vector<16x256xf32> to vector<8x256xf32>
    %771 = arith.mulf %764, %770 : vector<8x256xf32>
    %772 = arith.addf %769, %771 : vector<8x256xf32>
    %c1_i32 = arith.constant 1 : i32
    %773 = tpu.dynamic_rotate %12 by %c1_i32 dim 1 : vector<16x256xf32>, i32 -> vector<16x256xf32>
    %c1_i32_173 = arith.constant 1 : i32
    %774 = tpu.dynamic_rotate %13 by %c1_i32_173 dim 1 : vector<16x256xf32>, i32 -> vector<16x256xf32>
    %c23 = arith.constant 23 : index
    %c0_174 = arith.constant 0 : index
    %775 = vector.load %arg6[%c23, %c0_174] : memref<49x256xf32, #tpu.memory_space<vmem>>, vector<1x256xf32>
    %776 = arith.mulf %11, %773 : vector<16x256xf32>
    %777 = vector.extract_strided_slice %776 {offsets = [0, 0], sizes = [8, 256], strides = [1, 1]} : vector<16x256xf32> to vector<8x256xf32>
    %778 = vector.extract_strided_slice %776 {offsets = [8, 0], sizes = [8, 256], strides = [1, 1]} : vector<16x256xf32> to vector<8x256xf32>
    %779 = arith.addf %777, %778 : vector<8x256xf32>
    %780 = vector.broadcast %775 : vector<1x256xf32> to vector<8x256xf32>
    %781 = arith.mulf %779, %780 : vector<8x256xf32>
    %c2_175 = arith.constant 2 : index
    %c0_176 = arith.constant 0 : index
    %c0_177 = arith.constant 0 : index
    %782 = vector.load %arg12[%c2_175, %c0_176, %c0_177] : memref<7x8x256xf32, #tpu.memory_space<vmem>>, vector<1x8x256xf32>
    %783 = vector.shape_cast %782 : vector<1x8x256xf32> to vector<8x256xf32>
    %784 = arith.addf %712, %783 : vector<8x256xf32>
    %785 = arith.addf %781, %784 : vector<8x256xf32>
    %786 = arith.maximumf %756, %785 : vector<8x256xf32>
    %787 = arith.subf %756, %786 : vector<8x256xf32>
    %788 = math.exp %787 : vector<8x256xf32>
    %789 = arith.subf %785, %786 : vector<8x256xf32>
    %790 = math.exp %789 : vector<8x256xf32>
    %791 = arith.mulf %788, %762 : vector<8x256xf32>
    %792 = arith.addf %791, %790 : vector<8x256xf32>
    %793 = vector.broadcast %775 : vector<1x256xf32> to vector<8x256xf32>
    %794 = arith.mulf %790, %793 : vector<8x256xf32>
    %795 = arith.mulf %788, %768 : vector<8x256xf32>
    %796 = vector.extract_strided_slice %774 {offsets = [0, 0], sizes = [8, 256], strides = [1, 1]} : vector<16x256xf32> to vector<8x256xf32>
    %797 = arith.mulf %794, %796 : vector<8x256xf32>
    %798 = arith.addf %795, %797 : vector<8x256xf32>
    %799 = arith.mulf %788, %772 : vector<8x256xf32>
    %800 = vector.extract_strided_slice %774 {offsets = [8, 0], sizes = [8, 256], strides = [1, 1]} : vector<16x256xf32> to vector<8x256xf32>
    %801 = arith.mulf %794, %800 : vector<8x256xf32>
    %802 = arith.addf %799, %801 : vector<8x256xf32>
    %c24 = arith.constant 24 : index
    %c0_178 = arith.constant 0 : index
    %803 = vector.load %arg6[%c24, %c0_178] : memref<49x256xf32, #tpu.memory_space<vmem>>, vector<1x256xf32>
    %804 = arith.mulf %11, %12 : vector<16x256xf32>
    %805 = vector.extract_strided_slice %804 {offsets = [0, 0], sizes = [8, 256], strides = [1, 1]} : vector<16x256xf32> to vector<8x256xf32>
    %806 = vector.extract_strided_slice %804 {offsets = [8, 0], sizes = [8, 256], strides = [1, 1]} : vector<16x256xf32> to vector<8x256xf32>
    %807 = arith.addf %805, %806 : vector<8x256xf32>
    %808 = vector.broadcast %803 : vector<1x256xf32> to vector<8x256xf32>
    %809 = arith.mulf %807, %808 : vector<8x256xf32>
    %c3_179 = arith.constant 3 : index
    %c0_180 = arith.constant 0 : index
    %c0_181 = arith.constant 0 : index
    %810 = vector.load %arg12[%c3_179, %c0_180, %c0_181] : memref<7x8x256xf32, #tpu.memory_space<vmem>>, vector<1x8x256xf32>
    %811 = vector.shape_cast %810 : vector<1x8x256xf32> to vector<8x256xf32>
    %812 = arith.addf %712, %811 : vector<8x256xf32>
    %813 = arith.addf %809, %812 : vector<8x256xf32>
    %814 = arith.maximumf %786, %813 : vector<8x256xf32>
    %815 = arith.subf %786, %814 : vector<8x256xf32>
    %816 = math.exp %815 : vector<8x256xf32>
    %817 = arith.subf %813, %814 : vector<8x256xf32>
    %818 = math.exp %817 : vector<8x256xf32>
    %819 = arith.mulf %816, %792 : vector<8x256xf32>
    %820 = arith.addf %819, %818 : vector<8x256xf32>
    %821 = vector.broadcast %803 : vector<1x256xf32> to vector<8x256xf32>
    %822 = arith.mulf %818, %821 : vector<8x256xf32>
    %823 = arith.mulf %816, %798 : vector<8x256xf32>
    %824 = vector.extract_strided_slice %13 {offsets = [0, 0], sizes = [8, 256], strides = [1, 1]} : vector<16x256xf32> to vector<8x256xf32>
    %825 = arith.mulf %822, %824 : vector<8x256xf32>
    %826 = arith.addf %823, %825 : vector<8x256xf32>
    %827 = arith.mulf %816, %802 : vector<8x256xf32>
    %828 = vector.extract_strided_slice %13 {offsets = [8, 0], sizes = [8, 256], strides = [1, 1]} : vector<16x256xf32> to vector<8x256xf32>
    %829 = arith.mulf %822, %828 : vector<8x256xf32>
    %830 = arith.addf %827, %829 : vector<8x256xf32>
    %c255_i32 = arith.constant 255 : i32
    %831 = tpu.dynamic_rotate %12 by %c255_i32 dim 1 : vector<16x256xf32>, i32 -> vector<16x256xf32>
    %c255_i32_182 = arith.constant 255 : i32
    %832 = tpu.dynamic_rotate %13 by %c255_i32_182 dim 1 : vector<16x256xf32>, i32 -> vector<16x256xf32>
    %c25 = arith.constant 25 : index
    %c0_183 = arith.constant 0 : index
    %833 = vector.load %arg6[%c25, %c0_183] : memref<49x256xf32, #tpu.memory_space<vmem>>, vector<1x256xf32>
    %834 = arith.mulf %11, %831 : vector<16x256xf32>
    %835 = vector.extract_strided_slice %834 {offsets = [0, 0], sizes = [8, 256], strides = [1, 1]} : vector<16x256xf32> to vector<8x256xf32>
    %836 = vector.extract_strided_slice %834 {offsets = [8, 0], sizes = [8, 256], strides = [1, 1]} : vector<16x256xf32> to vector<8x256xf32>
    %837 = arith.addf %835, %836 : vector<8x256xf32>
    %838 = vector.broadcast %833 : vector<1x256xf32> to vector<8x256xf32>
    %839 = arith.mulf %837, %838 : vector<8x256xf32>
    %c4_184 = arith.constant 4 : index
    %c0_185 = arith.constant 0 : index
    %c0_186 = arith.constant 0 : index
    %840 = vector.load %arg12[%c4_184, %c0_185, %c0_186] : memref<7x8x256xf32, #tpu.memory_space<vmem>>, vector<1x8x256xf32>
    %841 = vector.shape_cast %840 : vector<1x8x256xf32> to vector<8x256xf32>
    %842 = arith.addf %712, %841 : vector<8x256xf32>
    %843 = arith.addf %839, %842 : vector<8x256xf32>
    %844 = arith.maximumf %814, %843 : vector<8x256xf32>
    %845 = arith.subf %814, %844 : vector<8x256xf32>
    %846 = math.exp %845 : vector<8x256xf32>
    %847 = arith.subf %843, %844 : vector<8x256xf32>
    %848 = math.exp %847 : vector<8x256xf32>
    %849 = arith.mulf %846, %820 : vector<8x256xf32>
    %850 = arith.addf %849, %848 : vector<8x256xf32>
    %851 = vector.broadcast %833 : vector<1x256xf32> to vector<8x256xf32>
    %852 = arith.mulf %848, %851 : vector<8x256xf32>
    %853 = arith.mulf %846, %826 : vector<8x256xf32>
    %854 = vector.extract_strided_slice %832 {offsets = [0, 0], sizes = [8, 256], strides = [1, 1]} : vector<16x256xf32> to vector<8x256xf32>
    %855 = arith.mulf %852, %854 : vector<8x256xf32>
    %856 = arith.addf %853, %855 : vector<8x256xf32>
    %857 = arith.mulf %846, %830 : vector<8x256xf32>
    %858 = vector.extract_strided_slice %832 {offsets = [8, 0], sizes = [8, 256], strides = [1, 1]} : vector<16x256xf32> to vector<8x256xf32>
    %859 = arith.mulf %852, %858 : vector<8x256xf32>
    %860 = arith.addf %857, %859 : vector<8x256xf32>
    %c254_i32 = arith.constant 254 : i32
    %861 = tpu.dynamic_rotate %12 by %c254_i32 dim 1 : vector<16x256xf32>, i32 -> vector<16x256xf32>
    %c254_i32_187 = arith.constant 254 : i32
    %862 = tpu.dynamic_rotate %13 by %c254_i32_187 dim 1 : vector<16x256xf32>, i32 -> vector<16x256xf32>
    %c26 = arith.constant 26 : index
    %c0_188 = arith.constant 0 : index
    %863 = vector.load %arg6[%c26, %c0_188] : memref<49x256xf32, #tpu.memory_space<vmem>>, vector<1x256xf32>
    %864 = arith.mulf %11, %861 : vector<16x256xf32>
    %865 = vector.extract_strided_slice %864 {offsets = [0, 0], sizes = [8, 256], strides = [1, 1]} : vector<16x256xf32> to vector<8x256xf32>
    %866 = vector.extract_strided_slice %864 {offsets = [8, 0], sizes = [8, 256], strides = [1, 1]} : vector<16x256xf32> to vector<8x256xf32>
    %867 = arith.addf %865, %866 : vector<8x256xf32>
    %868 = vector.broadcast %863 : vector<1x256xf32> to vector<8x256xf32>
    %869 = arith.mulf %867, %868 : vector<8x256xf32>
    %c5_189 = arith.constant 5 : index
    %c0_190 = arith.constant 0 : index
    %c0_191 = arith.constant 0 : index
    %870 = vector.load %arg12[%c5_189, %c0_190, %c0_191] : memref<7x8x256xf32, #tpu.memory_space<vmem>>, vector<1x8x256xf32>
    %871 = vector.shape_cast %870 : vector<1x8x256xf32> to vector<8x256xf32>
    %872 = arith.addf %712, %871 : vector<8x256xf32>
    %873 = arith.addf %869, %872 : vector<8x256xf32>
    %874 = arith.maximumf %844, %873 : vector<8x256xf32>
    %875 = arith.subf %844, %874 : vector<8x256xf32>
    %876 = math.exp %875 : vector<8x256xf32>
    %877 = arith.subf %873, %874 : vector<8x256xf32>
    %878 = math.exp %877 : vector<8x256xf32>
    %879 = arith.mulf %876, %850 : vector<8x256xf32>
    %880 = arith.addf %879, %878 : vector<8x256xf32>
    %881 = vector.broadcast %863 : vector<1x256xf32> to vector<8x256xf32>
    %882 = arith.mulf %878, %881 : vector<8x256xf32>
    %883 = arith.mulf %876, %856 : vector<8x256xf32>
    %884 = vector.extract_strided_slice %862 {offsets = [0, 0], sizes = [8, 256], strides = [1, 1]} : vector<16x256xf32> to vector<8x256xf32>
    %885 = arith.mulf %882, %884 : vector<8x256xf32>
    %886 = arith.addf %883, %885 : vector<8x256xf32>
    %887 = arith.mulf %876, %860 : vector<8x256xf32>
    %888 = vector.extract_strided_slice %862 {offsets = [8, 0], sizes = [8, 256], strides = [1, 1]} : vector<16x256xf32> to vector<8x256xf32>
    %889 = arith.mulf %882, %888 : vector<8x256xf32>
    %890 = arith.addf %887, %889 : vector<8x256xf32>
    %c253_i32 = arith.constant 253 : i32
    %891 = tpu.dynamic_rotate %12 by %c253_i32 dim 1 : vector<16x256xf32>, i32 -> vector<16x256xf32>
    %c253_i32_192 = arith.constant 253 : i32
    %892 = tpu.dynamic_rotate %13 by %c253_i32_192 dim 1 : vector<16x256xf32>, i32 -> vector<16x256xf32>
    %c27 = arith.constant 27 : index
    %c0_193 = arith.constant 0 : index
    %893 = vector.load %arg6[%c27, %c0_193] : memref<49x256xf32, #tpu.memory_space<vmem>>, vector<1x256xf32>
    %894 = arith.mulf %11, %891 : vector<16x256xf32>
    %895 = vector.extract_strided_slice %894 {offsets = [0, 0], sizes = [8, 256], strides = [1, 1]} : vector<16x256xf32> to vector<8x256xf32>
    %896 = vector.extract_strided_slice %894 {offsets = [8, 0], sizes = [8, 256], strides = [1, 1]} : vector<16x256xf32> to vector<8x256xf32>
    %897 = arith.addf %895, %896 : vector<8x256xf32>
    %898 = vector.broadcast %893 : vector<1x256xf32> to vector<8x256xf32>
    %899 = arith.mulf %897, %898 : vector<8x256xf32>
    %c6_194 = arith.constant 6 : index
    %c0_195 = arith.constant 0 : index
    %c0_196 = arith.constant 0 : index
    %900 = vector.load %arg12[%c6_194, %c0_195, %c0_196] : memref<7x8x256xf32, #tpu.memory_space<vmem>>, vector<1x8x256xf32>
    %901 = vector.shape_cast %900 : vector<1x8x256xf32> to vector<8x256xf32>
    %902 = arith.addf %712, %901 : vector<8x256xf32>
    %903 = arith.addf %899, %902 : vector<8x256xf32>
    %904 = arith.maximumf %874, %903 : vector<8x256xf32>
    %905 = arith.subf %874, %904 : vector<8x256xf32>
    %906 = math.exp %905 : vector<8x256xf32>
    %907 = arith.subf %903, %904 : vector<8x256xf32>
    %908 = math.exp %907 : vector<8x256xf32>
    %909 = arith.mulf %906, %880 : vector<8x256xf32>
    %910 = arith.addf %909, %908 : vector<8x256xf32>
    %911 = vector.broadcast %893 : vector<1x256xf32> to vector<8x256xf32>
    %912 = arith.mulf %908, %911 : vector<8x256xf32>
    %913 = arith.mulf %906, %886 : vector<8x256xf32>
    %914 = vector.extract_strided_slice %892 {offsets = [0, 0], sizes = [8, 256], strides = [1, 1]} : vector<16x256xf32> to vector<8x256xf32>
    %915 = arith.mulf %912, %914 : vector<8x256xf32>
    %916 = arith.addf %913, %915 : vector<8x256xf32>
    %917 = arith.mulf %906, %890 : vector<8x256xf32>
    %918 = vector.extract_strided_slice %892 {offsets = [8, 0], sizes = [8, 256], strides = [1, 1]} : vector<16x256xf32> to vector<8x256xf32>
    %919 = arith.mulf %912, %918 : vector<8x256xf32>
    %920 = arith.addf %917, %919 : vector<8x256xf32>
    %c0_197 = arith.constant 0 : index
    %c4_198 = arith.constant 4 : index
    %921 = memref.load %arg5[%c0_197, %c4_198] : memref<2x7xf32, #tpu.memory_space<smem>>
    %922 = vector.extract_strided_slice %11 {offsets = [0, 0], sizes = [8, 256], strides = [1, 1]} : vector<16x256xf32> to vector<8x256xf32>
    %923 = vector.broadcast %921 : f32 to vector<8x256xf32>
    %924 = arith.mulf %923, %922 : vector<8x256xf32>
    %c243_i32 = arith.constant 243 : i32
    %925 = tpu.dynamic_rotate %12 by %c243_i32 dim 1 : vector<16x256xf32>, i32 -> vector<16x256xf32>
    %c243_i32_199 = arith.constant 243 : i32
    %926 = tpu.dynamic_rotate %13 by %c243_i32_199 dim 1 : vector<16x256xf32>, i32 -> vector<16x256xf32>
    %c28 = arith.constant 28 : index
    %c0_200 = arith.constant 0 : index
    %927 = vector.load %arg6[%c28, %c0_200] : memref<49x256xf32, #tpu.memory_space<vmem>>, vector<1x256xf32>
    %928 = arith.mulf %11, %925 : vector<16x256xf32>
    %929 = vector.extract_strided_slice %928 {offsets = [0, 0], sizes = [8, 256], strides = [1, 1]} : vector<16x256xf32> to vector<8x256xf32>
    %930 = vector.extract_strided_slice %928 {offsets = [8, 0], sizes = [8, 256], strides = [1, 1]} : vector<16x256xf32> to vector<8x256xf32>
    %931 = arith.addf %929, %930 : vector<8x256xf32>
    %932 = vector.broadcast %927 : vector<1x256xf32> to vector<8x256xf32>
    %933 = arith.mulf %931, %932 : vector<8x256xf32>
    %c0_201 = arith.constant 0 : index
    %c0_202 = arith.constant 0 : index
    %c0_203 = arith.constant 0 : index
    %934 = vector.load %arg12[%c0_201, %c0_202, %c0_203] : memref<7x8x256xf32, #tpu.memory_space<vmem>>, vector<1x8x256xf32>
    %935 = vector.shape_cast %934 : vector<1x8x256xf32> to vector<8x256xf32>
    %936 = arith.addf %924, %935 : vector<8x256xf32>
    %937 = arith.addf %933, %936 : vector<8x256xf32>
    %938 = arith.maximumf %904, %937 : vector<8x256xf32>
    %939 = arith.subf %904, %938 : vector<8x256xf32>
    %940 = math.exp %939 : vector<8x256xf32>
    %941 = arith.subf %937, %938 : vector<8x256xf32>
    %942 = math.exp %941 : vector<8x256xf32>
    %943 = arith.mulf %940, %910 : vector<8x256xf32>
    %944 = arith.addf %943, %942 : vector<8x256xf32>
    %945 = vector.broadcast %927 : vector<1x256xf32> to vector<8x256xf32>
    %946 = arith.mulf %942, %945 : vector<8x256xf32>
    %947 = arith.mulf %940, %916 : vector<8x256xf32>
    %948 = vector.extract_strided_slice %926 {offsets = [0, 0], sizes = [8, 256], strides = [1, 1]} : vector<16x256xf32> to vector<8x256xf32>
    %949 = arith.mulf %946, %948 : vector<8x256xf32>
    %950 = arith.addf %947, %949 : vector<8x256xf32>
    %951 = arith.mulf %940, %920 : vector<8x256xf32>
    %952 = vector.extract_strided_slice %926 {offsets = [8, 0], sizes = [8, 256], strides = [1, 1]} : vector<16x256xf32> to vector<8x256xf32>
    %953 = arith.mulf %946, %952 : vector<8x256xf32>
    %954 = arith.addf %951, %953 : vector<8x256xf32>
    %c242_i32 = arith.constant 242 : i32
    %955 = tpu.dynamic_rotate %12 by %c242_i32 dim 1 : vector<16x256xf32>, i32 -> vector<16x256xf32>
    %c242_i32_204 = arith.constant 242 : i32
    %956 = tpu.dynamic_rotate %13 by %c242_i32_204 dim 1 : vector<16x256xf32>, i32 -> vector<16x256xf32>
    %c29 = arith.constant 29 : index
    %c0_205 = arith.constant 0 : index
    %957 = vector.load %arg6[%c29, %c0_205] : memref<49x256xf32, #tpu.memory_space<vmem>>, vector<1x256xf32>
    %958 = arith.mulf %11, %955 : vector<16x256xf32>
    %959 = vector.extract_strided_slice %958 {offsets = [0, 0], sizes = [8, 256], strides = [1, 1]} : vector<16x256xf32> to vector<8x256xf32>
    %960 = vector.extract_strided_slice %958 {offsets = [8, 0], sizes = [8, 256], strides = [1, 1]} : vector<16x256xf32> to vector<8x256xf32>
    %961 = arith.addf %959, %960 : vector<8x256xf32>
    %962 = vector.broadcast %957 : vector<1x256xf32> to vector<8x256xf32>
    %963 = arith.mulf %961, %962 : vector<8x256xf32>
    %c1_206 = arith.constant 1 : index
    %c0_207 = arith.constant 0 : index
    %c0_208 = arith.constant 0 : index
    %964 = vector.load %arg12[%c1_206, %c0_207, %c0_208] : memref<7x8x256xf32, #tpu.memory_space<vmem>>, vector<1x8x256xf32>
    %965 = vector.shape_cast %964 : vector<1x8x256xf32> to vector<8x256xf32>
    %966 = arith.addf %924, %965 : vector<8x256xf32>
    %967 = arith.addf %963, %966 : vector<8x256xf32>
    %968 = arith.maximumf %938, %967 : vector<8x256xf32>
    %969 = arith.subf %938, %968 : vector<8x256xf32>
    %970 = math.exp %969 : vector<8x256xf32>
    %971 = arith.subf %967, %968 : vector<8x256xf32>
    %972 = math.exp %971 : vector<8x256xf32>
    %973 = arith.mulf %970, %944 : vector<8x256xf32>
    %974 = arith.addf %973, %972 : vector<8x256xf32>
    %975 = vector.broadcast %957 : vector<1x256xf32> to vector<8x256xf32>
    %976 = arith.mulf %972, %975 : vector<8x256xf32>
    %977 = arith.mulf %970, %950 : vector<8x256xf32>
    %978 = vector.extract_strided_slice %956 {offsets = [0, 0], sizes = [8, 256], strides = [1, 1]} : vector<16x256xf32> to vector<8x256xf32>
    %979 = arith.mulf %976, %978 : vector<8x256xf32>
    %980 = arith.addf %977, %979 : vector<8x256xf32>
    %981 = arith.mulf %970, %954 : vector<8x256xf32>
    %982 = vector.extract_strided_slice %956 {offsets = [8, 0], sizes = [8, 256], strides = [1, 1]} : vector<16x256xf32> to vector<8x256xf32>
    %983 = arith.mulf %976, %982 : vector<8x256xf32>
    %984 = arith.addf %981, %983 : vector<8x256xf32>
    %c241_i32 = arith.constant 241 : i32
    %985 = tpu.dynamic_rotate %12 by %c241_i32 dim 1 : vector<16x256xf32>, i32 -> vector<16x256xf32>
    %c241_i32_209 = arith.constant 241 : i32
    %986 = tpu.dynamic_rotate %13 by %c241_i32_209 dim 1 : vector<16x256xf32>, i32 -> vector<16x256xf32>
    %c30 = arith.constant 30 : index
    %c0_210 = arith.constant 0 : index
    %987 = vector.load %arg6[%c30, %c0_210] : memref<49x256xf32, #tpu.memory_space<vmem>>, vector<1x256xf32>
    %988 = arith.mulf %11, %985 : vector<16x256xf32>
    %989 = vector.extract_strided_slice %988 {offsets = [0, 0], sizes = [8, 256], strides = [1, 1]} : vector<16x256xf32> to vector<8x256xf32>
    %990 = vector.extract_strided_slice %988 {offsets = [8, 0], sizes = [8, 256], strides = [1, 1]} : vector<16x256xf32> to vector<8x256xf32>
    %991 = arith.addf %989, %990 : vector<8x256xf32>
    %992 = vector.broadcast %987 : vector<1x256xf32> to vector<8x256xf32>
    %993 = arith.mulf %991, %992 : vector<8x256xf32>
    %c2_211 = arith.constant 2 : index
    %c0_212 = arith.constant 0 : index
    %c0_213 = arith.constant 0 : index
    %994 = vector.load %arg12[%c2_211, %c0_212, %c0_213] : memref<7x8x256xf32, #tpu.memory_space<vmem>>, vector<1x8x256xf32>
    %995 = vector.shape_cast %994 : vector<1x8x256xf32> to vector<8x256xf32>
    %996 = arith.addf %924, %995 : vector<8x256xf32>
    %997 = arith.addf %993, %996 : vector<8x256xf32>
    %998 = arith.maximumf %968, %997 : vector<8x256xf32>
    %999 = arith.subf %968, %998 : vector<8x256xf32>
    %1000 = math.exp %999 : vector<8x256xf32>
    %1001 = arith.subf %997, %998 : vector<8x256xf32>
    %1002 = math.exp %1001 : vector<8x256xf32>
    %1003 = arith.mulf %1000, %974 : vector<8x256xf32>
    %1004 = arith.addf %1003, %1002 : vector<8x256xf32>
    %1005 = vector.broadcast %987 : vector<1x256xf32> to vector<8x256xf32>
    %1006 = arith.mulf %1002, %1005 : vector<8x256xf32>
    %1007 = arith.mulf %1000, %980 : vector<8x256xf32>
    %1008 = vector.extract_strided_slice %986 {offsets = [0, 0], sizes = [8, 256], strides = [1, 1]} : vector<16x256xf32> to vector<8x256xf32>
    %1009 = arith.mulf %1006, %1008 : vector<8x256xf32>
    %1010 = arith.addf %1007, %1009 : vector<8x256xf32>
    %1011 = arith.mulf %1000, %984 : vector<8x256xf32>
    %1012 = vector.extract_strided_slice %986 {offsets = [8, 0], sizes = [8, 256], strides = [1, 1]} : vector<16x256xf32> to vector<8x256xf32>
    %1013 = arith.mulf %1006, %1012 : vector<8x256xf32>
    %1014 = arith.addf %1011, %1013 : vector<8x256xf32>
    %c240_i32 = arith.constant 240 : i32
    %1015 = tpu.dynamic_rotate %12 by %c240_i32 dim 1 : vector<16x256xf32>, i32 -> vector<16x256xf32>
    %c240_i32_214 = arith.constant 240 : i32
    %1016 = tpu.dynamic_rotate %13 by %c240_i32_214 dim 1 : vector<16x256xf32>, i32 -> vector<16x256xf32>
    %c31 = arith.constant 31 : index
    %c0_215 = arith.constant 0 : index
    %1017 = vector.load %arg6[%c31, %c0_215] : memref<49x256xf32, #tpu.memory_space<vmem>>, vector<1x256xf32>
    %1018 = arith.mulf %11, %1015 : vector<16x256xf32>
    %1019 = vector.extract_strided_slice %1018 {offsets = [0, 0], sizes = [8, 256], strides = [1, 1]} : vector<16x256xf32> to vector<8x256xf32>
    %1020 = vector.extract_strided_slice %1018 {offsets = [8, 0], sizes = [8, 256], strides = [1, 1]} : vector<16x256xf32> to vector<8x256xf32>
    %1021 = arith.addf %1019, %1020 : vector<8x256xf32>
    %1022 = vector.broadcast %1017 : vector<1x256xf32> to vector<8x256xf32>
    %1023 = arith.mulf %1021, %1022 : vector<8x256xf32>
    %c3_216 = arith.constant 3 : index
    %c0_217 = arith.constant 0 : index
    %c0_218 = arith.constant 0 : index
    %1024 = vector.load %arg12[%c3_216, %c0_217, %c0_218] : memref<7x8x256xf32, #tpu.memory_space<vmem>>, vector<1x8x256xf32>
    %1025 = vector.shape_cast %1024 : vector<1x8x256xf32> to vector<8x256xf32>
    %1026 = arith.addf %924, %1025 : vector<8x256xf32>
    %1027 = arith.addf %1023, %1026 : vector<8x256xf32>
    %1028 = arith.maximumf %998, %1027 : vector<8x256xf32>
    %1029 = arith.subf %998, %1028 : vector<8x256xf32>
    %1030 = math.exp %1029 : vector<8x256xf32>
    %1031 = arith.subf %1027, %1028 : vector<8x256xf32>
    %1032 = math.exp %1031 : vector<8x256xf32>
    %1033 = arith.mulf %1030, %1004 : vector<8x256xf32>
    %1034 = arith.addf %1033, %1032 : vector<8x256xf32>
    %1035 = vector.broadcast %1017 : vector<1x256xf32> to vector<8x256xf32>
    %1036 = arith.mulf %1032, %1035 : vector<8x256xf32>
    %1037 = arith.mulf %1030, %1010 : vector<8x256xf32>
    %1038 = vector.extract_strided_slice %1016 {offsets = [0, 0], sizes = [8, 256], strides = [1, 1]} : vector<16x256xf32> to vector<8x256xf32>
    %1039 = arith.mulf %1036, %1038 : vector<8x256xf32>
    %1040 = arith.addf %1037, %1039 : vector<8x256xf32>
    %1041 = arith.mulf %1030, %1014 : vector<8x256xf32>
    %1042 = vector.extract_strided_slice %1016 {offsets = [8, 0], sizes = [8, 256], strides = [1, 1]} : vector<16x256xf32> to vector<8x256xf32>
    %1043 = arith.mulf %1036, %1042 : vector<8x256xf32>
    %1044 = arith.addf %1041, %1043 : vector<8x256xf32>
    %c239_i32 = arith.constant 239 : i32
    %1045 = tpu.dynamic_rotate %12 by %c239_i32 dim 1 : vector<16x256xf32>, i32 -> vector<16x256xf32>
    %c239_i32_219 = arith.constant 239 : i32
    %1046 = tpu.dynamic_rotate %13 by %c239_i32_219 dim 1 : vector<16x256xf32>, i32 -> vector<16x256xf32>
    %c32 = arith.constant 32 : index
    %c0_220 = arith.constant 0 : index
    %1047 = vector.load %arg6[%c32, %c0_220] : memref<49x256xf32, #tpu.memory_space<vmem>>, vector<1x256xf32>
    %1048 = arith.mulf %11, %1045 : vector<16x256xf32>
    %1049 = vector.extract_strided_slice %1048 {offsets = [0, 0], sizes = [8, 256], strides = [1, 1]} : vector<16x256xf32> to vector<8x256xf32>
    %1050 = vector.extract_strided_slice %1048 {offsets = [8, 0], sizes = [8, 256], strides = [1, 1]} : vector<16x256xf32> to vector<8x256xf32>
    %1051 = arith.addf %1049, %1050 : vector<8x256xf32>
    %1052 = vector.broadcast %1047 : vector<1x256xf32> to vector<8x256xf32>
    %1053 = arith.mulf %1051, %1052 : vector<8x256xf32>
    %c4_221 = arith.constant 4 : index
    %c0_222 = arith.constant 0 : index
    %c0_223 = arith.constant 0 : index
    %1054 = vector.load %arg12[%c4_221, %c0_222, %c0_223] : memref<7x8x256xf32, #tpu.memory_space<vmem>>, vector<1x8x256xf32>
    %1055 = vector.shape_cast %1054 : vector<1x8x256xf32> to vector<8x256xf32>
    %1056 = arith.addf %924, %1055 : vector<8x256xf32>
    %1057 = arith.addf %1053, %1056 : vector<8x256xf32>
    %1058 = arith.maximumf %1028, %1057 : vector<8x256xf32>
    %1059 = arith.subf %1028, %1058 : vector<8x256xf32>
    %1060 = math.exp %1059 : vector<8x256xf32>
    %1061 = arith.subf %1057, %1058 : vector<8x256xf32>
    %1062 = math.exp %1061 : vector<8x256xf32>
    %1063 = arith.mulf %1060, %1034 : vector<8x256xf32>
    %1064 = arith.addf %1063, %1062 : vector<8x256xf32>
    %1065 = vector.broadcast %1047 : vector<1x256xf32> to vector<8x256xf32>
    %1066 = arith.mulf %1062, %1065 : vector<8x256xf32>
    %1067 = arith.mulf %1060, %1040 : vector<8x256xf32>
    %1068 = vector.extract_strided_slice %1046 {offsets = [0, 0], sizes = [8, 256], strides = [1, 1]} : vector<16x256xf32> to vector<8x256xf32>
    %1069 = arith.mulf %1066, %1068 : vector<8x256xf32>
    %1070 = arith.addf %1067, %1069 : vector<8x256xf32>
    %1071 = arith.mulf %1060, %1044 : vector<8x256xf32>
    %1072 = vector.extract_strided_slice %1046 {offsets = [8, 0], sizes = [8, 256], strides = [1, 1]} : vector<16x256xf32> to vector<8x256xf32>
    %1073 = arith.mulf %1066, %1072 : vector<8x256xf32>
    %1074 = arith.addf %1071, %1073 : vector<8x256xf32>
    %c238_i32 = arith.constant 238 : i32
    %1075 = tpu.dynamic_rotate %12 by %c238_i32 dim 1 : vector<16x256xf32>, i32 -> vector<16x256xf32>
    %c238_i32_224 = arith.constant 238 : i32
    %1076 = tpu.dynamic_rotate %13 by %c238_i32_224 dim 1 : vector<16x256xf32>, i32 -> vector<16x256xf32>
    %c33 = arith.constant 33 : index
    %c0_225 = arith.constant 0 : index
    %1077 = vector.load %arg6[%c33, %c0_225] : memref<49x256xf32, #tpu.memory_space<vmem>>, vector<1x256xf32>
    %1078 = arith.mulf %11, %1075 : vector<16x256xf32>
    %1079 = vector.extract_strided_slice %1078 {offsets = [0, 0], sizes = [8, 256], strides = [1, 1]} : vector<16x256xf32> to vector<8x256xf32>
    %1080 = vector.extract_strided_slice %1078 {offsets = [8, 0], sizes = [8, 256], strides = [1, 1]} : vector<16x256xf32> to vector<8x256xf32>
    %1081 = arith.addf %1079, %1080 : vector<8x256xf32>
    %1082 = vector.broadcast %1077 : vector<1x256xf32> to vector<8x256xf32>
    %1083 = arith.mulf %1081, %1082 : vector<8x256xf32>
    %c5_226 = arith.constant 5 : index
    %c0_227 = arith.constant 0 : index
    %c0_228 = arith.constant 0 : index
    %1084 = vector.load %arg12[%c5_226, %c0_227, %c0_228] : memref<7x8x256xf32, #tpu.memory_space<vmem>>, vector<1x8x256xf32>
    %1085 = vector.shape_cast %1084 : vector<1x8x256xf32> to vector<8x256xf32>
    %1086 = arith.addf %924, %1085 : vector<8x256xf32>
    %1087 = arith.addf %1083, %1086 : vector<8x256xf32>
    %1088 = arith.maximumf %1058, %1087 : vector<8x256xf32>
    %1089 = arith.subf %1058, %1088 : vector<8x256xf32>
    %1090 = math.exp %1089 : vector<8x256xf32>
    %1091 = arith.subf %1087, %1088 : vector<8x256xf32>
    %1092 = math.exp %1091 : vector<8x256xf32>
    %1093 = arith.mulf %1090, %1064 : vector<8x256xf32>
    %1094 = arith.addf %1093, %1092 : vector<8x256xf32>
    %1095 = vector.broadcast %1077 : vector<1x256xf32> to vector<8x256xf32>
    %1096 = arith.mulf %1092, %1095 : vector<8x256xf32>
    %1097 = arith.mulf %1090, %1070 : vector<8x256xf32>
    %1098 = vector.extract_strided_slice %1076 {offsets = [0, 0], sizes = [8, 256], strides = [1, 1]} : vector<16x256xf32> to vector<8x256xf32>
    %1099 = arith.mulf %1096, %1098 : vector<8x256xf32>
    %1100 = arith.addf %1097, %1099 : vector<8x256xf32>
    %1101 = arith.mulf %1090, %1074 : vector<8x256xf32>
    %1102 = vector.extract_strided_slice %1076 {offsets = [8, 0], sizes = [8, 256], strides = [1, 1]} : vector<16x256xf32> to vector<8x256xf32>
    %1103 = arith.mulf %1096, %1102 : vector<8x256xf32>
    %1104 = arith.addf %1101, %1103 : vector<8x256xf32>
    %c237_i32 = arith.constant 237 : i32
    %1105 = tpu.dynamic_rotate %12 by %c237_i32 dim 1 : vector<16x256xf32>, i32 -> vector<16x256xf32>
    %c237_i32_229 = arith.constant 237 : i32
    %1106 = tpu.dynamic_rotate %13 by %c237_i32_229 dim 1 : vector<16x256xf32>, i32 -> vector<16x256xf32>
    %c34 = arith.constant 34 : index
    %c0_230 = arith.constant 0 : index
    %1107 = vector.load %arg6[%c34, %c0_230] : memref<49x256xf32, #tpu.memory_space<vmem>>, vector<1x256xf32>
    %1108 = arith.mulf %11, %1105 : vector<16x256xf32>
    %1109 = vector.extract_strided_slice %1108 {offsets = [0, 0], sizes = [8, 256], strides = [1, 1]} : vector<16x256xf32> to vector<8x256xf32>
    %1110 = vector.extract_strided_slice %1108 {offsets = [8, 0], sizes = [8, 256], strides = [1, 1]} : vector<16x256xf32> to vector<8x256xf32>
    %1111 = arith.addf %1109, %1110 : vector<8x256xf32>
    %1112 = vector.broadcast %1107 : vector<1x256xf32> to vector<8x256xf32>
    %1113 = arith.mulf %1111, %1112 : vector<8x256xf32>
    %c6_231 = arith.constant 6 : index
    %c0_232 = arith.constant 0 : index
    %c0_233 = arith.constant 0 : index
    %1114 = vector.load %arg12[%c6_231, %c0_232, %c0_233] : memref<7x8x256xf32, #tpu.memory_space<vmem>>, vector<1x8x256xf32>
    %1115 = vector.shape_cast %1114 : vector<1x8x256xf32> to vector<8x256xf32>
    %1116 = arith.addf %924, %1115 : vector<8x256xf32>
    %1117 = arith.addf %1113, %1116 : vector<8x256xf32>
    %1118 = arith.maximumf %1088, %1117 : vector<8x256xf32>
    %1119 = arith.subf %1088, %1118 : vector<8x256xf32>
    %1120 = math.exp %1119 : vector<8x256xf32>
    %1121 = arith.subf %1117, %1118 : vector<8x256xf32>
    %1122 = math.exp %1121 : vector<8x256xf32>
    %1123 = arith.mulf %1120, %1094 : vector<8x256xf32>
    %1124 = arith.addf %1123, %1122 : vector<8x256xf32>
    %1125 = vector.broadcast %1107 : vector<1x256xf32> to vector<8x256xf32>
    %1126 = arith.mulf %1122, %1125 : vector<8x256xf32>
    %1127 = arith.mulf %1120, %1100 : vector<8x256xf32>
    %1128 = vector.extract_strided_slice %1106 {offsets = [0, 0], sizes = [8, 256], strides = [1, 1]} : vector<16x256xf32> to vector<8x256xf32>
    %1129 = arith.mulf %1126, %1128 : vector<8x256xf32>
    %1130 = arith.addf %1127, %1129 : vector<8x256xf32>
    %1131 = arith.mulf %1120, %1104 : vector<8x256xf32>
    %1132 = vector.extract_strided_slice %1106 {offsets = [8, 0], sizes = [8, 256], strides = [1, 1]} : vector<16x256xf32> to vector<8x256xf32>
    %1133 = arith.mulf %1126, %1132 : vector<8x256xf32>
    %1134 = arith.addf %1131, %1133 : vector<8x256xf32>
    %c0_234 = arith.constant 0 : index
    %c5_235 = arith.constant 5 : index
    %1135 = memref.load %arg5[%c0_234, %c5_235] : memref<2x7xf32, #tpu.memory_space<smem>>
    %1136 = vector.extract_strided_slice %11 {offsets = [0, 0], sizes = [8, 256], strides = [1, 1]} : vector<16x256xf32> to vector<8x256xf32>
    %1137 = vector.broadcast %1135 : f32 to vector<8x256xf32>
    %1138 = arith.mulf %1137, %1136 : vector<8x256xf32>
    %c227_i32 = arith.constant 227 : i32
    %1139 = tpu.dynamic_rotate %12 by %c227_i32 dim 1 : vector<16x256xf32>, i32 -> vector<16x256xf32>
    %c227_i32_236 = arith.constant 227 : i32
    %1140 = tpu.dynamic_rotate %13 by %c227_i32_236 dim 1 : vector<16x256xf32>, i32 -> vector<16x256xf32>
    %c35 = arith.constant 35 : index
    %c0_237 = arith.constant 0 : index
    %1141 = vector.load %arg6[%c35, %c0_237] : memref<49x256xf32, #tpu.memory_space<vmem>>, vector<1x256xf32>
    %1142 = arith.mulf %11, %1139 : vector<16x256xf32>
    %1143 = vector.extract_strided_slice %1142 {offsets = [0, 0], sizes = [8, 256], strides = [1, 1]} : vector<16x256xf32> to vector<8x256xf32>
    %1144 = vector.extract_strided_slice %1142 {offsets = [8, 0], sizes = [8, 256], strides = [1, 1]} : vector<16x256xf32> to vector<8x256xf32>
    %1145 = arith.addf %1143, %1144 : vector<8x256xf32>
    %1146 = vector.broadcast %1141 : vector<1x256xf32> to vector<8x256xf32>
    %1147 = arith.mulf %1145, %1146 : vector<8x256xf32>
    %c0_238 = arith.constant 0 : index
    %c0_239 = arith.constant 0 : index
    %c0_240 = arith.constant 0 : index
    %1148 = vector.load %arg12[%c0_238, %c0_239, %c0_240] : memref<7x8x256xf32, #tpu.memory_space<vmem>>, vector<1x8x256xf32>
    %1149 = vector.shape_cast %1148 : vector<1x8x256xf32> to vector<8x256xf32>
    %1150 = arith.addf %1138, %1149 : vector<8x256xf32>
    %1151 = arith.addf %1147, %1150 : vector<8x256xf32>
    %1152 = arith.maximumf %1118, %1151 : vector<8x256xf32>
    %1153 = arith.subf %1118, %1152 : vector<8x256xf32>
    %1154 = math.exp %1153 : vector<8x256xf32>
    %1155 = arith.subf %1151, %1152 : vector<8x256xf32>
    %1156 = math.exp %1155 : vector<8x256xf32>
    %1157 = arith.mulf %1154, %1124 : vector<8x256xf32>
    %1158 = arith.addf %1157, %1156 : vector<8x256xf32>
    %1159 = vector.broadcast %1141 : vector<1x256xf32> to vector<8x256xf32>
    %1160 = arith.mulf %1156, %1159 : vector<8x256xf32>
    %1161 = arith.mulf %1154, %1130 : vector<8x256xf32>
    %1162 = vector.extract_strided_slice %1140 {offsets = [0, 0], sizes = [8, 256], strides = [1, 1]} : vector<16x256xf32> to vector<8x256xf32>
    %1163 = arith.mulf %1160, %1162 : vector<8x256xf32>
    %1164 = arith.addf %1161, %1163 : vector<8x256xf32>
    %1165 = arith.mulf %1154, %1134 : vector<8x256xf32>
    %1166 = vector.extract_strided_slice %1140 {offsets = [8, 0], sizes = [8, 256], strides = [1, 1]} : vector<16x256xf32> to vector<8x256xf32>
    %1167 = arith.mulf %1160, %1166 : vector<8x256xf32>
    %1168 = arith.addf %1165, %1167 : vector<8x256xf32>
    %c226_i32 = arith.constant 226 : i32
    %1169 = tpu.dynamic_rotate %12 by %c226_i32 dim 1 : vector<16x256xf32>, i32 -> vector<16x256xf32>
    %c226_i32_241 = arith.constant 226 : i32
    %1170 = tpu.dynamic_rotate %13 by %c226_i32_241 dim 1 : vector<16x256xf32>, i32 -> vector<16x256xf32>
    %c36 = arith.constant 36 : index
    %c0_242 = arith.constant 0 : index
    %1171 = vector.load %arg6[%c36, %c0_242] : memref<49x256xf32, #tpu.memory_space<vmem>>, vector<1x256xf32>
    %1172 = arith.mulf %11, %1169 : vector<16x256xf32>
    %1173 = vector.extract_strided_slice %1172 {offsets = [0, 0], sizes = [8, 256], strides = [1, 1]} : vector<16x256xf32> to vector<8x256xf32>
    %1174 = vector.extract_strided_slice %1172 {offsets = [8, 0], sizes = [8, 256], strides = [1, 1]} : vector<16x256xf32> to vector<8x256xf32>
    %1175 = arith.addf %1173, %1174 : vector<8x256xf32>
    %1176 = vector.broadcast %1171 : vector<1x256xf32> to vector<8x256xf32>
    %1177 = arith.mulf %1175, %1176 : vector<8x256xf32>
    %c1_243 = arith.constant 1 : index
    %c0_244 = arith.constant 0 : index
    %c0_245 = arith.constant 0 : index
    %1178 = vector.load %arg12[%c1_243, %c0_244, %c0_245] : memref<7x8x256xf32, #tpu.memory_space<vmem>>, vector<1x8x256xf32>
    %1179 = vector.shape_cast %1178 : vector<1x8x256xf32> to vector<8x256xf32>
    %1180 = arith.addf %1138, %1179 : vector<8x256xf32>
    %1181 = arith.addf %1177, %1180 : vector<8x256xf32>
    %1182 = arith.maximumf %1152, %1181 : vector<8x256xf32>
    %1183 = arith.subf %1152, %1182 : vector<8x256xf32>
    %1184 = math.exp %1183 : vector<8x256xf32>
    %1185 = arith.subf %1181, %1182 : vector<8x256xf32>
    %1186 = math.exp %1185 : vector<8x256xf32>
    %1187 = arith.mulf %1184, %1158 : vector<8x256xf32>
    %1188 = arith.addf %1187, %1186 : vector<8x256xf32>
    %1189 = vector.broadcast %1171 : vector<1x256xf32> to vector<8x256xf32>
    %1190 = arith.mulf %1186, %1189 : vector<8x256xf32>
    %1191 = arith.mulf %1184, %1164 : vector<8x256xf32>
    %1192 = vector.extract_strided_slice %1170 {offsets = [0, 0], sizes = [8, 256], strides = [1, 1]} : vector<16x256xf32> to vector<8x256xf32>
    %1193 = arith.mulf %1190, %1192 : vector<8x256xf32>
    %1194 = arith.addf %1191, %1193 : vector<8x256xf32>
    %1195 = arith.mulf %1184, %1168 : vector<8x256xf32>
    %1196 = vector.extract_strided_slice %1170 {offsets = [8, 0], sizes = [8, 256], strides = [1, 1]} : vector<16x256xf32> to vector<8x256xf32>
    %1197 = arith.mulf %1190, %1196 : vector<8x256xf32>
    %1198 = arith.addf %1195, %1197 : vector<8x256xf32>
    %c225_i32 = arith.constant 225 : i32
    %1199 = tpu.dynamic_rotate %12 by %c225_i32 dim 1 : vector<16x256xf32>, i32 -> vector<16x256xf32>
    %c225_i32_246 = arith.constant 225 : i32
    %1200 = tpu.dynamic_rotate %13 by %c225_i32_246 dim 1 : vector<16x256xf32>, i32 -> vector<16x256xf32>
    %c37 = arith.constant 37 : index
    %c0_247 = arith.constant 0 : index
    %1201 = vector.load %arg6[%c37, %c0_247] : memref<49x256xf32, #tpu.memory_space<vmem>>, vector<1x256xf32>
    %1202 = arith.mulf %11, %1199 : vector<16x256xf32>
    %1203 = vector.extract_strided_slice %1202 {offsets = [0, 0], sizes = [8, 256], strides = [1, 1]} : vector<16x256xf32> to vector<8x256xf32>
    %1204 = vector.extract_strided_slice %1202 {offsets = [8, 0], sizes = [8, 256], strides = [1, 1]} : vector<16x256xf32> to vector<8x256xf32>
    %1205 = arith.addf %1203, %1204 : vector<8x256xf32>
    %1206 = vector.broadcast %1201 : vector<1x256xf32> to vector<8x256xf32>
    %1207 = arith.mulf %1205, %1206 : vector<8x256xf32>
    %c2_248 = arith.constant 2 : index
    %c0_249 = arith.constant 0 : index
    %c0_250 = arith.constant 0 : index
    %1208 = vector.load %arg12[%c2_248, %c0_249, %c0_250] : memref<7x8x256xf32, #tpu.memory_space<vmem>>, vector<1x8x256xf32>
    %1209 = vector.shape_cast %1208 : vector<1x8x256xf32> to vector<8x256xf32>
    %1210 = arith.addf %1138, %1209 : vector<8x256xf32>
    %1211 = arith.addf %1207, %1210 : vector<8x256xf32>
    %1212 = arith.maximumf %1182, %1211 : vector<8x256xf32>
    %1213 = arith.subf %1182, %1212 : vector<8x256xf32>
    %1214 = math.exp %1213 : vector<8x256xf32>
    %1215 = arith.subf %1211, %1212 : vector<8x256xf32>
    %1216 = math.exp %1215 : vector<8x256xf32>
    %1217 = arith.mulf %1214, %1188 : vector<8x256xf32>
    %1218 = arith.addf %1217, %1216 : vector<8x256xf32>
    %1219 = vector.broadcast %1201 : vector<1x256xf32> to vector<8x256xf32>
    %1220 = arith.mulf %1216, %1219 : vector<8x256xf32>
    %1221 = arith.mulf %1214, %1194 : vector<8x256xf32>
    %1222 = vector.extract_strided_slice %1200 {offsets = [0, 0], sizes = [8, 256], strides = [1, 1]} : vector<16x256xf32> to vector<8x256xf32>
    %1223 = arith.mulf %1220, %1222 : vector<8x256xf32>
    %1224 = arith.addf %1221, %1223 : vector<8x256xf32>
    %1225 = arith.mulf %1214, %1198 : vector<8x256xf32>
    %1226 = vector.extract_strided_slice %1200 {offsets = [8, 0], sizes = [8, 256], strides = [1, 1]} : vector<16x256xf32> to vector<8x256xf32>
    %1227 = arith.mulf %1220, %1226 : vector<8x256xf32>
    %1228 = arith.addf %1225, %1227 : vector<8x256xf32>
    %c224_i32 = arith.constant 224 : i32
    %1229 = tpu.dynamic_rotate %12 by %c224_i32 dim 1 : vector<16x256xf32>, i32 -> vector<16x256xf32>
    %c224_i32_251 = arith.constant 224 : i32
    %1230 = tpu.dynamic_rotate %13 by %c224_i32_251 dim 1 : vector<16x256xf32>, i32 -> vector<16x256xf32>
    %c38 = arith.constant 38 : index
    %c0_252 = arith.constant 0 : index
    %1231 = vector.load %arg6[%c38, %c0_252] : memref<49x256xf32, #tpu.memory_space<vmem>>, vector<1x256xf32>
    %1232 = arith.mulf %11, %1229 : vector<16x256xf32>
    %1233 = vector.extract_strided_slice %1232 {offsets = [0, 0], sizes = [8, 256], strides = [1, 1]} : vector<16x256xf32> to vector<8x256xf32>
    %1234 = vector.extract_strided_slice %1232 {offsets = [8, 0], sizes = [8, 256], strides = [1, 1]} : vector<16x256xf32> to vector<8x256xf32>
    %1235 = arith.addf %1233, %1234 : vector<8x256xf32>
    %1236 = vector.broadcast %1231 : vector<1x256xf32> to vector<8x256xf32>
    %1237 = arith.mulf %1235, %1236 : vector<8x256xf32>
    %c3_253 = arith.constant 3 : index
    %c0_254 = arith.constant 0 : index
    %c0_255 = arith.constant 0 : index
    %1238 = vector.load %arg12[%c3_253, %c0_254, %c0_255] : memref<7x8x256xf32, #tpu.memory_space<vmem>>, vector<1x8x256xf32>
    %1239 = vector.shape_cast %1238 : vector<1x8x256xf32> to vector<8x256xf32>
    %1240 = arith.addf %1138, %1239 : vector<8x256xf32>
    %1241 = arith.addf %1237, %1240 : vector<8x256xf32>
    %1242 = arith.maximumf %1212, %1241 : vector<8x256xf32>
    %1243 = arith.subf %1212, %1242 : vector<8x256xf32>
    %1244 = math.exp %1243 : vector<8x256xf32>
    %1245 = arith.subf %1241, %1242 : vector<8x256xf32>
    %1246 = math.exp %1245 : vector<8x256xf32>
    %1247 = arith.mulf %1244, %1218 : vector<8x256xf32>
    %1248 = arith.addf %1247, %1246 : vector<8x256xf32>
    %1249 = vector.broadcast %1231 : vector<1x256xf32> to vector<8x256xf32>
    %1250 = arith.mulf %1246, %1249 : vector<8x256xf32>
    %1251 = arith.mulf %1244, %1224 : vector<8x256xf32>
    %1252 = vector.extract_strided_slice %1230 {offsets = [0, 0], sizes = [8, 256], strides = [1, 1]} : vector<16x256xf32> to vector<8x256xf32>
    %1253 = arith.mulf %1250, %1252 : vector<8x256xf32>
    %1254 = arith.addf %1251, %1253 : vector<8x256xf32>
    %1255 = arith.mulf %1244, %1228 : vector<8x256xf32>
    %1256 = vector.extract_strided_slice %1230 {offsets = [8, 0], sizes = [8, 256], strides = [1, 1]} : vector<16x256xf32> to vector<8x256xf32>
    %1257 = arith.mulf %1250, %1256 : vector<8x256xf32>
    %1258 = arith.addf %1255, %1257 : vector<8x256xf32>
    %c223_i32 = arith.constant 223 : i32
    %1259 = tpu.dynamic_rotate %12 by %c223_i32 dim 1 : vector<16x256xf32>, i32 -> vector<16x256xf32>
    %c223_i32_256 = arith.constant 223 : i32
    %1260 = tpu.dynamic_rotate %13 by %c223_i32_256 dim 1 : vector<16x256xf32>, i32 -> vector<16x256xf32>
    %c39 = arith.constant 39 : index
    %c0_257 = arith.constant 0 : index
    %1261 = vector.load %arg6[%c39, %c0_257] : memref<49x256xf32, #tpu.memory_space<vmem>>, vector<1x256xf32>
    %1262 = arith.mulf %11, %1259 : vector<16x256xf32>
    %1263 = vector.extract_strided_slice %1262 {offsets = [0, 0], sizes = [8, 256], strides = [1, 1]} : vector<16x256xf32> to vector<8x256xf32>
    %1264 = vector.extract_strided_slice %1262 {offsets = [8, 0], sizes = [8, 256], strides = [1, 1]} : vector<16x256xf32> to vector<8x256xf32>
    %1265 = arith.addf %1263, %1264 : vector<8x256xf32>
    %1266 = vector.broadcast %1261 : vector<1x256xf32> to vector<8x256xf32>
    %1267 = arith.mulf %1265, %1266 : vector<8x256xf32>
    %c4_258 = arith.constant 4 : index
    %c0_259 = arith.constant 0 : index
    %c0_260 = arith.constant 0 : index
    %1268 = vector.load %arg12[%c4_258, %c0_259, %c0_260] : memref<7x8x256xf32, #tpu.memory_space<vmem>>, vector<1x8x256xf32>
    %1269 = vector.shape_cast %1268 : vector<1x8x256xf32> to vector<8x256xf32>
    %1270 = arith.addf %1138, %1269 : vector<8x256xf32>
    %1271 = arith.addf %1267, %1270 : vector<8x256xf32>
    %1272 = arith.maximumf %1242, %1271 : vector<8x256xf32>
    %1273 = arith.subf %1242, %1272 : vector<8x256xf32>
    %1274 = math.exp %1273 : vector<8x256xf32>
    %1275 = arith.subf %1271, %1272 : vector<8x256xf32>
    %1276 = math.exp %1275 : vector<8x256xf32>
    %1277 = arith.mulf %1274, %1248 : vector<8x256xf32>
    %1278 = arith.addf %1277, %1276 : vector<8x256xf32>
    %1279 = vector.broadcast %1261 : vector<1x256xf32> to vector<8x256xf32>
    %1280 = arith.mulf %1276, %1279 : vector<8x256xf32>
    %1281 = arith.mulf %1274, %1254 : vector<8x256xf32>
    %1282 = vector.extract_strided_slice %1260 {offsets = [0, 0], sizes = [8, 256], strides = [1, 1]} : vector<16x256xf32> to vector<8x256xf32>
    %1283 = arith.mulf %1280, %1282 : vector<8x256xf32>
    %1284 = arith.addf %1281, %1283 : vector<8x256xf32>
    %1285 = arith.mulf %1274, %1258 : vector<8x256xf32>
    %1286 = vector.extract_strided_slice %1260 {offsets = [8, 0], sizes = [8, 256], strides = [1, 1]} : vector<16x256xf32> to vector<8x256xf32>
    %1287 = arith.mulf %1280, %1286 : vector<8x256xf32>
    %1288 = arith.addf %1285, %1287 : vector<8x256xf32>
    %c222_i32 = arith.constant 222 : i32
    %1289 = tpu.dynamic_rotate %12 by %c222_i32 dim 1 : vector<16x256xf32>, i32 -> vector<16x256xf32>
    %c222_i32_261 = arith.constant 222 : i32
    %1290 = tpu.dynamic_rotate %13 by %c222_i32_261 dim 1 : vector<16x256xf32>, i32 -> vector<16x256xf32>
    %c40 = arith.constant 40 : index
    %c0_262 = arith.constant 0 : index
    %1291 = vector.load %arg6[%c40, %c0_262] : memref<49x256xf32, #tpu.memory_space<vmem>>, vector<1x256xf32>
    %1292 = arith.mulf %11, %1289 : vector<16x256xf32>
    %1293 = vector.extract_strided_slice %1292 {offsets = [0, 0], sizes = [8, 256], strides = [1, 1]} : vector<16x256xf32> to vector<8x256xf32>
    %1294 = vector.extract_strided_slice %1292 {offsets = [8, 0], sizes = [8, 256], strides = [1, 1]} : vector<16x256xf32> to vector<8x256xf32>
    %1295 = arith.addf %1293, %1294 : vector<8x256xf32>
    %1296 = vector.broadcast %1291 : vector<1x256xf32> to vector<8x256xf32>
    %1297 = arith.mulf %1295, %1296 : vector<8x256xf32>
    %c5_263 = arith.constant 5 : index
    %c0_264 = arith.constant 0 : index
    %c0_265 = arith.constant 0 : index
    %1298 = vector.load %arg12[%c5_263, %c0_264, %c0_265] : memref<7x8x256xf32, #tpu.memory_space<vmem>>, vector<1x8x256xf32>
    %1299 = vector.shape_cast %1298 : vector<1x8x256xf32> to vector<8x256xf32>
    %1300 = arith.addf %1138, %1299 : vector<8x256xf32>
    %1301 = arith.addf %1297, %1300 : vector<8x256xf32>
    %1302 = arith.maximumf %1272, %1301 : vector<8x256xf32>
    %1303 = arith.subf %1272, %1302 : vector<8x256xf32>
    %1304 = math.exp %1303 : vector<8x256xf32>
    %1305 = arith.subf %1301, %1302 : vector<8x256xf32>
    %1306 = math.exp %1305 : vector<8x256xf32>
    %1307 = arith.mulf %1304, %1278 : vector<8x256xf32>
    %1308 = arith.addf %1307, %1306 : vector<8x256xf32>
    %1309 = vector.broadcast %1291 : vector<1x256xf32> to vector<8x256xf32>
    %1310 = arith.mulf %1306, %1309 : vector<8x256xf32>
    %1311 = arith.mulf %1304, %1284 : vector<8x256xf32>
    %1312 = vector.extract_strided_slice %1290 {offsets = [0, 0], sizes = [8, 256], strides = [1, 1]} : vector<16x256xf32> to vector<8x256xf32>
    %1313 = arith.mulf %1310, %1312 : vector<8x256xf32>
    %1314 = arith.addf %1311, %1313 : vector<8x256xf32>
    %1315 = arith.mulf %1304, %1288 : vector<8x256xf32>
    %1316 = vector.extract_strided_slice %1290 {offsets = [8, 0], sizes = [8, 256], strides = [1, 1]} : vector<16x256xf32> to vector<8x256xf32>
    %1317 = arith.mulf %1310, %1316 : vector<8x256xf32>
    %1318 = arith.addf %1315, %1317 : vector<8x256xf32>
    %c221_i32 = arith.constant 221 : i32
    %1319 = tpu.dynamic_rotate %12 by %c221_i32 dim 1 : vector<16x256xf32>, i32 -> vector<16x256xf32>
    %c221_i32_266 = arith.constant 221 : i32
    %1320 = tpu.dynamic_rotate %13 by %c221_i32_266 dim 1 : vector<16x256xf32>, i32 -> vector<16x256xf32>
    %c41 = arith.constant 41 : index
    %c0_267 = arith.constant 0 : index
    %1321 = vector.load %arg6[%c41, %c0_267] : memref<49x256xf32, #tpu.memory_space<vmem>>, vector<1x256xf32>
    %1322 = arith.mulf %11, %1319 : vector<16x256xf32>
    %1323 = vector.extract_strided_slice %1322 {offsets = [0, 0], sizes = [8, 256], strides = [1, 1]} : vector<16x256xf32> to vector<8x256xf32>
    %1324 = vector.extract_strided_slice %1322 {offsets = [8, 0], sizes = [8, 256], strides = [1, 1]} : vector<16x256xf32> to vector<8x256xf32>
    %1325 = arith.addf %1323, %1324 : vector<8x256xf32>
    %1326 = vector.broadcast %1321 : vector<1x256xf32> to vector<8x256xf32>
    %1327 = arith.mulf %1325, %1326 : vector<8x256xf32>
    %c6_268 = arith.constant 6 : index
    %c0_269 = arith.constant 0 : index
    %c0_270 = arith.constant 0 : index
    %1328 = vector.load %arg12[%c6_268, %c0_269, %c0_270] : memref<7x8x256xf32, #tpu.memory_space<vmem>>, vector<1x8x256xf32>
    %1329 = vector.shape_cast %1328 : vector<1x8x256xf32> to vector<8x256xf32>
    %1330 = arith.addf %1138, %1329 : vector<8x256xf32>
    %1331 = arith.addf %1327, %1330 : vector<8x256xf32>
    %1332 = arith.maximumf %1302, %1331 : vector<8x256xf32>
    %1333 = arith.subf %1302, %1332 : vector<8x256xf32>
    %1334 = math.exp %1333 : vector<8x256xf32>
    %1335 = arith.subf %1331, %1332 : vector<8x256xf32>
    %1336 = math.exp %1335 : vector<8x256xf32>
    %1337 = arith.mulf %1334, %1308 : vector<8x256xf32>
    %1338 = arith.addf %1337, %1336 : vector<8x256xf32>
    %1339 = vector.broadcast %1321 : vector<1x256xf32> to vector<8x256xf32>
    %1340 = arith.mulf %1336, %1339 : vector<8x256xf32>
    %1341 = arith.mulf %1334, %1314 : vector<8x256xf32>
    %1342 = vector.extract_strided_slice %1320 {offsets = [0, 0], sizes = [8, 256], strides = [1, 1]} : vector<16x256xf32> to vector<8x256xf32>
    %1343 = arith.mulf %1340, %1342 : vector<8x256xf32>
    %1344 = arith.addf %1341, %1343 : vector<8x256xf32>
    %1345 = arith.mulf %1334, %1318 : vector<8x256xf32>
    %1346 = vector.extract_strided_slice %1320 {offsets = [8, 0], sizes = [8, 256], strides = [1, 1]} : vector<16x256xf32> to vector<8x256xf32>
    %1347 = arith.mulf %1340, %1346 : vector<8x256xf32>
    %1348 = arith.addf %1345, %1347 : vector<8x256xf32>
    %c0_271 = arith.constant 0 : index
    %c6_272 = arith.constant 6 : index
    %1349 = memref.load %arg5[%c0_271, %c6_272] : memref<2x7xf32, #tpu.memory_space<smem>>
    %1350 = vector.extract_strided_slice %11 {offsets = [0, 0], sizes = [8, 256], strides = [1, 1]} : vector<16x256xf32> to vector<8x256xf32>
    %1351 = vector.broadcast %1349 : f32 to vector<8x256xf32>
    %1352 = arith.mulf %1351, %1350 : vector<8x256xf32>
    %c211_i32 = arith.constant 211 : i32
    %1353 = tpu.dynamic_rotate %12 by %c211_i32 dim 1 : vector<16x256xf32>, i32 -> vector<16x256xf32>
    %c211_i32_273 = arith.constant 211 : i32
    %1354 = tpu.dynamic_rotate %13 by %c211_i32_273 dim 1 : vector<16x256xf32>, i32 -> vector<16x256xf32>
    %c42 = arith.constant 42 : index
    %c0_274 = arith.constant 0 : index
    %1355 = vector.load %arg6[%c42, %c0_274] : memref<49x256xf32, #tpu.memory_space<vmem>>, vector<1x256xf32>
    %1356 = arith.mulf %11, %1353 : vector<16x256xf32>
    %1357 = vector.extract_strided_slice %1356 {offsets = [0, 0], sizes = [8, 256], strides = [1, 1]} : vector<16x256xf32> to vector<8x256xf32>
    %1358 = vector.extract_strided_slice %1356 {offsets = [8, 0], sizes = [8, 256], strides = [1, 1]} : vector<16x256xf32> to vector<8x256xf32>
    %1359 = arith.addf %1357, %1358 : vector<8x256xf32>
    %1360 = vector.broadcast %1355 : vector<1x256xf32> to vector<8x256xf32>
    %1361 = arith.mulf %1359, %1360 : vector<8x256xf32>
    %c0_275 = arith.constant 0 : index
    %c0_276 = arith.constant 0 : index
    %c0_277 = arith.constant 0 : index
    %1362 = vector.load %arg12[%c0_275, %c0_276, %c0_277] : memref<7x8x256xf32, #tpu.memory_space<vmem>>, vector<1x8x256xf32>
    %1363 = vector.shape_cast %1362 : vector<1x8x256xf32> to vector<8x256xf32>
    %1364 = arith.addf %1352, %1363 : vector<8x256xf32>
    %1365 = arith.addf %1361, %1364 : vector<8x256xf32>
    %1366 = arith.maximumf %1332, %1365 : vector<8x256xf32>
    %1367 = arith.subf %1332, %1366 : vector<8x256xf32>
    %1368 = math.exp %1367 : vector<8x256xf32>
    %1369 = arith.subf %1365, %1366 : vector<8x256xf32>
    %1370 = math.exp %1369 : vector<8x256xf32>
    %1371 = arith.mulf %1368, %1338 : vector<8x256xf32>
    %1372 = arith.addf %1371, %1370 : vector<8x256xf32>
    %1373 = vector.broadcast %1355 : vector<1x256xf32> to vector<8x256xf32>
    %1374 = arith.mulf %1370, %1373 : vector<8x256xf32>
    %1375 = arith.mulf %1368, %1344 : vector<8x256xf32>
    %1376 = vector.extract_strided_slice %1354 {offsets = [0, 0], sizes = [8, 256], strides = [1, 1]} : vector<16x256xf32> to vector<8x256xf32>
    %1377 = arith.mulf %1374, %1376 : vector<8x256xf32>
    %1378 = arith.addf %1375, %1377 : vector<8x256xf32>
    %1379 = arith.mulf %1368, %1348 : vector<8x256xf32>
    %1380 = vector.extract_strided_slice %1354 {offsets = [8, 0], sizes = [8, 256], strides = [1, 1]} : vector<16x256xf32> to vector<8x256xf32>
    %1381 = arith.mulf %1374, %1380 : vector<8x256xf32>
    %1382 = arith.addf %1379, %1381 : vector<8x256xf32>
    %c210_i32 = arith.constant 210 : i32
    %1383 = tpu.dynamic_rotate %12 by %c210_i32 dim 1 : vector<16x256xf32>, i32 -> vector<16x256xf32>
    %c210_i32_278 = arith.constant 210 : i32
    %1384 = tpu.dynamic_rotate %13 by %c210_i32_278 dim 1 : vector<16x256xf32>, i32 -> vector<16x256xf32>
    %c43 = arith.constant 43 : index
    %c0_279 = arith.constant 0 : index
    %1385 = vector.load %arg6[%c43, %c0_279] : memref<49x256xf32, #tpu.memory_space<vmem>>, vector<1x256xf32>
    %1386 = arith.mulf %11, %1383 : vector<16x256xf32>
    %1387 = vector.extract_strided_slice %1386 {offsets = [0, 0], sizes = [8, 256], strides = [1, 1]} : vector<16x256xf32> to vector<8x256xf32>
    %1388 = vector.extract_strided_slice %1386 {offsets = [8, 0], sizes = [8, 256], strides = [1, 1]} : vector<16x256xf32> to vector<8x256xf32>
    %1389 = arith.addf %1387, %1388 : vector<8x256xf32>
    %1390 = vector.broadcast %1385 : vector<1x256xf32> to vector<8x256xf32>
    %1391 = arith.mulf %1389, %1390 : vector<8x256xf32>
    %c1_280 = arith.constant 1 : index
    %c0_281 = arith.constant 0 : index
    %c0_282 = arith.constant 0 : index
    %1392 = vector.load %arg12[%c1_280, %c0_281, %c0_282] : memref<7x8x256xf32, #tpu.memory_space<vmem>>, vector<1x8x256xf32>
    %1393 = vector.shape_cast %1392 : vector<1x8x256xf32> to vector<8x256xf32>
    %1394 = arith.addf %1352, %1393 : vector<8x256xf32>
    %1395 = arith.addf %1391, %1394 : vector<8x256xf32>
    %1396 = arith.maximumf %1366, %1395 : vector<8x256xf32>
    %1397 = arith.subf %1366, %1396 : vector<8x256xf32>
    %1398 = math.exp %1397 : vector<8x256xf32>
    %1399 = arith.subf %1395, %1396 : vector<8x256xf32>
    %1400 = math.exp %1399 : vector<8x256xf32>
    %1401 = arith.mulf %1398, %1372 : vector<8x256xf32>
    %1402 = arith.addf %1401, %1400 : vector<8x256xf32>
    %1403 = vector.broadcast %1385 : vector<1x256xf32> to vector<8x256xf32>
    %1404 = arith.mulf %1400, %1403 : vector<8x256xf32>
    %1405 = arith.mulf %1398, %1378 : vector<8x256xf32>
    %1406 = vector.extract_strided_slice %1384 {offsets = [0, 0], sizes = [8, 256], strides = [1, 1]} : vector<16x256xf32> to vector<8x256xf32>
    %1407 = arith.mulf %1404, %1406 : vector<8x256xf32>
    %1408 = arith.addf %1405, %1407 : vector<8x256xf32>
    %1409 = arith.mulf %1398, %1382 : vector<8x256xf32>
    %1410 = vector.extract_strided_slice %1384 {offsets = [8, 0], sizes = [8, 256], strides = [1, 1]} : vector<16x256xf32> to vector<8x256xf32>
    %1411 = arith.mulf %1404, %1410 : vector<8x256xf32>
    %1412 = arith.addf %1409, %1411 : vector<8x256xf32>
    %c209_i32 = arith.constant 209 : i32
    %1413 = tpu.dynamic_rotate %12 by %c209_i32 dim 1 : vector<16x256xf32>, i32 -> vector<16x256xf32>
    %c209_i32_283 = arith.constant 209 : i32
    %1414 = tpu.dynamic_rotate %13 by %c209_i32_283 dim 1 : vector<16x256xf32>, i32 -> vector<16x256xf32>
    %c44 = arith.constant 44 : index
    %c0_284 = arith.constant 0 : index
    %1415 = vector.load %arg6[%c44, %c0_284] : memref<49x256xf32, #tpu.memory_space<vmem>>, vector<1x256xf32>
    %1416 = arith.mulf %11, %1413 : vector<16x256xf32>
    %1417 = vector.extract_strided_slice %1416 {offsets = [0, 0], sizes = [8, 256], strides = [1, 1]} : vector<16x256xf32> to vector<8x256xf32>
    %1418 = vector.extract_strided_slice %1416 {offsets = [8, 0], sizes = [8, 256], strides = [1, 1]} : vector<16x256xf32> to vector<8x256xf32>
    %1419 = arith.addf %1417, %1418 : vector<8x256xf32>
    %1420 = vector.broadcast %1415 : vector<1x256xf32> to vector<8x256xf32>
    %1421 = arith.mulf %1419, %1420 : vector<8x256xf32>
    %c2_285 = arith.constant 2 : index
    %c0_286 = arith.constant 0 : index
    %c0_287 = arith.constant 0 : index
    %1422 = vector.load %arg12[%c2_285, %c0_286, %c0_287] : memref<7x8x256xf32, #tpu.memory_space<vmem>>, vector<1x8x256xf32>
    %1423 = vector.shape_cast %1422 : vector<1x8x256xf32> to vector<8x256xf32>
    %1424 = arith.addf %1352, %1423 : vector<8x256xf32>
    %1425 = arith.addf %1421, %1424 : vector<8x256xf32>
    %1426 = arith.maximumf %1396, %1425 : vector<8x256xf32>
    %1427 = arith.subf %1396, %1426 : vector<8x256xf32>
    %1428 = math.exp %1427 : vector<8x256xf32>
    %1429 = arith.subf %1425, %1426 : vector<8x256xf32>
    %1430 = math.exp %1429 : vector<8x256xf32>
    %1431 = arith.mulf %1428, %1402 : vector<8x256xf32>
    %1432 = arith.addf %1431, %1430 : vector<8x256xf32>
    %1433 = vector.broadcast %1415 : vector<1x256xf32> to vector<8x256xf32>
    %1434 = arith.mulf %1430, %1433 : vector<8x256xf32>
    %1435 = arith.mulf %1428, %1408 : vector<8x256xf32>
    %1436 = vector.extract_strided_slice %1414 {offsets = [0, 0], sizes = [8, 256], strides = [1, 1]} : vector<16x256xf32> to vector<8x256xf32>
    %1437 = arith.mulf %1434, %1436 : vector<8x256xf32>
    %1438 = arith.addf %1435, %1437 : vector<8x256xf32>
    %1439 = arith.mulf %1428, %1412 : vector<8x256xf32>
    %1440 = vector.extract_strided_slice %1414 {offsets = [8, 0], sizes = [8, 256], strides = [1, 1]} : vector<16x256xf32> to vector<8x256xf32>
    %1441 = arith.mulf %1434, %1440 : vector<8x256xf32>
    %1442 = arith.addf %1439, %1441 : vector<8x256xf32>
    %c208_i32 = arith.constant 208 : i32
    %1443 = tpu.dynamic_rotate %12 by %c208_i32 dim 1 : vector<16x256xf32>, i32 -> vector<16x256xf32>
    %c208_i32_288 = arith.constant 208 : i32
    %1444 = tpu.dynamic_rotate %13 by %c208_i32_288 dim 1 : vector<16x256xf32>, i32 -> vector<16x256xf32>
    %c45 = arith.constant 45 : index
    %c0_289 = arith.constant 0 : index
    %1445 = vector.load %arg6[%c45, %c0_289] : memref<49x256xf32, #tpu.memory_space<vmem>>, vector<1x256xf32>
    %1446 = arith.mulf %11, %1443 : vector<16x256xf32>
    %1447 = vector.extract_strided_slice %1446 {offsets = [0, 0], sizes = [8, 256], strides = [1, 1]} : vector<16x256xf32> to vector<8x256xf32>
    %1448 = vector.extract_strided_slice %1446 {offsets = [8, 0], sizes = [8, 256], strides = [1, 1]} : vector<16x256xf32> to vector<8x256xf32>
    %1449 = arith.addf %1447, %1448 : vector<8x256xf32>
    %1450 = vector.broadcast %1445 : vector<1x256xf32> to vector<8x256xf32>
    %1451 = arith.mulf %1449, %1450 : vector<8x256xf32>
    %c3_290 = arith.constant 3 : index
    %c0_291 = arith.constant 0 : index
    %c0_292 = arith.constant 0 : index
    %1452 = vector.load %arg12[%c3_290, %c0_291, %c0_292] : memref<7x8x256xf32, #tpu.memory_space<vmem>>, vector<1x8x256xf32>
    %1453 = vector.shape_cast %1452 : vector<1x8x256xf32> to vector<8x256xf32>
    %1454 = arith.addf %1352, %1453 : vector<8x256xf32>
    %1455 = arith.addf %1451, %1454 : vector<8x256xf32>
    %1456 = arith.maximumf %1426, %1455 : vector<8x256xf32>
    %1457 = arith.subf %1426, %1456 : vector<8x256xf32>
    %1458 = math.exp %1457 : vector<8x256xf32>
    %1459 = arith.subf %1455, %1456 : vector<8x256xf32>
    %1460 = math.exp %1459 : vector<8x256xf32>
    %1461 = arith.mulf %1458, %1432 : vector<8x256xf32>
    %1462 = arith.addf %1461, %1460 : vector<8x256xf32>
    %1463 = vector.broadcast %1445 : vector<1x256xf32> to vector<8x256xf32>
    %1464 = arith.mulf %1460, %1463 : vector<8x256xf32>
    %1465 = arith.mulf %1458, %1438 : vector<8x256xf32>
    %1466 = vector.extract_strided_slice %1444 {offsets = [0, 0], sizes = [8, 256], strides = [1, 1]} : vector<16x256xf32> to vector<8x256xf32>
    %1467 = arith.mulf %1464, %1466 : vector<8x256xf32>
    %1468 = arith.addf %1465, %1467 : vector<8x256xf32>
    %1469 = arith.mulf %1458, %1442 : vector<8x256xf32>
    %1470 = vector.extract_strided_slice %1444 {offsets = [8, 0], sizes = [8, 256], strides = [1, 1]} : vector<16x256xf32> to vector<8x256xf32>
    %1471 = arith.mulf %1464, %1470 : vector<8x256xf32>
    %1472 = arith.addf %1469, %1471 : vector<8x256xf32>
    %c207_i32 = arith.constant 207 : i32
    %1473 = tpu.dynamic_rotate %12 by %c207_i32 dim 1 : vector<16x256xf32>, i32 -> vector<16x256xf32>
    %c207_i32_293 = arith.constant 207 : i32
    %1474 = tpu.dynamic_rotate %13 by %c207_i32_293 dim 1 : vector<16x256xf32>, i32 -> vector<16x256xf32>
    %c46 = arith.constant 46 : index
    %c0_294 = arith.constant 0 : index
    %1475 = vector.load %arg6[%c46, %c0_294] : memref<49x256xf32, #tpu.memory_space<vmem>>, vector<1x256xf32>
    %1476 = arith.mulf %11, %1473 : vector<16x256xf32>
    %1477 = vector.extract_strided_slice %1476 {offsets = [0, 0], sizes = [8, 256], strides = [1, 1]} : vector<16x256xf32> to vector<8x256xf32>
    %1478 = vector.extract_strided_slice %1476 {offsets = [8, 0], sizes = [8, 256], strides = [1, 1]} : vector<16x256xf32> to vector<8x256xf32>
    %1479 = arith.addf %1477, %1478 : vector<8x256xf32>
    %1480 = vector.broadcast %1475 : vector<1x256xf32> to vector<8x256xf32>
    %1481 = arith.mulf %1479, %1480 : vector<8x256xf32>
    %c4_295 = arith.constant 4 : index
    %c0_296 = arith.constant 0 : index
    %c0_297 = arith.constant 0 : index
    %1482 = vector.load %arg12[%c4_295, %c0_296, %c0_297] : memref<7x8x256xf32, #tpu.memory_space<vmem>>, vector<1x8x256xf32>
    %1483 = vector.shape_cast %1482 : vector<1x8x256xf32> to vector<8x256xf32>
    %1484 = arith.addf %1352, %1483 : vector<8x256xf32>
    %1485 = arith.addf %1481, %1484 : vector<8x256xf32>
    %1486 = arith.maximumf %1456, %1485 : vector<8x256xf32>
    %1487 = arith.subf %1456, %1486 : vector<8x256xf32>
    %1488 = math.exp %1487 : vector<8x256xf32>
    %1489 = arith.subf %1485, %1486 : vector<8x256xf32>
    %1490 = math.exp %1489 : vector<8x256xf32>
    %1491 = arith.mulf %1488, %1462 : vector<8x256xf32>
    %1492 = arith.addf %1491, %1490 : vector<8x256xf32>
    %1493 = vector.broadcast %1475 : vector<1x256xf32> to vector<8x256xf32>
    %1494 = arith.mulf %1490, %1493 : vector<8x256xf32>
    %1495 = arith.mulf %1488, %1468 : vector<8x256xf32>
    %1496 = vector.extract_strided_slice %1474 {offsets = [0, 0], sizes = [8, 256], strides = [1, 1]} : vector<16x256xf32> to vector<8x256xf32>
    %1497 = arith.mulf %1494, %1496 : vector<8x256xf32>
    %1498 = arith.addf %1495, %1497 : vector<8x256xf32>
    %1499 = arith.mulf %1488, %1472 : vector<8x256xf32>
    %1500 = vector.extract_strided_slice %1474 {offsets = [8, 0], sizes = [8, 256], strides = [1, 1]} : vector<16x256xf32> to vector<8x256xf32>
    %1501 = arith.mulf %1494, %1500 : vector<8x256xf32>
    %1502 = arith.addf %1499, %1501 : vector<8x256xf32>
    %c206_i32 = arith.constant 206 : i32
    %1503 = tpu.dynamic_rotate %12 by %c206_i32 dim 1 : vector<16x256xf32>, i32 -> vector<16x256xf32>
    %c206_i32_298 = arith.constant 206 : i32
    %1504 = tpu.dynamic_rotate %13 by %c206_i32_298 dim 1 : vector<16x256xf32>, i32 -> vector<16x256xf32>
    %c47 = arith.constant 47 : index
    %c0_299 = arith.constant 0 : index
    %1505 = vector.load %arg6[%c47, %c0_299] : memref<49x256xf32, #tpu.memory_space<vmem>>, vector<1x256xf32>
    %1506 = arith.mulf %11, %1503 : vector<16x256xf32>
    %1507 = vector.extract_strided_slice %1506 {offsets = [0, 0], sizes = [8, 256], strides = [1, 1]} : vector<16x256xf32> to vector<8x256xf32>
    %1508 = vector.extract_strided_slice %1506 {offsets = [8, 0], sizes = [8, 256], strides = [1, 1]} : vector<16x256xf32> to vector<8x256xf32>
    %1509 = arith.addf %1507, %1508 : vector<8x256xf32>
    %1510 = vector.broadcast %1505 : vector<1x256xf32> to vector<8x256xf32>
    %1511 = arith.mulf %1509, %1510 : vector<8x256xf32>
    %c5_300 = arith.constant 5 : index
    %c0_301 = arith.constant 0 : index
    %c0_302 = arith.constant 0 : index
    %1512 = vector.load %arg12[%c5_300, %c0_301, %c0_302] : memref<7x8x256xf32, #tpu.memory_space<vmem>>, vector<1x8x256xf32>
    %1513 = vector.shape_cast %1512 : vector<1x8x256xf32> to vector<8x256xf32>
    %1514 = arith.addf %1352, %1513 : vector<8x256xf32>
    %1515 = arith.addf %1511, %1514 : vector<8x256xf32>
    %1516 = arith.maximumf %1486, %1515 : vector<8x256xf32>
    %1517 = arith.subf %1486, %1516 : vector<8x256xf32>
    %1518 = math.exp %1517 : vector<8x256xf32>
    %1519 = arith.subf %1515, %1516 : vector<8x256xf32>
    %1520 = math.exp %1519 : vector<8x256xf32>
    %1521 = arith.mulf %1518, %1492 : vector<8x256xf32>
    %1522 = arith.addf %1521, %1520 : vector<8x256xf32>
    %1523 = vector.broadcast %1505 : vector<1x256xf32> to vector<8x256xf32>
    %1524 = arith.mulf %1520, %1523 : vector<8x256xf32>
    %1525 = arith.mulf %1518, %1498 : vector<8x256xf32>
    %1526 = vector.extract_strided_slice %1504 {offsets = [0, 0], sizes = [8, 256], strides = [1, 1]} : vector<16x256xf32> to vector<8x256xf32>
    %1527 = arith.mulf %1524, %1526 : vector<8x256xf32>
    %1528 = arith.addf %1525, %1527 : vector<8x256xf32>
    %1529 = arith.mulf %1518, %1502 : vector<8x256xf32>
    %1530 = vector.extract_strided_slice %1504 {offsets = [8, 0], sizes = [8, 256], strides = [1, 1]} : vector<16x256xf32> to vector<8x256xf32>
    %1531 = arith.mulf %1524, %1530 : vector<8x256xf32>
    %1532 = arith.addf %1529, %1531 : vector<8x256xf32>
    %c205_i32 = arith.constant 205 : i32
    %1533 = tpu.dynamic_rotate %12 by %c205_i32 dim 1 : vector<16x256xf32>, i32 -> vector<16x256xf32>
    %c205_i32_303 = arith.constant 205 : i32
    %1534 = tpu.dynamic_rotate %13 by %c205_i32_303 dim 1 : vector<16x256xf32>, i32 -> vector<16x256xf32>
    %c48 = arith.constant 48 : index
    %c0_304 = arith.constant 0 : index
    %1535 = vector.load %arg6[%c48, %c0_304] : memref<49x256xf32, #tpu.memory_space<vmem>>, vector<1x256xf32>
    %1536 = arith.mulf %11, %1533 : vector<16x256xf32>
    %1537 = vector.extract_strided_slice %1536 {offsets = [0, 0], sizes = [8, 256], strides = [1, 1]} : vector<16x256xf32> to vector<8x256xf32>
    %1538 = vector.extract_strided_slice %1536 {offsets = [8, 0], sizes = [8, 256], strides = [1, 1]} : vector<16x256xf32> to vector<8x256xf32>
    %1539 = arith.addf %1537, %1538 : vector<8x256xf32>
    %1540 = vector.broadcast %1535 : vector<1x256xf32> to vector<8x256xf32>
    %1541 = arith.mulf %1539, %1540 : vector<8x256xf32>
    %c6_305 = arith.constant 6 : index
    %c0_306 = arith.constant 0 : index
    %c0_307 = arith.constant 0 : index
    %1542 = vector.load %arg12[%c6_305, %c0_306, %c0_307] : memref<7x8x256xf32, #tpu.memory_space<vmem>>, vector<1x8x256xf32>
    %1543 = vector.shape_cast %1542 : vector<1x8x256xf32> to vector<8x256xf32>
    %1544 = arith.addf %1352, %1543 : vector<8x256xf32>
    %1545 = arith.addf %1541, %1544 : vector<8x256xf32>
    %1546 = arith.maximumf %1516, %1545 : vector<8x256xf32>
    %1547 = arith.subf %1516, %1546 : vector<8x256xf32>
    %1548 = math.exp %1547 : vector<8x256xf32>
    %1549 = arith.subf %1545, %1546 : vector<8x256xf32>
    %1550 = math.exp %1549 : vector<8x256xf32>
    %1551 = arith.mulf %1548, %1522 : vector<8x256xf32>
    %1552 = arith.addf %1551, %1550 : vector<8x256xf32>
    %1553 = vector.broadcast %1535 : vector<1x256xf32> to vector<8x256xf32>
    %1554 = arith.mulf %1550, %1553 : vector<8x256xf32>
    %1555 = arith.mulf %1548, %1528 : vector<8x256xf32>
    %1556 = vector.extract_strided_slice %1534 {offsets = [0, 0], sizes = [8, 256], strides = [1, 1]} : vector<16x256xf32> to vector<8x256xf32>
    %1557 = arith.mulf %1554, %1556 : vector<8x256xf32>
    %1558 = arith.addf %1555, %1557 : vector<8x256xf32>
    %1559 = arith.mulf %1548, %1532 : vector<8x256xf32>
    %1560 = vector.extract_strided_slice %1534 {offsets = [8, 0], sizes = [8, 256], strides = [1, 1]} : vector<16x256xf32> to vector<8x256xf32>
    %1561 = arith.mulf %1554, %1560 : vector<8x256xf32>
    %1562 = arith.addf %1559, %1561 : vector<8x256xf32>
    %1563 = tpu.reciprocal %1552 : vector<8x256xf32> -> vector<8x256xf32>
    %1564 = arith.mulf %1558, %1563 : vector<8x256xf32>
    %1565 = arith.mulf %1562, %1563 : vector<8x256xf32>
    %1566 = tpu.concatenate %1564, %1565 in 0 : vector<8x256xf32>, vector<8x256xf32> -> vector<16x256xf32>
    %c0_308 = arith.constant 0 : index
    %c0_309 = arith.constant 0 : index
    %1567 = vector.load %arg7[%c0_308, %c0_309] : memref<16x1xf32, #tpu.memory_space<vmem>>, vector<16x1xf32>
    %1568 = vector.broadcast %1567 : vector<16x1xf32> to vector<16x256xf32>
    %1569 = arith.mulf %1566, %1568 : vector<16x256xf32>
    %c0_310 = arith.constant 0 : index
    %c0_311 = arith.constant 0 : index
    %1570 = vector.load %arg8[%c0_310, %c0_311] : memref<16x1xf32, #tpu.memory_space<vmem>>, vector<16x1xf32>
    %1571 = vector.broadcast %1570 : vector<16x1xf32> to vector<16x256xf32>
    %1572 = arith.addf %1569, %1571 : vector<16x256xf32>
    %cst_312 = arith.constant 0.000000e+00 : f32
    %1573 = vector.broadcast %cst_312 : f32 to vector<16x256xf32>
    %1574 = arith.maximumf %1572, %1573 : vector<16x256xf32>
    %c0_313 = arith.constant 0 : index
    %c0_314 = arith.constant 0 : index
    %1575 = vector.load %arg9[%c0_313, %c0_314] : memref<64x16xf32, #tpu.memory_space<vmem>>, vector<64x16xf32>
    %cst_315 = arith.constant dense<0.000000e+00> : vector<64x256xf32>
    %1576 = tpu.matmul %1575, %1574, %cst_315 {dimension_numbers = #tpu.dot_dimension_numbers<[1], [0], [0], [1], [0, 0, 1, 1], [], []>} : vector<64x16xf32>, vector<16x256xf32>, vector<64x256xf32> -> vector<64x256xf32>
    %c0_316 = arith.constant 0 : index
    %c0_317 = arith.constant 0 : index
    %1577 = vector.load %arg10[%c0_316, %c0_317] : memref<64x1xf32, #tpu.memory_space<vmem>>, vector<64x1xf32>
    %1578 = vector.broadcast %1577 : vector<64x1xf32> to vector<64x256xf32>
    %1579 = arith.addf %1576, %1578 : vector<64x256xf32>
    %1580 = arith.addf %1579, %1 : vector<64x256xf32>
    %cst_318 = arith.constant 0.000000e+00 : f32
    %1581 = vector.broadcast %cst_318 : f32 to vector<64x256xf32>
    %1582 = arith.maximumf %1580, %1581 : vector<64x256xf32>
    %c0_319 = arith.constant 0 : index
    %c0_320 = arith.constant 0 : index
    %c0_321 = arith.constant 0 : index
    %1583 = vector.load %arg11[%c0_319, %c0_320, %c0_321] : memref<1x64x256xf32, #tpu.memory_space<vmem>>, vector<1x64x256xf32>
    %1584 = vector.shape_cast %1583 : vector<1x64x256xf32> to vector<64x256xf32>
    %1585 = vector.shape_cast %1582 : vector<64x256xf32> to vector<1x64x256xf32>
    tpu.vector_store %arg11[%c0_319, %c0_320, %c0_321], %1585 {strides = array<i32>} : memref<1x64x256xf32, #tpu.memory_space<vmem>>, vector<1x64x256xf32>,
    return
  }
  func.func @transform_0(%arg0: i32) -> (i32, i32, i32) {
    %c0_i32 = arith.constant 0 : i32
    %c0_i32_0 = arith.constant 0 : i32
    %c0_i32_1 = arith.constant 0 : i32
    return %arg0, %c0_i32, %c0_i32_0 : i32, i32, i32
  }
  func.func @transform_1(%arg0: i32) -> (i32, i32) {
    %c0_i32 = arith.constant 0 : i32
    %c0_i32_0 = arith.constant 0 : i32
    %c0_i32_1 = arith.constant 0 : i32
    return %c0_i32, %c0_i32_0 : i32, i32
  }
  func.func @transform_2(%arg0: i32) -> (i32, i32) {
    %c0_i32 = arith.constant 0 : i32
    %c0_i32_0 = arith.constant 0 : i32
    %c0_i32_1 = arith.constant 0 : i32
    return %c0_i32, %c0_i32_0 : i32, i32
  }
  func.func @transform_3(%arg0: i32) -> (i32, i32) {
    %c0_i32 = arith.constant 0 : i32
    %c0_i32_0 = arith.constant 0 : i32
    %c0_i32_1 = arith.constant 0 : i32
    return %c0_i32, %c0_i32_0 : i32, i32
  }
  func.func @transform_4(%arg0: i32) -> (i32, i32) {
    %c0_i32 = arith.constant 0 : i32
    %c0_i32_0 = arith.constant 0 : i32
    %c0_i32_1 = arith.constant 0 : i32
    return %c0_i32, %c0_i32_0 : i32, i32
  }
  func.func @transform_5(%arg0: i32) -> (i32, i32) {
    %c0_i32 = arith.constant 0 : i32
    %c0_i32_0 = arith.constant 0 : i32
    %c0_i32_1 = arith.constant 0 : i32
    return %c0_i32, %c0_i32_0 : i32, i32
  }
  func.func @transform_6(%arg0: i32) -> (i32, i32) {
    %c0_i32 = arith.constant 0 : i32
    %c0_i32_0 = arith.constant 0 : i32
    %c0_i32_1 = arith.constant 0 : i32
    return %c0_i32, %c0_i32_0 : i32, i32
  }
  func.func @transform_7(%arg0: i32) -> (i32, i32) {
    %c0_i32 = arith.constant 0 : i32
    %c0_i32_0 = arith.constant 0 : i32
    %c0_i32_1 = arith.constant 0 : i32
    return %c0_i32, %c0_i32_0 : i32, i32
  }
  func.func @transform_8(%arg0: i32) -> (i32, i32) {
    %c0_i32 = arith.constant 0 : i32
    %c0_i32_0 = arith.constant 0 : i32
    %c0_i32_1 = arith.constant 0 : i32
    return %c0_i32, %c0_i32_0 : i32, i32
  }
  func.func @transform_9(%arg0: i32) -> (i32, i32) {
    %c0_i32 = arith.constant 0 : i32
    %c0_i32_0 = arith.constant 0 : i32
    %c0_i32_1 = arith.constant 0 : i32
    return %c0_i32, %c0_i32_0 : i32, i32
  }
  func.func @transform_10(%arg0: i32) -> (i32, i32, i32) {
    %c0_i32 = arith.constant 0 : i32
    %c0_i32_0 = arith.constant 0 : i32
    %c0_i32_1 = arith.constant 0 : i32
    return %arg0, %c0_i32, %c0_i32_0 : i32, i32, i32
  }
}

</mosaic_0001>

<llo_original>
// kernel: tpu_custom_call.1
$region0: #{tpu_custom_call.1}
  #allocation0 [shape = 'u32[]', space=smem, size = 0x4, offset = 0x4, fixed_abs, tag = 'smem constant byte address 0x4 - core index']
  #allocation1 [shape = 'u32[144,128]{1,0:T(1,128)}', space=vmem, size = 0x12000, scoped, tag = 'internal scratch']
  #allocation2 [shape = 'f32[7,8,256]{2,1,0:T(8,128)}', space=vmem, size = 0xe000, scoped, tag = 'scratch operand']
  %s0 = inlined_call_operand.vmem [shape: f32[2,64,256], index: 0, kind: input, shape index: {}]
  %s1 = inlined_call_operand.hbm [shape: f32[16,64], index: 1, kind: input, shape index: {}]
  %s2 = inlined_call_operand.vmem [shape: f32[16,1], index: 2, kind: input, shape index: {}]
  %s3 = inlined_call_operand.vmem [shape: f32[48,16], index: 3, kind: input, shape index: {}]
  %s4 = inlined_call_operand.vmem [shape: f32[2,7], index: 4, kind: input, shape index: {}]
  %s5 = inlined_call_operand.hbm [shape: f32[49,256], index: 5, kind: input, shape index: {}]
  %s6 = inlined_call_operand.vmem [shape: f32[16,1], index: 6, kind: input, shape index: {}]
  %s7 = inlined_call_operand.vmem [shape: f32[16,1], index: 7, kind: input, shape index: {}]
  %s8 = inlined_call_operand.vmem [shape: f32[64,16], index: 8, kind: input, shape index: {}]
  %s9 = inlined_call_operand.vmem [shape: f32[64,1], index: 9, kind: input, shape index: {}]
  %s10 = inlined_call_operand.hbm [shape: f32[2,64,256], index: 10, kind: output, shape index: {}]
  %s11 = sld [smem:[#allocation0]]
  $region85: #{tpu_custom_call.1} parent=0
    _
  %s13 = ssub.s32 1, %s11
  %s14 = scalar_select 0, %s13, %s11
  $region1: #{tpu_custom_call.1} parent=0
    #allocation3 [shape = 'u8[8192]{0}', space=vmem, size = 0x2000, scoped, tag = 'input window, operand 1, single buffered']
    #allocation4 [shape = 's32[2]{0}', space=sflag, size = 0x8, scoped, tag = 'scoped memory for tpu_custom_call.1']
    #allocation5 [shape = 's32[2]{0}', space=sflag, size = 0x8, scoped, tag = 'scoped memory for tpu_custom_call.1']
    #allocation6 [shape = 's32[2]{0}', space=sflag, size = 0x8, scoped, tag = 'scoped memory for tpu_custom_call.1']
    #allocation7 [shape = 'u8[1024]{0}', space=smem, size = 0x400, scoped, tag = 'input window, operand 4, single buffered']
    #allocation8 [shape = 'u8[57344]{0}', space=vmem, size = 0xe000, scoped, tag = 'input window, operand 5, single buffered']
    #allocation9 [shape = 's32[1]{0}', space=sflag, size = 0x4, scoped, tag = 'scoped memory for tpu_custom_call.1']
    #allocation10 [shape = 'u8[131072]{0}', space=vmem, size = 0x20000, scoped, tag = 'output window, operand 0']
    %15 = vsyncpa [#allocation4], 0
    %16 = vsyncpa [#allocation6], 0
    %17 = vsyncpa [#allocation9], 0
    %18 = vsyncpa [#allocation5], 0
    %s19 = scalar_lea.sflag [#allocation5], 1
    %20 = vsyncpa %s19, 0
    loop: start=0, step=1, limit=4
    $region2: #{tpu_custom_call.1} parent=1 // loop_pre_header
      _
    $region3: #{tpu_custom_call.1} parent=1 // loop_header
      %s22 = sphi 0, %s26
      %p23 = scmp.ge.s32.totalorder %s22, 4
      %s32 = sphi 0, %s34
      %s35 = sphi 0, %s32
      %s36 = sphi 0, %s35
      %s52 = sphi 0, %s36
      %s56 = sphi 0, %s56
      %s58 = sphi 0, %s56
      %s59 = sphi 0, %s58
      %s73 = sphi 0, %s59
      %s77 = sphi 0, %s77
      %s79 = sphi 0, %s77
      %s80 = sphi 0, %s79
      %s94 = sphi 0, %s80
      %s98 = sphi 0, %s98
      %s100 = sphi 0, %s98
      %s101 = sphi 0, %s100
      %s115 = sphi 0, %s101
      %s119 = sphi 0, %s119
      %s121 = sphi 0, %s119
      %s122 = sphi 0, %s121
      %s136 = sphi 0, %s122
      %s140 = sphi 0, %s140
      %s142 = sphi 0, %s140
      %s143 = sphi 0, %s142
      %s157 = sphi 0, %s143
      %s161 = sphi 0, %s161
      %s163 = sphi 0, %s161
      %s164 = sphi 0, %s163
      %s178 = sphi 0, %s164
      %s182 = sphi 0, %s182
      %s184 = sphi 0, %s182
      %s185 = sphi 0, %s184
      %s199 = sphi 0, %s185
      %s203 = sphi 0, %s203
      %s205 = sphi 0, %s203
      %s206 = sphi 0, %s205
      %s220 = sphi 0, %s206
      %s224 = sphi 0, %s224
      %s226 = sphi 0, %s224
      %s227 = sphi 0, %s226
      %s241 = sphi 0, %s227
      %s247 = sphi 0, %s249
      %s250 = sphi 0, %s247
      %s251 = sphi 0, %s250
      %s267 = sphi 0, %s251
    $region4: #{tpu_custom_call.1} parent=1 // loop_header_branch
      %25 = sbr.rel (%p23) target = $region8
    $region5: #{tpu_custom_call.1} parent=1 // loop_body
      %s27 = ssub.s32 %s22, 1
      %s28 = ssub.s32 %s22, 2
      %s29 = sadd.s32 %s22, 1
      %s30 = ssub.s32 %s22, %s29
      %p31 = scmp.eq.s32.totalorder %s30, 0
      %s33 = sadd.s32 %s32, 1
      %s34 = scalar_select %p31, %s32, %s33
      %p37 = pneg %p31
      %p38 = scmp.eq.s32.totalorder %s22, 1
      %p39 = por %p37, %p38
      %p40 = scmp.ne.s32.totalorder %s32, %s35
      %p41 = scmp.eq.s32.totalorder %s22, 0
      %p42 = por %p40, %p41
      %p43 = scmp.ne.s32.totalorder %s32, %s35
      %p44 = scmp.eq.s32.totalorder %s27, 1
      %p45 = por %p43, %p44
      %p46 = scmp.ne.s32.totalorder %s35, %s36
      %p47 = scmp.eq.s32.totalorder %s27, 0
      %p48 = por %p46, %p47
      %p49 = scmp.ne.s32.totalorder %s35, %s36
      %p50 = scmp.eq.s32.totalorder %s28, 1
      %p51 = por %p49, %p50
      %p53 = scmp.ne.s32.totalorder %s36, %s52
      %p54 = scmp.eq.s32.totalorder %s28, 0
      %p55 = por %p53, %p54
      %s57 = sadd.s32 %s56, 1
      %p60 = scmp.eq.s32.totalorder %s22, 1
      %p61 = scmp.ne.s32.totalorder %s56, %s58
      %p62 = scmp.eq.s32.totalorder %s22, 0
      %p63 = por %p61, %p62
      %p64 = scmp.ne.s32.totalorder %s56, %s58
      %p65 = scmp.eq.s32.totalorder %s27, 1
      %p66 = por %p64, %p65
      %p67 = scmp.ne.s32.totalorder %s58, %s59
      %p68 = scmp.eq.s32.totalorder %s27, 0
      %p69 = por %p67, %p68
      %p70 = scmp.ne.s32.totalorder %s58, %s59
      %p71 = scmp.eq.s32.totalorder %s28, 1
      %p72 = por %p70, %p71
      %p74 = scmp.ne.s32.totalorder %s59, %s73
      %p75 = scmp.eq.s32.totalorder %s28, 0
      %p76 = por %p74, %p75
      %s78 = sadd.s32 %s77, 1
      %p81 = scmp.eq.s32.totalorder %s22, 1
      %p82 = scmp.ne.s32.totalorder %s77, %s79
      %p83 = scmp.eq.s32.totalorder %s22, 0
      %p84 = por %p82, %p83
      %p85 = scmp.ne.s32.totalorder %s77, %s79
      %p86 = scmp.eq.s32.totalorder %s27, 1
      %p87 = por %p85, %p86
      %p88 = scmp.ne.s32.totalorder %s79, %s80
      %p89 = scmp.eq.s32.totalorder %s27, 0
      %p90 = por %p88, %p89
      %p91 = scmp.ne.s32.totalorder %s79, %s80
      %p92 = scmp.eq.s32.totalorder %s28, 1
      %p93 = por %p91, %p92
      %p95 = scmp.ne.s32.totalorder %s80, %s94
      %p96 = scmp.eq.s32.totalorder %s28, 0
      %p97 = por %p95, %p96
      %s99 = sadd.s32 %s98, 1
      %p102 = scmp.eq.s32.totalorder %s22, 1
      %p103 = scmp.ne.s32.totalorder %s98, %s100
      %p104 = scmp.eq.s32.totalorder %s22, 0
      %p105 = por %p103, %p104
      %p106 = scmp.ne.s32.totalorder %s98, %s100
      %p107 = scmp.eq.s32.totalorder %s27, 1
      %p108 = por %p106, %p107
      %p109 = scmp.ne.s32.totalorder %s100, %s101
      %p110 = scmp.eq.s32.totalorder %s27, 0
      %p111 = por %p109, %p110
      %p112 = scmp.ne.s32.totalorder %s100, %s101
      %p113 = scmp.eq.s32.totalorder %s28, 1
      %p114 = por %p112, %p113
      %p116 = scmp.ne.s32.totalorder %s101, %s115
      %p117 = scmp.eq.s32.totalorder %s28, 0
      %p118 = por %p116, %p117
      %s120 = sadd.s32 %s119, 1
      %p123 = scmp.eq.s32.totalorder %s22, 1
      %p124 = scmp.ne.s32.totalorder %s119, %s121
      %p125 = scmp.eq.s32.totalorder %s22, 0
      %p126 = por %p124, %p125
      %p127 = scmp.ne.s32.totalorder %s119, %s121
      %p128 = scmp.eq.s32.totalorder %s27, 1
      %p129 = por %p127, %p128
      %p130 = scmp.ne.s32.totalorder %s121, %s122
      %p131 = scmp.eq.s32.totalorder %s27, 0
      %p132 = por %p130, %p131
      %p133 = scmp.ne.s32.totalorder %s121, %s122
      %p134 = scmp.eq.s32.totalorder %s28, 1
      %p135 = por %p133, %p134
      %p137 = scmp.ne.s32.totalorder %s122, %s136
      %p138 = scmp.eq.s32.totalorder %s28, 0
      %p139 = por %p137, %p138
      %s141 = sadd.s32 %s140, 1
      %p144 = scmp.eq.s32.totalorder %s22, 1
      %p145 = scmp.ne.s32.totalorder %s140, %s142
      %p146 = scmp.eq.s32.totalorder %s22, 0
      %p147 = por %p145, %p146
      %p148 = scmp.ne.s32.totalorder %s140, %s142
      %p149 = scmp.eq.s32.totalorder %s27, 1
      %p150 = por %p148, %p149
      %p151 = scmp.ne.s32.totalorder %s142, %s143
      %p152 = scmp.eq.s32.totalorder %s27, 0
      %p153 = por %p151, %p152
      %p154 = scmp.ne.s32.totalorder %s142, %s143
      %p155 = scmp.eq.s32.totalorder %s28, 1
      %p156 = por %p154, %p155
      %p158 = scmp.ne.s32.totalorder %s143, %s157
      %p159 = scmp.eq.s32.totalorder %s28, 0
      %p160 = por %p158, %p159
      %s162 = sadd.s32 %s161, 1
      %p165 = scmp.eq.s32.totalorder %s22, 1
      %p166 = scmp.ne.s32.totalorder %s161, %s163
      %p167 = scmp.eq.s32.totalorder %s22, 0
      %p168 = por %p166, %p167
      %p169 = scmp.ne.s32.totalorder %s161, %s163
      %p170 = scmp.eq.s32.totalorder %s27, 1
      %p171 = por %p169, %p170
      %p172 = scmp.ne.s32.totalorder %s163, %s164
      %p173 = scmp.eq.s32.totalorder %s27, 0
      %p174 = por %p172, %p173
      %p175 = scmp.ne.s32.totalorder %s163, %s164
      %p176 = scmp.eq.s32.totalorder %s28, 1
      %p177 = por %p175, %p176
      %p179 = scmp.ne.s32.totalorder %s164, %s178
      %p180 = scmp.eq.s32.totalorder %s28, 0
      %p181 = por %p179, %p180
      %s183 = sadd.s32 %s182, 1
      %p186 = scmp.eq.s32.totalorder %s22, 1
      %p187 = scmp.ne.s32.totalorder %s182, %s184
      %p188 = scmp.eq.s32.totalorder %s22, 0
      %p189 = por %p187, %p188
      %p190 = scmp.ne.s32.totalorder %s182, %s184
      %p191 = scmp.eq.s32.totalorder %s27, 1
      %p192 = por %p190, %p191
      %p193 = scmp.ne.s32.totalorder %s184, %s185
      %p194 = scmp.eq.s32.totalorder %s27, 0
      %p195 = por %p193, %p194
      %p196 = scmp.ne.s32.totalorder %s184, %s185
      %p197 = scmp.eq.s32.totalorder %s28, 1
      %p198 = por %p196, %p197
      %p200 = scmp.ne.s32.totalorder %s185, %s199
      %p201 = scmp.eq.s32.totalorder %s28, 0
      %p202 = por %p200, %p201
      %s204 = sadd.s32 %s203, 1
      %p207 = scmp.eq.s32.totalorder %s22, 1
      %p208 = scmp.ne.s32.totalorder %s203, %s205
      %p209 = scmp.eq.s32.totalorder %s22, 0
      %p210 = por %p208, %p209
      %p211 = scmp.ne.s32.totalorder %s203, %s205
      %p212 = scmp.eq.s32.totalorder %s27, 1
      %p213 = por %p211, %p212
      %p214 = scmp.ne.s32.totalorder %s205, %s206
      %p215 = scmp.eq.s32.totalorder %s27, 0
      %p216 = por %p214, %p215
      %p217 = scmp.ne.s32.totalorder %s205, %s206
      %p218 = scmp.eq.s32.totalorder %s28, 1
      %p219 = por %p217, %p218
      %p221 = scmp.ne.s32.totalorder %s206, %s220
      %p222 = scmp.eq.s32.totalorder %s28, 0
      %p223 = por %p221, %p222
      %s225 = sadd.s32 %s224, 1
      %p228 = scmp.eq.s32.totalorder %s22, 1
      %p229 = scmp.ne.s32.totalorder %s224, %s226
      %p230 = scmp.eq.s32.totalorder %s22, 0
      %p231 = por %p229, %p230
      %p232 = scmp.ne.s32.totalorder %s224, %s226
      %p233 = scmp.eq.s32.totalorder %s27, 1
      %p234 = por %p232, %p233
      %p235 = scmp.ne.s32.totalorder %s226, %s227
      %p236 = scmp.eq.s32.totalorder %s27, 0
      %p237 = por %p235, %p236
      %p238 = scmp.ne.s32.totalorder %s226, %s227
      %p239 = scmp.eq.s32.totalorder %s28, 1
      %p240 = por %p238, %p239
      %p242 = scmp.ne.s32.totalorder %s227, %s241
      %p243 = scmp.eq.s32.totalorder %s28, 0
      %p244 = por %p242, %p243
      %s245 = ssub.s32 %s22, %s29
      %p246 = scmp.eq.s32.totalorder %s245, 0
      %s248 = sadd.s32 %s247, 1
      %s249 = scalar_select %p246, %s247, %s248
      %p252 = pneg %p246
      %p253 = scmp.eq.s32.totalorder %s22, 1
      %p254 = por %p252, %p253
      %p255 = scmp.ne.s32.totalorder %s247, %s250
      %p256 = scmp.eq.s32.totalorder %s22, 0
      %p257 = por %p255, %p256
      %p258 = scmp.ne.s32.totalorder %s247, %s250
      %p259 = scmp.eq.s32.totalorder %s27, 1
      %p260 = por %p258, %p259
      %p261 = scmp.ne.s32.totalorder %s250, %s251
      %p262 = scmp.eq.s32.totalorder %s27, 0
      %p263 = por %p261, %p262
      %p264 = scmp.ne.s32.totalorder %s250, %s251
      %p265 = scmp.eq.s32.totalorder %s28, 1
      %p266 = por %p264, %p265
      %p268 = scmp.ne.s32.totalorder %s251, %s267
      %p269 = scmp.eq.s32.totalorder %s28, 0
      %p270 = por %p268, %p269
      %p271 = scmp.le.s32.totalorder 1, %s22
      %p272 = scmp.lt.s32.totalorder %s22, 3
      %p273 = pnand %p271, %p272
      %p274 = pneg %p273
      // Predicated region
      $region9: #{tpu_custom_call.1} parent=5 // pred_check
        _
      $region10: #{tpu_custom_call.1} parent=5 // pred_check_branch
        %276 = sbr.rel (%p273) target = $region12
      $region11: #{tpu_custom_call.1} parent=5 // pred_region
        %s277 = ssub.s32 %s22, 1
        // Predicated region
        $region13: #{tpu_custom_call.1} parent=11 // pred_check
          %p278 = pneg %p69
        $region14: #{tpu_custom_call.1} parent=11 // pred_check_branch
          %280 = sbr.rel (%p278) target = $region16
        $region15: #{tpu_custom_call.1} parent=11 // pred_region
          %s282 = ssub.s32 256, 256
          %283 = vsyncadd [#allocation4], %s282
          %s284 = sshll.u32 [#allocation3], 4
          %s285 = int_to_ptr.vmem [resolvable:$true] %s284
          %290 = dma.hbm_to_vmem [thread:$0]  %s1, 256, %s285, [#allocation4], 128, 128, 8
        $region16: #{tpu_custom_call.1} parent=11 // pred_fallthru
          _
        // Predicated region
        $region17: #{tpu_custom_call.1} parent=11 // pred_check
          %p291 = pneg %p90
        $region18: #{tpu_custom_call.1} parent=11 // pred_check_branch
          %293 = sbr.rel (%p291) target = $region20
        $region19: #{tpu_custom_call.1} parent=11 // pred_region
          _
        $region20: #{tpu_custom_call.1} parent=11 // pred_fallthru
          _
        // Predicated region
        $region21: #{tpu_custom_call.1} parent=11 // pred_check
          %p294 = pneg %p111
        $region22: #{tpu_custom_call.1} parent=11 // pred_check_branch
          %296 = sbr.rel (%p294) target = $region24
        $region23: #{tpu_custom_call.1} parent=11 // pred_region
          _
        $region24: #{tpu_custom_call.1} parent=11 // pred_fallthru
          _
        // Predicated region
        $region25: #{tpu_custom_call.1} parent=11 // pred_check
          %p297 = pneg %p132
        $region26: #{tpu_custom_call.1} parent=11 // pred_check_branch
          %299 = sbr.rel (%p297) target = $region28
        $region27: #{tpu_custom_call.1} parent=11 // pred_region
          %s301 = ssub.s32 32, 32
          %302 = vsyncadd [#allocation6], %s301
          %s304 = sshll.u32 %s4, 4
          %s305 = int_to_ptr.vmem [resolvable:$true] %s304
          %307 = dma.vmem_to_smem %s305, 32, [#allocation7], [#allocation6]
        $region28: #{tpu_custom_call.1} parent=11 // pred_fallthru
          _
        // Predicated region
        $region29: #{tpu_custom_call.1} parent=11 // pred_check
          %p308 = pneg %p153
        $region30: #{tpu_custom_call.1} parent=11 // pred_check_branch
          %310 = sbr.rel (%p308) target = $region32
        $region31: #{tpu_custom_call.1} parent=11 // pred_region
          %s312 = ssub.s32 1792, 1792
          %313 = vsyncadd [#allocation9], %s312
          %s314 = sshll.u32 [#allocation8], 4
          %s315 = int_to_ptr.vmem [resolvable:$true] %s314
          %320 = dma.hbm_to_vmem [thread:$0]  %s5, 1792, %s315, [#allocation9], 256, 256, 16
        $region32: #{tpu_custom_call.1} parent=11 // pred_fallthru
          _
        // Predicated region
        $region33: #{tpu_custom_call.1} parent=11 // pred_check
          %p321 = pneg %p174
        $region34: #{tpu_custom_call.1} parent=11 // pred_check_branch
          %323 = sbr.rel (%p321) target = $region36
        $region35: #{tpu_custom_call.1} parent=11 // pred_region
          _
        $region36: #{tpu_custom_call.1} parent=11 // pred_fallthru
          _
        // Predicated region
        $region37: #{tpu_custom_call.1} parent=11 // pred_check
          %p324 = pneg %p195
        $region38: #{tpu_custom_call.1} parent=11 // pred_check_branch
          %326 = sbr.rel (%p324) target = $region40
        $region39: #{tpu_custom_call.1} parent=11 // pred_region
          _
        $region40: #{tpu_custom_call.1} parent=11 // pred_fallthru
          _
        // Predicated region
        $region41: #{tpu_custom_call.1} parent=11 // pred_check
          %p327 = pneg %p216
        $region42: #{tpu_custom_call.1} parent=11 // pred_check_branch
          %329 = sbr.rel (%p327) target = $region44
        $region43: #{tpu_custom_call.1} parent=11 // pred_region
          _
        $region44: #{tpu_custom_call.1} parent=11 // pred_fallthru
          _
        // Predicated region
        $region45: #{tpu_custom_call.1} parent=11 // pred_check
          %p330 = pneg %p237
        $region46: #{tpu_custom_call.1} parent=11 // pred_check_branch
          %332 = sbr.rel (%p330) target = $region48
        $region47: #{tpu_custom_call.1} parent=11 // pred_region
          _
        $region48: #{tpu_custom_call.1} parent=11 // pred_fallthru
          _
      $region12: #{tpu_custom_call.1} parent=5 // pred_fallthru
        _
      %p333 = scmp.lt.s32.totalorder %s22, 2
      // Predicated region
      $region49: #{tpu_custom_call.1} parent=5 // pred_check
        %p334 = pneg %p333
      $region50: #{tpu_custom_call.1} parent=5 // pred_check_branch
        %336 = sbr.rel (%p334) target = $region52
      $region51: #{tpu_custom_call.1} parent=5 // pred_region
        // Predicated region
        $region53: #{tpu_custom_call.1} parent=51 // pred_check
          %p337 = pneg %p42
        $region54: #{tpu_custom_call.1} parent=51 // pred_check_branch
          %339 = sbr.rel (%p337) target = $region56
        $region55: #{tpu_custom_call.1} parent=51 // pred_region
          %p340 = scmp.lt.s32.totalorder %s22, 1
          %s341 = scalar_select %p340, %s22, 1
          %s342 = smul.addr %s341, 16
          %s343 = smul.addr %s342, 8
          %s344 = scalar_lea.vmem %s0, %s343
        $region56: #{tpu_custom_call.1} parent=51 // pred_fallthru
          _
      $region52: #{tpu_custom_call.1} parent=5 // pred_fallthru
        _
      %p345 = scmp.le.s32.totalorder 1, %s22
      %p346 = scmp.lt.s32.totalorder %s22, 3
      %p347 = pnand %p345, %p346
      %p348 = pneg %p347
      // Predicated region
      $region57: #{tpu_custom_call.1} parent=5 // pred_check
        _
      $region58: #{tpu_custom_call.1} parent=5 // pred_check_branch
        %350 = sbr.rel (%p347) target = $region60
      $region59: #{tpu_custom_call.1} parent=5 // pred_region
        %s351 = ssub.s32 %s22, 1
        // Predicated region
        $region61: #{tpu_custom_call.1} parent=59 // pred_check
          %p352 = pneg %p69
        $region62: #{tpu_custom_call.1} parent=59 // pred_check_branch
          %354 = sbr.rel (%p352) target = $region64
        $region63: #{tpu_custom_call.1} parent=59 // pred_region
          %355 = dma.done [#allocation4], 256
        $region64: #{tpu_custom_call.1} parent=59 // pred_fallthru
          _
        // Predicated region
        $region65: #{tpu_custom_call.1} parent=59 // pred_check
          %p356 = pneg %p132
        $region66: #{tpu_custom_call.1} parent=59 // pred_check_branch
          %358 = sbr.rel (%p356) target = $region68
        $region67: #{tpu_custom_call.1} parent=59 // pred_region
          %359 = dma.done [#allocation6], 32
        $region68: #{tpu_custom_call.1} parent=59 // pred_fallthru
          _
        // Predicated region
        $region69: #{tpu_custom_call.1} parent=59 // pred_check
          %p360 = pneg %p153
        $region70: #{tpu_custom_call.1} parent=59 // pred_check_branch
          %362 = sbr.rel (%p360) target = $region72
        $region71: #{tpu_custom_call.1} parent=59 // pred_region
          %363 = dma.done [#allocation9], 1792
        $region72: #{tpu_custom_call.1} parent=59 // pred_fallthru
          _
        %364 = sfence
        %p365 = scmp.lt.s32.totalorder %s27, 1
        %s366 = scalar_select %p365, %s27, 1
        %s367 = smul.addr %s366, 16
        %s368 = smul.addr %s367, 8
        %s369 = scalar_lea.vmem %s0, %s368
        %p370 = pneg %p48
        %p371 = pneg %p45
        %p372 = pneg %p69
        %p373 = pneg %p66
        %p374 = pneg %p90
        %p375 = pneg %p87
        %p376 = pneg %p111
        %p377 = pneg %p108
        %p378 = pneg %p132
        %p379 = pneg %p129
        %p380 = pneg %p153
        %p381 = pneg %p150
        %p382 = pneg %p174
        %p383 = pneg %p171
        %p384 = pneg %p195
        %p385 = pneg %p192
        %p386 = pneg %p216
        %p387 = pneg %p213
        %p388 = pneg %p237
        %p389 = pneg %p234
        %p390 = pneg %p263
        %p391 = pneg %p260
        %s392 = sand.u32 %s250, 1
        %s393 = scalar_lea.sflag [#allocation5], %s392
        %s394 = sand.u32 %s250, 1
        %s395 = smul.addr %s394, 128
        %s396 = scalar_lea.vmem [#allocation10], %s395
        %p397 = scmp.lt.s32.totalorder %s27, 1
        %s398 = scalar_select %p397, %s27, 1
        %s399 = smul.addr %s398, 16
        %s400 = smul.addr %s399, 8
        %s401 = scalar_lea.vmem %s0, %s400
        %v402 = vld [vmem:[%s401] sm:$0xff]
        %v403 = vld [vmem:[%s401 + $0x8] sm:$0xff]
        %v404 = vld [vmem:[%s401 + $0x10] sm:$0xff]
        %v405 = vld [vmem:[%s401 + $0x18] sm:$0xff]
        %v406 = vld [vmem:[%s401 + $0x20] sm:$0xff]
        %v407 = vld [vmem:[%s401 + $0x28] sm:$0xff]
        %v408 = vld [vmem:[%s401 + $0x30] sm:$0xff]
        %v409 = vld [vmem:[%s401 + $0x38] sm:$0xff]
        %v410 = vld [vmem:[%s401 + $0x40] sm:$0xff]
        %v411 = vld [vmem:[%s401 + $0x48] sm:$0xff]
        %v412 = vld [vmem:[%s401 + $0x50] sm:$0xff]
        %v413 = vld [vmem:[%s401 + $0x58] sm:$0xff]
        %v414 = vld [vmem:[%s401 + $0x60] sm:$0xff]
        %v415 = vld [vmem:[%s401 + $0x68] sm:$0xff]
        %v416 = vld [vmem:[%s401 + $0x70] sm:$0xff]
        %v417 = vld [vmem:[%s401 + $0x78] sm:$0xff]
        %v418 = vld [vmem:[#allocation3] sm:$0xff]
        %v419 = vld [vmem:[#allocation3 + $0x8] sm:$0xff]
        %v420 = vld [vmem:[%s2] sm:$0xff]
        %v421 = vld [vmem:[%s2 + $0x8] sm:$0xff]
        %423 = vset.pattern.permute.xlu0 0
        %424 = vperm.xlu0 %423, %v420
        %v425 = vpop.permute.xlu0 %424
        %428 = vset.pattern.permute.xlu0 0
        %429 = vperm.xlu0 %428, %v421
        %v430 = vpop.permute.xlu0 %429
        %vm432 = vcmask 523264
        %v434 = vsel %vm432, %v418, 0
        %v437 = vsel %vm432, %v419, 0
        %439 = vmatprep.subr.mxu0 %v403
        %440 = vmatpush1.msra.mxu0 %v402
        %441 = vmatprep.subr.mxu0 %v405
        %442 = vmatpush1.msra.mxu0 %v404
        %443 = vmatprep.subr.mxu0 %v407
        %444 = vmatpush1.msra.mxu0 %v406
        %445 = vmatprep.subr.mxu0 %v409
        %446 = vmatpush1.msra.mxu0 %v408
        %447 = vmatprep.subr.mxu0 %v411
        %448 = vmatpush1.msra.mxu0 %v410
        %449 = vmatprep.subr.mxu0 %v413
        %450 = vmatpush1.msra.mxu0 %v412
        %451 = vmatprep.subr.mxu0 %v415
        %452 = vmatpush1.msra.mxu0 %v414
        %453 = vmatprep.subr.mxu0 %v417
        %454 = vmatpush1.msra.mxu0 %v416
        %455 = vmatprep.subr.mxu0 0.0
        %456 = vmatpush1.msra.mxu0 0.0
        %457 = vmatprep.subr.mxu0 0.0
        %458 = vmatpush1.msra.mxu0 0.0
        %459 = vmatprep.subr.mxu0 0.0
        %460 = vmatpush1.msra.mxu0 0.0
        %461 = vmatprep.subr.mxu0 0.0
        %462 = vmatpush1.msra.mxu0 0.0
        %463 = vmatprep.subr.mxu0 0.0
        %464 = vmatpush1.msra.mxu0 0.0
        %465 = vmatprep.subr.mxu0 0.0
        %466 = vmatpush1.msra.mxu0 0.0
        %467 = vmatprep.subr.mxu0 0.0
        %468 = vmatpush1.msra.mxu0 0.0
        %469 = vmatprep.subr.mxu0 0.0
        %470 = vmatpush1.msra.mxu0 0.0
        %471 = vmatprep.subr.mxu0 0.0
        %472 = vmatpush1.msra.mxu0 0.0
        %473 = vmatprep.subr.mxu0 0.0
        %474 = vmatpush1.msra.mxu0 0.0
        %475 = vmatprep.subr.mxu0 0.0
        %476 = vmatpush1.msra.mxu0 0.0
        %477 = vmatprep.subr.mxu0 0.0
        %478 = vmatpush1.msra.mxu0 0.0
        %479 = vmatprep.subr.mxu0 0.0
        %480 = vmatpush1.msra.mxu0 0.0
        %481 = vmatprep.subr.mxu0 0.0
        %482 = vmatpush1.msra.mxu0 0.0
        %483 = vmatprep.subr.mxu0 0.0
        %484 = vmatpush1.msra.mxu0 0.0
        %485 = vmatprep.subr.mxu0 0.0
        %486 = vmatpush1.msra.mxu0 0.0
        %487 = vmatprep.subr.mxu0 0.0
        %488 = vmatpush1.msra.mxu0 0.0
        %489 = vmatprep.subr.mxu0 0.0
        %490 = vmatpush1.msra.mxu0 0.0
        %491 = vmatprep.subr.mxu0 0.0
        %492 = vmatpush1.msra.mxu0 0.0
        %493 = vmatprep.subr.mxu0 0.0
        %494 = vmatpush1.msra.mxu0 0.0
        %495 = vmatprep.subr.mxu0 0.0
        %496 = vmatpush1.msra.mxu0 0.0
        %497 = vmatprep.subr.mxu0 0.0
        %498 = vmatpush1.msra.mxu0 0.0
        %499 = vmatprep.subr.mxu0 0.0
        %500 = vmatpush1.msra.mxu0 0.0
        %501 = vmatprep.subr.mxu0 0.0
        %502 = vmatpush1.msra.mxu0 0.0
        %503 = vmatprep.mubr.f32.mxu0 0.0
        %504 = vmatmul.mubr.f32.gmra.mrb[0].mxu0 %v434
        %v505 = vpop.f32.mrb[0].mxu0
        %v506 = vadd.f32 %v425, %v505
        %v507 = vpop.f32.mrb[0].mxu0
        %v508 = vadd.f32 %v425, %v507
        %509 = vmatprep.mubr.f32.mxu0 0.0
        %510 = vmatmul.mubr.f32.gmra.mrb[0].mxu0 %v437
        %v511 = vpop.f32.mrb[0].mxu0
        %v512 = vadd.f32 %v430, %v511
        %v513 = vpop.f32.mrb[0].mxu0
        %v514 = vadd.f32 %v430, %v513
        %515 = vdwg.mxu0
        %v516 = vmax.f32 %v506, 0.0
        %v517 = vmax.f32 %v508, 0.0
        %v518 = vmax.f32 %v512, 0.0
        %v519 = vmax.f32 %v514, 0.0
        %v520 = vld [vmem:[%s3] sm:$0xff]
        %v521 = vld [vmem:[%s3 + $0x8] sm:$0xff]
        %v522 = vld [vmem:[%s3 + $0x10] sm:$0xff]
        %v523 = vld [vmem:[%s3 + $0x18] sm:$0xff]
        %v524 = vld [vmem:[%s3 + $0x20] sm:$0xff]
        %v525 = vld [vmem:[%s3 + $0x28] sm:$0xff]
        %vm526 = vcmask 130048
        %v528 = vsel %vm526, %v520, 0
        %v531 = vsel %vm526, %v521, 0
        %v534 = vsel %vm526, %v522, 0
        %v537 = vsel %vm526, %v523, 0
        %v540 = vsel %vm526, %v524, 0
        %v543 = vsel %vm526, %v525, 0
        %545 = vmatprep.subr.mxu0 %v517
        %546 = vmatpush1.msra.mxu0 %v516
        %547 = vmatprep.subr.mxu0 %v519
        %548 = vmatpush1.msra.mxu0 %v518
        %549 = vmatprep.subr.mxu0 0.0
        %550 = vmatpush1.msra.mxu0 0.0
        %551 = vmatprep.subr.mxu0 0.0
        %552 = vmatpush1.msra.mxu0 0.0
        %553 = vmatprep.subr.mxu0 0.0
        %554 = vmatpush1.msra.mxu0 0.0
        %555 = vmatprep.subr.mxu0 0.0
        %556 = vmatpush1.msra.mxu0 0.0
        %557 = vmatprep.subr.mxu0 0.0
        %558 = vmatpush1.msra.mxu0 0.0
        %559 = vmatprep.subr.mxu0 0.0
        %560 = vmatpush1.msra.mxu0 0.0
        %561 = vmatprep.subr.mxu0 0.0
        %562 = vmatpush1.msra.mxu0 0.0
        %563 = vmatprep.subr.mxu0 0.0
        %564 = vmatpush1.msra.mxu0 0.0
        %565 = vmatprep.subr.mxu0 0.0
        %566 = vmatpush1.msra.mxu0 0.0
        %567 = vmatprep.subr.mxu0 0.0
        %568 = vmatpush1.msra.mxu0 0.0
        %569 = vmatprep.subr.mxu0 0.0
        %570 = vmatpush1.msra.mxu0 0.0
        %571 = vmatprep.subr.mxu0 0.0
        %572 = vmatpush1.msra.mxu0 0.0
        %573 = vmatprep.subr.mxu0 0.0
        %574 = vmatpush1.msra.mxu0 0.0
        %575 = vmatprep.subr.mxu0 0.0
        %576 = vmatpush1.msra.mxu0 0.0
        %577 = vmatprep.subr.mxu0 0.0
        %578 = vmatpush1.msra.mxu0 0.0
        %579 = vmatprep.subr.mxu0 0.0
        %580 = vmatpush1.msra.mxu0 0.0
        %581 = vmatprep.subr.mxu0 0.0
        %582 = vmatpush1.msra.mxu0 0.0
        %583 = vmatprep.subr.mxu0 0.0
        %584 = vmatpush1.msra.mxu0 0.0
        %585 = vmatprep.subr.mxu0 0.0
        %586 = vmatpush1.msra.mxu0 0.0
        %587 = vmatprep.subr.mxu0 0.0
        %588 = vmatpush1.msra.mxu0 0.0
        %589 = vmatprep.subr.mxu0 0.0
        %590 = vmatpush1.msra.mxu0 0.0
        %591 = vmatprep.subr.mxu0 0.0
        %592 = vmatpush1.msra.mxu0 0.0
        %593 = vmatprep.subr.mxu0 0.0
        %594 = vmatpush1.msra.mxu0 0.0
        %595 = vmatprep.subr.mxu0 0.0
        %596 = vmatpush1.msra.mxu0 0.0
        %597 = vmatprep.subr.mxu0 0.0
        %598 = vmatpush1.msra.mxu0 0.0
        %599 = vmatprep.subr.mxu0 0.0
        %600 = vmatpush1.msra.mxu0 0.0
        %601 = vmatprep.subr.mxu0 0.0
        %602 = vmatpush1.msra.mxu0 0.0
        %603 = vmatprep.subr.mxu0 0.0
        %604 = vmatpush1.msra.mxu0 0.0
        %605 = vmatprep.subr.mxu0 0.0
        %606 = vmatpush1.msra.mxu0 0.0
        %607 = vmatprep.subr.mxu0 0.0
        %608 = vmatpush1.msra.mxu0 0.0
        %609 = vmatprep.mubr.f32.mxu0 0.0
        %610 = vmatmul.mubr.f32.gmra.mrb[0].mxu0 %v528
        %v611 = vpop.f32.mrb[0].mxu0
        %v612 = vadd.f32 0.0, %v611
        %v613 = vpop.f32.mrb[0].mxu0
        %v614 = vadd.f32 0.0, %v613
        %615 = vmatprep.mubr.f32.mxu0 0.0
        %616 = vmatmul.mubr.f32.gmra.mrb[0].mxu0 %v531
        %v617 = vpop.f32.mrb[0].mxu0
        %v618 = vadd.f32 0.0, %v617
        %v619 = vpop.f32.mrb[0].mxu0
        %v620 = vadd.f32 0.0, %v619
        %621 = vmatprep.mubr.f32.mxu0 0.0
        %622 = vmatmul.mubr.f32.gmra.mrb[0].mxu0 %v534
        %v623 = vpop.f32.mrb[0].mxu0
        %v624 = vadd.f32 0.0, %v623
        %v625 = vpop.f32.mrb[0].mxu0
        %v626 = vadd.f32 0.0, %v625
        %627 = vmatprep.mubr.f32.mxu0 0.0
        %628 = vmatmul.mubr.f32.gmra.mrb[0].mxu0 %v537
        %v629 = vpop.f32.mrb[0].mxu0
        %v630 = vadd.f32 0.0, %v629
        %v631 = vpop.f32.mrb[0].mxu0
        %v632 = vadd.f32 0.0, %v631
        %633 = vmatprep.mubr.f32.mxu0 0.0
        %634 = vmatmul.mubr.f32.gmra.mrb[0].mxu0 %v540
        %v635 = vpop.f32.mrb[0].mxu0
        %v636 = vadd.f32 0.0, %v635
        %v637 = vpop.f32.mrb[0].mxu0
        %v638 = vadd.f32 0.0, %v637
        %639 = vmatprep.mubr.f32.mxu0 0.0
        %640 = vmatmul.mubr.f32.gmra.mrb[0].mxu0 %v543
        %v641 = vpop.f32.mrb[0].mxu0
        %v642 = vadd.f32 0.0, %v641
        %v643 = vpop.f32.mrb[0].mxu0
        %v644 = vadd.f32 0.0, %v643
        %645 = vdwg.mxu0
        %s646 = sld [smem:[#allocation7 + $0x80]]
        %v647 = vstv %s646
        %v648 = vmul.f32 %v647, %v618
        %v649 = vmul.f32 %v647, %v620
        %650 = vst [vmem:[#allocation2] sm:$0xff] %v648
        %651 = vst [vmem:[#allocation2 + $0x8] sm:$0xff] %v649
        %s652 = sld [smem:[#allocation7 + $0x81]]
        %v653 = vstv %s652
        %v654 = vmul.f32 %v653, %v618
        %v655 = vmul.f32 %v653, %v620
        %s656 = scalar_lea.vmem [#allocation2], 16
        %657 = vst [vmem:[%s656] sm:$0xff] %v654
        %658 = vst [vmem:[%s656 + $0x8] sm:$0xff] %v655
        %s659 = sld [smem:[#allocation7 + $0x82]]
        %v660 = vstv %s659
        %v661 = vmul.f32 %v660, %v618
        %v662 = vmul.f32 %v660, %v620
        %s663 = scalar_lea.vmem [#allocation2], 32
        %664 = vst [vmem:[%s663] sm:$0xff] %v661
        %665 = vst [vmem:[%s663 + $0x8] sm:$0xff] %v662
        %s666 = sld [smem:[#allocation7 + $0x83]]
        %v667 = vstv %s666
        %v668 = vmul.f32 %v667, %v618
        %v669 = vmul.f32 %v667, %v620
        %s670 = scalar_lea.vmem [#allocation2], 48
        %671 = vst [vmem:[%s670] sm:$0xff] %v668
        %672 = vst [vmem:[%s670 + $0x8] sm:$0xff] %v669
        %s673 = sld [smem:[#allocation7 + $0x84]]
        %v674 = vstv %s673
        %v675 = vmul.f32 %v674, %v618
        %v676 = vmul.f32 %v674, %v620
        %s677 = scalar_lea.vmem [#allocation2], 64
        %678 = vst [vmem:[%s677] sm:$0xff] %v675
        %679 = vst [vmem:[%s677 + $0x8] sm:$0xff] %v676
        %s680 = sld [smem:[#allocation7 + $0x85]]
        %v681 = vstv %s680
        %v682 = vmul.f32 %v681, %v618
        %v683 = vmul.f32 %v681, %v620
        %s684 = scalar_lea.vmem [#allocation2], 80
        %685 = vst [vmem:[%s684] sm:$0xff] %v682
        %686 = vst [vmem:[%s684 + $0x8] sm:$0xff] %v683
        %s687 = sld [smem:[#allocation7 + $0x86]]
        %v688 = vstv %s687
        %v689 = vmul.f32 %v688, %v618
        %v690 = vmul.f32 %v688, %v620
        %s691 = scalar_lea.vmem [#allocation2], 96
        %692 = vst [vmem:[%s691] sm:$0xff] %v689
        %693 = vst [vmem:[%s691 + $0x8] sm:$0xff] %v690
        %s694 = sld [smem:[#allocation7]]
        %v695 = vstv %s694
        %v696 = vmul.f32 %v695, %v612
        %v697 = vmul.f32 %v695, %v614
        %698 = vrot.lane.b32.xlu0 %v624, 51
        %v699 = vpop.permute.xlu0 %698
        %700 = vrot.lane.b32.xlu0 %v630, 51
        %v701 = vpop.permute.xlu0 %700
        %702 = vrot.lane.b32.xlu0 %v626, 51
        %v703 = vpop.permute.xlu0 %702
        %704 = vrot.lane.b32.xlu0 %v632, 51
        %v705 = vpop.permute.xlu0 %704
        %v706 = vlaneseq
        %v707 = vand.u32 %v706, 127
        %vm708 = vcmp.lt.s32.totalorder %v707, 51
        %v709 = vsel %vm708, %v699, %v703
        %v710 = vsel %vm708, %v701, %v705
        %v711 = vsel %vm708, %v703, %v699
        %v712 = vsel %vm708, %v705, %v701
        %713 = vrot.lane.b32.xlu0 %v636, 51
        %v714 = vpop.permute.xlu0 %713
        %715 = vrot.lane.b32.xlu0 %v642, 51
        %v716 = vpop.permute.xlu0 %715
        %717 = vrot.lane.b32.xlu0 %v638, 51
        %v718 = vpop.permute.xlu0 %717
        %719 = vrot.lane.b32.xlu0 %v644, 51
        %v720 = vpop.permute.xlu0 %719
        %v721 = vsel %vm708, %v714, %v718
        %v722 = vsel %vm708, %v716, %v720
        %v723 = vsel %vm708, %v718, %v714
        %v724 = vsel %vm708, %v720, %v716
        %v725 = vld [vmem:[#allocation8] ss:$8 sm:$0x3]
        %v726 = vmul.f32 %v612, %v711
        %v727 = vmul.f32 %v614, %v709
        %v728 = vmul.f32 %v618, %v712
        %v729 = vmul.f32 %v620, %v710
        %v730 = vadd.f32 %v726, %v728
        %v731 = vadd.f32 %v727, %v729
        %v733 = vlaneseq
        %v734 = vshrl.u32 %v733, 7
        %v735 = vsub.s32 0, %v734
        %v736 = vrot.slane %v725, %v735
        %v737 = vlaneseq
        %v738 = vshrl.u32 %v737, 7
        %v739 = vsub.s32 1, %v738
        %v740 = vrot.slane %v725, %v739
        %v743 = vmul.f32 %v730, %v736
        %v744 = vmul.f32 %v731, %v740
        %v745 = vld [vmem:[#allocation2] sm:$0xff]
        %v746 = vld [vmem:[#allocation2 + $0x8] sm:$0xff]
        %v747 = vadd.f32 %v696, %v745
        %v748 = vadd.f32 %v697, %v746
        %v749 = vadd.f32 %v743, %v747
        %v750 = vadd.f32 %v744, %v748
        %v751 = vsub.f32 -inf, %v749
        %v752 = vsub.f32 -inf, %v750
        %v753 = vmul.f32 %v751, 1.442695
        %v754 = vpow.pop %v753
        %v755 = vmul.f32 %v752, 1.442695
        %v756 = vpow.pop %v755
        %v757 = vsub.f32 %v749, %v749
        %v758 = vsub.f32 %v750, %v750
        %v759 = vmul.f32 %v757, 1.442695
        %v760 = vpow.pop %v759
        %v761 = vmul.f32 %v758, 1.442695
        %v762 = vpow.pop %v761
        %v763 = vmul.f32 %v754, 0.0
        %v764 = vmul.f32 %v756, 0.0
        %v765 = vadd.f32 %v763, %v760
        %v766 = vadd.f32 %v764, %v762
        %v767 = vmul.f32 %v760, %v736
        %v768 = vmul.f32 %v762, %v740
        %v769 = vmul.f32 %v767, %v723
        %v770 = vmul.f32 %v768, %v721
        %v771 = vadd.f32 %v763, %v769
        %v772 = vadd.f32 %v764, %v770
        %v773 = vmul.f32 %v767, %v724
        %v774 = vmul.f32 %v768, %v722
        %v775 = vadd.f32 %v763, %v773
        %v776 = vadd.f32 %v764, %v774
        %777 = vrot.lane.b32.xlu0 %v624, 50
        %v778 = vpop.permute.xlu0 %777
        %779 = vrot.lane.b32.xlu0 %v630, 50
        %v780 = vpop.permute.xlu0 %779
        %781 = vrot.lane.b32.xlu0 %v626, 50
        %v782 = vpop.permute.xlu0 %781
        %783 = vrot.lane.b32.xlu0 %v632, 50
        %v784 = vpop.permute.xlu0 %783
        %vm785 = vcmp.lt.s32.totalorder %v707, 50
        %v786 = vsel %vm785, %v778, %v782
        %v787 = vsel %vm785, %v780, %v784
        %v788 = vsel %vm785, %v782, %v778
        %v789 = vsel %vm785, %v784, %v780
        %790 = vrot.lane.b32.xlu0 %v636, 50
        %v791 = vpop.permute.xlu0 %790
        %792 = vrot.lane.b32.xlu0 %v642, 50
        %v793 = vpop.permute.xlu0 %792
        %794 = vrot.lane.b32.xlu0 %v638, 50
        %v795 = vpop.permute.xlu0 %794
        %796 = vrot.lane.b32.xlu0 %v644, 50
        %v797 = vpop.permute.xlu0 %796
        %v798 = vsel %vm785, %v791, %v795
        %v799 = vsel %vm785, %v793, %v797
        %v800 = vsel %vm785, %v795, %v791
        %v801 = vsel %vm785, %v797, %v793
        %s802 = scalar_lea.vmem [#allocation8], 1
        %v803 = vld [vmem:[%s802] ss:$8 sm:$0x3]
        %v804 = vmul.f32 %v612, %v788
        %v805 = vmul.f32 %v614, %v786
        %v806 = vmul.f32 %v618, %v789
        %v807 = vmul.f32 %v620, %v787
        %v808 = vadd.f32 %v804, %v806
        %v809 = vadd.f32 %v805, %v807
        %v811 = vlaneseq
        %v812 = vshrl.u32 %v811, 7
        %v813 = vsub.s32 0, %v812
        %v814 = vrot.slane %v803, %v813
        %v815 = vlaneseq
        %v816 = vshrl.u32 %v815, 7
        %v817 = vsub.s32 1, %v816
        %v818 = vrot.slane %v803, %v817
        %v821 = vmul.f32 %v808, %v814
        %v822 = vmul.f32 %v809, %v818
        %v823 = vld [vmem:[%s656] sm:$0xff]
        %v824 = vld [vmem:[%s656 + $0x8] sm:$0xff]
        %v825 = vadd.f32 %v696, %v823
        %v826 = vadd.f32 %v697, %v824
        %v827 = vadd.f32 %v821, %v825
        %v828 = vadd.f32 %v822, %v826
        %v829 = vmax.f32 %v749, %v827
        %v830 = vmax.f32 %v750, %v828
        %v831 = vsub.f32 %v749, %v829
        %v832 = vsub.f32 %v750, %v830
        %v833 = vmul.f32 %v831, 1.442695
        %v834 = vpow.pop %v833
        %v835 = vmul.f32 %v832, 1.442695
        %v836 = vpow.pop %v835
        %v837 = vsub.f32 %v827, %v829
        %v838 = vsub.f32 %v828, %v830
        %v839 = vmul.f32 %v837, 1.442695
        %v840 = vpow.pop %v839
        %v841 = vmul.f32 %v838, 1.442695
        %v842 = vpow.pop %v841
        %v843 = vmul.f32 %v834, %v765
        %v844 = vmul.f32 %v836, %v766
        %v845 = vadd.f32 %v843, %v840
        %v846 = vadd.f32 %v844, %v842
        %v847 = vmul.f32 %v840, %v814
        %v848 = vmul.f32 %v842, %v818
        %v849 = vmul.f32 %v834, %v771
        %v850 = vmul.f32 %v836, %v772
        %v851 = vmul.f32 %v847, %v800
        %v852 = vmul.f32 %v848, %v798
        %v853 = vadd.f32 %v849, %v851
        %v854 = vadd.f32 %v850, %v852
        %v855 = vmul.f32 %v834, %v775
        %v856 = vmul.f32 %v836, %v776
        %v857 = vmul.f32 %v847, %v801
        %v858 = vmul.f32 %v848, %v799
        %v859 = vadd.f32 %v855, %v857
        %v860 = vadd.f32 %v856, %v858
        %861 = vrot.lane.b32.xlu0 %v624, 49
        %v862 = vpop.permute.xlu0 %861
        %863 = vrot.lane.b32.xlu0 %v630, 49
        %v864 = vpop.permute.xlu0 %863
        %865 = vrot.lane.b32.xlu0 %v626, 49
        %v866 = vpop.permute.xlu0 %865
        %867 = vrot.lane.b32.xlu0 %v632, 49
        %v868 = vpop.permute.xlu0 %867
        %vm869 = vcmp.lt.s32.totalorder %v707, 49
        %v870 = vsel %vm869, %v862, %v866
        %v871 = vsel %vm869, %v864, %v868
        %v872 = vsel %vm869, %v866, %v862
        %v873 = vsel %vm869, %v868, %v864
        %874 = vrot.lane.b32.xlu0 %v636, 49
        %v875 = vpop.permute.xlu0 %874
        %876 = vrot.lane.b32.xlu0 %v642, 49
        %v877 = vpop.permute.xlu0 %876
        %878 = vrot.lane.b32.xlu0 %v638, 49
        %v879 = vpop.permute.xlu0 %878
        %880 = vrot.lane.b32.xlu0 %v644, 49
        %v881 = vpop.permute.xlu0 %880
        %v882 = vsel %vm869, %v875, %v879
        %v883 = vsel %vm869, %v877, %v881
        %v884 = vsel %vm869, %v879, %v875
        %v885 = vsel %vm869, %v881, %v877
        %s886 = scalar_lea.vmem [#allocation8], 2
        %v887 = vld [vmem:[%s886] ss:$8 sm:$0x3]
        %v888 = vmul.f32 %v612, %v872
        %v889 = vmul.f32 %v614, %v870
        %v890 = vmul.f32 %v618, %v873
        %v891 = vmul.f32 %v620, %v871
        %v892 = vadd.f32 %v888, %v890
        %v893 = vadd.f32 %v889, %v891
        %v895 = vlaneseq
        %v896 = vshrl.u32 %v895, 7
        %v897 = vsub.s32 0, %v896
        %v898 = vrot.slane %v887, %v897
        %v899 = vlaneseq
        %v900 = vshrl.u32 %v899, 7
        %v901 = vsub.s32 1, %v900
        %v902 = vrot.slane %v887, %v901
        %v905 = vmul.f32 %v892, %v898
        %v906 = vmul.f32 %v893, %v902
        %v907 = vld [vmem:[%s663] sm:$0xff]
        %v908 = vld [vmem:[%s663 + $0x8] sm:$0xff]
        %v909 = vadd.f32 %v696, %v907
        %v910 = vadd.f32 %v697, %v908
        %v911 = vadd.f32 %v905, %v909
        %v912 = vadd.f32 %v906, %v910
        %v913 = vmax.f32 %v829, %v911
        %v914 = vmax.f32 %v830, %v912
        %v915 = vsub.f32 %v829, %v913
        %v916 = vsub.f32 %v830, %v914
        %v917 = vmul.f32 %v915, 1.442695
        %v918 = vpow.pop %v917
        %v919 = vmul.f32 %v916, 1.442695
        %v920 = vpow.pop %v919
        %v921 = vsub.f32 %v911, %v913
        %v922 = vsub.f32 %v912, %v914
        %v923 = vmul.f32 %v921, 1.442695
        %v924 = vpow.pop %v923
        %v925 = vmul.f32 %v922, 1.442695
        %v926 = vpow.pop %v925
        %v927 = vmul.f32 %v918, %v845
        %v928 = vmul.f32 %v920, %v846
        %v929 = vadd.f32 %v927, %v924
        %v930 = vadd.f32 %v928, %v926
        %v931 = vmul.f32 %v924, %v898
        %v932 = vmul.f32 %v926, %v902
        %v933 = vmul.f32 %v918, %v853
        %v934 = vmul.f32 %v920, %v854
        %v935 = vmul.f32 %v931, %v884
        %v936 = vmul.f32 %v932, %v882
        %v937 = vadd.f32 %v933, %v935
        %v938 = vadd.f32 %v934, %v936
        %v939 = vmul.f32 %v918, %v859
        %v940 = vmul.f32 %v920, %v860
        %v941 = vmul.f32 %v931, %v885
        %v942 = vmul.f32 %v932, %v883
        %v943 = vadd.f32 %v939, %v941
        %v944 = vadd.f32 %v940, %v942
        %945 = vrot.lane.b32.xlu0 %v624, 48
        %v946 = vpop.permute.xlu0 %945
        %947 = vrot.lane.b32.xlu0 %v630, 48
        %v948 = vpop.permute.xlu0 %947
        %949 = vrot.lane.b32.xlu0 %v626, 48
        %v950 = vpop.permute.xlu0 %949
        %951 = vrot.lane.b32.xlu0 %v632, 48
        %v952 = vpop.permute.xlu0 %951
        %vm953 = vcmp.lt.s32.totalorder %v707, 48
        %v954 = vsel %vm953, %v946, %v950
        %v955 = vsel %vm953, %v948, %v952
        %v956 = vsel %vm953, %v950, %v946
        %v957 = vsel %vm953, %v952, %v948
        %958 = vrot.lane.b32.xlu0 %v636, 48
        %v959 = vpop.permute.xlu0 %958
        %960 = vrot.lane.b32.xlu0 %v642, 48
        %v961 = vpop.permute.xlu0 %960
        %962 = vrot.lane.b32.xlu0 %v638, 48
        %v963 = vpop.permute.xlu0 %962
        %964 = vrot.lane.b32.xlu0 %v644, 48
        %v965 = vpop.permute.xlu0 %964
        %v966 = vsel %vm953, %v959, %v963
        %v967 = vsel %vm953, %v961, %v965
        %v968 = vsel %vm953, %v963, %v959
        %v969 = vsel %vm953, %v965, %v961
        %s970 = scalar_lea.vmem [#allocation8], 3
        %v971 = vld [vmem:[%s970] ss:$8 sm:$0x3]
        %v972 = vmul.f32 %v612, %v956
        %v973 = vmul.f32 %v614, %v954
        %v974 = vmul.f32 %v618, %v957
        %v975 = vmul.f32 %v620, %v955
        %v976 = vadd.f32 %v972, %v974
        %v977 = vadd.f32 %v973, %v975
        %v979 = vlaneseq
        %v980 = vshrl.u32 %v979, 7
        %v981 = vsub.s32 0, %v980
        %v982 = vrot.slane %v971, %v981
        %v983 = vlaneseq
        %v984 = vshrl.u32 %v983, 7
        %v985 = vsub.s32 1, %v984
        %v986 = vrot.slane %v971, %v985
        %v989 = vmul.f32 %v976, %v982
        %v990 = vmul.f32 %v977, %v986
        %v991 = vld [vmem:[%s670] sm:$0xff]
        %v992 = vld [vmem:[%s670 + $0x8] sm:$0xff]
        %v993 = vadd.f32 %v696, %v991
        %v994 = vadd.f32 %v697, %v992
        %v995 = vadd.f32 %v989, %v993
        %v996 = vadd.f32 %v990, %v994
        %v997 = vmax.f32 %v913, %v995
        %v998 = vmax.f32 %v914, %v996
        %v999 = vsub.f32 %v913, %v997
        %v1000 = vsub.f32 %v914, %v998
        %v1001 = vmul.f32 %v999, 1.442695
        %v1002 = vpow.pop %v1001
        %v1003 = vmul.f32 %v1000, 1.442695
        %v1004 = vpow.pop %v1003
        %v1005 = vsub.f32 %v995, %v997
        %v1006 = vsub.f32 %v996, %v998
        %v1007 = vmul.f32 %v1005, 1.442695
        %v1008 = vpow.pop %v1007
        %v1009 = vmul.f32 %v1006, 1.442695
        %v1010 = vpow.pop %v1009
        %v1011 = vmul.f32 %v1002, %v929
        %v1012 = vmul.f32 %v1004, %v930
        %v1013 = vadd.f32 %v1011, %v1008
        %v1014 = vadd.f32 %v1012, %v1010
        %v1015 = vmul.f32 %v1008, %v982
        %v1016 = vmul.f32 %v1010, %v986
        %v1017 = vmul.f32 %v1002, %v937
        %v1018 = vmul.f32 %v1004, %v938
        %v1019 = vmul.f32 %v1015, %v968
        %v1020 = vmul.f32 %v1016, %v966
        %v1021 = vadd.f32 %v1017, %v1019
        %v1022 = vadd.f32 %v1018, %v1020
        %v1023 = vmul.f32 %v1002, %v943
        %v1024 = vmul.f32 %v1004, %v944
        %v1025 = vmul.f32 %v1015, %v969
        %v1026 = vmul.f32 %v1016, %v967
        %v1027 = vadd.f32 %v1023, %v1025
        %v1028 = vadd.f32 %v1024, %v1026
        %1029 = vrot.lane.b32.xlu0 %v624, 47
        %v1030 = vpop.permute.xlu0 %1029
        %1031 = vrot.lane.b32.xlu0 %v630, 47
        %v1032 = vpop.permute.xlu0 %1031
        %1033 = vrot.lane.b32.xlu0 %v626, 47
        %v1034 = vpop.permute.xlu0 %1033
        %1035 = vrot.lane.b32.xlu0 %v632, 47
        %v1036 = vpop.permute.xlu0 %1035
        %vm1037 = vcmp.lt.s32.totalorder %v707, 47
        %v1038 = vsel %vm1037, %v1030, %v1034
        %v1039 = vsel %vm1037, %v1032, %v1036
        %v1040 = vsel %vm1037, %v1034, %v1030
        %v1041 = vsel %vm1037, %v1036, %v1032
        %1042 = vrot.lane.b32.xlu0 %v636, 47
        %v1043 = vpop.permute.xlu0 %1042
        %1044 = vrot.lane.b32.xlu0 %v642, 47
        %v1045 = vpop.permute.xlu0 %1044
        %1046 = vrot.lane.b32.xlu0 %v638, 47
        %v1047 = vpop.permute.xlu0 %1046
        %1048 = vrot.lane.b32.xlu0 %v644, 47
        %v1049 = vpop.permute.xlu0 %1048
        %v1050 = vsel %vm1037, %v1043, %v1047
        %v1051 = vsel %vm1037, %v1045, %v1049
        %v1052 = vsel %vm1037, %v1047, %v1043
        %v1053 = vsel %vm1037, %v1049, %v1045
        %s1054 = scalar_lea.vmem [#allocation8], 4
        %v1055 = vld [vmem:[%s1054] ss:$8 sm:$0x3]
        %v1056 = vmul.f32 %v612, %v1040
        %v1057 = vmul.f32 %v614, %v1038
        %v1058 = vmul.f32 %v618, %v1041
        %v1059 = vmul.f32 %v620, %v1039
        %v1060 = vadd.f32 %v1056, %v1058
        %v1061 = vadd.f32 %v1057, %v1059
        %v1063 = vlaneseq
        %v1064 = vshrl.u32 %v1063, 7
        %v1065 = vsub.s32 0, %v1064
        %v1066 = vrot.slane %v1055, %v1065
        %v1067 = vlaneseq
        %v1068 = vshrl.u32 %v1067, 7
        %v1069 = vsub.s32 1, %v1068
        %v1070 = vrot.slane %v1055, %v1069
        %v1073 = vmul.f32 %v1060, %v1066
        %v1074 = vmul.f32 %v1061, %v1070
        %v1075 = vld [vmem:[%s677] sm:$0xff]
        %v1076 = vld [vmem:[%s677 + $0x8] sm:$0xff]
        %v1077 = vadd.f32 %v696, %v1075
        %v1078 = vadd.f32 %v697, %v1076
        %v1079 = vadd.f32 %v1073, %v1077
        %v1080 = vadd.f32 %v1074, %v1078
        %v1081 = vmax.f32 %v997, %v1079
        %v1082 = vmax.f32 %v998, %v1080
        %v1083 = vsub.f32 %v997, %v1081
        %v1084 = vsub.f32 %v998, %v1082
        %v1085 = vmul.f32 %v1083, 1.442695
        %v1086 = vpow.pop %v1085
        %v1087 = vmul.f32 %v1084, 1.442695
        %v1088 = vpow.pop %v1087
        %v1089 = vsub.f32 %v1079, %v1081
        %v1090 = vsub.f32 %v1080, %v1082
        %v1091 = vmul.f32 %v1089, 1.442695
        %v1092 = vpow.pop %v1091
        %v1093 = vmul.f32 %v1090, 1.442695
        %v1094 = vpow.pop %v1093
        %v1095 = vmul.f32 %v1086, %v1013
        %v1096 = vmul.f32 %v1088, %v1014
        %v1097 = vadd.f32 %v1095, %v1092
        %v1098 = vadd.f32 %v1096, %v1094
        %v1099 = vmul.f32 %v1092, %v1066
        %v1100 = vmul.f32 %v1094, %v1070
        %v1101 = vmul.f32 %v1086, %v1021
        %v1102 = vmul.f32 %v1088, %v1022
        %v1103 = vmul.f32 %v1099, %v1052
        %v1104 = vmul.f32 %v1100, %v1050
        %v1105 = vadd.f32 %v1101, %v1103
        %v1106 = vadd.f32 %v1102, %v1104
        %v1107 = vmul.f32 %v1086, %v1027
        %v1108 = vmul.f32 %v1088, %v1028
        %v1109 = vmul.f32 %v1099, %v1053
        %v1110 = vmul.f32 %v1100, %v1051
        %v1111 = vadd.f32 %v1107, %v1109
        %v1112 = vadd.f32 %v1108, %v1110
        %1113 = vrot.lane.b32.xlu0 %v624, 46
        %v1114 = vpop.permute.xlu0 %1113
        %1115 = vrot.lane.b32.xlu0 %v630, 46
        %v1116 = vpop.permute.xlu0 %1115
        %1117 = vrot.lane.b32.xlu0 %v626, 46
        %v1118 = vpop.permute.xlu0 %1117
        %1119 = vrot.lane.b32.xlu0 %v632, 46
        %v1120 = vpop.permute.xlu0 %1119
        %vm1121 = vcmp.lt.s32.totalorder %v707, 46
        %v1122 = vsel %vm1121, %v1114, %v1118
        %v1123 = vsel %vm1121, %v1116, %v1120
        %v1124 = vsel %vm1121, %v1118, %v1114
        %v1125 = vsel %vm1121, %v1120, %v1116
        %1126 = vrot.lane.b32.xlu0 %v636, 46
        %v1127 = vpop.permute.xlu0 %1126
        %1128 = vrot.lane.b32.xlu0 %v642, 46
        %v1129 = vpop.permute.xlu0 %1128
        %1130 = vrot.lane.b32.xlu0 %v638, 46
        %v1131 = vpop.permute.xlu0 %1130
        %1132 = vrot.lane.b32.xlu0 %v644, 46
        %v1133 = vpop.permute.xlu0 %1132
        %v1134 = vsel %vm1121, %v1127, %v1131
        %v1135 = vsel %vm1121, %v1129, %v1133
        %v1136 = vsel %vm1121, %v1131, %v1127
        %v1137 = vsel %vm1121, %v1133, %v1129
        %s1138 = scalar_lea.vmem [#allocation8], 5
        %v1139 = vld [vmem:[%s1138] ss:$8 sm:$0x3]
        %v1140 = vmul.f32 %v612, %v1124
        %v1141 = vmul.f32 %v614, %v1122
        %v1142 = vmul.f32 %v618, %v1125
        %v1143 = vmul.f32 %v620, %v1123
        %v1144 = vadd.f32 %v1140, %v1142
        %v1145 = vadd.f32 %v1141, %v1143
        %v1147 = vlaneseq
        %v1148 = vshrl.u32 %v1147, 7
        %v1149 = vsub.s32 0, %v1148
        %v1150 = vrot.slane %v1139, %v1149
        %v1151 = vlaneseq
        %v1152 = vshrl.u32 %v1151, 7
        %v1153 = vsub.s32 1, %v1152
        %v1154 = vrot.slane %v1139, %v1153
        %v1157 = vmul.f32 %v1144, %v1150
        %v1158 = vmul.f32 %v1145, %v1154
        %v1159 = vld [vmem:[%s684] sm:$0xff]
        %v1160 = vld [vmem:[%s684 + $0x8] sm:$0xff]
        %v1161 = vadd.f32 %v696, %v1159
        %v1162 = vadd.f32 %v697, %v1160
        %v1163 = vadd.f32 %v1157, %v1161
        %v1164 = vadd.f32 %v1158, %v1162
        %v1165 = vmax.f32 %v1081, %v1163
        %v1166 = vmax.f32 %v1082, %v1164
        %v1167 = vsub.f32 %v1081, %v1165
        %v1168 = vsub.f32 %v1082, %v1166
        %v1169 = vmul.f32 %v1167, 1.442695
        %v1170 = vpow.pop %v1169
        %v1171 = vmul.f32 %v1168, 1.442695
        %v1172 = vpow.pop %v1171
        %v1173 = vsub.f32 %v1163, %v1165
        %v1174 = vsub.f32 %v1164, %v1166
        %v1175 = vmul.f32 %v1173, 1.442695
        %v1176 = vpow.pop %v1175
        %v1177 = vmul.f32 %v1174, 1.442695
        %v1178 = vpow.pop %v1177
        %v1179 = vmul.f32 %v1170, %v1097
        %v1180 = vmul.f32 %v1172, %v1098
        %v1181 = vadd.f32 %v1179, %v1176
        %v1182 = vadd.f32 %v1180, %v1178
        %v1183 = vmul.f32 %v1176, %v1150
        %v1184 = vmul.f32 %v1178, %v1154
        %v1185 = vmul.f32 %v1170, %v1105
        %v1186 = vmul.f32 %v1172, %v1106
        %v1187 = vmul.f32 %v1183, %v1136
        %v1188 = vmul.f32 %v1184, %v1134
        %v1189 = vadd.f32 %v1185, %v1187
        %v1190 = vadd.f32 %v1186, %v1188
        %v1191 = vmul.f32 %v1170, %v1111
        %v1192 = vmul.f32 %v1172, %v1112
        %v1193 = vmul.f32 %v1183, %v1137
        %v1194 = vmul.f32 %v1184, %v1135
        %v1195 = vadd.f32 %v1191, %v1193
        %v1196 = vadd.f32 %v1192, %v1194
        %1197 = vrot.lane.b32.xlu0 %v624, 45
        %v1198 = vpop.permute.xlu0 %1197
        %1199 = vrot.lane.b32.xlu0 %v630, 45
        %v1200 = vpop.permute.xlu0 %1199
        %1201 = vrot.lane.b32.xlu0 %v626, 45
        %v1202 = vpop.permute.xlu0 %1201
        %1203 = vrot.lane.b32.xlu0 %v632, 45
        %v1204 = vpop.permute.xlu0 %1203
        %vm1205 = vcmp.lt.s32.totalorder %v707, 45
        %v1206 = vsel %vm1205, %v1198, %v1202
        %v1207 = vsel %vm1205, %v1200, %v1204
        %v1208 = vsel %vm1205, %v1202, %v1198
        %v1209 = vsel %vm1205, %v1204, %v1200
        %1210 = vrot.lane.b32.xlu0 %v636, 45
        %v1211 = vpop.permute.xlu0 %1210
        %1212 = vrot.lane.b32.xlu0 %v642, 45
        %v1213 = vpop.permute.xlu0 %1212
        %1214 = vrot.lane.b32.xlu0 %v638, 45
        %v1215 = vpop.permute.xlu0 %1214
        %1216 = vrot.lane.b32.xlu0 %v644, 45
        %v1217 = vpop.permute.xlu0 %1216
        %v1218 = vsel %vm1205, %v1211, %v1215
        %v1219 = vsel %vm1205, %v1213, %v1217
        %v1220 = vsel %vm1205, %v1215, %v1211
        %v1221 = vsel %vm1205, %v1217, %v1213
        %s1222 = scalar_lea.vmem [#allocation8], 6
        %v1223 = vld [vmem:[%s1222] ss:$8 sm:$0x3]
        %v1224 = vmul.f32 %v612, %v1208
        %v1225 = vmul.f32 %v614, %v1206
        %v1226 = vmul.f32 %v618, %v1209
        %v1227 = vmul.f32 %v620, %v1207
        %v1228 = vadd.f32 %v1224, %v1226
        %v1229 = vadd.f32 %v1225, %v1227
        %v1231 = vlaneseq
        %v1232 = vshrl.u32 %v1231, 7
        %v1233 = vsub.s32 0, %v1232
        %v1234 = vrot.slane %v1223, %v1233
        %v1235 = vlaneseq
        %v1236 = vshrl.u32 %v1235, 7
        %v1237 = vsub.s32 1, %v1236
        %v1238 = vrot.slane %v1223, %v1237
        %v1241 = vmul.f32 %v1228, %v1234
        %v1242 = vmul.f32 %v1229, %v1238
        %v1243 = vld [vmem:[%s691] sm:$0xff]
        %v1244 = vld [vmem:[%s691 + $0x8] sm:$0xff]
        %v1245 = vadd.f32 %v696, %v1243
        %v1246 = vadd.f32 %v697, %v1244
        %v1247 = vadd.f32 %v1241, %v1245
        %v1248 = vadd.f32 %v1242, %v1246
        %v1249 = vmax.f32 %v1165, %v1247
        %v1250 = vmax.f32 %v1166, %v1248
        %v1251 = vsub.f32 %v1165, %v1249
        %v1252 = vsub.f32 %v1166, %v1250
        %v1253 = vmul.f32 %v1251, 1.442695
        %v1254 = vpow.pop %v1253
        %v1255 = vmul.f32 %v1252, 1.442695
        %v1256 = vpow.pop %v1255
        %v1257 = vsub.f32 %v1247, %v1249
        %v1258 = vsub.f32 %v1248, %v1250
        %v1259 = vmul.f32 %v1257, 1.442695
        %v1260 = vpow.pop %v1259
        %v1261 = vmul.f32 %v1258, 1.442695
        %v1262 = vpow.pop %v1261
        %v1263 = vmul.f32 %v1254, %v1181
        %v1264 = vmul.f32 %v1256, %v1182
        %v1265 = vadd.f32 %v1263, %v1260
        %v1266 = vadd.f32 %v1264, %v1262
        %v1267 = vmul.f32 %v1260, %v1234
        %v1268 = vmul.f32 %v1262, %v1238
        %v1269 = vmul.f32 %v1254, %v1189
        %v1270 = vmul.f32 %v1256, %v1190
        %v1271 = vmul.f32 %v1267, %v1220
        %v1272 = vmul.f32 %v1268, %v1218
        %v1273 = vadd.f32 %v1269, %v1271
        %v1274 = vadd.f32 %v1270, %v1272
        %v1275 = vmul.f32 %v1254, %v1195
        %v1276 = vmul.f32 %v1256, %v1196
        %v1277 = vmul.f32 %v1267, %v1221
        %v1278 = vmul.f32 %v1268, %v1219
        %v1279 = vadd.f32 %v1275, %v1277
        %v1280 = vadd.f32 %v1276, %v1278
        %s1281 = sld [smem:[#allocation7 + $0x1]]
        %v1282 = vstv %s1281
        %v1283 = vmul.f32 %v1282, %v612
        %v1284 = vmul.f32 %v1282, %v614
        %1285 = vrot.lane.b32.xlu0 %v624, 35
        %v1286 = vpop.permute.xlu0 %1285
        %1287 = vrot.lane.b32.xlu0 %v630, 35
        %v1288 = vpop.permute.xlu0 %1287
        %1289 = vrot.lane.b32.xlu0 %v626, 35
        %v1290 = vpop.permute.xlu0 %1289
        %1291 = vrot.lane.b32.xlu0 %v632, 35
        %v1292 = vpop.permute.xlu0 %1291
        %vm1293 = vcmp.lt.s32.totalorder %v707, 35
        %v1294 = vsel %vm1293, %v1286, %v1290
        %v1295 = vsel %vm1293, %v1288, %v1292
        %v1296 = vsel %vm1293, %v1290, %v1286
        %v1297 = vsel %vm1293, %v1292, %v1288
        %1298 = vrot.lane.b32.xlu0 %v636, 35
        %v1299 = vpop.permute.xlu0 %1298
        %1300 = vrot.lane.b32.xlu0 %v642, 35
        %v1301 = vpop.permute.xlu0 %1300
        %1302 = vrot.lane.b32.xlu0 %v638, 35
        %v1303 = vpop.permute.xlu0 %1302
        %1304 = vrot.lane.b32.xlu0 %v644, 35
        %v1305 = vpop.permute.xlu0 %1304
        %v1306 = vsel %vm1293, %v1299, %v1303
        %v1307 = vsel %vm1293, %v1301, %v1305
        %v1308 = vsel %vm1293, %v1303, %v1299
        %v1309 = vsel %vm1293, %v1305, %v1301
        %s1310 = scalar_lea.vmem [#allocation8], 7
        %v1311 = vld [vmem:[%s1310] ss:$8 sm:$0x3]
        %v1312 = vmul.f32 %v612, %v1296
        %v1313 = vmul.f32 %v614, %v1294
        %v1314 = vmul.f32 %v618, %v1297
        %v1315 = vmul.f32 %v620, %v1295
        %v1316 = vadd.f32 %v1312, %v1314
        %v1317 = vadd.f32 %v1313, %v1315
        %v1319 = vlaneseq
        %v1320 = vshrl.u32 %v1319, 7
        %v1321 = vsub.s32 0, %v1320
        %v1322 = vrot.slane %v1311, %v1321
        %v1323 = vlaneseq
        %v1324 = vshrl.u32 %v1323, 7
        %v1325 = vsub.s32 1, %v1324
        %v1326 = vrot.slane %v1311, %v1325
        %v1329 = vmul.f32 %v1316, %v1322
        %v1330 = vmul.f32 %v1317, %v1326
        %v1331 = vadd.f32 %v1283, %v745
        %v1332 = vadd.f32 %v1284, %v746
        %v1333 = vadd.f32 %v1329, %v1331
        %v1334 = vadd.f32 %v1330, %v1332
        %v1335 = vmax.f32 %v1249, %v1333
        %v1336 = vmax.f32 %v1250, %v1334
        %v1337 = vsub.f32 %v1249, %v1335
        %v1338 = vsub.f32 %v1250, %v1336
        %v1339 = vmul.f32 %v1337, 1.442695
        %v1340 = vpow.pop %v1339
        %v1341 = vmul.f32 %v1338, 1.442695
        %v1342 = vpow.pop %v1341
        %v1343 = vsub.f32 %v1333, %v1335
        %v1344 = vsub.f32 %v1334, %v1336
        %v1345 = vmul.f32 %v1343, 1.442695
        %v1346 = vpow.pop %v1345
        %v1347 = vmul.f32 %v1344, 1.442695
        %v1348 = vpow.pop %v1347
        %v1349 = vmul.f32 %v1340, %v1265
        %v1350 = vmul.f32 %v1342, %v1266
        %v1351 = vadd.f32 %v1349, %v1346
        %v1352 = vadd.f32 %v1350, %v1348
        %v1353 = vmul.f32 %v1346, %v1322
        %v1354 = vmul.f32 %v1348, %v1326
        %v1355 = vmul.f32 %v1340, %v1273
        %v1356 = vmul.f32 %v1342, %v1274
        %v1357 = vmul.f32 %v1353, %v1308
        %v1358 = vmul.f32 %v1354, %v1306
        %v1359 = vadd.f32 %v1355, %v1357
        %v1360 = vadd.f32 %v1356, %v1358
        %v1361 = vmul.f32 %v1340, %v1279
        %v1362 = vmul.f32 %v1342, %v1280
        %v1363 = vmul.f32 %v1353, %v1309
        %v1364 = vmul.f32 %v1354, %v1307
        %v1365 = vadd.f32 %v1361, %v1363
        %v1366 = vadd.f32 %v1362, %v1364
        %1367 = vrot.lane.b32.xlu0 %v624, 34
        %v1368 = vpop.permute.xlu0 %1367
        %1369 = vrot.lane.b32.xlu0 %v630, 34
        %v1370 = vpop.permute.xlu0 %1369
        %1371 = vrot.lane.b32.xlu0 %v626, 34
        %v1372 = vpop.permute.xlu0 %1371
        %1373 = vrot.lane.b32.xlu0 %v632, 34
        %v1374 = vpop.permute.xlu0 %1373
        %vm1375 = vcmp.lt.s32.totalorder %v707, 34
        %v1376 = vsel %vm1375, %v1368, %v1372
        %v1377 = vsel %vm1375, %v1370, %v1374
        %v1378 = vsel %vm1375, %v1372, %v1368
        %v1379 = vsel %vm1375, %v1374, %v1370
        %1380 = vrot.lane.b32.xlu0 %v636, 34
        %v1381 = vpop.permute.xlu0 %1380
        %1382 = vrot.lane.b32.xlu0 %v642, 34
        %v1383 = vpop.permute.xlu0 %1382
        %1384 = vrot.lane.b32.xlu0 %v638, 34
        %v1385 = vpop.permute.xlu0 %1384
        %1386 = vrot.lane.b32.xlu0 %v644, 34
        %v1387 = vpop.permute.xlu0 %1386
        %v1388 = vsel %vm1375, %v1381, %v1385
        %v1389 = vsel %vm1375, %v1383, %v1387
        %v1390 = vsel %vm1375, %v1385, %v1381
        %v1391 = vsel %vm1375, %v1387, %v1383
        %s1392 = scalar_lea.vmem [#allocation8], 16
        %v1393 = vld [vmem:[%s1392] ss:$8 sm:$0x3]
        %v1394 = vmul.f32 %v612, %v1378
        %v1395 = vmul.f32 %v614, %v1376
        %v1396 = vmul.f32 %v618, %v1379
        %v1397 = vmul.f32 %v620, %v1377
        %v1398 = vadd.f32 %v1394, %v1396
        %v1399 = vadd.f32 %v1395, %v1397
        %v1401 = vlaneseq
        %v1402 = vshrl.u32 %v1401, 7
        %v1403 = vsub.s32 0, %v1402
        %v1404 = vrot.slane %v1393, %v1403
        %v1405 = vlaneseq
        %v1406 = vshrl.u32 %v1405, 7
        %v1407 = vsub.s32 1, %v1406
        %v1408 = vrot.slane %v1393, %v1407
        %v1411 = vmul.f32 %v1398, %v1404
        %v1412 = vmul.f32 %v1399, %v1408
        %v1413 = vadd.f32 %v1283, %v823
        %v1414 = vadd.f32 %v1284, %v824
        %v1415 = vadd.f32 %v1411, %v1413
        %v1416 = vadd.f32 %v1412, %v1414
        %v1417 = vmax.f32 %v1335, %v1415
        %v1418 = vmax.f32 %v1336, %v1416
        %v1419 = vsub.f32 %v1335, %v1417
        %v1420 = vsub.f32 %v1336, %v1418
        %v1421 = vmul.f32 %v1419, 1.442695
        %v1422 = vpow.pop %v1421
        %v1423 = vmul.f32 %v1420, 1.442695
        %v1424 = vpow.pop %v1423
        %v1425 = vsub.f32 %v1415, %v1417
        %v1426 = vsub.f32 %v1416, %v1418
        %v1427 = vmul.f32 %v1425, 1.442695
        %v1428 = vpow.pop %v1427
        %v1429 = vmul.f32 %v1426, 1.442695
        %v1430 = vpow.pop %v1429
        %v1431 = vmul.f32 %v1422, %v1351
        %v1432 = vmul.f32 %v1424, %v1352
        %v1433 = vadd.f32 %v1431, %v1428
        %v1434 = vadd.f32 %v1432, %v1430
        %v1435 = vmul.f32 %v1428, %v1404
        %v1436 = vmul.f32 %v1430, %v1408
        %v1437 = vmul.f32 %v1422, %v1359
        %v1438 = vmul.f32 %v1424, %v1360
        %v1439 = vmul.f32 %v1435, %v1390
        %v1440 = vmul.f32 %v1436, %v1388
        %v1441 = vadd.f32 %v1437, %v1439
        %v1442 = vadd.f32 %v1438, %v1440
        %v1443 = vmul.f32 %v1422, %v1365
        %v1444 = vmul.f32 %v1424, %v1366
        %v1445 = vmul.f32 %v1435, %v1391
        %v1446 = vmul.f32 %v1436, %v1389
        %v1447 = vadd.f32 %v1443, %v1445
        %v1448 = vadd.f32 %v1444, %v1446
        %1449 = vrot.lane.b32.xlu0 %v624, 33
        %v1450 = vpop.permute.xlu0 %1449
        %1451 = vrot.lane.b32.xlu0 %v630, 33
        %v1452 = vpop.permute.xlu0 %1451
        %1453 = vrot.lane.b32.xlu0 %v626, 33
        %v1454 = vpop.permute.xlu0 %1453
        %1455 = vrot.lane.b32.xlu0 %v632, 33
        %v1456 = vpop.permute.xlu0 %1455
        %vm1457 = vcmp.lt.s32.totalorder %v707, 33
        %v1458 = vsel %vm1457, %v1450, %v1454
        %v1459 = vsel %vm1457, %v1452, %v1456
        %v1460 = vsel %vm1457, %v1454, %v1450
        %v1461 = vsel %vm1457, %v1456, %v1452
        %1462 = vrot.lane.b32.xlu0 %v636, 33
        %v1463 = vpop.permute.xlu0 %1462
        %1464 = vrot.lane.b32.xlu0 %v642, 33
        %v1465 = vpop.permute.xlu0 %1464
        %1466 = vrot.lane.b32.xlu0 %v638, 33
        %v1467 = vpop.permute.xlu0 %1466
        %1468 = vrot.lane.b32.xlu0 %v644, 33
        %v1469 = vpop.permute.xlu0 %1468
        %v1470 = vsel %vm1457, %v1463, %v1467
        %v1471 = vsel %vm1457, %v1465, %v1469
        %v1472 = vsel %vm1457, %v1467, %v1463
        %v1473 = vsel %vm1457, %v1469, %v1465
        %s1474 = scalar_lea.vmem [#allocation8], 17
        %v1475 = vld [vmem:[%s1474] ss:$8 sm:$0x3]
        %v1476 = vmul.f32 %v612, %v1460
        %v1477 = vmul.f32 %v614, %v1458
        %v1478 = vmul.f32 %v618, %v1461
        %v1479 = vmul.f32 %v620, %v1459
        %v1480 = vadd.f32 %v1476, %v1478
        %v1481 = vadd.f32 %v1477, %v1479
        %v1483 = vlaneseq
        %v1484 = vshrl.u32 %v1483, 7
        %v1485 = vsub.s32 0, %v1484
        %v1486 = vrot.slane %v1475, %v1485
        %v1487 = vlaneseq
        %v1488 = vshrl.u32 %v1487, 7
        %v1489 = vsub.s32 1, %v1488
        %v1490 = vrot.slane %v1475, %v1489
        %v1493 = vmul.f32 %v1480, %v1486
        %v1494 = vmul.f32 %v1481, %v1490
        %v1495 = vadd.f32 %v1283, %v907
        %v1496 = vadd.f32 %v1284, %v908
        %v1497 = vadd.f32 %v1493, %v1495
        %v1498 = vadd.f32 %v1494, %v1496
        %v1499 = vmax.f32 %v1417, %v1497
        %v1500 = vmax.f32 %v1418, %v1498
        %v1501 = vsub.f32 %v1417, %v1499
        %v1502 = vsub.f32 %v1418, %v1500
        %v1503 = vmul.f32 %v1501, 1.442695
        %v1504 = vpow.pop %v1503
        %v1505 = vmul.f32 %v1502, 1.442695
        %v1506 = vpow.pop %v1505
        %v1507 = vsub.f32 %v1497, %v1499
        %v1508 = vsub.f32 %v1498, %v1500
        %v1509 = vmul.f32 %v1507, 1.442695
        %v1510 = vpow.pop %v1509
        %v1511 = vmul.f32 %v1508, 1.442695
        %v1512 = vpow.pop %v1511
        %v1513 = vmul.f32 %v1504, %v1433
        %v1514 = vmul.f32 %v1506, %v1434
        %v1515 = vadd.f32 %v1513, %v1510
        %v1516 = vadd.f32 %v1514, %v1512
        %v1517 = vmul.f32 %v1510, %v1486
        %v1518 = vmul.f32 %v1512, %v1490
        %v1519 = vmul.f32 %v1504, %v1441
        %v1520 = vmul.f32 %v1506, %v1442
        %v1521 = vmul.f32 %v1517, %v1472
        %v1522 = vmul.f32 %v1518, %v1470
        %v1523 = vadd.f32 %v1519, %v1521
        %v1524 = vadd.f32 %v1520, %v1522
        %v1525 = vmul.f32 %v1504, %v1447
        %v1526 = vmul.f32 %v1506, %v1448
        %v1527 = vmul.f32 %v1517, %v1473
        %v1528 = vmul.f32 %v1518, %v1471
        %v1529 = vadd.f32 %v1525, %v1527
        %v1530 = vadd.f32 %v1526, %v1528
        %1531 = vrot.lane.b32.xlu0 %v624, 32
        %v1532 = vpop.permute.xlu0 %1531
        %1533 = vrot.lane.b32.xlu0 %v630, 32
        %v1534 = vpop.permute.xlu0 %1533
        %1535 = vrot.lane.b32.xlu0 %v626, 32
        %v1536 = vpop.permute.xlu0 %1535
        %1537 = vrot.lane.b32.xlu0 %v632, 32
        %v1538 = vpop.permute.xlu0 %1537
        %vm1539 = vcmp.lt.s32.totalorder %v707, 32
        %v1540 = vsel %vm1539, %v1532, %v1536
        %v1541 = vsel %vm1539, %v1534, %v1538
        %v1542 = vsel %vm1539, %v1536, %v1532
        %v1543 = vsel %vm1539, %v1538, %v1534
        %1544 = vrot.lane.b32.xlu0 %v636, 32
        %v1545 = vpop.permute.xlu0 %1544
        %1546 = vrot.lane.b32.xlu0 %v642, 32
        %v1547 = vpop.permute.xlu0 %1546
        %1548 = vrot.lane.b32.xlu0 %v638, 32
        %v1549 = vpop.permute.xlu0 %1548
        %1550 = vrot.lane.b32.xlu0 %v644, 32
        %v1551 = vpop.permute.xlu0 %1550
        %v1552 = vsel %vm1539, %v1545, %v1549
        %v1553 = vsel %vm1539, %v1547, %v1551
        %v1554 = vsel %vm1539, %v1549, %v1545
        %v1555 = vsel %vm1539, %v1551, %v1547
        %s1556 = scalar_lea.vmem [#allocation8], 18
        %v1557 = vld [vmem:[%s1556] ss:$8 sm:$0x3]
        %v1558 = vmul.f32 %v612, %v1542
        %v1559 = vmul.f32 %v614, %v1540
        %v1560 = vmul.f32 %v618, %v1543
        %v1561 = vmul.f32 %v620, %v1541
        %v1562 = vadd.f32 %v1558, %v1560
        %v1563 = vadd.f32 %v1559, %v1561
        %v1565 = vlaneseq
        %v1566 = vshrl.u32 %v1565, 7
        %v1567 = vsub.s32 0, %v1566
        %v1568 = vrot.slane %v1557, %v1567
        %v1569 = vlaneseq
        %v1570 = vshrl.u32 %v1569, 7
        %v1571 = vsub.s32 1, %v1570
        %v1572 = vrot.slane %v1557, %v1571
        %v1575 = vmul.f32 %v1562, %v1568
        %v1576 = vmul.f32 %v1563, %v1572
        %v1577 = vadd.f32 %v1283, %v991
        %v1578 = vadd.f32 %v1284, %v992
        %v1579 = vadd.f32 %v1575, %v1577
        %v1580 = vadd.f32 %v1576, %v1578
        %v1581 = vmax.f32 %v1499, %v1579
        %v1582 = vmax.f32 %v1500, %v1580
        %v1583 = vsub.f32 %v1499, %v1581
        %v1584 = vsub.f32 %v1500, %v1582
        %v1585 = vmul.f32 %v1583, 1.442695
        %v1586 = vpow.pop %v1585
        %v1587 = vmul.f32 %v1584, 1.442695
        %v1588 = vpow.pop %v1587
        %v1589 = vsub.f32 %v1579, %v1581
        %v1590 = vsub.f32 %v1580, %v1582
        %v1591 = vmul.f32 %v1589, 1.442695
        %v1592 = vpow.pop %v1591
        %v1593 = vmul.f32 %v1590, 1.442695
        %v1594 = vpow.pop %v1593
        %v1595 = vmul.f32 %v1586, %v1515
        %v1596 = vmul.f32 %v1588, %v1516
        %v1597 = vadd.f32 %v1595, %v1592
        %v1598 = vadd.f32 %v1596, %v1594
        %v1599 = vmul.f32 %v1592, %v1568
        %v1600 = vmul.f32 %v1594, %v1572
        %v1601 = vmul.f32 %v1586, %v1523
        %v1602 = vmul.f32 %v1588, %v1524
        %v1603 = vmul.f32 %v1599, %v1554
        %v1604 = vmul.f32 %v1600, %v1552
        %v1605 = vadd.f32 %v1601, %v1603
        %v1606 = vadd.f32 %v1602, %v1604
        %v1607 = vmul.f32 %v1586, %v1529
        %v1608 = vmul.f32 %v1588, %v1530
        %v1609 = vmul.f32 %v1599, %v1555
        %v1610 = vmul.f32 %v1600, %v1553
        %v1611 = vadd.f32 %v1607, %v1609
        %v1612 = vadd.f32 %v1608, %v1610
        %1613 = vrot.lane.b32.xlu0 %v624, 31
        %v1614 = vpop.permute.xlu0 %1613
        %1615 = vrot.lane.b32.xlu0 %v630, 31
        %v1616 = vpop.permute.xlu0 %1615
        %1617 = vrot.lane.b32.xlu0 %v626, 31
        %v1618 = vpop.permute.xlu0 %1617
        %1619 = vrot.lane.b32.xlu0 %v632, 31
        %v1620 = vpop.permute.xlu0 %1619
        %vm1621 = vcmp.lt.s32.totalorder %v707, 31
        %v1622 = vsel %vm1621, %v1614, %v1618
        %v1623 = vsel %vm1621, %v1616, %v1620
        %v1624 = vsel %vm1621, %v1618, %v1614
        %v1625 = vsel %vm1621, %v1620, %v1616
        %1626 = vrot.lane.b32.xlu0 %v636, 31
        %v1627 = vpop.permute.xlu0 %1626
        %1628 = vrot.lane.b32.xlu0 %v642, 31
        %v1629 = vpop.permute.xlu0 %1628
        %1630 = vrot.lane.b32.xlu0 %v638, 31
        %v1631 = vpop.permute.xlu0 %1630
        %1632 = vrot.lane.b32.xlu0 %v644, 31
        %v1633 = vpop.permute.xlu0 %1632
        %v1634 = vsel %vm1621, %v1627, %v1631
        %v1635 = vsel %vm1621, %v1629, %v1633
        %v1636 = vsel %vm1621, %v1631, %v1627
        %v1637 = vsel %vm1621, %v1633, %v1629
        %s1638 = scalar_lea.vmem [#allocation8], 19
        %v1639 = vld [vmem:[%s1638] ss:$8 sm:$0x3]
        %v1640 = vmul.f32 %v612, %v1624
        %v1641 = vmul.f32 %v614, %v1622
        %v1642 = vmul.f32 %v618, %v1625
        %v1643 = vmul.f32 %v620, %v1623
        %v1644 = vadd.f32 %v1640, %v1642
        %v1645 = vadd.f32 %v1641, %v1643
        %v1647 = vlaneseq
        %v1648 = vshrl.u32 %v1647, 7
        %v1649 = vsub.s32 0, %v1648
        %v1650 = vrot.slane %v1639, %v1649
        %v1651 = vlaneseq
        %v1652 = vshrl.u32 %v1651, 7
        %v1653 = vsub.s32 1, %v1652
        %v1654 = vrot.slane %v1639, %v1653
        %v1657 = vmul.f32 %v1644, %v1650
        %v1658 = vmul.f32 %v1645, %v1654
        %v1659 = vadd.f32 %v1283, %v1075
        %v1660 = vadd.f32 %v1284, %v1076
        %v1661 = vadd.f32 %v1657, %v1659
        %v1662 = vadd.f32 %v1658, %v1660
        %v1663 = vmax.f32 %v1581, %v1661
        %v1664 = vmax.f32 %v1582, %v1662
        %v1665 = vsub.f32 %v1581, %v1663
        %v1666 = vsub.f32 %v1582, %v1664
        %v1667 = vmul.f32 %v1665, 1.442695
        %v1668 = vpow.pop %v1667
        %v1669 = vmul.f32 %v1666, 1.442695
        %v1670 = vpow.pop %v1669
        %v1671 = vsub.f32 %v1661, %v1663
        %v1672 = vsub.f32 %v1662, %v1664
        %v1673 = vmul.f32 %v1671, 1.442695
        %v1674 = vpow.pop %v1673
        %v1675 = vmul.f32 %v1672, 1.442695
        %v1676 = vpow.pop %v1675
        %v1677 = vmul.f32 %v1668, %v1597
        %v1678 = vmul.f32 %v1670, %v1598
        %v1679 = vadd.f32 %v1677, %v1674
        %v1680 = vadd.f32 %v1678, %v1676
        %v1681 = vmul.f32 %v1674, %v1650
        %v1682 = vmul.f32 %v1676, %v1654
        %v1683 = vmul.f32 %v1668, %v1605
        %v1684 = vmul.f32 %v1670, %v1606
        %v1685 = vmul.f32 %v1681, %v1636
        %v1686 = vmul.f32 %v1682, %v1634
        %v1687 = vadd.f32 %v1683, %v1685
        %v1688 = vadd.f32 %v1684, %v1686
        %v1689 = vmul.f32 %v1668, %v1611
        %v1690 = vmul.f32 %v1670, %v1612
        %v1691 = vmul.f32 %v1681, %v1637
        %v1692 = vmul.f32 %v1682, %v1635
        %v1693 = vadd.f32 %v1689, %v1691
        %v1694 = vadd.f32 %v1690, %v1692
        %1695 = vrot.lane.b32.xlu0 %v624, 30
        %v1696 = vpop.permute.xlu0 %1695
        %1697 = vrot.lane.b32.xlu0 %v630, 30
        %v1698 = vpop.permute.xlu0 %1697
        %1699 = vrot.lane.b32.xlu0 %v626, 30
        %v1700 = vpop.permute.xlu0 %1699
        %1701 = vrot.lane.b32.xlu0 %v632, 30
        %v1702 = vpop.permute.xlu0 %1701
        %vm1703 = vcmp.lt.s32.totalorder %v707, 30
        %v1704 = vsel %vm1703, %v1696, %v1700
        %v1705 = vsel %vm1703, %v1698, %v1702
        %v1706 = vsel %vm1703, %v1700, %v1696
        %v1707 = vsel %vm1703, %v1702, %v1698
        %1708 = vrot.lane.b32.xlu0 %v636, 30
        %v1709 = vpop.permute.xlu0 %1708
        %1710 = vrot.lane.b32.xlu0 %v642, 30
        %v1711 = vpop.permute.xlu0 %1710
        %1712 = vrot.lane.b32.xlu0 %v638, 30
        %v1713 = vpop.permute.xlu0 %1712
        %1714 = vrot.lane.b32.xlu0 %v644, 30
        %v1715 = vpop.permute.xlu0 %1714
        %v1716 = vsel %vm1703, %v1709, %v1713
        %v1717 = vsel %vm1703, %v1711, %v1715
        %v1718 = vsel %vm1703, %v1713, %v1709
        %v1719 = vsel %vm1703, %v1715, %v1711
        %s1720 = scalar_lea.vmem [#allocation8], 20
        %v1721 = vld [vmem:[%s1720] ss:$8 sm:$0x3]
        %v1722 = vmul.f32 %v612, %v1706
        %v1723 = vmul.f32 %v614, %v1704
        %v1724 = vmul.f32 %v618, %v1707
        %v1725 = vmul.f32 %v620, %v1705
        %v1726 = vadd.f32 %v1722, %v1724
        %v1727 = vadd.f32 %v1723, %v1725
        %v1729 = vlaneseq
        %v1730 = vshrl.u32 %v1729, 7
        %v1731 = vsub.s32 0, %v1730
        %v1732 = vrot.slane %v1721, %v1731
        %v1733 = vlaneseq
        %v1734 = vshrl.u32 %v1733, 7
        %v1735 = vsub.s32 1, %v1734
        %v1736 = vrot.slane %v1721, %v1735
        %v1739 = vmul.f32 %v1726, %v1732
        %v1740 = vmul.f32 %v1727, %v1736
        %v1741 = vadd.f32 %v1283, %v1159
        %v1742 = vadd.f32 %v1284, %v1160
        %v1743 = vadd.f32 %v1739, %v1741
        %v1744 = vadd.f32 %v1740, %v1742
        %v1745 = vmax.f32 %v1663, %v1743
        %v1746 = vmax.f32 %v1664, %v1744
        %v1747 = vsub.f32 %v1663, %v1745
        %v1748 = vsub.f32 %v1664, %v1746
        %v1749 = vmul.f32 %v1747, 1.442695
        %v1750 = vpow.pop %v1749
        %v1751 = vmul.f32 %v1748, 1.442695
        %v1752 = vpow.pop %v1751
        %v1753 = vsub.f32 %v1743, %v1745
        %v1754 = vsub.f32 %v1744, %v1746
        %v1755 = vmul.f32 %v1753, 1.442695
        %v1756 = vpow.pop %v1755
        %v1757 = vmul.f32 %v1754, 1.442695
        %v1758 = vpow.pop %v1757
        %v1759 = vmul.f32 %v1750, %v1679
        %v1760 = vmul.f32 %v1752, %v1680
        %v1761 = vadd.f32 %v1759, %v1756
        %v1762 = vadd.f32 %v1760, %v1758
        %v1763 = vmul.f32 %v1756, %v1732
        %v1764 = vmul.f32 %v1758, %v1736
        %v1765 = vmul.f32 %v1750, %v1687
        %v1766 = vmul.f32 %v1752, %v1688
        %v1767 = vmul.f32 %v1763, %v1718
        %v1768 = vmul.f32 %v1764, %v1716
        %v1769 = vadd.f32 %v1765, %v1767
        %v1770 = vadd.f32 %v1766, %v1768
        %v1771 = vmul.f32 %v1750, %v1693
        %v1772 = vmul.f32 %v1752, %v1694
        %v1773 = vmul.f32 %v1763, %v1719
        %v1774 = vmul.f32 %v1764, %v1717
        %v1775 = vadd.f32 %v1771, %v1773
        %v1776 = vadd.f32 %v1772, %v1774
        %1777 = vrot.lane.b32.xlu0 %v624, 29
        %v1778 = vpop.permute.xlu0 %1777
        %1779 = vrot.lane.b32.xlu0 %v630, 29
        %v1780 = vpop.permute.xlu0 %1779
        %1781 = vrot.lane.b32.xlu0 %v626, 29
        %v1782 = vpop.permute.xlu0 %1781
        %1783 = vrot.lane.b32.xlu0 %v632, 29
        %v1784 = vpop.permute.xlu0 %1783
        %vm1785 = vcmp.lt.s32.totalorder %v707, 29
        %v1786 = vsel %vm1785, %v1778, %v1782
        %v1787 = vsel %vm1785, %v1780, %v1784
        %v1788 = vsel %vm1785, %v1782, %v1778
        %v1789 = vsel %vm1785, %v1784, %v1780
        %1790 = vrot.lane.b32.xlu0 %v636, 29
        %v1791 = vpop.permute.xlu0 %1790
        %1792 = vrot.lane.b32.xlu0 %v642, 29
        %v1793 = vpop.permute.xlu0 %1792
        %1794 = vrot.lane.b32.xlu0 %v638, 29
        %v1795 = vpop.permute.xlu0 %1794
        %1796 = vrot.lane.b32.xlu0 %v644, 29
        %v1797 = vpop.permute.xlu0 %1796
        %v1798 = vsel %vm1785, %v1791, %v1795
        %v1799 = vsel %vm1785, %v1793, %v1797
        %v1800 = vsel %vm1785, %v1795, %v1791
        %v1801 = vsel %vm1785, %v1797, %v1793
        %s1802 = scalar_lea.vmem [#allocation8], 21
        %v1803 = vld [vmem:[%s1802] ss:$8 sm:$0x3]
        %v1804 = vmul.f32 %v612, %v1788
        %v1805 = vmul.f32 %v614, %v1786
        %v1806 = vmul.f32 %v618, %v1789
        %v1807 = vmul.f32 %v620, %v1787
        %v1808 = vadd.f32 %v1804, %v1806
        %v1809 = vadd.f32 %v1805, %v1807
        %v1811 = vlaneseq
        %v1812 = vshrl.u32 %v1811, 7
        %v1813 = vsub.s32 0, %v1812
        %v1814 = vrot.slane %v1803, %v1813
        %v1815 = vlaneseq
        %v1816 = vshrl.u32 %v1815, 7
        %v1817 = vsub.s32 1, %v1816
        %v1818 = vrot.slane %v1803, %v1817
        %v1821 = vmul.f32 %v1808, %v1814
        %v1822 = vmul.f32 %v1809, %v1818
        %v1823 = vadd.f32 %v1283, %v1243
        %v1824 = vadd.f32 %v1284, %v1244
        %v1825 = vadd.f32 %v1821, %v1823
        %v1826 = vadd.f32 %v1822, %v1824
        %v1827 = vmax.f32 %v1745, %v1825
        %v1828 = vmax.f32 %v1746, %v1826
        %v1829 = vsub.f32 %v1745, %v1827
        %v1830 = vsub.f32 %v1746, %v1828
        %v1831 = vmul.f32 %v1829, 1.442695
        %v1832 = vpow.pop %v1831
        %v1833 = vmul.f32 %v1830, 1.442695
        %v1834 = vpow.pop %v1833
        %v1835 = vsub.f32 %v1825, %v1827
        %v1836 = vsub.f32 %v1826, %v1828
        %v1837 = vmul.f32 %v1835, 1.442695
        %v1838 = vpow.pop %v1837
        %v1839 = vmul.f32 %v1836, 1.442695
        %v1840 = vpow.pop %v1839
        %v1841 = vmul.f32 %v1832, %v1761
        %v1842 = vmul.f32 %v1834, %v1762
        %v1843 = vadd.f32 %v1841, %v1838
        %v1844 = vadd.f32 %v1842, %v1840
        %v1845 = vmul.f32 %v1838, %v1814
        %v1846 = vmul.f32 %v1840, %v1818
        %v1847 = vmul.f32 %v1832, %v1769
        %v1848 = vmul.f32 %v1834, %v1770
        %v1849 = vmul.f32 %v1845, %v1800
        %v1850 = vmul.f32 %v1846, %v1798
        %v1851 = vadd.f32 %v1847, %v1849
        %v1852 = vadd.f32 %v1848, %v1850
        %v1853 = vmul.f32 %v1832, %v1775
        %v1854 = vmul.f32 %v1834, %v1776
        %v1855 = vmul.f32 %v1845, %v1801
        %v1856 = vmul.f32 %v1846, %v1799
        %v1857 = vadd.f32 %v1853, %v1855
        %v1858 = vadd.f32 %v1854, %v1856
        %s1859 = sld [smem:[#allocation7 + $0x2]]
        %v1860 = vstv %s1859
        %v1861 = vmul.f32 %v1860, %v612
        %v1862 = vmul.f32 %v1860, %v614
        %1863 = vrot.lane.b32.xlu0 %v624, 19
        %v1864 = vpop.permute.xlu0 %1863
        %1865 = vrot.lane.b32.xlu0 %v630, 19
        %v1866 = vpop.permute.xlu0 %1865
        %1867 = vrot.lane.b32.xlu0 %v626, 19
        %v1868 = vpop.permute.xlu0 %1867
        %1869 = vrot.lane.b32.xlu0 %v632, 19
        %v1870 = vpop.permute.xlu0 %1869
        %vm1871 = vcmp.lt.s32.totalorder %v707, 19
        %v1872 = vsel %vm1871, %v1864, %v1868
        %v1873 = vsel %vm1871, %v1866, %v1870
        %v1874 = vsel %vm1871, %v1868, %v1864
        %v1875 = vsel %vm1871, %v1870, %v1866
        %1876 = vrot.lane.b32.xlu0 %v636, 19
        %v1877 = vpop.permute.xlu0 %1876
        %1878 = vrot.lane.b32.xlu0 %v642, 19
        %v1879 = vpop.permute.xlu0 %1878
        %1880 = vrot.lane.b32.xlu0 %v638, 19
        %v1881 = vpop.permute.xlu0 %1880
        %1882 = vrot.lane.b32.xlu0 %v644, 19
        %v1883 = vpop.permute.xlu0 %1882
        %v1884 = vsel %vm1871, %v1877, %v1881
        %v1885 = vsel %vm1871, %v1879, %v1883
        %v1886 = vsel %vm1871, %v1881, %v1877
        %v1887 = vsel %vm1871, %v1883, %v1879
        %s1888 = scalar_lea.vmem [#allocation8], 22
        %v1889 = vld [vmem:[%s1888] ss:$8 sm:$0x3]
        %v1890 = vmul.f32 %v612, %v1874
        %v1891 = vmul.f32 %v614, %v1872
        %v1892 = vmul.f32 %v618, %v1875
        %v1893 = vmul.f32 %v620, %v1873
        %v1894 = vadd.f32 %v1890, %v1892
        %v1895 = vadd.f32 %v1891, %v1893
        %v1897 = vlaneseq
        %v1898 = vshrl.u32 %v1897, 7
        %v1899 = vsub.s32 0, %v1898
        %v1900 = vrot.slane %v1889, %v1899
        %v1901 = vlaneseq
        %v1902 = vshrl.u32 %v1901, 7
        %v1903 = vsub.s32 1, %v1902
        %v1904 = vrot.slane %v1889, %v1903
        %v1907 = vmul.f32 %v1894, %v1900
        %v1908 = vmul.f32 %v1895, %v1904
        %v1909 = vadd.f32 %v1861, %v745
        %v1910 = vadd.f32 %v1862, %v746
        %v1911 = vadd.f32 %v1907, %v1909
        %v1912 = vadd.f32 %v1908, %v1910
        %v1913 = vmax.f32 %v1827, %v1911
        %v1914 = vmax.f32 %v1828, %v1912
        %v1915 = vsub.f32 %v1827, %v1913
        %v1916 = vsub.f32 %v1828, %v1914
        %v1917 = vmul.f32 %v1915, 1.442695
        %v1918 = vpow.pop %v1917
        %v1919 = vmul.f32 %v1916, 1.442695
        %v1920 = vpow.pop %v1919
        %v1921 = vsub.f32 %v1911, %v1913
        %v1922 = vsub.f32 %v1912, %v1914
        %v1923 = vmul.f32 %v1921, 1.442695
        %v1924 = vpow.pop %v1923
        %v1925 = vmul.f32 %v1922, 1.442695
        %v1926 = vpow.pop %v1925
        %v1927 = vmul.f32 %v1918, %v1843
        %v1928 = vmul.f32 %v1920, %v1844
        %v1929 = vadd.f32 %v1927, %v1924
        %v1930 = vadd.f32 %v1928, %v1926
        %v1931 = vmul.f32 %v1924, %v1900
        %v1932 = vmul.f32 %v1926, %v1904
        %v1933 = vmul.f32 %v1918, %v1851
        %v1934 = vmul.f32 %v1920, %v1852
        %v1935 = vmul.f32 %v1931, %v1886
        %v1936 = vmul.f32 %v1932, %v1884
        %v1937 = vadd.f32 %v1933, %v1935
        %v1938 = vadd.f32 %v1934, %v1936
        %v1939 = vmul.f32 %v1918, %v1857
        %v1940 = vmul.f32 %v1920, %v1858
        %v1941 = vmul.f32 %v1931, %v1887
        %v1942 = vmul.f32 %v1932, %v1885
        %v1943 = vadd.f32 %v1939, %v1941
        %v1944 = vadd.f32 %v1940, %v1942
        %1945 = vrot.lane.b32.xlu0 %v624, 18
        %v1946 = vpop.permute.xlu0 %1945
        %1947 = vrot.lane.b32.xlu0 %v630, 18
        %v1948 = vpop.permute.xlu0 %1947
        %1949 = vrot.lane.b32.xlu0 %v626, 18
        %v1950 = vpop.permute.xlu0 %1949
        %1951 = vrot.lane.b32.xlu0 %v632, 18
        %v1952 = vpop.permute.xlu0 %1951
        %vm1953 = vcmp.lt.s32.totalorder %v707, 18
        %v1954 = vsel %vm1953, %v1946, %v1950
        %v1955 = vsel %vm1953, %v1948, %v1952
        %v1956 = vsel %vm1953, %v1950, %v1946
        %v1957 = vsel %vm1953, %v1952, %v1948
        %1958 = vrot.lane.b32.xlu0 %v636, 18
        %v1959 = vpop.permute.xlu0 %1958
        %1960 = vrot.lane.b32.xlu0 %v642, 18
        %v1961 = vpop.permute.xlu0 %1960
        %1962 = vrot.lane.b32.xlu0 %v638, 18
        %v1963 = vpop.permute.xlu0 %1962
        %1964 = vrot.lane.b32.xlu0 %v644, 18
        %v1965 = vpop.permute.xlu0 %1964
        %v1966 = vsel %vm1953, %v1959, %v1963
        %v1967 = vsel %vm1953, %v1961, %v1965
        %v1968 = vsel %vm1953, %v1963, %v1959
        %v1969 = vsel %vm1953, %v1965, %v1961
        %s1970 = scalar_lea.vmem [#allocation8], 23
        %v1971 = vld [vmem:[%s1970] ss:$8 sm:$0x3]
        %v1972 = vmul.f32 %v612, %v1956
        %v1973 = vmul.f32 %v614, %v1954
        %v1974 = vmul.f32 %v618, %v1957
        %v1975 = vmul.f32 %v620, %v1955
        %v1976 = vadd.f32 %v1972, %v1974
        %v1977 = vadd.f32 %v1973, %v1975
        %v1979 = vlaneseq
        %v1980 = vshrl.u32 %v1979, 7
        %v1981 = vsub.s32 0, %v1980
        %v1982 = vrot.slane %v1971, %v1981
        %v1983 = vlaneseq
        %v1984 = vshrl.u32 %v1983, 7
        %v1985 = vsub.s32 1, %v1984
        %v1986 = vrot.slane %v1971, %v1985
        %v1989 = vmul.f32 %v1976, %v1982
        %v1990 = vmul.f32 %v1977, %v1986
        %v1991 = vadd.f32 %v1861, %v823
        %v1992 = vadd.f32 %v1862, %v824
        %v1993 = vadd.f32 %v1989, %v1991
        %v1994 = vadd.f32 %v1990, %v1992
        %v1995 = vmax.f32 %v1913, %v1993
        %v1996 = vmax.f32 %v1914, %v1994
        %v1997 = vsub.f32 %v1913, %v1995
        %v1998 = vsub.f32 %v1914, %v1996
        %v1999 = vmul.f32 %v1997, 1.442695
        %v2000 = vpow.pop %v1999
        %v2001 = vmul.f32 %v1998, 1.442695
        %v2002 = vpow.pop %v2001
        %v2003 = vsub.f32 %v1993, %v1995
        %v2004 = vsub.f32 %v1994, %v1996
        %v2005 = vmul.f32 %v2003, 1.442695
        %v2006 = vpow.pop %v2005
        %v2007 = vmul.f32 %v2004, 1.442695
        %v2008 = vpow.pop %v2007
        %v2009 = vmul.f32 %v2000, %v1929
        %v2010 = vmul.f32 %v2002, %v1930
        %v2011 = vadd.f32 %v2009, %v2006
        %v2012 = vadd.f32 %v2010, %v2008
        %v2013 = vmul.f32 %v2006, %v1982
        %v2014 = vmul.f32 %v2008, %v1986
        %v2015 = vmul.f32 %v2000, %v1937
        %v2016 = vmul.f32 %v2002, %v1938
        %v2017 = vmul.f32 %v2013, %v1968
        %v2018 = vmul.f32 %v2014, %v1966
        %v2019 = vadd.f32 %v2015, %v2017
        %v2020 = vadd.f32 %v2016, %v2018
        %v2021 = vmul.f32 %v2000, %v1943
        %v2022 = vmul.f32 %v2002, %v1944
        %v2023 = vmul.f32 %v2013, %v1969
        %v2024 = vmul.f32 %v2014, %v1967
        %v2025 = vadd.f32 %v2021, %v2023
        %v2026 = vadd.f32 %v2022, %v2024
        %2027 = vrot.lane.b32.xlu0 %v624, 17
        %v2028 = vpop.permute.xlu0 %2027
        %2029 = vrot.lane.b32.xlu0 %v630, 17
        %v2030 = vpop.permute.xlu0 %2029
        %2031 = vrot.lane.b32.xlu0 %v626, 17
        %v2032 = vpop.permute.xlu0 %2031
        %2033 = vrot.lane.b32.xlu0 %v632, 17
        %v2034 = vpop.permute.xlu0 %2033
        %vm2035 = vcmp.lt.s32.totalorder %v707, 17
        %v2036 = vsel %vm2035, %v2028, %v2032
        %v2037 = vsel %vm2035, %v2030, %v2034
        %v2038 = vsel %vm2035, %v2032, %v2028
        %v2039 = vsel %vm2035, %v2034, %v2030
        %2040 = vrot.lane.b32.xlu0 %v636, 17
        %v2041 = vpop.permute.xlu0 %2040
        %2042 = vrot.lane.b32.xlu0 %v642, 17
        %v2043 = vpop.permute.xlu0 %2042
        %2044 = vrot.lane.b32.xlu0 %v638, 17
        %v2045 = vpop.permute.xlu0 %2044
        %2046 = vrot.lane.b32.xlu0 %v644, 17
        %v2047 = vpop.permute.xlu0 %2046
        %v2048 = vsel %vm2035, %v2041, %v2045
        %v2049 = vsel %vm2035, %v2043, %v2047
        %v2050 = vsel %vm2035, %v2045, %v2041
        %v2051 = vsel %vm2035, %v2047, %v2043
        %s2052 = scalar_lea.vmem [#allocation8], 32
        %v2053 = vld [vmem:[%s2052] ss:$8 sm:$0x3]
        %v2054 = vmul.f32 %v612, %v2038
        %v2055 = vmul.f32 %v614, %v2036
        %v2056 = vmul.f32 %v618, %v2039
        %v2057 = vmul.f32 %v620, %v2037
        %v2058 = vadd.f32 %v2054, %v2056
        %v2059 = vadd.f32 %v2055, %v2057
        %v2061 = vlaneseq
        %v2062 = vshrl.u32 %v2061, 7
        %v2063 = vsub.s32 0, %v2062
        %v2064 = vrot.slane %v2053, %v2063
        %v2065 = vlaneseq
        %v2066 = vshrl.u32 %v2065, 7
        %v2067 = vsub.s32 1, %v2066
        %v2068 = vrot.slane %v2053, %v2067
        %v2071 = vmul.f32 %v2058, %v2064
        %v2072 = vmul.f32 %v2059, %v2068
        %v2073 = vadd.f32 %v1861, %v907
        %v2074 = vadd.f32 %v1862, %v908
        %v2075 = vadd.f32 %v2071, %v2073
        %v2076 = vadd.f32 %v2072, %v2074
        %v2077 = vmax.f32 %v1995, %v2075
        %v2078 = vmax.f32 %v1996, %v2076
        %v2079 = vsub.f32 %v1995, %v2077
        %v2080 = vsub.f32 %v1996, %v2078
        %v2081 = vmul.f32 %v2079, 1.442695
        %v2082 = vpow.pop %v2081
        %v2083 = vmul.f32 %v2080, 1.442695
        %v2084 = vpow.pop %v2083
        %v2085 = vsub.f32 %v2075, %v2077
        %v2086 = vsub.f32 %v2076, %v2078
        %v2087 = vmul.f32 %v2085, 1.442695
        %v2088 = vpow.pop %v2087
        %v2089 = vmul.f32 %v2086, 1.442695
        %v2090 = vpow.pop %v2089
        %v2091 = vmul.f32 %v2082, %v2011
        %v2092 = vmul.f32 %v2084, %v2012
        %v2093 = vadd.f32 %v2091, %v2088
        %v2094 = vadd.f32 %v2092, %v2090
        %v2095 = vmul.f32 %v2088, %v2064
        %v2096 = vmul.f32 %v2090, %v2068
        %v2097 = vmul.f32 %v2082, %v2019
        %v2098 = vmul.f32 %v2084, %v2020
        %v2099 = vmul.f32 %v2095, %v2050
        %v2100 = vmul.f32 %v2096, %v2048
        %v2101 = vadd.f32 %v2097, %v2099
        %v2102 = vadd.f32 %v2098, %v2100
        %v2103 = vmul.f32 %v2082, %v2025
        %v2104 = vmul.f32 %v2084, %v2026
        %v2105 = vmul.f32 %v2095, %v2051
        %v2106 = vmul.f32 %v2096, %v2049
        %v2107 = vadd.f32 %v2103, %v2105
        %v2108 = vadd.f32 %v2104, %v2106
        %2109 = vrot.lane.b32.xlu0 %v624, 16
        %v2110 = vpop.permute.xlu0 %2109
        %2111 = vrot.lane.b32.xlu0 %v630, 16
        %v2112 = vpop.permute.xlu0 %2111
        %2113 = vrot.lane.b32.xlu0 %v626, 16
        %v2114 = vpop.permute.xlu0 %2113
        %2115 = vrot.lane.b32.xlu0 %v632, 16
        %v2116 = vpop.permute.xlu0 %2115
        %vm2117 = vcmp.lt.s32.totalorder %v707, 16
        %v2118 = vsel %vm2117, %v2110, %v2114
        %v2119 = vsel %vm2117, %v2112, %v2116
        %v2120 = vsel %vm2117, %v2114, %v2110
        %v2121 = vsel %vm2117, %v2116, %v2112
        %2122 = vrot.lane.b32.xlu0 %v636, 16
        %v2123 = vpop.permute.xlu0 %2122
        %2124 = vrot.lane.b32.xlu0 %v642, 16
        %v2125 = vpop.permute.xlu0 %2124
        %2126 = vrot.lane.b32.xlu0 %v638, 16
        %v2127 = vpop.permute.xlu0 %2126
        %2128 = vrot.lane.b32.xlu0 %v644, 16
        %v2129 = vpop.permute.xlu0 %2128
        %v2130 = vsel %vm2117, %v2123, %v2127
        %v2131 = vsel %vm2117, %v2125, %v2129
        %v2132 = vsel %vm2117, %v2127, %v2123
        %v2133 = vsel %vm2117, %v2129, %v2125
        %s2134 = scalar_lea.vmem [#allocation8], 33
        %v2135 = vld [vmem:[%s2134] ss:$8 sm:$0x3]
        %v2136 = vmul.f32 %v612, %v2120
        %v2137 = vmul.f32 %v614, %v2118
        %v2138 = vmul.f32 %v618, %v2121
        %v2139 = vmul.f32 %v620, %v2119
        %v2140 = vadd.f32 %v2136, %v2138
        %v2141 = vadd.f32 %v2137, %v2139
        %v2143 = vlaneseq
        %v2144 = vshrl.u32 %v2143, 7
        %v2145 = vsub.s32 0, %v2144
        %v2146 = vrot.slane %v2135, %v2145
        %v2147 = vlaneseq
        %v2148 = vshrl.u32 %v2147, 7
        %v2149 = vsub.s32 1, %v2148
        %v2150 = vrot.slane %v2135, %v2149
        %v2153 = vmul.f32 %v2140, %v2146
        %v2154 = vmul.f32 %v2141, %v2150
        %v2155 = vadd.f32 %v1861, %v991
        %v2156 = vadd.f32 %v1862, %v992
        %v2157 = vadd.f32 %v2153, %v2155
        %v2158 = vadd.f32 %v2154, %v2156
        %v2159 = vmax.f32 %v2077, %v2157
        %v2160 = vmax.f32 %v2078, %v2158
        %v2161 = vsub.f32 %v2077, %v2159
        %v2162 = vsub.f32 %v2078, %v2160
        %v2163 = vmul.f32 %v2161, 1.442695
        %v2164 = vpow.pop %v2163
        %v2165 = vmul.f32 %v2162, 1.442695
        %v2166 = vpow.pop %v2165
        %v2167 = vsub.f32 %v2157, %v2159
        %v2168 = vsub.f32 %v2158, %v2160
        %v2169 = vmul.f32 %v2167, 1.442695
        %v2170 = vpow.pop %v2169
        %v2171 = vmul.f32 %v2168, 1.442695
        %v2172 = vpow.pop %v2171
        %v2173 = vmul.f32 %v2164, %v2093
        %v2174 = vmul.f32 %v2166, %v2094
        %v2175 = vadd.f32 %v2173, %v2170
        %v2176 = vadd.f32 %v2174, %v2172
        %v2177 = vmul.f32 %v2170, %v2146
        %v2178 = vmul.f32 %v2172, %v2150
        %v2179 = vmul.f32 %v2164, %v2101
        %v2180 = vmul.f32 %v2166, %v2102
        %v2181 = vmul.f32 %v2177, %v2132
        %v2182 = vmul.f32 %v2178, %v2130
        %v2183 = vadd.f32 %v2179, %v2181
        %v2184 = vadd.f32 %v2180, %v2182
        %v2185 = vmul.f32 %v2164, %v2107
        %v2186 = vmul.f32 %v2166, %v2108
        %v2187 = vmul.f32 %v2177, %v2133
        %v2188 = vmul.f32 %v2178, %v2131
        %v2189 = vadd.f32 %v2185, %v2187
        %v2190 = vadd.f32 %v2186, %v2188
        %2191 = vrot.lane.b32.xlu0 %v624, 15
        %v2192 = vpop.permute.xlu0 %2191
        %2193 = vrot.lane.b32.xlu0 %v630, 15
        %v2194 = vpop.permute.xlu0 %2193
        %2195 = vrot.lane.b32.xlu0 %v626, 15
        %v2196 = vpop.permute.xlu0 %2195
        %2197 = vrot.lane.b32.xlu0 %v632, 15
        %v2198 = vpop.permute.xlu0 %2197
        %vm2199 = vcmp.lt.s32.totalorder %v707, 15
        %v2200 = vsel %vm2199, %v2192, %v2196
        %v2201 = vsel %vm2199, %v2194, %v2198
        %v2202 = vsel %vm2199, %v2196, %v2192
        %v2203 = vsel %vm2199, %v2198, %v2194
        %2204 = vrot.lane.b32.xlu0 %v636, 15
        %v2205 = vpop.permute.xlu0 %2204
        %2206 = vrot.lane.b32.xlu0 %v642, 15
        %v2207 = vpop.permute.xlu0 %2206
        %2208 = vrot.lane.b32.xlu0 %v638, 15
        %v2209 = vpop.permute.xlu0 %2208
        %2210 = vrot.lane.b32.xlu0 %v644, 15
        %v2211 = vpop.permute.xlu0 %2210
        %v2212 = vsel %vm2199, %v2205, %v2209
        %v2213 = vsel %vm2199, %v2207, %v2211
        %v2214 = vsel %vm2199, %v2209, %v2205
        %v2215 = vsel %vm2199, %v2211, %v2207
        %s2216 = scalar_lea.vmem [#allocation8], 34
        %v2217 = vld [vmem:[%s2216] ss:$8 sm:$0x3]
        %v2218 = vmul.f32 %v612, %v2202
        %v2219 = vmul.f32 %v614, %v2200
        %v2220 = vmul.f32 %v618, %v2203
        %v2221 = vmul.f32 %v620, %v2201
        %v2222 = vadd.f32 %v2218, %v2220
        %v2223 = vadd.f32 %v2219, %v2221
        %v2225 = vlaneseq
        %v2226 = vshrl.u32 %v2225, 7
        %v2227 = vsub.s32 0, %v2226
        %v2228 = vrot.slane %v2217, %v2227
        %v2229 = vlaneseq
        %v2230 = vshrl.u32 %v2229, 7
        %v2231 = vsub.s32 1, %v2230
        %v2232 = vrot.slane %v2217, %v2231
        %v2235 = vmul.f32 %v2222, %v2228
        %v2236 = vmul.f32 %v2223, %v2232
        %v2237 = vadd.f32 %v1861, %v1075
        %v2238 = vadd.f32 %v1862, %v1076
        %v2239 = vadd.f32 %v2235, %v2237
        %v2240 = vadd.f32 %v2236, %v2238
        %v2241 = vmax.f32 %v2159, %v2239
        %v2242 = vmax.f32 %v2160, %v2240
        %v2243 = vsub.f32 %v2159, %v2241
        %v2244 = vsub.f32 %v2160, %v2242
        %v2245 = vmul.f32 %v2243, 1.442695
        %v2246 = vpow.pop %v2245
        %v2247 = vmul.f32 %v2244, 1.442695
        %v2248 = vpow.pop %v2247
        %v2249 = vsub.f32 %v2239, %v2241
        %v2250 = vsub.f32 %v2240, %v2242
        %v2251 = vmul.f32 %v2249, 1.442695
        %v2252 = vpow.pop %v2251
        %v2253 = vmul.f32 %v2250, 1.442695
        %v2254 = vpow.pop %v2253
        %v2255 = vmul.f32 %v2246, %v2175
        %v2256 = vmul.f32 %v2248, %v2176
        %v2257 = vadd.f32 %v2255, %v2252
        %v2258 = vadd.f32 %v2256, %v2254
        %v2259 = vmul.f32 %v2252, %v2228
        %v2260 = vmul.f32 %v2254, %v2232
        %v2261 = vmul.f32 %v2246, %v2183
        %v2262 = vmul.f32 %v2248, %v2184
        %v2263 = vmul.f32 %v2259, %v2214
        %v2264 = vmul.f32 %v2260, %v2212
        %v2265 = vadd.f32 %v2261, %v2263
        %v2266 = vadd.f32 %v2262, %v2264
        %v2267 = vmul.f32 %v2246, %v2189
        %v2268 = vmul.f32 %v2248, %v2190
        %v2269 = vmul.f32 %v2259, %v2215
        %v2270 = vmul.f32 %v2260, %v2213
        %v2271 = vadd.f32 %v2267, %v2269
        %v2272 = vadd.f32 %v2268, %v2270
        %2273 = vrot.lane.b32.xlu0 %v624, 14
        %v2274 = vpop.permute.xlu0 %2273
        %2275 = vrot.lane.b32.xlu0 %v630, 14
        %v2276 = vpop.permute.xlu0 %2275
        %2277 = vrot.lane.b32.xlu0 %v626, 14
        %v2278 = vpop.permute.xlu0 %2277
        %2279 = vrot.lane.b32.xlu0 %v632, 14
        %v2280 = vpop.permute.xlu0 %2279
        %vm2281 = vcmp.lt.s32.totalorder %v707, 14
        %v2282 = vsel %vm2281, %v2274, %v2278
        %v2283 = vsel %vm2281, %v2276, %v2280
        %v2284 = vsel %vm2281, %v2278, %v2274
        %v2285 = vsel %vm2281, %v2280, %v2276
        %2286 = vrot.lane.b32.xlu0 %v636, 14
        %v2287 = vpop.permute.xlu0 %2286
        %2288 = vrot.lane.b32.xlu0 %v642, 14
        %v2289 = vpop.permute.xlu0 %2288
        %2290 = vrot.lane.b32.xlu0 %v638, 14
        %v2291 = vpop.permute.xlu0 %2290
        %2292 = vrot.lane.b32.xlu0 %v644, 14
        %v2293 = vpop.permute.xlu0 %2292
        %v2294 = vsel %vm2281, %v2287, %v2291
        %v2295 = vsel %vm2281, %v2289, %v2293
        %v2296 = vsel %vm2281, %v2291, %v2287
        %v2297 = vsel %vm2281, %v2293, %v2289
        %s2298 = scalar_lea.vmem [#allocation8], 35
        %v2299 = vld [vmem:[%s2298] ss:$8 sm:$0x3]
        %v2300 = vmul.f32 %v612, %v2284
        %v2301 = vmul.f32 %v614, %v2282
        %v2302 = vmul.f32 %v618, %v2285
        %v2303 = vmul.f32 %v620, %v2283
        %v2304 = vadd.f32 %v2300, %v2302
        %v2305 = vadd.f32 %v2301, %v2303
        %v2307 = vlaneseq
        %v2308 = vshrl.u32 %v2307, 7
        %v2309 = vsub.s32 0, %v2308
        %v2310 = vrot.slane %v2299, %v2309
        %v2311 = vlaneseq
        %v2312 = vshrl.u32 %v2311, 7
        %v2313 = vsub.s32 1, %v2312
        %v2314 = vrot.slane %v2299, %v2313
        %v2317 = vmul.f32 %v2304, %v2310
        %v2318 = vmul.f32 %v2305, %v2314
        %v2319 = vadd.f32 %v1861, %v1159
        %v2320 = vadd.f32 %v1862, %v1160
        %v2321 = vadd.f32 %v2317, %v2319
        %v2322 = vadd.f32 %v2318, %v2320
        %v2323 = vmax.f32 %v2241, %v2321
        %v2324 = vmax.f32 %v2242, %v2322
        %v2325 = vsub.f32 %v2241, %v2323
        %v2326 = vsub.f32 %v2242, %v2324
        %v2327 = vmul.f32 %v2325, 1.442695
        %v2328 = vpow.pop %v2327
        %v2329 = vmul.f32 %v2326, 1.442695
        %v2330 = vpow.pop %v2329
        %v2331 = vsub.f32 %v2321, %v2323
        %v2332 = vsub.f32 %v2322, %v2324
        %v2333 = vmul.f32 %v2331, 1.442695
        %v2334 = vpow.pop %v2333
        %v2335 = vmul.f32 %v2332, 1.442695
        %v2336 = vpow.pop %v2335
        %v2337 = vmul.f32 %v2328, %v2257
        %v2338 = vmul.f32 %v2330, %v2258
        %v2339 = vadd.f32 %v2337, %v2334
        %v2340 = vadd.f32 %v2338, %v2336
        %v2341 = vmul.f32 %v2334, %v2310
        %v2342 = vmul.f32 %v2336, %v2314
        %v2343 = vmul.f32 %v2328, %v2265
        %v2344 = vmul.f32 %v2330, %v2266
        %v2345 = vmul.f32 %v2341, %v2296
        %v2346 = vmul.f32 %v2342, %v2294
        %v2347 = vadd.f32 %v2343, %v2345
        %v2348 = vadd.f32 %v2344, %v2346
        %v2349 = vmul.f32 %v2328, %v2271
        %v2350 = vmul.f32 %v2330, %v2272
        %v2351 = vmul.f32 %v2341, %v2297
        %v2352 = vmul.f32 %v2342, %v2295
        %v2353 = vadd.f32 %v2349, %v2351
        %v2354 = vadd.f32 %v2350, %v2352
        %2355 = vrot.lane.b32.xlu0 %v624, 13
        %v2356 = vpop.permute.xlu0 %2355
        %2357 = vrot.lane.b32.xlu0 %v630, 13
        %v2358 = vpop.permute.xlu0 %2357
        %2359 = vrot.lane.b32.xlu0 %v626, 13
        %v2360 = vpop.permute.xlu0 %2359
        %2361 = vrot.lane.b32.xlu0 %v632, 13
        %v2362 = vpop.permute.xlu0 %2361
        %vm2363 = vcmp.lt.s32.totalorder %v707, 13
        %v2364 = vsel %vm2363, %v2356, %v2360
        %v2365 = vsel %vm2363, %v2358, %v2362
        %v2366 = vsel %vm2363, %v2360, %v2356
        %v2367 = vsel %vm2363, %v2362, %v2358
        %2368 = vrot.lane.b32.xlu0 %v636, 13
        %v2369 = vpop.permute.xlu0 %2368
        %2370 = vrot.lane.b32.xlu0 %v642, 13
        %v2371 = vpop.permute.xlu0 %2370
        %2372 = vrot.lane.b32.xlu0 %v638, 13
        %v2373 = vpop.permute.xlu0 %2372
        %2374 = vrot.lane.b32.xlu0 %v644, 13
        %v2375 = vpop.permute.xlu0 %2374
        %v2376 = vsel %vm2363, %v2369, %v2373
        %v2377 = vsel %vm2363, %v2371, %v2375
        %v2378 = vsel %vm2363, %v2373, %v2369
        %v2379 = vsel %vm2363, %v2375, %v2371
        %s2380 = scalar_lea.vmem [#allocation8], 36
        %v2381 = vld [vmem:[%s2380] ss:$8 sm:$0x3]
        %v2382 = vmul.f32 %v612, %v2366
        %v2383 = vmul.f32 %v614, %v2364
        %v2384 = vmul.f32 %v618, %v2367
        %v2385 = vmul.f32 %v620, %v2365
        %v2386 = vadd.f32 %v2382, %v2384
        %v2387 = vadd.f32 %v2383, %v2385
        %v2389 = vlaneseq
        %v2390 = vshrl.u32 %v2389, 7
        %v2391 = vsub.s32 0, %v2390
        %v2392 = vrot.slane %v2381, %v2391
        %v2393 = vlaneseq
        %v2394 = vshrl.u32 %v2393, 7
        %v2395 = vsub.s32 1, %v2394
        %v2396 = vrot.slane %v2381, %v2395
        %v2399 = vmul.f32 %v2386, %v2392
        %v2400 = vmul.f32 %v2387, %v2396
        %v2401 = vadd.f32 %v1861, %v1243
        %v2402 = vadd.f32 %v1862, %v1244
        %v2403 = vadd.f32 %v2399, %v2401
        %v2404 = vadd.f32 %v2400, %v2402
        %v2405 = vmax.f32 %v2323, %v2403
        %v2406 = vmax.f32 %v2324, %v2404
        %v2407 = vsub.f32 %v2323, %v2405
        %v2408 = vsub.f32 %v2324, %v2406
        %v2409 = vmul.f32 %v2407, 1.442695
        %v2410 = vpow.pop %v2409
        %v2411 = vmul.f32 %v2408, 1.442695
        %v2412 = vpow.pop %v2411
        %v2413 = vsub.f32 %v2403, %v2405
        %v2414 = vsub.f32 %v2404, %v2406
        %v2415 = vmul.f32 %v2413, 1.442695
        %v2416 = vpow.pop %v2415
        %v2417 = vmul.f32 %v2414, 1.442695
        %v2418 = vpow.pop %v2417
        %v2419 = vmul.f32 %v2410, %v2339
        %v2420 = vmul.f32 %v2412, %v2340
        %v2421 = vadd.f32 %v2419, %v2416
        %v2422 = vadd.f32 %v2420, %v2418
        %v2423 = vmul.f32 %v2416, %v2392
        %v2424 = vmul.f32 %v2418, %v2396
        %v2425 = vmul.f32 %v2410, %v2347
        %v2426 = vmul.f32 %v2412, %v2348
        %v2427 = vmul.f32 %v2423, %v2378
        %v2428 = vmul.f32 %v2424, %v2376
        %v2429 = vadd.f32 %v2425, %v2427
        %v2430 = vadd.f32 %v2426, %v2428
        %v2431 = vmul.f32 %v2410, %v2353
        %v2432 = vmul.f32 %v2412, %v2354
        %v2433 = vmul.f32 %v2423, %v2379
        %v2434 = vmul.f32 %v2424, %v2377
        %v2435 = vadd.f32 %v2431, %v2433
        %v2436 = vadd.f32 %v2432, %v2434
        %s2437 = sld [smem:[#allocation7 + $0x3]]
        %v2438 = vstv %s2437
        %v2439 = vmul.f32 %v2438, %v612
        %v2440 = vmul.f32 %v2438, %v614
        %2441 = vrot.lane.b32.xlu0 %v624, 3
        %v2442 = vpop.permute.xlu0 %2441
        %2443 = vrot.lane.b32.xlu0 %v630, 3
        %v2444 = vpop.permute.xlu0 %2443
        %2445 = vrot.lane.b32.xlu0 %v626, 3
        %v2446 = vpop.permute.xlu0 %2445
        %2447 = vrot.lane.b32.xlu0 %v632, 3
        %v2448 = vpop.permute.xlu0 %2447
        %vm2449 = vcmp.lt.s32.totalorder %v707, 3
        %v2450 = vsel %vm2449, %v2442, %v2446
        %v2451 = vsel %vm2449, %v2444, %v2448
        %v2452 = vsel %vm2449, %v2446, %v2442
        %v2453 = vsel %vm2449, %v2448, %v2444
        %2454 = vrot.lane.b32.xlu0 %v636, 3
        %v2455 = vpop.permute.xlu0 %2454
        %2456 = vrot.lane.b32.xlu0 %v642, 3
        %v2457 = vpop.permute.xlu0 %2456
        %2458 = vrot.lane.b32.xlu0 %v638, 3
        %v2459 = vpop.permute.xlu0 %2458
        %2460 = vrot.lane.b32.xlu0 %v644, 3
        %v2461 = vpop.permute.xlu0 %2460
        %v2462 = vsel %vm2449, %v2455, %v2459
        %v2463 = vsel %vm2449, %v2457, %v2461
        %v2464 = vsel %vm2449, %v2459, %v2455
        %v2465 = vsel %vm2449, %v2461, %v2457
        %s2466 = scalar_lea.vmem [#allocation8], 37
        %v2467 = vld [vmem:[%s2466] ss:$8 sm:$0x3]
        %v2468 = vmul.f32 %v612, %v2452
        %v2469 = vmul.f32 %v614, %v2450
        %v2470 = vmul.f32 %v618, %v2453
        %v2471 = vmul.f32 %v620, %v2451
        %v2472 = vadd.f32 %v2468, %v2470
        %v2473 = vadd.f32 %v2469, %v2471
        %v2475 = vlaneseq
        %v2476 = vshrl.u32 %v2475, 7
        %v2477 = vsub.s32 0, %v2476
        %v2478 = vrot.slane %v2467, %v2477
        %v2479 = vlaneseq
        %v2480 = vshrl.u32 %v2479, 7
        %v2481 = vsub.s32 1, %v2480
        %v2482 = vrot.slane %v2467, %v2481
        %v2485 = vmul.f32 %v2472, %v2478
        %v2486 = vmul.f32 %v2473, %v2482
        %v2487 = vadd.f32 %v2439, %v745
        %v2488 = vadd.f32 %v2440, %v746
        %v2489 = vadd.f32 %v2485, %v2487
        %v2490 = vadd.f32 %v2486, %v2488
        %v2491 = vmax.f32 %v2405, %v2489
        %v2492 = vmax.f32 %v2406, %v2490
        %v2493 = vsub.f32 %v2405, %v2491
        %v2494 = vsub.f32 %v2406, %v2492
        %v2495 = vmul.f32 %v2493, 1.442695
        %v2496 = vpow.pop %v2495
        %v2497 = vmul.f32 %v2494, 1.442695
        %v2498 = vpow.pop %v2497
        %v2499 = vsub.f32 %v2489, %v2491
        %v2500 = vsub.f32 %v2490, %v2492
        %v2501 = vmul.f32 %v2499, 1.442695
        %v2502 = vpow.pop %v2501
        %v2503 = vmul.f32 %v2500, 1.442695
        %v2504 = vpow.pop %v2503
        %v2505 = vmul.f32 %v2496, %v2421
        %v2506 = vmul.f32 %v2498, %v2422
        %v2507 = vadd.f32 %v2505, %v2502
        %v2508 = vadd.f32 %v2506, %v2504
        %v2509 = vmul.f32 %v2502, %v2478
        %v2510 = vmul.f32 %v2504, %v2482
        %v2511 = vmul.f32 %v2496, %v2429
        %v2512 = vmul.f32 %v2498, %v2430
        %v2513 = vmul.f32 %v2509, %v2464
        %v2514 = vmul.f32 %v2510, %v2462
        %v2515 = vadd.f32 %v2511, %v2513
        %v2516 = vadd.f32 %v2512, %v2514
        %v2517 = vmul.f32 %v2496, %v2435
        %v2518 = vmul.f32 %v2498, %v2436
        %v2519 = vmul.f32 %v2509, %v2465
        %v2520 = vmul.f32 %v2510, %v2463
        %v2521 = vadd.f32 %v2517, %v2519
        %v2522 = vadd.f32 %v2518, %v2520
        %2523 = vrot.lane.b32.xlu0 %v624, 2
        %v2524 = vpop.permute.xlu0 %2523
        %2525 = vrot.lane.b32.xlu0 %v630, 2
        %v2526 = vpop.permute.xlu0 %2525
        %2527 = vrot.lane.b32.xlu0 %v626, 2
        %v2528 = vpop.permute.xlu0 %2527
        %2529 = vrot.lane.b32.xlu0 %v632, 2
        %v2530 = vpop.permute.xlu0 %2529
        %vm2531 = vcmp.lt.s32.totalorder %v707, 2
        %v2532 = vsel %vm2531, %v2524, %v2528
        %v2533 = vsel %vm2531, %v2526, %v2530
        %v2534 = vsel %vm2531, %v2528, %v2524
        %v2535 = vsel %vm2531, %v2530, %v2526
        %2536 = vrot.lane.b32.xlu0 %v636, 2
        %v2537 = vpop.permute.xlu0 %2536
        %2538 = vrot.lane.b32.xlu0 %v642, 2
        %v2539 = vpop.permute.xlu0 %2538
        %2540 = vrot.lane.b32.xlu0 %v638, 2
        %v2541 = vpop.permute.xlu0 %2540
        %2542 = vrot.lane.b32.xlu0 %v644, 2
        %v2543 = vpop.permute.xlu0 %2542
        %v2544 = vsel %vm2531, %v2537, %v2541
        %v2545 = vsel %vm2531, %v2539, %v2543
        %v2546 = vsel %vm2531, %v2541, %v2537
        %v2547 = vsel %vm2531, %v2543, %v2539
        %s2548 = scalar_lea.vmem [#allocation8], 38
        %v2549 = vld [vmem:[%s2548] ss:$8 sm:$0x3]
        %v2550 = vmul.f32 %v612, %v2534
        %v2551 = vmul.f32 %v614, %v2532
        %v2552 = vmul.f32 %v618, %v2535
        %v2553 = vmul.f32 %v620, %v2533
        %v2554 = vadd.f32 %v2550, %v2552
        %v2555 = vadd.f32 %v2551, %v2553
        %v2557 = vlaneseq
        %v2558 = vshrl.u32 %v2557, 7
        %v2559 = vsub.s32 0, %v2558
        %v2560 = vrot.slane %v2549, %v2559
        %v2561 = vlaneseq
        %v2562 = vshrl.u32 %v2561, 7
        %v2563 = vsub.s32 1, %v2562
        %v2564 = vrot.slane %v2549, %v2563
        %v2567 = vmul.f32 %v2554, %v2560
        %v2568 = vmul.f32 %v2555, %v2564
        %v2569 = vadd.f32 %v2439, %v823
        %v2570 = vadd.f32 %v2440, %v824
        %v2571 = vadd.f32 %v2567, %v2569
        %v2572 = vadd.f32 %v2568, %v2570
        %v2573 = vmax.f32 %v2491, %v2571
        %v2574 = vmax.f32 %v2492, %v2572
        %v2575 = vsub.f32 %v2491, %v2573
        %v2576 = vsub.f32 %v2492, %v2574
        %v2577 = vmul.f32 %v2575, 1.442695
        %v2578 = vpow.pop %v2577
        %v2579 = vmul.f32 %v2576, 1.442695
        %v2580 = vpow.pop %v2579
        %v2581 = vsub.f32 %v2571, %v2573
        %v2582 = vsub.f32 %v2572, %v2574
        %v2583 = vmul.f32 %v2581, 1.442695
        %v2584 = vpow.pop %v2583
        %v2585 = vmul.f32 %v2582, 1.442695
        %v2586 = vpow.pop %v2585
        %v2587 = vmul.f32 %v2578, %v2507
        %v2588 = vmul.f32 %v2580, %v2508
        %v2589 = vadd.f32 %v2587, %v2584
        %v2590 = vadd.f32 %v2588, %v2586
        %v2591 = vmul.f32 %v2584, %v2560
        %v2592 = vmul.f32 %v2586, %v2564
        %v2593 = vmul.f32 %v2578, %v2515
        %v2594 = vmul.f32 %v2580, %v2516
        %v2595 = vmul.f32 %v2591, %v2546
        %v2596 = vmul.f32 %v2592, %v2544
        %v2597 = vadd.f32 %v2593, %v2595
        %v2598 = vadd.f32 %v2594, %v2596
        %v2599 = vmul.f32 %v2578, %v2521
        %v2600 = vmul.f32 %v2580, %v2522
        %v2601 = vmul.f32 %v2591, %v2547
        %v2602 = vmul.f32 %v2592, %v2545
        %v2603 = vadd.f32 %v2599, %v2601
        %v2604 = vadd.f32 %v2600, %v2602
        %2605 = vrot.lane.b32.xlu0 %v624, 1
        %v2606 = vpop.permute.xlu0 %2605
        %2607 = vrot.lane.b32.xlu0 %v630, 1
        %v2608 = vpop.permute.xlu0 %2607
        %2609 = vrot.lane.b32.xlu0 %v626, 1
        %v2610 = vpop.permute.xlu0 %2609
        %2611 = vrot.lane.b32.xlu0 %v632, 1
        %v2612 = vpop.permute.xlu0 %2611
        %vm2613 = vcmp.lt.s32.totalorder %v707, 1
        %v2614 = vsel %vm2613, %v2606, %v2610
        %v2615 = vsel %vm2613, %v2608, %v2612
        %v2616 = vsel %vm2613, %v2610, %v2606
        %v2617 = vsel %vm2613, %v2612, %v2608
        %2618 = vrot.lane.b32.xlu0 %v636, 1
        %v2619 = vpop.permute.xlu0 %2618
        %2620 = vrot.lane.b32.xlu0 %v642, 1
        %v2621 = vpop.permute.xlu0 %2620
        %2622 = vrot.lane.b32.xlu0 %v638, 1
        %v2623 = vpop.permute.xlu0 %2622
        %2624 = vrot.lane.b32.xlu0 %v644, 1
        %v2625 = vpop.permute.xlu0 %2624
        %v2626 = vsel %vm2613, %v2619, %v2623
        %v2627 = vsel %vm2613, %v2621, %v2625
        %v2628 = vsel %vm2613, %v2623, %v2619
        %v2629 = vsel %vm2613, %v2625, %v2621
        %s2630 = scalar_lea.vmem [#allocation8], 39
        %v2631 = vld [vmem:[%s2630] ss:$8 sm:$0x3]
        %v2632 = vmul.f32 %v612, %v2616
        %v2633 = vmul.f32 %v614, %v2614
        %v2634 = vmul.f32 %v618, %v2617
        %v2635 = vmul.f32 %v620, %v2615
        %v2636 = vadd.f32 %v2632, %v2634
        %v2637 = vadd.f32 %v2633, %v2635
        %v2639 = vlaneseq
        %v2640 = vshrl.u32 %v2639, 7
        %v2641 = vsub.s32 0, %v2640
        %v2642 = vrot.slane %v2631, %v2641
        %v2643 = vlaneseq
        %v2644 = vshrl.u32 %v2643, 7
        %v2645 = vsub.s32 1, %v2644
        %v2646 = vrot.slane %v2631, %v2645
        %v2649 = vmul.f32 %v2636, %v2642
        %v2650 = vmul.f32 %v2637, %v2646
        %v2651 = vadd.f32 %v2439, %v907
        %v2652 = vadd.f32 %v2440, %v908
        %v2653 = vadd.f32 %v2649, %v2651
        %v2654 = vadd.f32 %v2650, %v2652
        %v2655 = vmax.f32 %v2573, %v2653
        %v2656 = vmax.f32 %v2574, %v2654
        %v2657 = vsub.f32 %v2573, %v2655
        %v2658 = vsub.f32 %v2574, %v2656
        %v2659 = vmul.f32 %v2657, 1.442695
        %v2660 = vpow.pop %v2659
        %v2661 = vmul.f32 %v2658, 1.442695
        %v2662 = vpow.pop %v2661
        %v2663 = vsub.f32 %v2653, %v2655
        %v2664 = vsub.f32 %v2654, %v2656
        %v2665 = vmul.f32 %v2663, 1.442695
        %v2666 = vpow.pop %v2665
        %v2667 = vmul.f32 %v2664, 1.442695
        %v2668 = vpow.pop %v2667
        %v2669 = vmul.f32 %v2660, %v2589
        %v2670 = vmul.f32 %v2662, %v2590
        %v2671 = vadd.f32 %v2669, %v2666
        %v2672 = vadd.f32 %v2670, %v2668
        %v2673 = vmul.f32 %v2666, %v2642
        %v2674 = vmul.f32 %v2668, %v2646
        %v2675 = vmul.f32 %v2660, %v2597
        %v2676 = vmul.f32 %v2662, %v2598
        %v2677 = vmul.f32 %v2673, %v2628
        %v2678 = vmul.f32 %v2674, %v2626
        %v2679 = vadd.f32 %v2675, %v2677
        %v2680 = vadd.f32 %v2676, %v2678
        %v2681 = vmul.f32 %v2660, %v2603
        %v2682 = vmul.f32 %v2662, %v2604
        %v2683 = vmul.f32 %v2673, %v2629
        %v2684 = vmul.f32 %v2674, %v2627
        %v2685 = vadd.f32 %v2681, %v2683
        %v2686 = vadd.f32 %v2682, %v2684
        %s2687 = scalar_lea.vmem [#allocation8], 48
        %v2688 = vld [vmem:[%s2687] ss:$8 sm:$0x3]
        %v2689 = vmul.f32 %v612, %v624
        %v2690 = vmul.f32 %v614, %v626
        %v2691 = vmul.f32 %v618, %v630
        %v2692 = vmul.f32 %v620, %v632
        %v2693 = vadd.f32 %v2689, %v2691
        %v2694 = vadd.f32 %v2690, %v2692
        %v2696 = vlaneseq
        %v2697 = vshrl.u32 %v2696, 7
        %v2698 = vsub.s32 0, %v2697
        %v2699 = vrot.slane %v2688, %v2698
        %v2700 = vlaneseq
        %v2701 = vshrl.u32 %v2700, 7
        %v2702 = vsub.s32 1, %v2701
        %v2703 = vrot.slane %v2688, %v2702
        %v2706 = vmul.f32 %v2693, %v2699
        %v2707 = vmul.f32 %v2694, %v2703
        %v2708 = vadd.f32 %v2439, %v991
        %v2709 = vadd.f32 %v2440, %v992
        %v2710 = vadd.f32 %v2706, %v2708
        %v2711 = vadd.f32 %v2707, %v2709
        %v2712 = vmax.f32 %v2655, %v2710
        %v2713 = vmax.f32 %v2656, %v2711
        %v2714 = vsub.f32 %v2655, %v2712
        %v2715 = vsub.f32 %v2656, %v2713
        %v2716 = vmul.f32 %v2714, 1.442695
        %v2717 = vpow.pop %v2716
        %v2718 = vmul.f32 %v2715, 1.442695
        %v2719 = vpow.pop %v2718
        %v2720 = vsub.f32 %v2710, %v2712
        %v2721 = vsub.f32 %v2711, %v2713
        %v2722 = vmul.f32 %v2720, 1.442695
        %v2723 = vpow.pop %v2722
        %v2724 = vmul.f32 %v2721, 1.442695
        %v2725 = vpow.pop %v2724
        %v2726 = vmul.f32 %v2717, %v2671
        %v2727 = vmul.f32 %v2719, %v2672
        %v2728 = vadd.f32 %v2726, %v2723
        %v2729 = vadd.f32 %v2727, %v2725
        %v2730 = vmul.f32 %v2723, %v2699
        %v2731 = vmul.f32 %v2725, %v2703
        %v2732 = vmul.f32 %v2717, %v2679
        %v2733 = vmul.f32 %v2719, %v2680
        %v2734 = vmul.f32 %v2730, %v636
        %v2735 = vmul.f32 %v2731, %v638
        %v2736 = vadd.f32 %v2732, %v2734
        %v2737 = vadd.f32 %v2733, %v2735
        %v2738 = vmul.f32 %v2717, %v2685
        %v2739 = vmul.f32 %v2719, %v2686
        %v2740 = vmul.f32 %v2730, %v642
        %v2741 = vmul.f32 %v2731, %v644
        %v2742 = vadd.f32 %v2738, %v2740
        %v2743 = vadd.f32 %v2739, %v2741
        %2744 = vrot.lane.b32.xlu0 %v624, 127
        %v2745 = vpop.permute.xlu0 %2744
        %2746 = vrot.lane.b32.xlu0 %v630, 127
        %v2747 = vpop.permute.xlu0 %2746
        %2748 = vrot.lane.b32.xlu0 %v626, 127
        %v2749 = vpop.permute.xlu0 %2748
        %2750 = vrot.lane.b32.xlu0 %v632, 127
        %v2751 = vpop.permute.xlu0 %2750
        %vm2752 = vcmp.lt.s32.totalorder %v707, 127
        %v2753 = vsel %vm2752, %v2745, %v2749
        %v2754 = vsel %vm2752, %v2747, %v2751
        %v2755 = vsel %vm2752, %v2749, %v2745
        %v2756 = vsel %vm2752, %v2751, %v2747
        %2757 = vrot.lane.b32.xlu0 %v636, 127
        %v2758 = vpop.permute.xlu0 %2757
        %2759 = vrot.lane.b32.xlu0 %v642, 127
        %v2760 = vpop.permute.xlu0 %2759
        %2761 = vrot.lane.b32.xlu0 %v638, 127
        %v2762 = vpop.permute.xlu0 %2761
        %2763 = vrot.lane.b32.xlu0 %v644, 127
        %v2764 = vpop.permute.xlu0 %2763
        %v2765 = vsel %vm2752, %v2758, %v2762
        %v2766 = vsel %vm2752, %v2760, %v2764
        %v2767 = vsel %vm2752, %v2762, %v2758
        %v2768 = vsel %vm2752, %v2764, %v2760
        %s2769 = scalar_lea.vmem [#allocation8], 49
        %v2770 = vld [vmem:[%s2769] ss:$8 sm:$0x3]
        %v2771 = vmul.f32 %v612, %v2753
        %v2772 = vmul.f32 %v614, %v2755
        %v2773 = vmul.f32 %v618, %v2754
        %v2774 = vmul.f32 %v620, %v2756
        %v2775 = vadd.f32 %v2771, %v2773
        %v2776 = vadd.f32 %v2772, %v2774
        %v2778 = vlaneseq
        %v2779 = vshrl.u32 %v2778, 7
        %v2780 = vsub.s32 0, %v2779
        %v2781 = vrot.slane %v2770, %v2780
        %v2782 = vlaneseq
        %v2783 = vshrl.u32 %v2782, 7
        %v2784 = vsub.s32 1, %v2783
        %v2785 = vrot.slane %v2770, %v2784
        %v2788 = vmul.f32 %v2775, %v2781
        %v2789 = vmul.f32 %v2776, %v2785
        %v2790 = vadd.f32 %v2439, %v1075
        %v2791 = vadd.f32 %v2440, %v1076
        %v2792 = vadd.f32 %v2788, %v2790
        %v2793 = vadd.f32 %v2789, %v2791
        %v2794 = vmax.f32 %v2712, %v2792
        %v2795 = vmax.f32 %v2713, %v2793
        %v2796 = vsub.f32 %v2712, %v2794
        %v2797 = vsub.f32 %v2713, %v2795
        %v2798 = vmul.f32 %v2796, 1.442695
        %v2799 = vpow.pop %v2798
        %v2800 = vmul.f32 %v2797, 1.442695
        %v2801 = vpow.pop %v2800
        %v2802 = vsub.f32 %v2792, %v2794
        %v2803 = vsub.f32 %v2793, %v2795
        %v2804 = vmul.f32 %v2802, 1.442695
        %v2805 = vpow.pop %v2804
        %v2806 = vmul.f32 %v2803, 1.442695
        %v2807 = vpow.pop %v2806
        %v2808 = vmul.f32 %v2799, %v2728
        %v2809 = vmul.f32 %v2801, %v2729
        %v2810 = vadd.f32 %v2808, %v2805
        %v2811 = vadd.f32 %v2809, %v2807
        %v2812 = vmul.f32 %v2805, %v2781
        %v2813 = vmul.f32 %v2807, %v2785
        %v2814 = vmul.f32 %v2799, %v2736
        %v2815 = vmul.f32 %v2801, %v2737
        %v2816 = vmul.f32 %v2812, %v2765
        %v2817 = vmul.f32 %v2813, %v2767
        %v2818 = vadd.f32 %v2814, %v2816
        %v2819 = vadd.f32 %v2815, %v2817
        %v2820 = vmul.f32 %v2799, %v2742
        %v2821 = vmul.f32 %v2801, %v2743
        %v2822 = vmul.f32 %v2812, %v2766
        %v2823 = vmul.f32 %v2813, %v2768
        %v2824 = vadd.f32 %v2820, %v2822
        %v2825 = vadd.f32 %v2821, %v2823
        %2826 = vrot.lane.b32.xlu0 %v624, 126
        %v2827 = vpop.permute.xlu0 %2826
        %2828 = vrot.lane.b32.xlu0 %v630, 126
        %v2829 = vpop.permute.xlu0 %2828
        %2830 = vrot.lane.b32.xlu0 %v626, 126
        %v2831 = vpop.permute.xlu0 %2830
        %2832 = vrot.lane.b32.xlu0 %v632, 126
        %v2833 = vpop.permute.xlu0 %2832
        %vm2834 = vcmp.lt.s32.totalorder %v707, 126
        %v2835 = vsel %vm2834, %v2827, %v2831
        %v2836 = vsel %vm2834, %v2829, %v2833
        %v2837 = vsel %vm2834, %v2831, %v2827
        %v2838 = vsel %vm2834, %v2833, %v2829
        %2839 = vrot.lane.b32.xlu0 %v636, 126
        %v2840 = vpop.permute.xlu0 %2839
        %2841 = vrot.lane.b32.xlu0 %v642, 126
        %v2842 = vpop.permute.xlu0 %2841
        %2843 = vrot.lane.b32.xlu0 %v638, 126
        %v2844 = vpop.permute.xlu0 %2843
        %2845 = vrot.lane.b32.xlu0 %v644, 126
        %v2846 = vpop.permute.xlu0 %2845
        %v2847 = vsel %vm2834, %v2840, %v2844
        %v2848 = vsel %vm2834, %v2842, %v2846
        %v2849 = vsel %vm2834, %v2844, %v2840
        %v2850 = vsel %vm2834, %v2846, %v2842
        %s2851 = scalar_lea.vmem [#allocation8], 50
        %v2852 = vld [vmem:[%s2851] ss:$8 sm:$0x3]
        %v2853 = vmul.f32 %v612, %v2835
        %v2854 = vmul.f32 %v614, %v2837
        %v2855 = vmul.f32 %v618, %v2836
        %v2856 = vmul.f32 %v620, %v2838
        %v2857 = vadd.f32 %v2853, %v2855
        %v2858 = vadd.f32 %v2854, %v2856
        %v2860 = vlaneseq
        %v2861 = vshrl.u32 %v2860, 7
        %v2862 = vsub.s32 0, %v2861
        %v2863 = vrot.slane %v2852, %v2862
        %v2864 = vlaneseq
        %v2865 = vshrl.u32 %v2864, 7
        %v2866 = vsub.s32 1, %v2865
        %v2867 = vrot.slane %v2852, %v2866
        %v2870 = vmul.f32 %v2857, %v2863
        %v2871 = vmul.f32 %v2858, %v2867
        %v2872 = vadd.f32 %v2439, %v1159
        %v2873 = vadd.f32 %v2440, %v1160
        %v2874 = vadd.f32 %v2870, %v2872
        %v2875 = vadd.f32 %v2871, %v2873
        %v2876 = vmax.f32 %v2794, %v2874
        %v2877 = vmax.f32 %v2795, %v2875
        %v2878 = vsub.f32 %v2794, %v2876
        %v2879 = vsub.f32 %v2795, %v2877
        %v2880 = vmul.f32 %v2878, 1.442695
        %v2881 = vpow.pop %v2880
        %v2882 = vmul.f32 %v2879, 1.442695
        %v2883 = vpow.pop %v2882
        %v2884 = vsub.f32 %v2874, %v2876
        %v2885 = vsub.f32 %v2875, %v2877
        %v2886 = vmul.f32 %v2884, 1.442695
        %v2887 = vpow.pop %v2886
        %v2888 = vmul.f32 %v2885, 1.442695
        %v2889 = vpow.pop %v2888
        %v2890 = vmul.f32 %v2881, %v2810
        %v2891 = vmul.f32 %v2883, %v2811
        %v2892 = vadd.f32 %v2890, %v2887
        %v2893 = vadd.f32 %v2891, %v2889
        %v2894 = vmul.f32 %v2887, %v2863
        %v2895 = vmul.f32 %v2889, %v2867
        %v2896 = vmul.f32 %v2881, %v2818
        %v2897 = vmul.f32 %v2883, %v2819
        %v2898 = vmul.f32 %v2894, %v2847
        %v2899 = vmul.f32 %v2895, %v2849
        %v2900 = vadd.f32 %v2896, %v2898
        %v2901 = vadd.f32 %v2897, %v2899
        %v2902 = vmul.f32 %v2881, %v2824
        %v2903 = vmul.f32 %v2883, %v2825
        %v2904 = vmul.f32 %v2894, %v2848
        %v2905 = vmul.f32 %v2895, %v2850
        %v2906 = vadd.f32 %v2902, %v2904
        %v2907 = vadd.f32 %v2903, %v2905
        %2908 = vrot.lane.b32.xlu0 %v624, 125
        %v2909 = vpop.permute.xlu0 %2908
        %2910 = vrot.lane.b32.xlu0 %v630, 125
        %v2911 = vpop.permute.xlu0 %2910
        %2912 = vrot.lane.b32.xlu0 %v626, 125
        %v2913 = vpop.permute.xlu0 %2912
        %2914 = vrot.lane.b32.xlu0 %v632, 125
        %v2915 = vpop.permute.xlu0 %2914
        %vm2916 = vcmp.lt.s32.totalorder %v707, 125
        %v2917 = vsel %vm2916, %v2909, %v2913
        %v2918 = vsel %vm2916, %v2911, %v2915
        %v2919 = vsel %vm2916, %v2913, %v2909
        %v2920 = vsel %vm2916, %v2915, %v2911
        %2921 = vrot.lane.b32.xlu0 %v636, 125
        %v2922 = vpop.permute.xlu0 %2921
        %2923 = vrot.lane.b32.xlu0 %v642, 125
        %v2924 = vpop.permute.xlu0 %2923
        %2925 = vrot.lane.b32.xlu0 %v638, 125
        %v2926 = vpop.permute.xlu0 %2925
        %2927 = vrot.lane.b32.xlu0 %v644, 125
        %v2928 = vpop.permute.xlu0 %2927
        %v2929 = vsel %vm2916, %v2922, %v2926
        %v2930 = vsel %vm2916, %v2924, %v2928
        %v2931 = vsel %vm2916, %v2926, %v2922
        %v2932 = vsel %vm2916, %v2928, %v2924
        %s2933 = scalar_lea.vmem [#allocation8], 51
        %v2934 = vld [vmem:[%s2933] ss:$8 sm:$0x3]
        %v2935 = vmul.f32 %v612, %v2917
        %v2936 = vmul.f32 %v614, %v2919
        %v2937 = vmul.f32 %v618, %v2918
        %v2938 = vmul.f32 %v620, %v2920
        %v2939 = vadd.f32 %v2935, %v2937
        %v2940 = vadd.f32 %v2936, %v2938
        %v2942 = vlaneseq
        %v2943 = vshrl.u32 %v2942, 7
        %v2944 = vsub.s32 0, %v2943
        %v2945 = vrot.slane %v2934, %v2944
        %v2946 = vlaneseq
        %v2947 = vshrl.u32 %v2946, 7
        %v2948 = vsub.s32 1, %v2947
        %v2949 = vrot.slane %v2934, %v2948
        %v2952 = vmul.f32 %v2939, %v2945
        %v2953 = vmul.f32 %v2940, %v2949
        %v2954 = vadd.f32 %v2439, %v1243
        %v2955 = vadd.f32 %v2440, %v1244
        %v2956 = vadd.f32 %v2952, %v2954
        %v2957 = vadd.f32 %v2953, %v2955
        %v2958 = vmax.f32 %v2876, %v2956
        %v2959 = vmax.f32 %v2877, %v2957
        %v2960 = vsub.f32 %v2876, %v2958
        %v2961 = vsub.f32 %v2877, %v2959
        %v2962 = vmul.f32 %v2960, 1.442695
        %v2963 = vpow.pop %v2962
        %v2964 = vmul.f32 %v2961, 1.442695
        %v2965 = vpow.pop %v2964
        %v2966 = vsub.f32 %v2956, %v2958
        %v2967 = vsub.f32 %v2957, %v2959
        %v2968 = vmul.f32 %v2966, 1.442695
        %v2969 = vpow.pop %v2968
        %v2970 = vmul.f32 %v2967, 1.442695
        %v2971 = vpow.pop %v2970
        %v2972 = vmul.f32 %v2963, %v2892
        %v2973 = vmul.f32 %v2965, %v2893
        %v2974 = vadd.f32 %v2972, %v2969
        %v2975 = vadd.f32 %v2973, %v2971
        %v2976 = vmul.f32 %v2969, %v2945
        %v2977 = vmul.f32 %v2971, %v2949
        %v2978 = vmul.f32 %v2963, %v2900
        %v2979 = vmul.f32 %v2965, %v2901
        %v2980 = vmul.f32 %v2976, %v2929
        %v2981 = vmul.f32 %v2977, %v2931
        %v2982 = vadd.f32 %v2978, %v2980
        %v2983 = vadd.f32 %v2979, %v2981
        %v2984 = vmul.f32 %v2963, %v2906
        %v2985 = vmul.f32 %v2965, %v2907
        %v2986 = vmul.f32 %v2976, %v2930
        %v2987 = vmul.f32 %v2977, %v2932
        %v2988 = vadd.f32 %v2984, %v2986
        %v2989 = vadd.f32 %v2985, %v2987
        %s2990 = sld [smem:[#allocation7 + $0x4]]
        %v2991 = vstv %s2990
        %v2992 = vmul.f32 %v2991, %v612
        %v2993 = vmul.f32 %v2991, %v614
        %2994 = vrot.lane.b32.xlu0 %v624, 115
        %v2995 = vpop.permute.xlu0 %2994
        %2996 = vrot.lane.b32.xlu0 %v630, 115
        %v2997 = vpop.permute.xlu0 %2996
        %2998 = vrot.lane.b32.xlu0 %v626, 115
        %v2999 = vpop.permute.xlu0 %2998
        %3000 = vrot.lane.b32.xlu0 %v632, 115
        %v3001 = vpop.permute.xlu0 %3000
        %vm3002 = vcmp.lt.s32.totalorder %v707, 115
        %v3003 = vsel %vm3002, %v2995, %v2999
        %v3004 = vsel %vm3002, %v2997, %v3001
        %v3005 = vsel %vm3002, %v2999, %v2995
        %v3006 = vsel %vm3002, %v3001, %v2997
        %3007 = vrot.lane.b32.xlu0 %v636, 115
        %v3008 = vpop.permute.xlu0 %3007
        %3009 = vrot.lane.b32.xlu0 %v642, 115
        %v3010 = vpop.permute.xlu0 %3009
        %3011 = vrot.lane.b32.xlu0 %v638, 115
        %v3012 = vpop.permute.xlu0 %3011
        %3013 = vrot.lane.b32.xlu0 %v644, 115
        %v3014 = vpop.permute.xlu0 %3013
        %v3015 = vsel %vm3002, %v3008, %v3012
        %v3016 = vsel %vm3002, %v3010, %v3014
        %v3017 = vsel %vm3002, %v3012, %v3008
        %v3018 = vsel %vm3002, %v3014, %v3010
        %s3019 = scalar_lea.vmem [#allocation8], 52
        %v3020 = vld [vmem:[%s3019] ss:$8 sm:$0x3]
        %v3021 = vmul.f32 %v612, %v3003
        %v3022 = vmul.f32 %v614, %v3005
        %v3023 = vmul.f32 %v618, %v3004
        %v3024 = vmul.f32 %v620, %v3006
        %v3025 = vadd.f32 %v3021, %v3023
        %v3026 = vadd.f32 %v3022, %v3024
        %v3028 = vlaneseq
        %v3029 = vshrl.u32 %v3028, 7
        %v3030 = vsub.s32 0, %v3029
        %v3031 = vrot.slane %v3020, %v3030
        %v3032 = vlaneseq
        %v3033 = vshrl.u32 %v3032, 7
        %v3034 = vsub.s32 1, %v3033
        %v3035 = vrot.slane %v3020, %v3034
        %v3038 = vmul.f32 %v3025, %v3031
        %v3039 = vmul.f32 %v3026, %v3035
        %v3040 = vadd.f32 %v2992, %v745
        %v3041 = vadd.f32 %v2993, %v746
        %v3042 = vadd.f32 %v3038, %v3040
        %v3043 = vadd.f32 %v3039, %v3041
        %v3044 = vmax.f32 %v2958, %v3042
        %v3045 = vmax.f32 %v2959, %v3043
        %v3046 = vsub.f32 %v2958, %v3044
        %v3047 = vsub.f32 %v2959, %v3045
        %v3048 = vmul.f32 %v3046, 1.442695
        %v3049 = vpow.pop %v3048
        %v3050 = vmul.f32 %v3047, 1.442695
        %v3051 = vpow.pop %v3050
        %v3052 = vsub.f32 %v3042, %v3044
        %v3053 = vsub.f32 %v3043, %v3045
        %v3054 = vmul.f32 %v3052, 1.442695
        %v3055 = vpow.pop %v3054
        %v3056 = vmul.f32 %v3053, 1.442695
        %v3057 = vpow.pop %v3056
        %v3058 = vmul.f32 %v3049, %v2974
        %v3059 = vmul.f32 %v3051, %v2975
        %v3060 = vadd.f32 %v3058, %v3055
        %v3061 = vadd.f32 %v3059, %v3057
        %v3062 = vmul.f32 %v3055, %v3031
        %v3063 = vmul.f32 %v3057, %v3035
        %v3064 = vmul.f32 %v3049, %v2982
        %v3065 = vmul.f32 %v3051, %v2983
        %v3066 = vmul.f32 %v3062, %v3015
        %v3067 = vmul.f32 %v3063, %v3017
        %v3068 = vadd.f32 %v3064, %v3066
        %v3069 = vadd.f32 %v3065, %v3067
        %v3070 = vmul.f32 %v3049, %v2988
        %v3071 = vmul.f32 %v3051, %v2989
        %v3072 = vmul.f32 %v3062, %v3016
        %v3073 = vmul.f32 %v3063, %v3018
        %v3074 = vadd.f32 %v3070, %v3072
        %v3075 = vadd.f32 %v3071, %v3073
        %3076 = vrot.lane.b32.xlu0 %v624, 114
        %v3077 = vpop.permute.xlu0 %3076
        %3078 = vrot.lane.b32.xlu0 %v630, 114
        %v3079 = vpop.permute.xlu0 %3078
        %3080 = vrot.lane.b32.xlu0 %v626, 114
        %v3081 = vpop.permute.xlu0 %3080
        %3082 = vrot.lane.b32.xlu0 %v632, 114
        %v3083 = vpop.permute.xlu0 %3082
        %vm3084 = vcmp.lt.s32.totalorder %v707, 114
        %v3085 = vsel %vm3084, %v3077, %v3081
        %v3086 = vsel %vm3084, %v3079, %v3083
        %v3087 = vsel %vm3084, %v3081, %v3077
        %v3088 = vsel %vm3084, %v3083, %v3079
        %3089 = vrot.lane.b32.xlu0 %v636, 114
        %v3090 = vpop.permute.xlu0 %3089
        %3091 = vrot.lane.b32.xlu0 %v642, 114
        %v3092 = vpop.permute.xlu0 %3091
        %3093 = vrot.lane.b32.xlu0 %v638, 114
        %v3094 = vpop.permute.xlu0 %3093
        %3095 = vrot.lane.b32.xlu0 %v644, 114
        %v3096 = vpop.permute.xlu0 %3095
        %v3097 = vsel %vm3084, %v3090, %v3094
        %v3098 = vsel %vm3084, %v3092, %v3096
        %v3099 = vsel %vm3084, %v3094, %v3090
        %v3100 = vsel %vm3084, %v3096, %v3092
        %s3101 = scalar_lea.vmem [#allocation8], 53
        %v3102 = vld [vmem:[%s3101] ss:$8 sm:$0x3]
        %v3103 = vmul.f32 %v612, %v3085
        %v3104 = vmul.f32 %v614, %v3087
        %v3105 = vmul.f32 %v618, %v3086
        %v3106 = vmul.f32 %v620, %v3088
        %v3107 = vadd.f32 %v3103, %v3105
        %v3108 = vadd.f32 %v3104, %v3106
        %v3110 = vlaneseq
        %v3111 = vshrl.u32 %v3110, 7
        %v3112 = vsub.s32 0, %v3111
        %v3113 = vrot.slane %v3102, %v3112
        %v3114 = vlaneseq
        %v3115 = vshrl.u32 %v3114, 7
        %v3116 = vsub.s32 1, %v3115
        %v3117 = vrot.slane %v3102, %v3116
        %v3120 = vmul.f32 %v3107, %v3113
        %v3121 = vmul.f32 %v3108, %v3117
        %v3122 = vadd.f32 %v2992, %v823
        %v3123 = vadd.f32 %v2993, %v824
        %v3124 = vadd.f32 %v3120, %v3122
        %v3125 = vadd.f32 %v3121, %v3123
        %v3126 = vmax.f32 %v3044, %v3124
        %v3127 = vmax.f32 %v3045, %v3125
        %v3128 = vsub.f32 %v3044, %v3126
        %v3129 = vsub.f32 %v3045, %v3127
        %v3130 = vmul.f32 %v3128, 1.442695
        %v3131 = vpow.pop %v3130
        %v3132 = vmul.f32 %v3129, 1.442695
        %v3133 = vpow.pop %v3132
        %v3134 = vsub.f32 %v3124, %v3126
        %v3135 = vsub.f32 %v3125, %v3127
        %v3136 = vmul.f32 %v3134, 1.442695
        %v3137 = vpow.pop %v3136
        %v3138 = vmul.f32 %v3135, 1.442695
        %v3139 = vpow.pop %v3138
        %v3140 = vmul.f32 %v3131, %v3060
        %v3141 = vmul.f32 %v3133, %v3061
        %v3142 = vadd.f32 %v3140, %v3137
        %v3143 = vadd.f32 %v3141, %v3139
        %v3144 = vmul.f32 %v3137, %v3113
        %v3145 = vmul.f32 %v3139, %v3117
        %v3146 = vmul.f32 %v3131, %v3068
        %v3147 = vmul.f32 %v3133, %v3069
        %v3148 = vmul.f32 %v3144, %v3097
        %v3149 = vmul.f32 %v3145, %v3099
        %v3150 = vadd.f32 %v3146, %v3148
        %v3151 = vadd.f32 %v3147, %v3149
        %v3152 = vmul.f32 %v3131, %v3074
        %v3153 = vmul.f32 %v3133, %v3075
        %v3154 = vmul.f32 %v3144, %v3098
        %v3155 = vmul.f32 %v3145, %v3100
        %v3156 = vadd.f32 %v3152, %v3154
        %v3157 = vadd.f32 %v3153, %v3155
        %3158 = vrot.lane.b32.xlu0 %v624, 113
        %v3159 = vpop.permute.xlu0 %3158
        %3160 = vrot.lane.b32.xlu0 %v630, 113
        %v3161 = vpop.permute.xlu0 %3160
        %3162 = vrot.lane.b32.xlu0 %v626, 113
        %v3163 = vpop.permute.xlu0 %3162
        %3164 = vrot.lane.b32.xlu0 %v632, 113
        %v3165 = vpop.permute.xlu0 %3164
        %vm3166 = vcmp.lt.s32.totalorder %v707, 113
        %v3167 = vsel %vm3166, %v3159, %v3163
        %v3168 = vsel %vm3166, %v3161, %v3165
        %v3169 = vsel %vm3166, %v3163, %v3159
        %v3170 = vsel %vm3166, %v3165, %v3161
        %3171 = vrot.lane.b32.xlu0 %v636, 113
        %v3172 = vpop.permute.xlu0 %3171
        %3173 = vrot.lane.b32.xlu0 %v642, 113
        %v3174 = vpop.permute.xlu0 %3173
        %3175 = vrot.lane.b32.xlu0 %v638, 113
        %v3176 = vpop.permute.xlu0 %3175
        %3177 = vrot.lane.b32.xlu0 %v644, 113
        %v3178 = vpop.permute.xlu0 %3177
        %v3179 = vsel %vm3166, %v3172, %v3176
        %v3180 = vsel %vm3166, %v3174, %v3178
        %v3181 = vsel %vm3166, %v3176, %v3172
        %v3182 = vsel %vm3166, %v3178, %v3174
        %s3183 = scalar_lea.vmem [#allocation8], 54
        %v3184 = vld [vmem:[%s3183] ss:$8 sm:$0x3]
        %v3185 = vmul.f32 %v612, %v3167
        %v3186 = vmul.f32 %v614, %v3169
        %v3187 = vmul.f32 %v618, %v3168
        %v3188 = vmul.f32 %v620, %v3170
        %v3189 = vadd.f32 %v3185, %v3187
        %v3190 = vadd.f32 %v3186, %v3188
        %v3192 = vlaneseq
        %v3193 = vshrl.u32 %v3192, 7
        %v3194 = vsub.s32 0, %v3193
        %v3195 = vrot.slane %v3184, %v3194
        %v3196 = vlaneseq
        %v3197 = vshrl.u32 %v3196, 7
        %v3198 = vsub.s32 1, %v3197
        %v3199 = vrot.slane %v3184, %v3198
        %v3202 = vmul.f32 %v3189, %v3195
        %v3203 = vmul.f32 %v3190, %v3199
        %v3204 = vadd.f32 %v2992, %v907
        %v3205 = vadd.f32 %v2993, %v908
        %v3206 = vadd.f32 %v3202, %v3204
        %v3207 = vadd.f32 %v3203, %v3205
        %v3208 = vmax.f32 %v3126, %v3206
        %v3209 = vmax.f32 %v3127, %v3207
        %v3210 = vsub.f32 %v3126, %v3208
        %v3211 = vsub.f32 %v3127, %v3209
        %v3212 = vmul.f32 %v3210, 1.442695
        %v3213 = vpow.pop %v3212
        %v3214 = vmul.f32 %v3211, 1.442695
        %v3215 = vpow.pop %v3214
        %v3216 = vsub.f32 %v3206, %v3208
        %v3217 = vsub.f32 %v3207, %v3209
        %v3218 = vmul.f32 %v3216, 1.442695
        %v3219 = vpow.pop %v3218
        %v3220 = vmul.f32 %v3217, 1.442695
        %v3221 = vpow.pop %v3220
        %v3222 = vmul.f32 %v3213, %v3142
        %v3223 = vmul.f32 %v3215, %v3143
        %v3224 = vadd.f32 %v3222, %v3219
        %v3225 = vadd.f32 %v3223, %v3221
        %v3226 = vmul.f32 %v3219, %v3195
        %v3227 = vmul.f32 %v3221, %v3199
        %v3228 = vmul.f32 %v3213, %v3150
        %v3229 = vmul.f32 %v3215, %v3151
        %v3230 = vmul.f32 %v3226, %v3179
        %v3231 = vmul.f32 %v3227, %v3181
        %v3232 = vadd.f32 %v3228, %v3230
        %v3233 = vadd.f32 %v3229, %v3231
        %v3234 = vmul.f32 %v3213, %v3156
        %v3235 = vmul.f32 %v3215, %v3157
        %v3236 = vmul.f32 %v3226, %v3180
        %v3237 = vmul.f32 %v3227, %v3182
        %v3238 = vadd.f32 %v3234, %v3236
        %v3239 = vadd.f32 %v3235, %v3237
        %3240 = vrot.lane.b32.xlu0 %v624, 112
        %v3241 = vpop.permute.xlu0 %3240
        %3242 = vrot.lane.b32.xlu0 %v630, 112
        %v3243 = vpop.permute.xlu0 %3242
        %3244 = vrot.lane.b32.xlu0 %v626, 112
        %v3245 = vpop.permute.xlu0 %3244
        %3246 = vrot.lane.b32.xlu0 %v632, 112
        %v3247 = vpop.permute.xlu0 %3246
        %vm3248 = vcmp.lt.s32.totalorder %v707, 112
        %v3249 = vsel %vm3248, %v3241, %v3245
        %v3250 = vsel %vm3248, %v3243, %v3247
        %v3251 = vsel %vm3248, %v3245, %v3241
        %v3252 = vsel %vm3248, %v3247, %v3243
        %3253 = vrot.lane.b32.xlu0 %v636, 112
        %v3254 = vpop.permute.xlu0 %3253
        %3255 = vrot.lane.b32.xlu0 %v642, 112
        %v3256 = vpop.permute.xlu0 %3255
        %3257 = vrot.lane.b32.xlu0 %v638, 112
        %v3258 = vpop.permute.xlu0 %3257
        %3259 = vrot.lane.b32.xlu0 %v644, 112
        %v3260 = vpop.permute.xlu0 %3259
        %v3261 = vsel %vm3248, %v3254, %v3258
        %v3262 = vsel %vm3248, %v3256, %v3260
        %v3263 = vsel %vm3248, %v3258, %v3254
        %v3264 = vsel %vm3248, %v3260, %v3256
        %s3265 = scalar_lea.vmem [#allocation8], 55
        %v3266 = vld [vmem:[%s3265] ss:$8 sm:$0x3]
        %v3267 = vmul.f32 %v612, %v3249
        %v3268 = vmul.f32 %v614, %v3251
        %v3269 = vmul.f32 %v618, %v3250
        %v3270 = vmul.f32 %v620, %v3252
        %v3271 = vadd.f32 %v3267, %v3269
        %v3272 = vadd.f32 %v3268, %v3270
        %v3274 = vlaneseq
        %v3275 = vshrl.u32 %v3274, 7
        %v3276 = vsub.s32 0, %v3275
        %v3277 = vrot.slane %v3266, %v3276
        %v3278 = vlaneseq
        %v3279 = vshrl.u32 %v3278, 7
        %v3280 = vsub.s32 1, %v3279
        %v3281 = vrot.slane %v3266, %v3280
        %v3284 = vmul.f32 %v3271, %v3277
        %v3285 = vmul.f32 %v3272, %v3281
        %v3286 = vadd.f32 %v2992, %v991
        %v3287 = vadd.f32 %v2993, %v992
        %v3288 = vadd.f32 %v3284, %v3286
        %v3289 = vadd.f32 %v3285, %v3287
        %v3290 = vmax.f32 %v3208, %v3288
        %v3291 = vmax.f32 %v3209, %v3289
        %v3292 = vsub.f32 %v3208, %v3290
        %v3293 = vsub.f32 %v3209, %v3291
        %v3294 = vmul.f32 %v3292, 1.442695
        %v3295 = vpow.pop %v3294
        %v3296 = vmul.f32 %v3293, 1.442695
        %v3297 = vpow.pop %v3296
        %v3298 = vsub.f32 %v3288, %v3290
        %v3299 = vsub.f32 %v3289, %v3291
        %v3300 = vmul.f32 %v3298, 1.442695
        %v3301 = vpow.pop %v3300
        %v3302 = vmul.f32 %v3299, 1.442695
        %v3303 = vpow.pop %v3302
        %v3304 = vmul.f32 %v3295, %v3224
        %v3305 = vmul.f32 %v3297, %v3225
        %v3306 = vadd.f32 %v3304, %v3301
        %v3307 = vadd.f32 %v3305, %v3303
        %v3308 = vmul.f32 %v3301, %v3277
        %v3309 = vmul.f32 %v3303, %v3281
        %v3310 = vmul.f32 %v3295, %v3232
        %v3311 = vmul.f32 %v3297, %v3233
        %v3312 = vmul.f32 %v3308, %v3261
        %v3313 = vmul.f32 %v3309, %v3263
        %v3314 = vadd.f32 %v3310, %v3312
        %v3315 = vadd.f32 %v3311, %v3313
        %v3316 = vmul.f32 %v3295, %v3238
        %v3317 = vmul.f32 %v3297, %v3239
        %v3318 = vmul.f32 %v3308, %v3262
        %v3319 = vmul.f32 %v3309, %v3264
        %v3320 = vadd.f32 %v3316, %v3318
        %v3321 = vadd.f32 %v3317, %v3319
        %3322 = vrot.lane.b32.xlu0 %v624, 111
        %v3323 = vpop.permute.xlu0 %3322
        %3324 = vrot.lane.b32.xlu0 %v630, 111
        %v3325 = vpop.permute.xlu0 %3324
        %3326 = vrot.lane.b32.xlu0 %v626, 111
        %v3327 = vpop.permute.xlu0 %3326
        %3328 = vrot.lane.b32.xlu0 %v632, 111
        %v3329 = vpop.permute.xlu0 %3328
        %vm3330 = vcmp.lt.s32.totalorder %v707, 111
        %v3331 = vsel %vm3330, %v3323, %v3327
        %v3332 = vsel %vm3330, %v3325, %v3329
        %v3333 = vsel %vm3330, %v3327, %v3323
        %v3334 = vsel %vm3330, %v3329, %v3325
        %3335 = vrot.lane.b32.xlu0 %v636, 111
        %v3336 = vpop.permute.xlu0 %3335
        %3337 = vrot.lane.b32.xlu0 %v642, 111
        %v3338 = vpop.permute.xlu0 %3337
        %3339 = vrot.lane.b32.xlu0 %v638, 111
        %v3340 = vpop.permute.xlu0 %3339
        %3341 = vrot.lane.b32.xlu0 %v644, 111
        %v3342 = vpop.permute.xlu0 %3341
        %v3343 = vsel %vm3330, %v3336, %v3340
        %v3344 = vsel %vm3330, %v3338, %v3342
        %v3345 = vsel %vm3330, %v3340, %v3336
        %v3346 = vsel %vm3330, %v3342, %v3338
        %s3347 = scalar_lea.vmem [#allocation8], 64
        %v3348 = vld [vmem:[%s3347] ss:$8 sm:$0x3]
        %v3349 = vmul.f32 %v612, %v3331
        %v3350 = vmul.f32 %v614, %v3333
        %v3351 = vmul.f32 %v618, %v3332
        %v3352 = vmul.f32 %v620, %v3334
        %v3353 = vadd.f32 %v3349, %v3351
        %v3354 = vadd.f32 %v3350, %v3352
        %v3356 = vlaneseq
        %v3357 = vshrl.u32 %v3356, 7
        %v3358 = vsub.s32 0, %v3357
        %v3359 = vrot.slane %v3348, %v3358
        %v3360 = vlaneseq
        %v3361 = vshrl.u32 %v3360, 7
        %v3362 = vsub.s32 1, %v3361
        %v3363 = vrot.slane %v3348, %v3362
        %v3366 = vmul.f32 %v3353, %v3359
        %v3367 = vmul.f32 %v3354, %v3363
        %v3368 = vadd.f32 %v2992, %v1075
        %v3369 = vadd.f32 %v2993, %v1076
        %v3370 = vadd.f32 %v3366, %v3368
        %v3371 = vadd.f32 %v3367, %v3369
        %v3372 = vmax.f32 %v3290, %v3370
        %v3373 = vmax.f32 %v3291, %v3371
        %v3374 = vsub.f32 %v3290, %v3372
        %v3375 = vsub.f32 %v3291, %v3373
        %v3376 = vmul.f32 %v3374, 1.442695
        %v3377 = vpow.pop %v3376
        %v3378 = vmul.f32 %v3375, 1.442695
        %v3379 = vpow.pop %v3378
        %v3380 = vsub.f32 %v3370, %v3372
        %v3381 = vsub.f32 %v3371, %v3373
        %v3382 = vmul.f32 %v3380, 1.442695
        %v3383 = vpow.pop %v3382
        %v3384 = vmul.f32 %v3381, 1.442695
        %v3385 = vpow.pop %v3384
        %v3386 = vmul.f32 %v3377, %v3306
        %v3387 = vmul.f32 %v3379, %v3307
        %v3388 = vadd.f32 %v3386, %v3383
        %v3389 = vadd.f32 %v3387, %v3385
        %v3390 = vmul.f32 %v3383, %v3359
        %v3391 = vmul.f32 %v3385, %v3363
        %v3392 = vmul.f32 %v3377, %v3314
        %v3393 = vmul.f32 %v3379, %v3315
        %v3394 = vmul.f32 %v3390, %v3343
        %v3395 = vmul.f32 %v3391, %v3345
        %v3396 = vadd.f32 %v3392, %v3394
        %v3397 = vadd.f32 %v3393, %v3395
        %v3398 = vmul.f32 %v3377, %v3320
        %v3399 = vmul.f32 %v3379, %v3321
        %v3400 = vmul.f32 %v3390, %v3344
        %v3401 = vmul.f32 %v3391, %v3346
        %v3402 = vadd.f32 %v3398, %v3400
        %v3403 = vadd.f32 %v3399, %v3401
        %3404 = vrot.lane.b32.xlu0 %v624, 110
        %v3405 = vpop.permute.xlu0 %3404
        %3406 = vrot.lane.b32.xlu0 %v630, 110
        %v3407 = vpop.permute.xlu0 %3406
        %3408 = vrot.lane.b32.xlu0 %v626, 110
        %v3409 = vpop.permute.xlu0 %3408
        %3410 = vrot.lane.b32.xlu0 %v632, 110
        %v3411 = vpop.permute.xlu0 %3410
        %vm3412 = vcmp.lt.s32.totalorder %v707, 110
        %v3413 = vsel %vm3412, %v3405, %v3409
        %v3414 = vsel %vm3412, %v3407, %v3411
        %v3415 = vsel %vm3412, %v3409, %v3405
        %v3416 = vsel %vm3412, %v3411, %v3407
        %3417 = vrot.lane.b32.xlu0 %v636, 110
        %v3418 = vpop.permute.xlu0 %3417
        %3419 = vrot.lane.b32.xlu0 %v642, 110
        %v3420 = vpop.permute.xlu0 %3419
        %3421 = vrot.lane.b32.xlu0 %v638, 110
        %v3422 = vpop.permute.xlu0 %3421
        %3423 = vrot.lane.b32.xlu0 %v644, 110
        %v3424 = vpop.permute.xlu0 %3423
        %v3425 = vsel %vm3412, %v3418, %v3422
        %v3426 = vsel %vm3412, %v3420, %v3424
        %v3427 = vsel %vm3412, %v3422, %v3418
        %v3428 = vsel %vm3412, %v3424, %v3420
        %s3429 = scalar_lea.vmem [#allocation8], 65
        %v3430 = vld [vmem:[%s3429] ss:$8 sm:$0x3]
        %v3431 = vmul.f32 %v612, %v3413
        %v3432 = vmul.f32 %v614, %v3415
        %v3433 = vmul.f32 %v618, %v3414
        %v3434 = vmul.f32 %v620, %v3416
        %v3435 = vadd.f32 %v3431, %v3433
        %v3436 = vadd.f32 %v3432, %v3434
        %v3438 = vlaneseq
        %v3439 = vshrl.u32 %v3438, 7
        %v3440 = vsub.s32 0, %v3439
        %v3441 = vrot.slane %v3430, %v3440
        %v3442 = vlaneseq
        %v3443 = vshrl.u32 %v3442, 7
        %v3444 = vsub.s32 1, %v3443
        %v3445 = vrot.slane %v3430, %v3444
        %v3448 = vmul.f32 %v3435, %v3441
        %v3449 = vmul.f32 %v3436, %v3445
        %v3450 = vadd.f32 %v2992, %v1159
        %v3451 = vadd.f32 %v2993, %v1160
        %v3452 = vadd.f32 %v3448, %v3450
        %v3453 = vadd.f32 %v3449, %v3451
        %v3454 = vmax.f32 %v3372, %v3452
        %v3455 = vmax.f32 %v3373, %v3453
        %v3456 = vsub.f32 %v3372, %v3454
        %v3457 = vsub.f32 %v3373, %v3455
        %v3458 = vmul.f32 %v3456, 1.442695
        %v3459 = vpow.pop %v3458
        %v3460 = vmul.f32 %v3457, 1.442695
        %v3461 = vpow.pop %v3460
        %v3462 = vsub.f32 %v3452, %v3454
        %v3463 = vsub.f32 %v3453, %v3455
        %v3464 = vmul.f32 %v3462, 1.442695
        %v3465 = vpow.pop %v3464
        %v3466 = vmul.f32 %v3463, 1.442695
        %v3467 = vpow.pop %v3466
        %v3468 = vmul.f32 %v3459, %v3388
        %v3469 = vmul.f32 %v3461, %v3389
        %v3470 = vadd.f32 %v3468, %v3465
        %v3471 = vadd.f32 %v3469, %v3467
        %v3472 = vmul.f32 %v3465, %v3441
        %v3473 = vmul.f32 %v3467, %v3445
        %v3474 = vmul.f32 %v3459, %v3396
        %v3475 = vmul.f32 %v3461, %v3397
        %v3476 = vmul.f32 %v3472, %v3425
        %v3477 = vmul.f32 %v3473, %v3427
        %v3478 = vadd.f32 %v3474, %v3476
        %v3479 = vadd.f32 %v3475, %v3477
        %v3480 = vmul.f32 %v3459, %v3402
        %v3481 = vmul.f32 %v3461, %v3403
        %v3482 = vmul.f32 %v3472, %v3426
        %v3483 = vmul.f32 %v3473, %v3428
        %v3484 = vadd.f32 %v3480, %v3482
        %v3485 = vadd.f32 %v3481, %v3483
        %3486 = vrot.lane.b32.xlu0 %v624, 109
        %v3487 = vpop.permute.xlu0 %3486
        %3488 = vrot.lane.b32.xlu0 %v630, 109
        %v3489 = vpop.permute.xlu0 %3488
        %3490 = vrot.lane.b32.xlu0 %v626, 109
        %v3491 = vpop.permute.xlu0 %3490
        %3492 = vrot.lane.b32.xlu0 %v632, 109
        %v3493 = vpop.permute.xlu0 %3492
        %vm3494 = vcmp.lt.s32.totalorder %v707, 109
        %v3495 = vsel %vm3494, %v3487, %v3491
        %v3496 = vsel %vm3494, %v3489, %v3493
        %v3497 = vsel %vm3494, %v3491, %v3487
        %v3498 = vsel %vm3494, %v3493, %v3489
        %3499 = vrot.lane.b32.xlu0 %v636, 109
        %v3500 = vpop.permute.xlu0 %3499
        %3501 = vrot.lane.b32.xlu0 %v642, 109
        %v3502 = vpop.permute.xlu0 %3501
        %3503 = vrot.lane.b32.xlu0 %v638, 109
        %v3504 = vpop.permute.xlu0 %3503
        %3505 = vrot.lane.b32.xlu0 %v644, 109
        %v3506 = vpop.permute.xlu0 %3505
        %v3507 = vsel %vm3494, %v3500, %v3504
        %v3508 = vsel %vm3494, %v3502, %v3506
        %v3509 = vsel %vm3494, %v3504, %v3500
        %v3510 = vsel %vm3494, %v3506, %v3502
        %s3511 = scalar_lea.vmem [#allocation8], 66
        %v3512 = vld [vmem:[%s3511] ss:$8 sm:$0x3]
        %v3513 = vmul.f32 %v612, %v3495
        %v3514 = vmul.f32 %v614, %v3497
        %v3515 = vmul.f32 %v618, %v3496
        %v3516 = vmul.f32 %v620, %v3498
        %v3517 = vadd.f32 %v3513, %v3515
        %v3518 = vadd.f32 %v3514, %v3516
        %v3520 = vlaneseq
        %v3521 = vshrl.u32 %v3520, 7
        %v3522 = vsub.s32 0, %v3521
        %v3523 = vrot.slane %v3512, %v3522
        %v3524 = vlaneseq
        %v3525 = vshrl.u32 %v3524, 7
        %v3526 = vsub.s32 1, %v3525
        %v3527 = vrot.slane %v3512, %v3526
        %v3530 = vmul.f32 %v3517, %v3523
        %v3531 = vmul.f32 %v3518, %v3527
        %v3532 = vadd.f32 %v2992, %v1243
        %v3533 = vadd.f32 %v2993, %v1244
        %v3534 = vadd.f32 %v3530, %v3532
        %v3535 = vadd.f32 %v3531, %v3533
        %v3536 = vmax.f32 %v3454, %v3534
        %v3537 = vmax.f32 %v3455, %v3535
        %v3538 = vsub.f32 %v3454, %v3536
        %v3539 = vsub.f32 %v3455, %v3537
        %v3540 = vmul.f32 %v3538, 1.442695
        %v3541 = vpow.pop %v3540
        %v3542 = vmul.f32 %v3539, 1.442695
        %v3543 = vpow.pop %v3542
        %v3544 = vsub.f32 %v3534, %v3536
        %v3545 = vsub.f32 %v3535, %v3537
        %v3546 = vmul.f32 %v3544, 1.442695
        %v3547 = vpow.pop %v3546
        %v3548 = vmul.f32 %v3545, 1.442695
        %v3549 = vpow.pop %v3548
        %v3550 = vmul.f32 %v3541, %v3470
        %v3551 = vmul.f32 %v3543, %v3471
        %v3552 = vadd.f32 %v3550, %v3547
        %v3553 = vadd.f32 %v3551, %v3549
        %v3554 = vmul.f32 %v3547, %v3523
        %v3555 = vmul.f32 %v3549, %v3527
        %v3556 = vmul.f32 %v3541, %v3478
        %v3557 = vmul.f32 %v3543, %v3479
        %v3558 = vmul.f32 %v3554, %v3507
        %v3559 = vmul.f32 %v3555, %v3509
        %v3560 = vadd.f32 %v3556, %v3558
        %v3561 = vadd.f32 %v3557, %v3559
        %v3562 = vmul.f32 %v3541, %v3484
        %v3563 = vmul.f32 %v3543, %v3485
        %v3564 = vmul.f32 %v3554, %v3508
        %v3565 = vmul.f32 %v3555, %v3510
        %v3566 = vadd.f32 %v3562, %v3564
        %v3567 = vadd.f32 %v3563, %v3565
        %s3568 = sld [smem:[#allocation7 + $0x5]]
        %v3569 = vstv %s3568
        %v3570 = vmul.f32 %v3569, %v612
        %v3571 = vmul.f32 %v3569, %v614
        %3572 = vrot.lane.b32.xlu0 %v624, 99
        %v3573 = vpop.permute.xlu0 %3572
        %3574 = vrot.lane.b32.xlu0 %v630, 99
        %v3575 = vpop.permute.xlu0 %3574
        %3576 = vrot.lane.b32.xlu0 %v626, 99
        %v3577 = vpop.permute.xlu0 %3576
        %3578 = vrot.lane.b32.xlu0 %v632, 99
        %v3579 = vpop.permute.xlu0 %3578
        %vm3580 = vcmp.lt.s32.totalorder %v707, 99
        %v3581 = vsel %vm3580, %v3573, %v3577
        %v3582 = vsel %vm3580, %v3575, %v3579
        %v3583 = vsel %vm3580, %v3577, %v3573
        %v3584 = vsel %vm3580, %v3579, %v3575
        %3585 = vrot.lane.b32.xlu0 %v636, 99
        %v3586 = vpop.permute.xlu0 %3585
        %3587 = vrot.lane.b32.xlu0 %v642, 99
        %v3588 = vpop.permute.xlu0 %3587
        %3589 = vrot.lane.b32.xlu0 %v638, 99
        %v3590 = vpop.permute.xlu0 %3589
        %3591 = vrot.lane.b32.xlu0 %v644, 99
        %v3592 = vpop.permute.xlu0 %3591
        %v3593 = vsel %vm3580, %v3586, %v3590
        %v3594 = vsel %vm3580, %v3588, %v3592
        %v3595 = vsel %vm3580, %v3590, %v3586
        %v3596 = vsel %vm3580, %v3592, %v3588
        %s3597 = scalar_lea.vmem [#allocation8], 67
        %v3598 = vld [vmem:[%s3597] ss:$8 sm:$0x3]
        %v3599 = vmul.f32 %v612, %v3581
        %v3600 = vmul.f32 %v614, %v3583
        %v3601 = vmul.f32 %v618, %v3582
        %v3602 = vmul.f32 %v620, %v3584
        %v3603 = vadd.f32 %v3599, %v3601
        %v3604 = vadd.f32 %v3600, %v3602
        %v3606 = vlaneseq
        %v3607 = vshrl.u32 %v3606, 7
        %v3608 = vsub.s32 0, %v3607
        %v3609 = vrot.slane %v3598, %v3608
        %v3610 = vlaneseq
        %v3611 = vshrl.u32 %v3610, 7
        %v3612 = vsub.s32 1, %v3611
        %v3613 = vrot.slane %v3598, %v3612
        %v3616 = vmul.f32 %v3603, %v3609
        %v3617 = vmul.f32 %v3604, %v3613
        %v3618 = vadd.f32 %v3570, %v745
        %v3619 = vadd.f32 %v3571, %v746
        %v3620 = vadd.f32 %v3616, %v3618
        %v3621 = vadd.f32 %v3617, %v3619
        %v3622 = vmax.f32 %v3536, %v3620
        %v3623 = vmax.f32 %v3537, %v3621
        %v3624 = vsub.f32 %v3536, %v3622
        %v3625 = vsub.f32 %v3537, %v3623
        %v3626 = vmul.f32 %v3624, 1.442695
        %v3627 = vpow.pop %v3626
        %v3628 = vmul.f32 %v3625, 1.442695
        %v3629 = vpow.pop %v3628
        %v3630 = vsub.f32 %v3620, %v3622
        %v3631 = vsub.f32 %v3621, %v3623
        %v3632 = vmul.f32 %v3630, 1.442695
        %v3633 = vpow.pop %v3632
        %v3634 = vmul.f32 %v3631, 1.442695
        %v3635 = vpow.pop %v3634
        %v3636 = vmul.f32 %v3627, %v3552
        %v3637 = vmul.f32 %v3629, %v3553
        %v3638 = vadd.f32 %v3636, %v3633
        %v3639 = vadd.f32 %v3637, %v3635
        %v3640 = vmul.f32 %v3633, %v3609
        %v3641 = vmul.f32 %v3635, %v3613
        %v3642 = vmul.f32 %v3627, %v3560
        %v3643 = vmul.f32 %v3629, %v3561
        %v3644 = vmul.f32 %v3640, %v3593
        %v3645 = vmul.f32 %v3641, %v3595
        %v3646 = vadd.f32 %v3642, %v3644
        %v3647 = vadd.f32 %v3643, %v3645
        %v3648 = vmul.f32 %v3627, %v3566
        %v3649 = vmul.f32 %v3629, %v3567
        %v3650 = vmul.f32 %v3640, %v3594
        %v3651 = vmul.f32 %v3641, %v3596
        %v3652 = vadd.f32 %v3648, %v3650
        %v3653 = vadd.f32 %v3649, %v3651
        %3654 = vrot.lane.b32.xlu0 %v624, 98
        %v3655 = vpop.permute.xlu0 %3654
        %3656 = vrot.lane.b32.xlu0 %v630, 98
        %v3657 = vpop.permute.xlu0 %3656
        %3658 = vrot.lane.b32.xlu0 %v626, 98
        %v3659 = vpop.permute.xlu0 %3658
        %3660 = vrot.lane.b32.xlu0 %v632, 98
        %v3661 = vpop.permute.xlu0 %3660
        %vm3662 = vcmp.lt.s32.totalorder %v707, 98
        %v3663 = vsel %vm3662, %v3655, %v3659
        %v3664 = vsel %vm3662, %v3657, %v3661
        %v3665 = vsel %vm3662, %v3659, %v3655
        %v3666 = vsel %vm3662, %v3661, %v3657
        %3667 = vrot.lane.b32.xlu0 %v636, 98
        %v3668 = vpop.permute.xlu0 %3667
        %3669 = vrot.lane.b32.xlu0 %v642, 98
        %v3670 = vpop.permute.xlu0 %3669
        %3671 = vrot.lane.b32.xlu0 %v638, 98
        %v3672 = vpop.permute.xlu0 %3671
        %3673 = vrot.lane.b32.xlu0 %v644, 98
        %v3674 = vpop.permute.xlu0 %3673
        %v3675 = vsel %vm3662, %v3668, %v3672
        %v3676 = vsel %vm3662, %v3670, %v3674
        %v3677 = vsel %vm3662, %v3672, %v3668
        %v3678 = vsel %vm3662, %v3674, %v3670
        %s3679 = scalar_lea.vmem [#allocation8], 68
        %v3680 = vld [vmem:[%s3679] ss:$8 sm:$0x3]
        %v3681 = vmul.f32 %v612, %v3663
        %v3682 = vmul.f32 %v614, %v3665
        %v3683 = vmul.f32 %v618, %v3664
        %v3684 = vmul.f32 %v620, %v3666
        %v3685 = vadd.f32 %v3681, %v3683
        %v3686 = vadd.f32 %v3682, %v3684
        %v3688 = vlaneseq
        %v3689 = vshrl.u32 %v3688, 7
        %v3690 = vsub.s32 0, %v3689
        %v3691 = vrot.slane %v3680, %v3690
        %v3692 = vlaneseq
        %v3693 = vshrl.u32 %v3692, 7
        %v3694 = vsub.s32 1, %v3693
        %v3695 = vrot.slane %v3680, %v3694
        %v3698 = vmul.f32 %v3685, %v3691
        %v3699 = vmul.f32 %v3686, %v3695
        %v3700 = vadd.f32 %v3570, %v823
        %v3701 = vadd.f32 %v3571, %v824
        %v3702 = vadd.f32 %v3698, %v3700
        %v3703 = vadd.f32 %v3699, %v3701
        %v3704 = vmax.f32 %v3622, %v3702
        %v3705 = vmax.f32 %v3623, %v3703
        %v3706 = vsub.f32 %v3622, %v3704
        %v3707 = vsub.f32 %v3623, %v3705
        %v3708 = vmul.f32 %v3706, 1.442695
        %v3709 = vpow.pop %v3708
        %v3710 = vmul.f32 %v3707, 1.442695
        %v3711 = vpow.pop %v3710
        %v3712 = vsub.f32 %v3702, %v3704
        %v3713 = vsub.f32 %v3703, %v3705
        %v3714 = vmul.f32 %v3712, 1.442695
        %v3715 = vpow.pop %v3714
        %v3716 = vmul.f32 %v3713, 1.442695
        %v3717 = vpow.pop %v3716
        %v3718 = vmul.f32 %v3709, %v3638
        %v3719 = vmul.f32 %v3711, %v3639
        %v3720 = vadd.f32 %v3718, %v3715
        %v3721 = vadd.f32 %v3719, %v3717
        %v3722 = vmul.f32 %v3715, %v3691
        %v3723 = vmul.f32 %v3717, %v3695
        %v3724 = vmul.f32 %v3709, %v3646
        %v3725 = vmul.f32 %v3711, %v3647
        %v3726 = vmul.f32 %v3722, %v3675
        %v3727 = vmul.f32 %v3723, %v3677
        %v3728 = vadd.f32 %v3724, %v3726
        %v3729 = vadd.f32 %v3725, %v3727
        %v3730 = vmul.f32 %v3709, %v3652
        %v3731 = vmul.f32 %v3711, %v3653
        %v3732 = vmul.f32 %v3722, %v3676
        %v3733 = vmul.f32 %v3723, %v3678
        %v3734 = vadd.f32 %v3730, %v3732
        %v3735 = vadd.f32 %v3731, %v3733
        %3736 = vrot.lane.b32.xlu0 %v624, 97
        %v3737 = vpop.permute.xlu0 %3736
        %3738 = vrot.lane.b32.xlu0 %v630, 97
        %v3739 = vpop.permute.xlu0 %3738
        %3740 = vrot.lane.b32.xlu0 %v626, 97
        %v3741 = vpop.permute.xlu0 %3740
        %3742 = vrot.lane.b32.xlu0 %v632, 97
        %v3743 = vpop.permute.xlu0 %3742
        %vm3744 = vcmp.lt.s32.totalorder %v707, 97
        %v3745 = vsel %vm3744, %v3737, %v3741
        %v3746 = vsel %vm3744, %v3739, %v3743
        %v3747 = vsel %vm3744, %v3741, %v3737
        %v3748 = vsel %vm3744, %v3743, %v3739
        %3749 = vrot.lane.b32.xlu0 %v636, 97
        %v3750 = vpop.permute.xlu0 %3749
        %3751 = vrot.lane.b32.xlu0 %v642, 97
        %v3752 = vpop.permute.xlu0 %3751
        %3753 = vrot.lane.b32.xlu0 %v638, 97
        %v3754 = vpop.permute.xlu0 %3753
        %3755 = vrot.lane.b32.xlu0 %v644, 97
        %v3756 = vpop.permute.xlu0 %3755
        %v3757 = vsel %vm3744, %v3750, %v3754
        %v3758 = vsel %vm3744, %v3752, %v3756
        %v3759 = vsel %vm3744, %v3754, %v3750
        %v3760 = vsel %vm3744, %v3756, %v3752
        %s3761 = scalar_lea.vmem [#allocation8], 69
        %v3762 = vld [vmem:[%s3761] ss:$8 sm:$0x3]
        %v3763 = vmul.f32 %v612, %v3745
        %v3764 = vmul.f32 %v614, %v3747
        %v3765 = vmul.f32 %v618, %v3746
        %v3766 = vmul.f32 %v620, %v3748
        %v3767 = vadd.f32 %v3763, %v3765
        %v3768 = vadd.f32 %v3764, %v3766
        %v3770 = vlaneseq
        %v3771 = vshrl.u32 %v3770, 7
        %v3772 = vsub.s32 0, %v3771
        %v3773 = vrot.slane %v3762, %v3772
        %v3774 = vlaneseq
        %v3775 = vshrl.u32 %v3774, 7
        %v3776 = vsub.s32 1, %v3775
        %v3777 = vrot.slane %v3762, %v3776
        %v3780 = vmul.f32 %v3767, %v3773
        %v3781 = vmul.f32 %v3768, %v3777
        %v3782 = vadd.f32 %v3570, %v907
        %v3783 = vadd.f32 %v3571, %v908
        %v3784 = vadd.f32 %v3780, %v3782
        %v3785 = vadd.f32 %v3781, %v3783
        %v3786 = vmax.f32 %v3704, %v3784
        %v3787 = vmax.f32 %v3705, %v3785
        %v3788 = vsub.f32 %v3704, %v3786
        %v3789 = vsub.f32 %v3705, %v3787
        %v3790 = vmul.f32 %v3788, 1.442695
        %v3791 = vpow.pop %v3790
        %v3792 = vmul.f32 %v3789, 1.442695
        %v3793 = vpow.pop %v3792
        %v3794 = vsub.f32 %v3784, %v3786
        %v3795 = vsub.f32 %v3785, %v3787
        %v3796 = vmul.f32 %v3794, 1.442695
        %v3797 = vpow.pop %v3796
        %v3798 = vmul.f32 %v3795, 1.442695
        %v3799 = vpow.pop %v3798
        %v3800 = vmul.f32 %v3791, %v3720
        %v3801 = vmul.f32 %v3793, %v3721
        %v3802 = vadd.f32 %v3800, %v3797
        %v3803 = vadd.f32 %v3801, %v3799
        %v3804 = vmul.f32 %v3797, %v3773
        %v3805 = vmul.f32 %v3799, %v3777
        %v3806 = vmul.f32 %v3791, %v3728
        %v3807 = vmul.f32 %v3793, %v3729
        %v3808 = vmul.f32 %v3804, %v3757
        %v3809 = vmul.f32 %v3805, %v3759
        %v3810 = vadd.f32 %v3806, %v3808
        %v3811 = vadd.f32 %v3807, %v3809
        %v3812 = vmul.f32 %v3791, %v3734
        %v3813 = vmul.f32 %v3793, %v3735
        %v3814 = vmul.f32 %v3804, %v3758
        %v3815 = vmul.f32 %v3805, %v3760
        %v3816 = vadd.f32 %v3812, %v3814
        %v3817 = vadd.f32 %v3813, %v3815
        %3818 = vrot.lane.b32.xlu0 %v624, 96
        %v3819 = vpop.permute.xlu0 %3818
        %3820 = vrot.lane.b32.xlu0 %v630, 96
        %v3821 = vpop.permute.xlu0 %3820
        %3822 = vrot.lane.b32.xlu0 %v626, 96
        %v3823 = vpop.permute.xlu0 %3822
        %3824 = vrot.lane.b32.xlu0 %v632, 96
        %v3825 = vpop.permute.xlu0 %3824
        %vm3826 = vcmp.lt.s32.totalorder %v707, 96
        %v3827 = vsel %vm3826, %v3819, %v3823
        %v3828 = vsel %vm3826, %v3821, %v3825
        %v3829 = vsel %vm3826, %v3823, %v3819
        %v3830 = vsel %vm3826, %v3825, %v3821
        %3831 = vrot.lane.b32.xlu0 %v636, 96
        %v3832 = vpop.permute.xlu0 %3831
        %3833 = vrot.lane.b32.xlu0 %v642, 96
        %v3834 = vpop.permute.xlu0 %3833
        %3835 = vrot.lane.b32.xlu0 %v638, 96
        %v3836 = vpop.permute.xlu0 %3835
        %3837 = vrot.lane.b32.xlu0 %v644, 96
        %v3838 = vpop.permute.xlu0 %3837
        %v3839 = vsel %vm3826, %v3832, %v3836
        %v3840 = vsel %vm3826, %v3834, %v3838
        %v3841 = vsel %vm3826, %v3836, %v3832
        %v3842 = vsel %vm3826, %v3838, %v3834
        %s3843 = scalar_lea.vmem [#allocation8], 70
        %v3844 = vld [vmem:[%s3843] ss:$8 sm:$0x3]
        %v3845 = vmul.f32 %v612, %v3827
        %v3846 = vmul.f32 %v614, %v3829
        %v3847 = vmul.f32 %v618, %v3828
        %v3848 = vmul.f32 %v620, %v3830
        %v3849 = vadd.f32 %v3845, %v3847
        %v3850 = vadd.f32 %v3846, %v3848
        %v3852 = vlaneseq
        %v3853 = vshrl.u32 %v3852, 7
        %v3854 = vsub.s32 0, %v3853
        %v3855 = vrot.slane %v3844, %v3854
        %v3856 = vlaneseq
        %v3857 = vshrl.u32 %v3856, 7
        %v3858 = vsub.s32 1, %v3857
        %v3859 = vrot.slane %v3844, %v3858
        %v3862 = vmul.f32 %v3849, %v3855
        %v3863 = vmul.f32 %v3850, %v3859
        %v3864 = vadd.f32 %v3570, %v991
        %v3865 = vadd.f32 %v3571, %v992
        %v3866 = vadd.f32 %v3862, %v3864
        %v3867 = vadd.f32 %v3863, %v3865
        %v3868 = vmax.f32 %v3786, %v3866
        %v3869 = vmax.f32 %v3787, %v3867
        %v3870 = vsub.f32 %v3786, %v3868
        %v3871 = vsub.f32 %v3787, %v3869
        %v3872 = vmul.f32 %v3870, 1.442695
        %v3873 = vpow.pop %v3872
        %v3874 = vmul.f32 %v3871, 1.442695
        %v3875 = vpow.pop %v3874
        %v3876 = vsub.f32 %v3866, %v3868
        %v3877 = vsub.f32 %v3867, %v3869
        %v3878 = vmul.f32 %v3876, 1.442695
        %v3879 = vpow.pop %v3878
        %v3880 = vmul.f32 %v3877, 1.442695
        %v3881 = vpow.pop %v3880
        %v3882 = vmul.f32 %v3873, %v3802
        %v3883 = vmul.f32 %v3875, %v3803
        %v3884 = vadd.f32 %v3882, %v3879
        %v3885 = vadd.f32 %v3883, %v3881
        %v3886 = vmul.f32 %v3879, %v3855
        %v3887 = vmul.f32 %v3881, %v3859
        %v3888 = vmul.f32 %v3873, %v3810
        %v3889 = vmul.f32 %v3875, %v3811
        %v3890 = vmul.f32 %v3886, %v3839
        %v3891 = vmul.f32 %v3887, %v3841
        %v3892 = vadd.f32 %v3888, %v3890
        %v3893 = vadd.f32 %v3889, %v3891
        %v3894 = vmul.f32 %v3873, %v3816
        %v3895 = vmul.f32 %v3875, %v3817
        %v3896 = vmul.f32 %v3886, %v3840
        %v3897 = vmul.f32 %v3887, %v3842
        %v3898 = vadd.f32 %v3894, %v3896
        %v3899 = vadd.f32 %v3895, %v3897
        %3900 = vrot.lane.b32.xlu0 %v624, 95
        %v3901 = vpop.permute.xlu0 %3900
        %3902 = vrot.lane.b32.xlu0 %v630, 95
        %v3903 = vpop.permute.xlu0 %3902
        %3904 = vrot.lane.b32.xlu0 %v626, 95
        %v3905 = vpop.permute.xlu0 %3904
        %3906 = vrot.lane.b32.xlu0 %v632, 95
        %v3907 = vpop.permute.xlu0 %3906
        %vm3908 = vcmp.lt.s32.totalorder %v707, 95
        %v3909 = vsel %vm3908, %v3901, %v3905
        %v3910 = vsel %vm3908, %v3903, %v3907
        %v3911 = vsel %vm3908, %v3905, %v3901
        %v3912 = vsel %vm3908, %v3907, %v3903
        %3913 = vrot.lane.b32.xlu0 %v636, 95
        %v3914 = vpop.permute.xlu0 %3913
        %3915 = vrot.lane.b32.xlu0 %v642, 95
        %v3916 = vpop.permute.xlu0 %3915
        %3917 = vrot.lane.b32.xlu0 %v638, 95
        %v3918 = vpop.permute.xlu0 %3917
        %3919 = vrot.lane.b32.xlu0 %v644, 95
        %v3920 = vpop.permute.xlu0 %3919
        %v3921 = vsel %vm3908, %v3914, %v3918
        %v3922 = vsel %vm3908, %v3916, %v3920
        %v3923 = vsel %vm3908, %v3918, %v3914
        %v3924 = vsel %vm3908, %v3920, %v3916
        %s3925 = scalar_lea.vmem [#allocation8], 71
        %v3926 = vld [vmem:[%s3925] ss:$8 sm:$0x3]
        %v3927 = vmul.f32 %v612, %v3909
        %v3928 = vmul.f32 %v614, %v3911
        %v3929 = vmul.f32 %v618, %v3910
        %v3930 = vmul.f32 %v620, %v3912
        %v3931 = vadd.f32 %v3927, %v3929
        %v3932 = vadd.f32 %v3928, %v3930
        %v3934 = vlaneseq
        %v3935 = vshrl.u32 %v3934, 7
        %v3936 = vsub.s32 0, %v3935
        %v3937 = vrot.slane %v3926, %v3936
        %v3938 = vlaneseq
        %v3939 = vshrl.u32 %v3938, 7
        %v3940 = vsub.s32 1, %v3939
        %v3941 = vrot.slane %v3926, %v3940
        %v3944 = vmul.f32 %v3931, %v3937
        %v3945 = vmul.f32 %v3932, %v3941
        %v3946 = vadd.f32 %v3570, %v1075
        %v3947 = vadd.f32 %v3571, %v1076
        %v3948 = vadd.f32 %v3944, %v3946
        %v3949 = vadd.f32 %v3945, %v3947
        %v3950 = vmax.f32 %v3868, %v3948
        %v3951 = vmax.f32 %v3869, %v3949
        %v3952 = vsub.f32 %v3868, %v3950
        %v3953 = vsub.f32 %v3869, %v3951
        %v3954 = vmul.f32 %v3952, 1.442695
        %v3955 = vpow.pop %v3954
        %v3956 = vmul.f32 %v3953, 1.442695
        %v3957 = vpow.pop %v3956
        %v3958 = vsub.f32 %v3948, %v3950
        %v3959 = vsub.f32 %v3949, %v3951
        %v3960 = vmul.f32 %v3958, 1.442695
        %v3961 = vpow.pop %v3960
        %v3962 = vmul.f32 %v3959, 1.442695
        %v3963 = vpow.pop %v3962
        %v3964 = vmul.f32 %v3955, %v3884
        %v3965 = vmul.f32 %v3957, %v3885
        %v3966 = vadd.f32 %v3964, %v3961
        %v3967 = vadd.f32 %v3965, %v3963
        %v3968 = vmul.f32 %v3961, %v3937
        %v3969 = vmul.f32 %v3963, %v3941
        %v3970 = vmul.f32 %v3955, %v3892
        %v3971 = vmul.f32 %v3957, %v3893
        %v3972 = vmul.f32 %v3968, %v3921
        %v3973 = vmul.f32 %v3969, %v3923
        %v3974 = vadd.f32 %v3970, %v3972
        %v3975 = vadd.f32 %v3971, %v3973
        %v3976 = vmul.f32 %v3955, %v3898
        %v3977 = vmul.f32 %v3957, %v3899
        %v3978 = vmul.f32 %v3968, %v3922
        %v3979 = vmul.f32 %v3969, %v3924
        %v3980 = vadd.f32 %v3976, %v3978
        %v3981 = vadd.f32 %v3977, %v3979
        %3982 = vrot.lane.b32.xlu0 %v624, 94
        %v3983 = vpop.permute.xlu0 %3982
        %3984 = vrot.lane.b32.xlu0 %v630, 94
        %v3985 = vpop.permute.xlu0 %3984
        %3986 = vrot.lane.b32.xlu0 %v626, 94
        %v3987 = vpop.permute.xlu0 %3986
        %3988 = vrot.lane.b32.xlu0 %v632, 94
        %v3989 = vpop.permute.xlu0 %3988
        %vm3990 = vcmp.lt.s32.totalorder %v707, 94
        %v3991 = vsel %vm3990, %v3983, %v3987
        %v3992 = vsel %vm3990, %v3985, %v3989
        %v3993 = vsel %vm3990, %v3987, %v3983
        %v3994 = vsel %vm3990, %v3989, %v3985
        %3995 = vrot.lane.b32.xlu0 %v636, 94
        %v3996 = vpop.permute.xlu0 %3995
        %3997 = vrot.lane.b32.xlu0 %v642, 94
        %v3998 = vpop.permute.xlu0 %3997
        %3999 = vrot.lane.b32.xlu0 %v638, 94
        %v4000 = vpop.permute.xlu0 %3999
        %4001 = vrot.lane.b32.xlu0 %v644, 94
        %v4002 = vpop.permute.xlu0 %4001
        %v4003 = vsel %vm3990, %v3996, %v4000
        %v4004 = vsel %vm3990, %v3998, %v4002
        %v4005 = vsel %vm3990, %v4000, %v3996
        %v4006 = vsel %vm3990, %v4002, %v3998
        %s4007 = scalar_lea.vmem [#allocation8], 80
        %v4008 = vld [vmem:[%s4007] ss:$8 sm:$0x3]
        %v4009 = vmul.f32 %v612, %v3991
        %v4010 = vmul.f32 %v614, %v3993
        %v4011 = vmul.f32 %v618, %v3992
        %v4012 = vmul.f32 %v620, %v3994
        %v4013 = vadd.f32 %v4009, %v4011
        %v4014 = vadd.f32 %v4010, %v4012
        %v4016 = vlaneseq
        %v4017 = vshrl.u32 %v4016, 7
        %v4018 = vsub.s32 0, %v4017
        %v4019 = vrot.slane %v4008, %v4018
        %v4020 = vlaneseq
        %v4021 = vshrl.u32 %v4020, 7
        %v4022 = vsub.s32 1, %v4021
        %v4023 = vrot.slane %v4008, %v4022
        %v4026 = vmul.f32 %v4013, %v4019
        %v4027 = vmul.f32 %v4014, %v4023
        %v4028 = vadd.f32 %v3570, %v1159
        %v4029 = vadd.f32 %v3571, %v1160
        %v4030 = vadd.f32 %v4026, %v4028
        %v4031 = vadd.f32 %v4027, %v4029
        %v4032 = vmax.f32 %v3950, %v4030
        %v4033 = vmax.f32 %v3951, %v4031
        %v4034 = vsub.f32 %v3950, %v4032
        %v4035 = vsub.f32 %v3951, %v4033
        %v4036 = vmul.f32 %v4034, 1.442695
        %v4037 = vpow.pop %v4036
        %v4038 = vmul.f32 %v4035, 1.442695
        %v4039 = vpow.pop %v4038
        %v4040 = vsub.f32 %v4030, %v4032
        %v4041 = vsub.f32 %v4031, %v4033
        %v4042 = vmul.f32 %v4040, 1.442695
        %v4043 = vpow.pop %v4042
        %v4044 = vmul.f32 %v4041, 1.442695
        %v4045 = vpow.pop %v4044
        %v4046 = vmul.f32 %v4037, %v3966
        %v4047 = vmul.f32 %v4039, %v3967
        %v4048 = vadd.f32 %v4046, %v4043
        %v4049 = vadd.f32 %v4047, %v4045
        %v4050 = vmul.f32 %v4043, %v4019
        %v4051 = vmul.f32 %v4045, %v4023
        %v4052 = vmul.f32 %v4037, %v3974
        %v4053 = vmul.f32 %v4039, %v3975
        %v4054 = vmul.f32 %v4050, %v4003
        %v4055 = vmul.f32 %v4051, %v4005
        %v4056 = vadd.f32 %v4052, %v4054
        %v4057 = vadd.f32 %v4053, %v4055
        %v4058 = vmul.f32 %v4037, %v3980
        %v4059 = vmul.f32 %v4039, %v3981
        %v4060 = vmul.f32 %v4050, %v4004
        %v4061 = vmul.f32 %v4051, %v4006
        %v4062 = vadd.f32 %v4058, %v4060
        %v4063 = vadd.f32 %v4059, %v4061
        %4064 = vrot.lane.b32.xlu0 %v624, 93
        %v4065 = vpop.permute.xlu0 %4064
        %4066 = vrot.lane.b32.xlu0 %v630, 93
        %v4067 = vpop.permute.xlu0 %4066
        %4068 = vrot.lane.b32.xlu0 %v626, 93
        %v4069 = vpop.permute.xlu0 %4068
        %4070 = vrot.lane.b32.xlu0 %v632, 93
        %v4071 = vpop.permute.xlu0 %4070
        %vm4072 = vcmp.lt.s32.totalorder %v707, 93
        %v4073 = vsel %vm4072, %v4065, %v4069
        %v4074 = vsel %vm4072, %v4067, %v4071
        %v4075 = vsel %vm4072, %v4069, %v4065
        %v4076 = vsel %vm4072, %v4071, %v4067
        %4077 = vrot.lane.b32.xlu0 %v636, 93
        %v4078 = vpop.permute.xlu0 %4077
        %4079 = vrot.lane.b32.xlu0 %v642, 93
        %v4080 = vpop.permute.xlu0 %4079
        %4081 = vrot.lane.b32.xlu0 %v638, 93
        %v4082 = vpop.permute.xlu0 %4081
        %4083 = vrot.lane.b32.xlu0 %v644, 93
        %v4084 = vpop.permute.xlu0 %4083
        %v4085 = vsel %vm4072, %v4078, %v4082
        %v4086 = vsel %vm4072, %v4080, %v4084
        %v4087 = vsel %vm4072, %v4082, %v4078
        %v4088 = vsel %vm4072, %v4084, %v4080
        %s4089 = scalar_lea.vmem [#allocation8], 81
        %v4090 = vld [vmem:[%s4089] ss:$8 sm:$0x3]
        %v4091 = vmul.f32 %v612, %v4073
        %v4092 = vmul.f32 %v614, %v4075
        %v4093 = vmul.f32 %v618, %v4074
        %v4094 = vmul.f32 %v620, %v4076
        %v4095 = vadd.f32 %v4091, %v4093
        %v4096 = vadd.f32 %v4092, %v4094
        %v4098 = vlaneseq
        %v4099 = vshrl.u32 %v4098, 7
        %v4100 = vsub.s32 0, %v4099
        %v4101 = vrot.slane %v4090, %v4100
        %v4102 = vlaneseq
        %v4103 = vshrl.u32 %v4102, 7
        %v4104 = vsub.s32 1, %v4103
        %v4105 = vrot.slane %v4090, %v4104
        %v4108 = vmul.f32 %v4095, %v4101
        %v4109 = vmul.f32 %v4096, %v4105
        %v4110 = vadd.f32 %v3570, %v1243
        %v4111 = vadd.f32 %v3571, %v1244
        %v4112 = vadd.f32 %v4108, %v4110
        %v4113 = vadd.f32 %v4109, %v4111
        %v4114 = vmax.f32 %v4032, %v4112
        %v4115 = vmax.f32 %v4033, %v4113
        %v4116 = vsub.f32 %v4032, %v4114
        %v4117 = vsub.f32 %v4033, %v4115
        %v4118 = vmul.f32 %v4116, 1.442695
        %v4119 = vpow.pop %v4118
        %v4120 = vmul.f32 %v4117, 1.442695
        %v4121 = vpow.pop %v4120
        %v4122 = vsub.f32 %v4112, %v4114
        %v4123 = vsub.f32 %v4113, %v4115
        %v4124 = vmul.f32 %v4122, 1.442695
        %v4125 = vpow.pop %v4124
        %v4126 = vmul.f32 %v4123, 1.442695
        %v4127 = vpow.pop %v4126
        %v4128 = vmul.f32 %v4119, %v4048
        %v4129 = vmul.f32 %v4121, %v4049
        %v4130 = vadd.f32 %v4128, %v4125
        %v4131 = vadd.f32 %v4129, %v4127
        %v4132 = vmul.f32 %v4125, %v4101
        %v4133 = vmul.f32 %v4127, %v4105
        %v4134 = vmul.f32 %v4119, %v4056
        %v4135 = vmul.f32 %v4121, %v4057
        %v4136 = vmul.f32 %v4132, %v4085
        %v4137 = vmul.f32 %v4133, %v4087
        %v4138 = vadd.f32 %v4134, %v4136
        %v4139 = vadd.f32 %v4135, %v4137
        %v4140 = vmul.f32 %v4119, %v4062
        %v4141 = vmul.f32 %v4121, %v4063
        %v4142 = vmul.f32 %v4132, %v4086
        %v4143 = vmul.f32 %v4133, %v4088
        %v4144 = vadd.f32 %v4140, %v4142
        %v4145 = vadd.f32 %v4141, %v4143
        %s4146 = sld [smem:[#allocation7 + $0x6]]
        %v4147 = vstv %s4146
        %v4148 = vmul.f32 %v4147, %v612
        %v4149 = vmul.f32 %v4147, %v614
        %4150 = vrot.lane.b32.xlu0 %v624, 83
        %v4151 = vpop.permute.xlu0 %4150
        %4152 = vrot.lane.b32.xlu0 %v630, 83
        %v4153 = vpop.permute.xlu0 %4152
        %4154 = vrot.lane.b32.xlu0 %v626, 83
        %v4155 = vpop.permute.xlu0 %4154
        %4156 = vrot.lane.b32.xlu0 %v632, 83
        %v4157 = vpop.permute.xlu0 %4156
        %vm4158 = vcmp.lt.s32.totalorder %v707, 83
        %v4159 = vsel %vm4158, %v4151, %v4155
        %v4160 = vsel %vm4158, %v4153, %v4157
        %v4161 = vsel %vm4158, %v4155, %v4151
        %v4162 = vsel %vm4158, %v4157, %v4153
        %4163 = vrot.lane.b32.xlu0 %v636, 83
        %v4164 = vpop.permute.xlu0 %4163
        %4165 = vrot.lane.b32.xlu0 %v642, 83
        %v4166 = vpop.permute.xlu0 %4165
        %4167 = vrot.lane.b32.xlu0 %v638, 83
        %v4168 = vpop.permute.xlu0 %4167
        %4169 = vrot.lane.b32.xlu0 %v644, 83
        %v4170 = vpop.permute.xlu0 %4169
        %v4171 = vsel %vm4158, %v4164, %v4168
        %v4172 = vsel %vm4158, %v4166, %v4170
        %v4173 = vsel %vm4158, %v4168, %v4164
        %v4174 = vsel %vm4158, %v4170, %v4166
        %s4175 = scalar_lea.vmem [#allocation8], 82
        %v4176 = vld [vmem:[%s4175] ss:$8 sm:$0x3]
        %v4177 = vmul.f32 %v612, %v4159
        %v4178 = vmul.f32 %v614, %v4161
        %v4179 = vmul.f32 %v618, %v4160
        %v4180 = vmul.f32 %v620, %v4162
        %v4181 = vadd.f32 %v4177, %v4179
        %v4182 = vadd.f32 %v4178, %v4180
        %v4184 = vlaneseq
        %v4185 = vshrl.u32 %v4184, 7
        %v4186 = vsub.s32 0, %v4185
        %v4187 = vrot.slane %v4176, %v4186
        %v4188 = vlaneseq
        %v4189 = vshrl.u32 %v4188, 7
        %v4190 = vsub.s32 1, %v4189
        %v4191 = vrot.slane %v4176, %v4190
        %v4194 = vmul.f32 %v4181, %v4187
        %v4195 = vmul.f32 %v4182, %v4191
        %v4196 = vadd.f32 %v4148, %v745
        %v4197 = vadd.f32 %v4149, %v746
        %v4198 = vadd.f32 %v4194, %v4196
        %v4199 = vadd.f32 %v4195, %v4197
        %v4200 = vmax.f32 %v4114, %v4198
        %v4201 = vmax.f32 %v4115, %v4199
        %v4202 = vsub.f32 %v4114, %v4200
        %v4203 = vsub.f32 %v4115, %v4201
        %v4204 = vmul.f32 %v4202, 1.442695
        %v4205 = vpow.pop %v4204
        %v4206 = vmul.f32 %v4203, 1.442695
        %v4207 = vpow.pop %v4206
        %v4208 = vsub.f32 %v4198, %v4200
        %v4209 = vsub.f32 %v4199, %v4201
        %v4210 = vmul.f32 %v4208, 1.442695
        %v4211 = vpow.pop %v4210
        %v4212 = vmul.f32 %v4209, 1.442695
        %v4213 = vpow.pop %v4212
        %v4214 = vmul.f32 %v4205, %v4130
        %v4215 = vmul.f32 %v4207, %v4131
        %v4216 = vadd.f32 %v4214, %v4211
        %v4217 = vadd.f32 %v4215, %v4213
        %v4218 = vmul.f32 %v4211, %v4187
        %v4219 = vmul.f32 %v4213, %v4191
        %v4220 = vmul.f32 %v4205, %v4138
        %v4221 = vmul.f32 %v4207, %v4139
        %v4222 = vmul.f32 %v4218, %v4171
        %v4223 = vmul.f32 %v4219, %v4173
        %v4224 = vadd.f32 %v4220, %v4222
        %v4225 = vadd.f32 %v4221, %v4223
        %v4226 = vmul.f32 %v4205, %v4144
        %v4227 = vmul.f32 %v4207, %v4145
        %v4228 = vmul.f32 %v4218, %v4172
        %v4229 = vmul.f32 %v4219, %v4174
        %v4230 = vadd.f32 %v4226, %v4228
        %v4231 = vadd.f32 %v4227, %v4229
        %4232 = vrot.lane.b32.xlu0 %v624, 82
        %v4233 = vpop.permute.xlu0 %4232
        %4234 = vrot.lane.b32.xlu0 %v630, 82
        %v4235 = vpop.permute.xlu0 %4234
        %4236 = vrot.lane.b32.xlu0 %v626, 82
        %v4237 = vpop.permute.xlu0 %4236
        %4238 = vrot.lane.b32.xlu0 %v632, 82
        %v4239 = vpop.permute.xlu0 %4238
        %vm4240 = vcmp.lt.s32.totalorder %v707, 82
        %v4241 = vsel %vm4240, %v4233, %v4237
        %v4242 = vsel %vm4240, %v4235, %v4239
        %v4243 = vsel %vm4240, %v4237, %v4233
        %v4244 = vsel %vm4240, %v4239, %v4235
        %4245 = vrot.lane.b32.xlu0 %v636, 82
        %v4246 = vpop.permute.xlu0 %4245
        %4247 = vrot.lane.b32.xlu0 %v642, 82
        %v4248 = vpop.permute.xlu0 %4247
        %4249 = vrot.lane.b32.xlu0 %v638, 82
        %v4250 = vpop.permute.xlu0 %4249
        %4251 = vrot.lane.b32.xlu0 %v644, 82
        %v4252 = vpop.permute.xlu0 %4251
        %v4253 = vsel %vm4240, %v4246, %v4250
        %v4254 = vsel %vm4240, %v4248, %v4252
        %v4255 = vsel %vm4240, %v4250, %v4246
        %v4256 = vsel %vm4240, %v4252, %v4248
        %s4257 = scalar_lea.vmem [#allocation8], 83
        %v4258 = vld [vmem:[%s4257] ss:$8 sm:$0x3]
        %v4259 = vmul.f32 %v612, %v4241
        %v4260 = vmul.f32 %v614, %v4243
        %v4261 = vmul.f32 %v618, %v4242
        %v4262 = vmul.f32 %v620, %v4244
        %v4263 = vadd.f32 %v4259, %v4261
        %v4264 = vadd.f32 %v4260, %v4262
        %v4266 = vlaneseq
        %v4267 = vshrl.u32 %v4266, 7
        %v4268 = vsub.s32 0, %v4267
        %v4269 = vrot.slane %v4258, %v4268
        %v4270 = vlaneseq
        %v4271 = vshrl.u32 %v4270, 7
        %v4272 = vsub.s32 1, %v4271
        %v4273 = vrot.slane %v4258, %v4272
        %v4276 = vmul.f32 %v4263, %v4269
        %v4277 = vmul.f32 %v4264, %v4273
        %v4278 = vadd.f32 %v4148, %v823
        %v4279 = vadd.f32 %v4149, %v824
        %v4280 = vadd.f32 %v4276, %v4278
        %v4281 = vadd.f32 %v4277, %v4279
        %v4282 = vmax.f32 %v4200, %v4280
        %v4283 = vmax.f32 %v4201, %v4281
        %v4284 = vsub.f32 %v4200, %v4282
        %v4285 = vsub.f32 %v4201, %v4283
        %v4286 = vmul.f32 %v4284, 1.442695
        %v4287 = vpow.pop %v4286
        %v4288 = vmul.f32 %v4285, 1.442695
        %v4289 = vpow.pop %v4288
        %v4290 = vsub.f32 %v4280, %v4282
        %v4291 = vsub.f32 %v4281, %v4283
        %v4292 = vmul.f32 %v4290, 1.442695
        %v4293 = vpow.pop %v4292
        %v4294 = vmul.f32 %v4291, 1.442695
        %v4295 = vpow.pop %v4294
        %v4296 = vmul.f32 %v4287, %v4216
        %v4297 = vmul.f32 %v4289, %v4217
        %v4298 = vadd.f32 %v4296, %v4293
        %v4299 = vadd.f32 %v4297, %v4295
        %v4300 = vmul.f32 %v4293, %v4269
        %v4301 = vmul.f32 %v4295, %v4273
        %v4302 = vmul.f32 %v4287, %v4224
        %v4303 = vmul.f32 %v4289, %v4225
        %v4304 = vmul.f32 %v4300, %v4253
        %v4305 = vmul.f32 %v4301, %v4255
        %v4306 = vadd.f32 %v4302, %v4304
        %v4307 = vadd.f32 %v4303, %v4305
        %v4308 = vmul.f32 %v4287, %v4230
        %v4309 = vmul.f32 %v4289, %v4231
        %v4310 = vmul.f32 %v4300, %v4254
        %v4311 = vmul.f32 %v4301, %v4256
        %v4312 = vadd.f32 %v4308, %v4310
        %v4313 = vadd.f32 %v4309, %v4311
        %4314 = vrot.lane.b32.xlu0 %v624, 81
        %v4315 = vpop.permute.xlu0 %4314
        %4316 = vrot.lane.b32.xlu0 %v630, 81
        %v4317 = vpop.permute.xlu0 %4316
        %4318 = vrot.lane.b32.xlu0 %v626, 81
        %v4319 = vpop.permute.xlu0 %4318
        %4320 = vrot.lane.b32.xlu0 %v632, 81
        %v4321 = vpop.permute.xlu0 %4320
        %vm4322 = vcmp.lt.s32.totalorder %v707, 81
        %v4323 = vsel %vm4322, %v4315, %v4319
        %v4324 = vsel %vm4322, %v4317, %v4321
        %v4325 = vsel %vm4322, %v4319, %v4315
        %v4326 = vsel %vm4322, %v4321, %v4317
        %4327 = vrot.lane.b32.xlu0 %v636, 81
        %v4328 = vpop.permute.xlu0 %4327
        %4329 = vrot.lane.b32.xlu0 %v642, 81
        %v4330 = vpop.permute.xlu0 %4329
        %4331 = vrot.lane.b32.xlu0 %v638, 81
        %v4332 = vpop.permute.xlu0 %4331
        %4333 = vrot.lane.b32.xlu0 %v644, 81
        %v4334 = vpop.permute.xlu0 %4333
        %v4335 = vsel %vm4322, %v4328, %v4332
        %v4336 = vsel %vm4322, %v4330, %v4334
        %v4337 = vsel %vm4322, %v4332, %v4328
        %v4338 = vsel %vm4322, %v4334, %v4330
        %s4339 = scalar_lea.vmem [#allocation8], 84
        %v4340 = vld [vmem:[%s4339] ss:$8 sm:$0x3]
        %v4341 = vmul.f32 %v612, %v4323
        %v4342 = vmul.f32 %v614, %v4325
        %v4343 = vmul.f32 %v618, %v4324
        %v4344 = vmul.f32 %v620, %v4326
        %v4345 = vadd.f32 %v4341, %v4343
        %v4346 = vadd.f32 %v4342, %v4344
        %v4348 = vlaneseq
        %v4349 = vshrl.u32 %v4348, 7
        %v4350 = vsub.s32 0, %v4349
        %v4351 = vrot.slane %v4340, %v4350
        %v4352 = vlaneseq
        %v4353 = vshrl.u32 %v4352, 7
        %v4354 = vsub.s32 1, %v4353
        %v4355 = vrot.slane %v4340, %v4354
        %v4358 = vmul.f32 %v4345, %v4351
        %v4359 = vmul.f32 %v4346, %v4355
        %v4360 = vadd.f32 %v4148, %v907
        %v4361 = vadd.f32 %v4149, %v908
        %v4362 = vadd.f32 %v4358, %v4360
        %v4363 = vadd.f32 %v4359, %v4361
        %v4364 = vmax.f32 %v4282, %v4362
        %v4365 = vmax.f32 %v4283, %v4363
        %v4366 = vsub.f32 %v4282, %v4364
        %v4367 = vsub.f32 %v4283, %v4365
        %v4368 = vmul.f32 %v4366, 1.442695
        %v4369 = vpow.pop %v4368
        %v4370 = vmul.f32 %v4367, 1.442695
        %v4371 = vpow.pop %v4370
        %v4372 = vsub.f32 %v4362, %v4364
        %v4373 = vsub.f32 %v4363, %v4365
        %v4374 = vmul.f32 %v4372, 1.442695
        %v4375 = vpow.pop %v4374
        %v4376 = vmul.f32 %v4373, 1.442695
        %v4377 = vpow.pop %v4376
        %v4378 = vmul.f32 %v4369, %v4298
        %v4379 = vmul.f32 %v4371, %v4299
        %v4380 = vadd.f32 %v4378, %v4375
        %v4381 = vadd.f32 %v4379, %v4377
        %v4382 = vmul.f32 %v4375, %v4351
        %v4383 = vmul.f32 %v4377, %v4355
        %v4384 = vmul.f32 %v4369, %v4306
        %v4385 = vmul.f32 %v4371, %v4307
        %v4386 = vmul.f32 %v4382, %v4335
        %v4387 = vmul.f32 %v4383, %v4337
        %v4388 = vadd.f32 %v4384, %v4386
        %v4389 = vadd.f32 %v4385, %v4387
        %v4390 = vmul.f32 %v4369, %v4312
        %v4391 = vmul.f32 %v4371, %v4313
        %v4392 = vmul.f32 %v4382, %v4336
        %v4393 = vmul.f32 %v4383, %v4338
        %v4394 = vadd.f32 %v4390, %v4392
        %v4395 = vadd.f32 %v4391, %v4393
        %4396 = vrot.lane.b32.xlu0 %v624, 80
        %v4397 = vpop.permute.xlu0 %4396
        %4398 = vrot.lane.b32.xlu0 %v630, 80
        %v4399 = vpop.permute.xlu0 %4398
        %4400 = vrot.lane.b32.xlu0 %v626, 80
        %v4401 = vpop.permute.xlu0 %4400
        %4402 = vrot.lane.b32.xlu0 %v632, 80
        %v4403 = vpop.permute.xlu0 %4402
        %vm4404 = vcmp.lt.s32.totalorder %v707, 80
        %v4405 = vsel %vm4404, %v4397, %v4401
        %v4406 = vsel %vm4404, %v4399, %v4403
        %v4407 = vsel %vm4404, %v4401, %v4397
        %v4408 = vsel %vm4404, %v4403, %v4399
        %4409 = vrot.lane.b32.xlu0 %v636, 80
        %v4410 = vpop.permute.xlu0 %4409
        %4411 = vrot.lane.b32.xlu0 %v642, 80
        %v4412 = vpop.permute.xlu0 %4411
        %4413 = vrot.lane.b32.xlu0 %v638, 80
        %v4414 = vpop.permute.xlu0 %4413
        %4415 = vrot.lane.b32.xlu0 %v644, 80
        %v4416 = vpop.permute.xlu0 %4415
        %v4417 = vsel %vm4404, %v4410, %v4414
        %v4418 = vsel %vm4404, %v4412, %v4416
        %v4419 = vsel %vm4404, %v4414, %v4410
        %v4420 = vsel %vm4404, %v4416, %v4412
        %s4421 = scalar_lea.vmem [#allocation8], 85
        %v4422 = vld [vmem:[%s4421] ss:$8 sm:$0x3]
        %v4423 = vmul.f32 %v612, %v4405
        %v4424 = vmul.f32 %v614, %v4407
        %v4425 = vmul.f32 %v618, %v4406
        %v4426 = vmul.f32 %v620, %v4408
        %v4427 = vadd.f32 %v4423, %v4425
        %v4428 = vadd.f32 %v4424, %v4426
        %v4430 = vlaneseq
        %v4431 = vshrl.u32 %v4430, 7
        %v4432 = vsub.s32 0, %v4431
        %v4433 = vrot.slane %v4422, %v4432
        %v4434 = vlaneseq
        %v4435 = vshrl.u32 %v4434, 7
        %v4436 = vsub.s32 1, %v4435
        %v4437 = vrot.slane %v4422, %v4436
        %v4440 = vmul.f32 %v4427, %v4433
        %v4441 = vmul.f32 %v4428, %v4437
        %v4442 = vadd.f32 %v4148, %v991
        %v4443 = vadd.f32 %v4149, %v992
        %v4444 = vadd.f32 %v4440, %v4442
        %v4445 = vadd.f32 %v4441, %v4443
        %v4446 = vmax.f32 %v4364, %v4444
        %v4447 = vmax.f32 %v4365, %v4445
        %v4448 = vsub.f32 %v4364, %v4446
        %v4449 = vsub.f32 %v4365, %v4447
        %v4450 = vmul.f32 %v4448, 1.442695
        %v4451 = vpow.pop %v4450
        %v4452 = vmul.f32 %v4449, 1.442695
        %v4453 = vpow.pop %v4452
        %v4454 = vsub.f32 %v4444, %v4446
        %v4455 = vsub.f32 %v4445, %v4447
        %v4456 = vmul.f32 %v4454, 1.442695
        %v4457 = vpow.pop %v4456
        %v4458 = vmul.f32 %v4455, 1.442695
        %v4459 = vpow.pop %v4458
        %v4460 = vmul.f32 %v4451, %v4380
        %v4461 = vmul.f32 %v4453, %v4381
        %v4462 = vadd.f32 %v4460, %v4457
        %v4463 = vadd.f32 %v4461, %v4459
        %v4464 = vmul.f32 %v4457, %v4433
        %v4465 = vmul.f32 %v4459, %v4437
        %v4466 = vmul.f32 %v4451, %v4388
        %v4467 = vmul.f32 %v4453, %v4389
        %v4468 = vmul.f32 %v4464, %v4417
        %v4469 = vmul.f32 %v4465, %v4419
        %v4470 = vadd.f32 %v4466, %v4468
        %v4471 = vadd.f32 %v4467, %v4469
        %v4472 = vmul.f32 %v4451, %v4394
        %v4473 = vmul.f32 %v4453, %v4395
        %v4474 = vmul.f32 %v4464, %v4418
        %v4475 = vmul.f32 %v4465, %v4420
        %v4476 = vadd.f32 %v4472, %v4474
        %v4477 = vadd.f32 %v4473, %v4475
        %4478 = vrot.lane.b32.xlu0 %v624, 79
        %v4479 = vpop.permute.xlu0 %4478
        %4480 = vrot.lane.b32.xlu0 %v630, 79
        %v4481 = vpop.permute.xlu0 %4480
        %4482 = vrot.lane.b32.xlu0 %v626, 79
        %v4483 = vpop.permute.xlu0 %4482
        %4484 = vrot.lane.b32.xlu0 %v632, 79
        %v4485 = vpop.permute.xlu0 %4484
        %vm4486 = vcmp.lt.s32.totalorder %v707, 79
        %v4487 = vsel %vm4486, %v4479, %v4483
        %v4488 = vsel %vm4486, %v4481, %v4485
        %v4489 = vsel %vm4486, %v4483, %v4479
        %v4490 = vsel %vm4486, %v4485, %v4481
        %4491 = vrot.lane.b32.xlu0 %v636, 79
        %v4492 = vpop.permute.xlu0 %4491
        %4493 = vrot.lane.b32.xlu0 %v642, 79
        %v4494 = vpop.permute.xlu0 %4493
        %4495 = vrot.lane.b32.xlu0 %v638, 79
        %v4496 = vpop.permute.xlu0 %4495
        %4497 = vrot.lane.b32.xlu0 %v644, 79
        %v4498 = vpop.permute.xlu0 %4497
        %v4499 = vsel %vm4486, %v4492, %v4496
        %v4500 = vsel %vm4486, %v4494, %v4498
        %v4501 = vsel %vm4486, %v4496, %v4492
        %v4502 = vsel %vm4486, %v4498, %v4494
        %s4503 = scalar_lea.vmem [#allocation8], 86
        %v4504 = vld [vmem:[%s4503] ss:$8 sm:$0x3]
        %v4505 = vmul.f32 %v612, %v4487
        %v4506 = vmul.f32 %v614, %v4489
        %v4507 = vmul.f32 %v618, %v4488
        %v4508 = vmul.f32 %v620, %v4490
        %v4509 = vadd.f32 %v4505, %v4507
        %v4510 = vadd.f32 %v4506, %v4508
        %v4512 = vlaneseq
        %v4513 = vshrl.u32 %v4512, 7
        %v4514 = vsub.s32 0, %v4513
        %v4515 = vrot.slane %v4504, %v4514
        %v4516 = vlaneseq
        %v4517 = vshrl.u32 %v4516, 7
        %v4518 = vsub.s32 1, %v4517
        %v4519 = vrot.slane %v4504, %v4518
        %v4522 = vmul.f32 %v4509, %v4515
        %v4523 = vmul.f32 %v4510, %v4519
        %v4524 = vadd.f32 %v4148, %v1075
        %v4525 = vadd.f32 %v4149, %v1076
        %v4526 = vadd.f32 %v4522, %v4524
        %v4527 = vadd.f32 %v4523, %v4525
        %v4528 = vmax.f32 %v4446, %v4526
        %v4529 = vmax.f32 %v4447, %v4527
        %v4530 = vsub.f32 %v4446, %v4528
        %v4531 = vsub.f32 %v4447, %v4529
        %v4532 = vmul.f32 %v4530, 1.442695
        %v4533 = vpow.pop %v4532
        %v4534 = vmul.f32 %v4531, 1.442695
        %v4535 = vpow.pop %v4534
        %v4536 = vsub.f32 %v4526, %v4528
        %v4537 = vsub.f32 %v4527, %v4529
        %v4538 = vmul.f32 %v4536, 1.442695
        %v4539 = vpow.pop %v4538
        %v4540 = vmul.f32 %v4537, 1.442695
        %v4541 = vpow.pop %v4540
        %v4542 = vmul.f32 %v4533, %v4462
        %v4543 = vmul.f32 %v4535, %v4463
        %v4544 = vadd.f32 %v4542, %v4539
        %v4545 = vadd.f32 %v4543, %v4541
        %v4546 = vmul.f32 %v4539, %v4515
        %v4547 = vmul.f32 %v4541, %v4519
        %v4548 = vmul.f32 %v4533, %v4470
        %v4549 = vmul.f32 %v4535, %v4471
        %v4550 = vmul.f32 %v4546, %v4499
        %v4551 = vmul.f32 %v4547, %v4501
        %v4552 = vadd.f32 %v4548, %v4550
        %v4553 = vadd.f32 %v4549, %v4551
        %v4554 = vmul.f32 %v4533, %v4476
        %v4555 = vmul.f32 %v4535, %v4477
        %v4556 = vmul.f32 %v4546, %v4500
        %v4557 = vmul.f32 %v4547, %v4502
        %v4558 = vadd.f32 %v4554, %v4556
        %v4559 = vadd.f32 %v4555, %v4557
        %4560 = vrot.lane.b32.xlu0 %v624, 78
        %v4561 = vpop.permute.xlu0 %4560
        %4562 = vrot.lane.b32.xlu0 %v630, 78
        %v4563 = vpop.permute.xlu0 %4562
        %4564 = vrot.lane.b32.xlu0 %v626, 78
        %v4565 = vpop.permute.xlu0 %4564
        %4566 = vrot.lane.b32.xlu0 %v632, 78
        %v4567 = vpop.permute.xlu0 %4566
        %vm4568 = vcmp.lt.s32.totalorder %v707, 78
        %v4569 = vsel %vm4568, %v4561, %v4565
        %v4570 = vsel %vm4568, %v4563, %v4567
        %v4571 = vsel %vm4568, %v4565, %v4561
        %v4572 = vsel %vm4568, %v4567, %v4563
        %4573 = vrot.lane.b32.xlu0 %v636, 78
        %v4574 = vpop.permute.xlu0 %4573
        %4575 = vrot.lane.b32.xlu0 %v642, 78
        %v4576 = vpop.permute.xlu0 %4575
        %4577 = vrot.lane.b32.xlu0 %v638, 78
        %v4578 = vpop.permute.xlu0 %4577
        %4579 = vrot.lane.b32.xlu0 %v644, 78
        %v4580 = vpop.permute.xlu0 %4579
        %v4581 = vsel %vm4568, %v4574, %v4578
        %v4582 = vsel %vm4568, %v4576, %v4580
        %v4583 = vsel %vm4568, %v4578, %v4574
        %v4584 = vsel %vm4568, %v4580, %v4576
        %s4585 = scalar_lea.vmem [#allocation8], 87
        %v4586 = vld [vmem:[%s4585] ss:$8 sm:$0x3]
        %v4587 = vmul.f32 %v612, %v4569
        %v4588 = vmul.f32 %v614, %v4571
        %v4589 = vmul.f32 %v618, %v4570
        %v4590 = vmul.f32 %v620, %v4572
        %v4591 = vadd.f32 %v4587, %v4589
        %v4592 = vadd.f32 %v4588, %v4590
        %v4594 = vlaneseq
        %v4595 = vshrl.u32 %v4594, 7
        %v4596 = vsub.s32 0, %v4595
        %v4597 = vrot.slane %v4586, %v4596
        %v4598 = vlaneseq
        %v4599 = vshrl.u32 %v4598, 7
        %v4600 = vsub.s32 1, %v4599
        %v4601 = vrot.slane %v4586, %v4600
        %v4604 = vmul.f32 %v4591, %v4597
        %v4605 = vmul.f32 %v4592, %v4601
        %v4606 = vadd.f32 %v4148, %v1159
        %v4607 = vadd.f32 %v4149, %v1160
        %v4608 = vadd.f32 %v4604, %v4606
        %v4609 = vadd.f32 %v4605, %v4607
        %v4610 = vmax.f32 %v4528, %v4608
        %v4611 = vmax.f32 %v4529, %v4609
        %v4612 = vsub.f32 %v4528, %v4610
        %v4613 = vsub.f32 %v4529, %v4611
        %v4614 = vmul.f32 %v4612, 1.442695
        %v4615 = vpow.pop %v4614
        %v4616 = vmul.f32 %v4613, 1.442695
        %v4617 = vpow.pop %v4616
        %v4618 = vsub.f32 %v4608, %v4610
        %v4619 = vsub.f32 %v4609, %v4611
        %v4620 = vmul.f32 %v4618, 1.442695
        %v4621 = vpow.pop %v4620
        %v4622 = vmul.f32 %v4619, 1.442695
        %v4623 = vpow.pop %v4622
        %v4624 = vmul.f32 %v4615, %v4544
        %v4625 = vmul.f32 %v4617, %v4545
        %v4626 = vadd.f32 %v4624, %v4621
        %v4627 = vadd.f32 %v4625, %v4623
        %v4628 = vmul.f32 %v4621, %v4597
        %v4629 = vmul.f32 %v4623, %v4601
        %v4630 = vmul.f32 %v4615, %v4552
        %v4631 = vmul.f32 %v4617, %v4553
        %v4632 = vmul.f32 %v4628, %v4581
        %v4633 = vmul.f32 %v4629, %v4583
        %v4634 = vadd.f32 %v4630, %v4632
        %v4635 = vadd.f32 %v4631, %v4633
        %v4636 = vmul.f32 %v4615, %v4558
        %v4637 = vmul.f32 %v4617, %v4559
        %v4638 = vmul.f32 %v4628, %v4582
        %v4639 = vmul.f32 %v4629, %v4584
        %v4640 = vadd.f32 %v4636, %v4638
        %v4641 = vadd.f32 %v4637, %v4639
        %4642 = vrot.lane.b32.xlu0 %v624, 77
        %v4643 = vpop.permute.xlu0 %4642
        %4644 = vrot.lane.b32.xlu0 %v630, 77
        %v4645 = vpop.permute.xlu0 %4644
        %4646 = vrot.lane.b32.xlu0 %v626, 77
        %v4647 = vpop.permute.xlu0 %4646
        %4648 = vrot.lane.b32.xlu0 %v632, 77
        %v4649 = vpop.permute.xlu0 %4648
        %vm4650 = vcmp.lt.s32.totalorder %v707, 77
        %v4651 = vsel %vm4650, %v4643, %v4647
        %v4652 = vsel %vm4650, %v4645, %v4649
        %v4653 = vsel %vm4650, %v4647, %v4643
        %v4654 = vsel %vm4650, %v4649, %v4645
        %4655 = vrot.lane.b32.xlu0 %v636, 77
        %v4656 = vpop.permute.xlu0 %4655
        %4657 = vrot.lane.b32.xlu0 %v642, 77
        %v4658 = vpop.permute.xlu0 %4657
        %4659 = vrot.lane.b32.xlu0 %v638, 77
        %v4660 = vpop.permute.xlu0 %4659
        %4661 = vrot.lane.b32.xlu0 %v644, 77
        %v4662 = vpop.permute.xlu0 %4661
        %v4663 = vsel %vm4650, %v4656, %v4660
        %v4664 = vsel %vm4650, %v4658, %v4662
        %v4665 = vsel %vm4650, %v4660, %v4656
        %v4666 = vsel %vm4650, %v4662, %v4658
        %s4667 = scalar_lea.vmem [#allocation8], 96
        %v4668 = vld [vmem:[%s4667] ss:$8 sm:$0x3]
        %v4669 = vmul.f32 %v612, %v4651
        %v4670 = vmul.f32 %v614, %v4653
        %v4671 = vmul.f32 %v618, %v4652
        %v4672 = vmul.f32 %v620, %v4654
        %v4673 = vadd.f32 %v4669, %v4671
        %v4674 = vadd.f32 %v4670, %v4672
        %v4676 = vlaneseq
        %v4677 = vshrl.u32 %v4676, 7
        %v4678 = vsub.s32 0, %v4677
        %v4679 = vrot.slane %v4668, %v4678
        %v4680 = vlaneseq
        %v4681 = vshrl.u32 %v4680, 7
        %v4682 = vsub.s32 1, %v4681
        %v4683 = vrot.slane %v4668, %v4682
        %v4686 = vmul.f32 %v4673, %v4679
        %v4687 = vmul.f32 %v4674, %v4683
        %v4688 = vadd.f32 %v4148, %v1243
        %v4689 = vadd.f32 %v4149, %v1244
        %v4690 = vadd.f32 %v4686, %v4688
        %v4691 = vadd.f32 %v4687, %v4689
        %v4692 = vmax.f32 %v4610, %v4690
        %v4693 = vmax.f32 %v4611, %v4691
        %v4694 = vsub.f32 %v4610, %v4692
        %v4695 = vsub.f32 %v4611, %v4693
        %v4696 = vmul.f32 %v4694, 1.442695
        %v4697 = vpow.pop %v4696
        %v4698 = vmul.f32 %v4695, 1.442695
        %v4699 = vpow.pop %v4698
        %v4700 = vsub.f32 %v4690, %v4692
        %v4701 = vsub.f32 %v4691, %v4693
        %v4702 = vmul.f32 %v4700, 1.442695
        %v4703 = vpow.pop %v4702
        %v4704 = vmul.f32 %v4701, 1.442695
        %v4705 = vpow.pop %v4704
        %v4706 = vmul.f32 %v4697, %v4626
        %v4707 = vmul.f32 %v4699, %v4627
        %v4708 = vadd.f32 %v4706, %v4703
        %v4709 = vadd.f32 %v4707, %v4705
        %v4710 = vmul.f32 %v4703, %v4679
        %v4711 = vmul.f32 %v4705, %v4683
        %v4712 = vmul.f32 %v4697, %v4634
        %v4713 = vmul.f32 %v4699, %v4635
        %v4714 = vmul.f32 %v4710, %v4663
        %v4715 = vmul.f32 %v4711, %v4665
        %v4716 = vadd.f32 %v4712, %v4714
        %v4717 = vadd.f32 %v4713, %v4715
        %v4718 = vmul.f32 %v4697, %v4640
        %v4719 = vmul.f32 %v4699, %v4641
        %v4720 = vmul.f32 %v4710, %v4664
        %v4721 = vmul.f32 %v4711, %v4666
        %v4722 = vadd.f32 %v4718, %v4720
        %v4723 = vadd.f32 %v4719, %v4721
        %v4724 = vrcp.pop %v4708
        %v4725 = vrcp.pop %v4709
        %v4726 = vmul.f32 %v4716, %v4724
        %v4727 = vmul.f32 %v4717, %v4725
        %v4728 = vmul.f32 %v4722, %v4724
        %v4729 = vmul.f32 %v4723, %v4725
        %v4730 = vld [vmem:[%s6] sm:$0xff]
        %v4731 = vld [vmem:[%s6 + $0x8] sm:$0xff]
        %4733 = vset.pattern.permute.xlu0 0
        %4734 = vperm.xlu0 %4733, %v4730
        %v4735 = vpop.permute.xlu0 %4734
        %4738 = vset.pattern.permute.xlu0 0
        %4739 = vperm.xlu0 %4738, %v4731
        %v4740 = vpop.permute.xlu0 %4739
        %v4742 = vmul.f32 %v4726, %v4735
        %v4743 = vmul.f32 %v4727, %v4735
        %v4744 = vmul.f32 %v4728, %v4740
        %v4745 = vmul.f32 %v4729, %v4740
        %v4746 = vld [vmem:[%s7] sm:$0xff]
        %v4747 = vld [vmem:[%s7 + $0x8] sm:$0xff]
        %4749 = vset.pattern.permute.xlu0 0
        %4750 = vperm.xlu0 %4749, %v4746
        %v4751 = vpop.permute.xlu0 %4750
        %4754 = vset.pattern.permute.xlu0 0
        %4755 = vperm.xlu0 %4754, %v4747
        %v4756 = vpop.permute.xlu0 %4755
        %v4758 = vadd.f32 %v4742, %v4751
        %v4759 = vadd.f32 %v4743, %v4751
        %v4760 = vadd.f32 %v4744, %v4756
        %v4761 = vadd.f32 %v4745, %v4756
        %v4762 = vmax.f32 %v4758, 0.0
        %v4763 = vmax.f32 %v4759, 0.0
        %v4764 = vmax.f32 %v4760, 0.0
        %v4765 = vmax.f32 %v4761, 0.0
        %v4766 = vld [vmem:[%s8] sm:$0xff]
        %v4767 = vld [vmem:[%s8 + $0x8] sm:$0xff]
        %v4768 = vld [vmem:[%s8 + $0x10] sm:$0xff]
        %v4769 = vld [vmem:[%s8 + $0x18] sm:$0xff]
        %v4770 = vld [vmem:[%s8 + $0x20] sm:$0xff]
        %v4771 = vld [vmem:[%s8 + $0x28] sm:$0xff]
        %v4772 = vld [vmem:[%s8 + $0x30] sm:$0xff]
        %v4773 = vld [vmem:[%s8 + $0x38] sm:$0xff]
        %v4774 = vld [vmem:[%s9] sm:$0xff]
        %v4775 = vld [vmem:[%s9 + $0x8] sm:$0xff]
        %v4776 = vld [vmem:[%s9 + $0x10] sm:$0xff]
        %v4777 = vld [vmem:[%s9 + $0x18] sm:$0xff]
        %v4778 = vld [vmem:[%s9 + $0x20] sm:$0xff]
        %v4779 = vld [vmem:[%s9 + $0x28] sm:$0xff]
        %v4780 = vld [vmem:[%s9 + $0x30] sm:$0xff]
        %v4781 = vld [vmem:[%s9 + $0x38] sm:$0xff]
        %4783 = vset.pattern.permute.xlu0 0
        %4784 = vperm.xlu0 %4783, %v4774
        %v4785 = vpop.permute.xlu0 %4784
        %4788 = vset.pattern.permute.xlu0 0
        %4789 = vperm.xlu0 %4788, %v4775
        %v4790 = vpop.permute.xlu0 %4789
        %4793 = vset.pattern.permute.xlu0 0
        %4794 = vperm.xlu0 %4793, %v4776
        %v4795 = vpop.permute.xlu0 %4794
        %4798 = vset.pattern.permute.xlu0 0
        %4799 = vperm.xlu0 %4798, %v4777
        %v4800 = vpop.permute.xlu0 %4799
        %4803 = vset.pattern.permute.xlu0 0
        %4804 = vperm.xlu0 %4803, %v4778
        %v4805 = vpop.permute.xlu0 %4804
        %4808 = vset.pattern.permute.xlu0 0
        %4809 = vperm.xlu0 %4808, %v4779
        %v4810 = vpop.permute.xlu0 %4809
        %4813 = vset.pattern.permute.xlu0 0
        %4814 = vperm.xlu0 %4813, %v4780
        %v4815 = vpop.permute.xlu0 %4814
        %4818 = vset.pattern.permute.xlu0 0
        %4819 = vperm.xlu0 %4818, %v4781
        %v4820 = vpop.permute.xlu0 %4819
        %v4823 = vsel %vm526, %v4766, 0
        %v4826 = vsel %vm526, %v4767, 0
        %v4829 = vsel %vm526, %v4768, 0
        %v4832 = vsel %vm526, %v4769, 0
        %v4835 = vsel %vm526, %v4770, 0
        %v4838 = vsel %vm526, %v4771, 0
        %v4841 = vsel %vm526, %v4772, 0
        %v4844 = vsel %vm526, %v4773, 0
        %4846 = vmatprep.subr.mxu0 %v4763
        %4847 = vmatpush1.msra.mxu0 %v4762
        %4848 = vmatprep.subr.mxu0 %v4765
        %4849 = vmatpush1.msra.mxu0 %v4764
        %4850 = vmatprep.subr.mxu0 0.0
        %4851 = vmatpush1.msra.mxu0 0.0
        %4852 = vmatprep.subr.mxu0 0.0
        %4853 = vmatpush1.msra.mxu0 0.0
        %4854 = vmatprep.subr.mxu0 0.0
        %4855 = vmatpush1.msra.mxu0 0.0
        %4856 = vmatprep.subr.mxu0 0.0
        %4857 = vmatpush1.msra.mxu0 0.0
        %4858 = vmatprep.subr.mxu0 0.0
        %4859 = vmatpush1.msra.mxu0 0.0
        %4860 = vmatprep.subr.mxu0 0.0
        %4861 = vmatpush1.msra.mxu0 0.0
        %4862 = vmatprep.subr.mxu0 0.0
        %4863 = vmatpush1.msra.mxu0 0.0
        %4864 = vmatprep.subr.mxu0 0.0
        %4865 = vmatpush1.msra.mxu0 0.0
        %4866 = vmatprep.subr.mxu0 0.0
        %4867 = vmatpush1.msra.mxu0 0.0
        %4868 = vmatprep.subr.mxu0 0.0
        %4869 = vmatpush1.msra.mxu0 0.0
        %4870 = vmatprep.subr.mxu0 0.0
        %4871 = vmatpush1.msra.mxu0 0.0
        %4872 = vmatprep.subr.mxu0 0.0
        %4873 = vmatpush1.msra.mxu0 0.0
        %4874 = vmatprep.subr.mxu0 0.0
        %4875 = vmatpush1.msra.mxu0 0.0
        %4876 = vmatprep.subr.mxu0 0.0
        %4877 = vmatpush1.msra.mxu0 0.0
        %4878 = vmatprep.subr.mxu0 0.0
        %4879 = vmatpush1.msra.mxu0 0.0
        %4880 = vmatprep.subr.mxu0 0.0
        %4881 = vmatpush1.msra.mxu0 0.0
        %4882 = vmatprep.subr.mxu0 0.0
        %4883 = vmatpush1.msra.mxu0 0.0
        %4884 = vmatprep.subr.mxu0 0.0
        %4885 = vmatpush1.msra.mxu0 0.0
        %4886 = vmatprep.subr.mxu0 0.0
        %4887 = vmatpush1.msra.mxu0 0.0
        %4888 = vmatprep.subr.mxu0 0.0
        %4889 = vmatpush1.msra.mxu0 0.0
        %4890 = vmatprep.subr.mxu0 0.0
        %4891 = vmatpush1.msra.mxu0 0.0
        %4892 = vmatprep.subr.mxu0 0.0
        %4893 = vmatpush1.msra.mxu0 0.0
        %4894 = vmatprep.subr.mxu0 0.0
        %4895 = vmatpush1.msra.mxu0 0.0
        %4896 = vmatprep.subr.mxu0 0.0
        %4897 = vmatpush1.msra.mxu0 0.0
        %4898 = vmatprep.subr.mxu0 0.0
        %4899 = vmatpush1.msra.mxu0 0.0
        %4900 = vmatprep.subr.mxu0 0.0
        %4901 = vmatpush1.msra.mxu0 0.0
        %4902 = vmatprep.subr.mxu0 0.0
        %4903 = vmatpush1.msra.mxu0 0.0
        %4904 = vmatprep.subr.mxu0 0.0
        %4905 = vmatpush1.msra.mxu0 0.0
        %4906 = vmatprep.subr.mxu0 0.0
        %4907 = vmatpush1.msra.mxu0 0.0
        %4908 = vmatprep.subr.mxu0 0.0
        %4909 = vmatpush1.msra.mxu0 0.0
        %4910 = vmatprep.mubr.f32.mxu0 0.0
        %4911 = vmatmul.mubr.f32.gmra.mrb[0].mxu0 %v4823
        %v4912 = vpop.f32.mrb[0].mxu0
        %v4913 = vadd.f32 %v4785, %v4912
        %v4914 = vpop.f32.mrb[0].mxu0
        %v4915 = vadd.f32 %v4785, %v4914
        %4916 = vmatprep.mubr.f32.mxu0 0.0
        %4917 = vmatmul.mubr.f32.gmra.mrb[0].mxu0 %v4826
        %v4918 = vpop.f32.mrb[0].mxu0
        %v4919 = vadd.f32 %v4790, %v4918
        %v4920 = vpop.f32.mrb[0].mxu0
        %v4921 = vadd.f32 %v4790, %v4920
        %4922 = vmatprep.mubr.f32.mxu0 0.0
        %4923 = vmatmul.mubr.f32.gmra.mrb[0].mxu0 %v4829
        %v4924 = vpop.f32.mrb[0].mxu0
        %v4925 = vadd.f32 %v4795, %v4924
        %v4926 = vpop.f32.mrb[0].mxu0
        %v4927 = vadd.f32 %v4795, %v4926
        %4928 = vmatprep.mubr.f32.mxu0 0.0
        %4929 = vmatmul.mubr.f32.gmra.mrb[0].mxu0 %v4832
        %v4930 = vpop.f32.mrb[0].mxu0
        %v4931 = vadd.f32 %v4800, %v4930
        %v4932 = vpop.f32.mrb[0].mxu0
        %v4933 = vadd.f32 %v4800, %v4932
        %4934 = vmatprep.mubr.f32.mxu0 0.0
        %4935 = vmatmul.mubr.f32.gmra.mrb[0].mxu0 %v4835
        %v4936 = vpop.f32.mrb[0].mxu0
        %v4937 = vadd.f32 %v4805, %v4936
        %v4938 = vpop.f32.mrb[0].mxu0
        %v4939 = vadd.f32 %v4805, %v4938
        %4940 = vmatprep.mubr.f32.mxu0 0.0
        %4941 = vmatmul.mubr.f32.gmra.mrb[0].mxu0 %v4838
        %v4942 = vpop.f32.mrb[0].mxu0
        %v4943 = vadd.f32 %v4810, %v4942
        %v4944 = vpop.f32.mrb[0].mxu0
        %v4945 = vadd.f32 %v4810, %v4944
        %4946 = vmatprep.mubr.f32.mxu0 0.0
        %4947 = vmatmul.mubr.f32.gmra.mrb[0].mxu0 %v4841
        %v4948 = vpop.f32.mrb[0].mxu0
        %v4949 = vadd.f32 %v4815, %v4948
        %v4950 = vpop.f32.mrb[0].mxu0
        %v4951 = vadd.f32 %v4815, %v4950
        %4952 = vmatprep.mubr.f32.mxu0 0.0
        %4953 = vmatmul.mubr.f32.gmra.mrb[0].mxu0 %v4844
        %v4954 = vpop.f32.mrb[0].mxu0
        %v4955 = vadd.f32 %v4820, %v4954
        %v4956 = vpop.f32.mrb[0].mxu0
        %v4957 = vadd.f32 %v4820, %v4956
        %4958 = vdwg.mxu0
        %v4959 = vadd.f32 %v4913, %v402
        %v4960 = vadd.f32 %v4915, %v403
        %v4961 = vadd.f32 %v4919, %v404
        %v4962 = vadd.f32 %v4921, %v405
        %v4963 = vadd.f32 %v4925, %v406
        %v4964 = vadd.f32 %v4927, %v407
        %v4965 = vadd.f32 %v4931, %v408
        %v4966 = vadd.f32 %v4933, %v409
        %v4967 = vadd.f32 %v4937, %v410
        %v4968 = vadd.f32 %v4939, %v411
        %v4969 = vadd.f32 %v4943, %v412
        %v4970 = vadd.f32 %v4945, %v413
        %v4971 = vadd.f32 %v4949, %v414
        %v4972 = vadd.f32 %v4951, %v415
        %v4973 = vadd.f32 %v4955, %v416
        %v4974 = vadd.f32 %v4957, %v417
        %v4975 = vmax.f32 %v4959, 0.0
        %v4976 = vmax.f32 %v4960, 0.0
        %v4977 = vmax.f32 %v4961, 0.0
        %v4978 = vmax.f32 %v4962, 0.0
        %v4979 = vmax.f32 %v4963, 0.0
        %v4980 = vmax.f32 %v4964, 0.0
        %v4981 = vmax.f32 %v4965, 0.0
        %v4982 = vmax.f32 %v4966, 0.0
        %v4983 = vmax.f32 %v4967, 0.0
        %v4984 = vmax.f32 %v4968, 0.0
        %v4985 = vmax.f32 %v4969, 0.0
        %v4986 = vmax.f32 %v4970, 0.0
        %v4987 = vmax.f32 %v4971, 0.0
        %v4988 = vmax.f32 %v4972, 0.0
        %v4989 = vmax.f32 %v4973, 0.0
        %v4990 = vmax.f32 %v4974, 0.0
        %4991 = vst [vmem:[%s396] sm:$0xff] %v4975
        %4992 = vst [vmem:[%s396 + $0x8] sm:$0xff] %v4976
        %4993 = vst [vmem:[%s396 + $0x10] sm:$0xff] %v4977
        %4994 = vst [vmem:[%s396 + $0x18] sm:$0xff] %v4978
        %4995 = vst [vmem:[%s396 + $0x20] sm:$0xff] %v4979
        %4996 = vst [vmem:[%s396 + $0x28] sm:$0xff] %v4980
        %4997 = vst [vmem:[%s396 + $0x30] sm:$0xff] %v4981
        %4998 = vst [vmem:[%s396 + $0x38] sm:$0xff] %v4982
        %4999 = vst [vmem:[%s396 + $0x40] sm:$0xff] %v4983
        %5000 = vst [vmem:[%s396 + $0x48] sm:$0xff] %v4984
        %5001 = vst [vmem:[%s396 + $0x50] sm:$0xff] %v4985
        %5002 = vst [vmem:[%s396 + $0x58] sm:$0xff] %v4986
        %5003 = vst [vmem:[%s396 + $0x60] sm:$0xff] %v4987
        %5004 = vst [vmem:[%s396 + $0x68] sm:$0xff] %v4988
        %5005 = vst [vmem:[%s396 + $0x70] sm:$0xff] %v4989
        %5006 = vst [vmem:[%s396 + $0x78] sm:$0xff] %v4990
        %s5007 = sand.u32 %s250, 1
        %s5008 = scalar_lea.sflag [#allocation5], %s5007
        %s5009 = sand.u32 %s250, 1
        %s5010 = smul.addr %s5009, 128
        %s5011 = scalar_lea.vmem [#allocation10], %s5010
        // Predicated region
        $region73: #{tpu_custom_call.1} parent=59 // pred_check
          %p5012 = pneg %p260
        $region74: #{tpu_custom_call.1} parent=59 // pred_check_branch
          %5014 = sbr.rel (%p5012) target = $region76
        $region75: #{tpu_custom_call.1} parent=59 // pred_region
          %s5016 = ssub.s32 2048, 2048
          %5017 = vsyncadd %s5008, %s5016
          %s5018 = smul.addr %s27, 16
          %s5019 = smul.addr %s5018, 128
          %s5020 = scalar_lea.hbm %s10, %s5019
          %s5021 = sshll.u32 %s5011, 4
          %s5022 = int_to_ptr.vmem [resolvable:$true] %s5021
          %5027 = dma.vmem_to_hbm [thread:$0]  %s5022, 2048, %s5020, %s5008, 256, 256, 16
        $region76: #{tpu_custom_call.1} parent=59 // pred_fallthru
          _
      $region60: #{tpu_custom_call.1} parent=5 // pred_fallthru
        _
      %p5028 = scmp.le.s32.totalorder 2, %s22
      // Predicated region
      $region77: #{tpu_custom_call.1} parent=5 // pred_check
        %p5029 = pneg %p5028
      $region78: #{tpu_custom_call.1} parent=5 // pred_check_branch
        %5031 = sbr.rel (%p5029) target = $region80
      $region79: #{tpu_custom_call.1} parent=5 // pred_region
        %s5032 = ssub.s32 %s22, 2
        // Predicated region
        $region81: #{tpu_custom_call.1} parent=79 // pred_check
          %p5033 = pneg %p266
        $region82: #{tpu_custom_call.1} parent=79 // pred_check_branch
          %5035 = sbr.rel (%p5033) target = $region84
        $region83: #{tpu_custom_call.1} parent=79 // pred_region
          %s5036 = sand.u32 %s251, 1
          %s5037 = scalar_lea.sflag [#allocation5], %s5036
          %s5038 = sand.u32 %s251, 1
          %s5039 = smul.addr %s5038, 128
          %s5040 = scalar_lea.vmem [#allocation10], %s5039
          %5041 = dma.done %s5037, 2048
        $region84: #{tpu_custom_call.1} parent=79 // pred_fallthru
          _
      $region80: #{tpu_custom_call.1} parent=5 // pred_fallthru
        _
    $region6: #{tpu_custom_call.1} parent=1 // loop_footer
      %s26 = sadd.s32 1, %s22
    $region7: #{tpu_custom_call.1} parent=1 // loop_footer_branch
      %21 = sbr.rel target = $region3
    $region8: #{tpu_custom_call.1} parent=1 // loop_exit
      _
    %5042 = vsyncpa [#allocation4], 1
    %s5043 = scalar_lea.sflag [#allocation4], 1
    %5044 = vsyncpa %s5043, 1
    %5045 = vsyncpa [#allocation9], 1
    %5046 = vsyncpa [#allocation5], 1
    %s5047 = scalar_lea.sflag [#allocation5], 1
    %5048 = vsyncpa %s5047, 1
    %5049 = vsyncpa [#allocation6], 1
    %s5050 = scalar_lea.sflag [#allocation6], 1
    %5051 = vsyncpa %s5050, 1

</llo_original>
